<compile_context>
chip_gen: v7x
topology: tpu7x:2x2x1
jax: 0.10.0
libtpu: 0.0.40
codegen_flags: <defaults>
</compile_context>

<pallas_src>
import functools

import jax
import jax.numpy as jnp
from jax import lax
from jax.experimental import pallas as pl
from jax.experimental.pallas import tpu as pltpu


def _round_up(x, m):
    return ((x + m - 1) // m) * m


def _basic_block_kernel(xf_ref, w1_ref, w2_ref, s1_ref, b1_ref, s2_ref, b2_ref,
                        mask_ref, o_ref, midp_ref, *,
                        W, Cout, L_pad, n_rows_pad, tile_l):
    Wp = W + 2
    num_full = L_pad // tile_l
    rem = L_pad - num_full * tile_l          # already a multiple of 8

    # ---- zero the pad border of the scratch (8-aligned extents) --------------
    # The strip region [Wp+1, Wp+1+L_pad) is fully rewritten by the conv1 tile
    # loop below, so any overlap with these zeroed regions is harmless; every
    # scratch row is (re)written each grid step, keeping steps independent and
    # the batch axis megacore-safe ("parallel").
    head_len = _round_up(Wp + 1, 8)
    tail_start = ((Wp + 1 + L_pad) // 8) * 8
    tail_len = n_rows_pad - tail_start
    midp_ref[pl.ds(0, head_len), :] = jnp.zeros((head_len, Cout), jnp.float32)
    midp_ref[pl.ds(tail_start, tail_len), :] = jnp.zeros((tail_len, Cout),
                                                         jnp.float32)

    # Hoist the folded-BN vectors out of the tile loops.
    s1 = s1_ref[...]
    b1 = b1_ref[...]
    s2 = s2_ref[...]
    b2 = b2_ref[...]

    def nine_tap(load, t0, tl, w_ref):
        """Sum of the nine 3x3-tap matmuls for tile rows [t0, t0+tl)."""
        acc = jnp.zeros((tl, Cout), jnp.float32)
        for kh in range(3):
            for kw in range(3):
                strip = load(kh * Wp + kw + t0, tl)
                acc = acc + jnp.dot(strip.astype(jnp.bfloat16),
                                    w_ref[kh * 3 + kw],
                                    preferred_element_type=jnp.float32)
        return acc

    def load_x(start, tl):
        return xf_ref[pl.ds(start, tl), :]

    def load_mid(start, tl):
        return midp_ref[pl.ds(start, tl), :]

    def conv1_tile(t0, tl):
        acc = nine_tap(load_x, t0, tl, w1_ref)
        mid = jnp.maximum(acc * s1 + b1, 0.0)
        # Mask wrap-around ("junk") columns and padded tail rows to zero: they
        # land on the scratch's pad border, which conv2 reads and must be zero.
        mid = mid * mask_ref[pl.ds(t0, tl), :]
        midp_ref[pl.ds(Wp + 1 + t0, tl), :] = mid

    def conv2_tile(t0, tl):
        acc = nine_tap(load_mid, t0, tl, w2_ref)
        identity = xf_ref[pl.ds(Wp + 1 + t0, tl), :]      # residual, f32
        out = jnp.maximum(acc * s2 + b2 + identity, 0.0)
        o_ref[pl.ds(t0, tl), :] = out.astype(o_ref.dtype)

    # conv1 over all row tiles (writes the padded scratch), then conv2 over all
    # row tiles (reads the scratch).  conv2 tiles read up to Wp+1 rows ahead of
    # their own range, so the two loops cannot be fused without a halo lag.
    if num_full > 0:
        def body1(t, c):
            conv1_tile(pl.multiple_of(t * tile_l, 8), tile_l)
            return c
        lax.fori_loop(0, num_full, body1, 0)
    if rem > 0:
        conv1_tile(num_full * tile_l, rem)

    if num_full > 0:
        def body2(t, c):
            conv2_tile(pl.multiple_of(t * tile_l, 8), tile_l)
            return c
        lax.fori_loop(0, num_full, body2, 0)
    if rem > 0:
        conv2_tile(num_full * tile_l, rem)


def basic_block_pallas(x_nchw, w1_oihw, w2_oihw, bn1, bn2, eps=1e-5, tile_l=256):
    """BasicBlock forward. x: (N,C,H,W) f32, weights OIHW, bn = (gamma, beta, mean, var)."""
    N, Cin, H, W = x_nchw.shape
    Cout = w1_oihw.shape[0]
    assert Cin == Cout, "stride=1 / downsample=None BasicBlock requires inplanes == planes"

    Wp = W + 2
    L = H * Wp                                  # strip length (incl. junk cols)
    L_pad = _round_up(L, 8)                     # 8-aligned strip length
    n_rows_pad = _round_up(L_pad + 2 * Wp + 2, 8)   # flat padded rows + guards

    TILE_L = max(8, min(_round_up(tile_l, 8), L_pad))
    assert TILE_L % 8 == 0 and L_pad % 8 == 0

    # NCHW -> NHWC, zero-pad spatial by 1, flatten the padded grid to one row
    # axis (channels stay minor / on lanes), then pad rows up to n_rows_pad.
    x = jnp.transpose(x_nchw, (0, 2, 3, 1))
    xp = jnp.pad(x, ((0, 0), (1, 1), (1, 1), (0, 0)))
    xpf = xp.reshape(N, (H + 2) * Wp, Cin)
    xpf = jnp.pad(xpf, ((0, 0), (0, n_rows_pad - (H + 2) * Wp), (0, 0)))

    def prep_w(w):  # OIHW -> (kh*kw, Cin, Cout), bf16 MXU operand
        return (jnp.transpose(w, (2, 3, 1, 0))
                .reshape(9, w.shape[1], w.shape[0])
                .astype(jnp.bfloat16))

    w1 = prep_w(w1_oihw)
    w2 = prep_w(w2_oihw)

    def fold_bn(p):  # eval-mode BN folded to y = x * s + b (f32)
        gamma, beta, mean, var = p
        s = gamma / jnp.sqrt(var + eps)
        b = beta - mean * s
        return (s.reshape(1, -1).astype(jnp.float32),
                b.reshape(1, -1).astype(jnp.float32))

    s1, b1 = fold_bn(bn1)
    s2, b2 = fold_bn(bn2)

    # Hoisted junk-column / padded-row mask: strip position p is a real output
    # iff (p % Wp) < W and p < L.
    rows = jnp.arange(L_pad, dtype=jnp.int32)
    mask = (((rows % Wp) < W) & (rows < L)).astype(jnp.float32).reshape(L_pad, 1)

    kernel = functools.partial(_basic_block_kernel, W=W, Cout=Cout,
                               L_pad=L_pad, n_rows_pad=n_rows_pad, tile_l=TILE_L)

    # Explicit VMEM budget (double-buffered blocks + scratch + tile temporaries).
    block_bytes = (
        2 * n_rows_pad * Cin * 4                 # input block
        + 2 * L_pad * Cout * 4                   # output block
        + 2 * 9 * (Cin + Cout) * Cout * 2        # bf16 weights
        + 2 * 4 * Cout * 4                       # folded BN vectors
        + 2 * L_pad * 4                          # column mask
        + n_rows_pad * Cout * 4                  # mid scratch
        + 6 * TILE_L * Cout * 4                  # in-flight tile temporaries
    )
    vmem_limit = int(min(100 * 1024 * 1024, max(32 * 1024 * 1024, 2 * block_bytes)))

    out_strip = pl.pallas_call(
        kernel,
        out_shape=jax.ShapeDtypeStruct((N, L_pad, Cout), x.dtype),
        grid_spec=pltpu.PrefetchScalarGridSpec(
            num_scalar_prefetch=0,
            grid=(N,),
            in_specs=[
                pl.BlockSpec((None, n_rows_pad, Cin), lambda n: (n, 0, 0)),
                pl.BlockSpec((9, Cin, Cout), lambda n: (0, 0, 0)),
                pl.BlockSpec((9, Cout, Cout), lambda n: (0, 0, 0)),
                pl.BlockSpec((1, Cout), lambda n: (0, 0)),
                pl.BlockSpec((1, Cout), lambda n: (0, 0)),
                pl.BlockSpec((1, Cout), lambda n: (0, 0)),
                pl.BlockSpec((1, Cout), lambda n: (0, 0)),
                pl.BlockSpec((L_pad, 1), lambda n: (0, 0)),
            ],
            out_specs=pl.BlockSpec((None, L_pad, Cout), lambda n: (n, 0, 0)),
            scratch_shapes=[pltpu.VMEM((n_rows_pad, Cout), jnp.float32)],
        ),
        compiler_params=pltpu.CompilerParams(
            dimension_semantics=("parallel",),
            vmem_limit_bytes=vmem_limit),
    )(xpf, w1, w2, s1, b1, s2, b2, mask)

    # Un-strip: drop padded rows + the 2 wrap-around columns, back to NCHW.
    out = out_strip[:, :L, :].reshape(N, H, Wp, Cout)[:, :, :W, :]
    return jnp.transpose(out, (0, 3, 1, 2))


def basic_block_ref(x, w1, w2, bn1, bn2, eps=1e-5):
    """Pure-JAX f32 reference (NCHW), mirrors the PyTorch forward in eval mode."""
    def conv(x, w):
        return lax.conv_general_dilated(
            x, w, window_strides=(1, 1), padding=((1, 1), (1, 1)),
            dimension_numbers=("NCHW", "OIHW", "NCHW"))

    def bn(x, p):
        g, b, m, v = (q[None, :, None, None] for q in p)
        return (x - m) / jnp.sqrt(v + eps) * g + b

    out = jax.nn.relu(bn(conv(x, w1), bn1))
    out = bn(conv(out, w2), bn2)
    return jax.nn.relu(out + x)


if __name__ == "__main__":
    key = jax.random.PRNGKey(0)
    N, C, H, W = 2, 4, 16, 16          # inplanes = planes = 4, stride = 1
    planes = C

    keys = jax.random.split(key, 11)
    x = jax.random.normal(keys[0], (N, C, H, W), jnp.float32)
    w1 = 0.2 * jax.random.normal(keys[1], (planes, C, 3, 3), jnp.float32)
    w2 = 0.2 * jax.random.normal(keys[2], (planes, planes, 3, 3), jnp.float32)

    bn1 = (1.0 + 0.1 * jax.random.normal(keys[3], (planes,), jnp.float32),   # gamma
           0.1 * jax.random.normal(keys[4], (planes,), jnp.float32),         # beta
           0.05 * jax.random.normal(keys[5], (planes,), jnp.float32),        # running_mean
           1.0 + 0.1 * jnp.abs(jax.random.normal(keys[6], (planes,), jnp.float32)))  # running_var
    bn2 = (1.0 + 0.1 * jax.random.normal(keys[7], (planes,), jnp.float32),
           0.1 * jax.random.normal(keys[8], (planes,), jnp.float32),
           0.05 * jax.random.normal(keys[9], (planes,), jnp.float32),
           1.0 + 0.1 * jnp.abs(jax.random.normal(keys[10], (planes,), jnp.float32)))

    out = basic_block_pallas(x, w1, w2, bn1, bn2)
    out = jax.block_until_ready(out)

    ref = jax.block_until_ready(basic_block_ref(x, w1, w2, bn1, bn2))
    assert out.shape == ref.shape == (N, planes, H, W)

    # bf16 MXU operands (per perf review) -> ~1e-2-level agreement against the
    # pure-f32 reference; check both the max and the mean absolute error.
    max_err = float(jnp.max(jnp.abs(out - ref)))
    mean_err = float(jnp.mean(jnp.abs(out - ref)))
    assert max_err < 1e-1, f"max abs err {max_err}"
    assert mean_err < 1e-2, f"mean abs err {mean_err}"

    print("KERNEL_OK")
</pallas_src>

<mosaic_0001>
module attributes {stable_mosaic.version = 11 : i64} {
  func.func @_basic_block_kernel(%arg0: i32, %arg1: memref<1x328x4xf32, #tpu.memory_space<vmem>>, %arg2: memref<9x4x4xbf16, #tpu.memory_space<vmem>>, %arg3: memref<9x4x4xbf16, #tpu.memory_space<vmem>>, %arg4: memref<1x4xf32, #tpu.memory_space<vmem>>, %arg5: memref<1x4xf32, #tpu.memory_space<vmem>>, %arg6: memref<1x4xf32, #tpu.memory_space<vmem>>, %arg7: memref<1x4xf32, #tpu.memory_space<vmem>>, %arg8: memref<288x1xf32, #tpu.memory_space<vmem>>, %arg9: memref<1x288x4xf32, #tpu.memory_space<vmem>>, %arg10: memref<328x4xf32, #tpu.memory_space<vmem>>) attributes {dimension_semantics = [#tpu.dimension_semantics<parallel>], iteration_bounds = array<i64: 2>, scalar_prefetch = 0 : i64, scratch_operands = 1 : i64, tpu.core_type = #tpu.core_type<tc>, window_params = [{transform_indices = @transform_0, window_bounds = array<i64: 1, 328, 4>}, {pipeline_mode = #tpu.pipeline_mode<synchronous>, transform_indices = @transform_1, window_bounds = array<i64: 9, 4, 4>}, {pipeline_mode = #tpu.pipeline_mode<synchronous>, transform_indices = @transform_2, window_bounds = array<i64: 9, 4, 4>}, {pipeline_mode = #tpu.pipeline_mode<synchronous>, transform_indices = @transform_3, window_bounds = array<i64: 1, 4>}, {pipeline_mode = #tpu.pipeline_mode<synchronous>, transform_indices = @transform_4, window_bounds = array<i64: 1, 4>}, {pipeline_mode = #tpu.pipeline_mode<synchronous>, transform_indices = @transform_5, window_bounds = array<i64: 1, 4>}, {pipeline_mode = #tpu.pipeline_mode<synchronous>, transform_indices = @transform_6, window_bounds = array<i64: 1, 4>}, {pipeline_mode = #tpu.pipeline_mode<synchronous>, transform_indices = @transform_7, window_bounds = array<i64: 288, 1>}, {transform_indices = @transform_8, window_bounds = array<i64: 1, 288, 4>}]} {
    %cst = arith.constant 0.000000e+00 : f32
    %0 = vector.broadcast %cst : f32 to vector<24x4xf32>
    %c0 = arith.constant 0 : index
    %c0_0 = arith.constant 0 : index
    %1 = vector.load %arg10[%c0, %c0_0] : memref<328x4xf32, #tpu.memory_space<vmem>>, vector<24x4xf32>
    tpu.vector_store %arg10[%c0, %c0_0], %0 {strides = array<i32>} : memref<328x4xf32, #tpu.memory_space<vmem>>, vector<24x4xf32>,
    %cst_1 = arith.constant 0.000000e+00 : f32
    %2 = vector.broadcast %cst_1 : f32 to vector<24x4xf32>
    %c304 = arith.constant 304 : index
    %c0_2 = arith.constant 0 : index
    %3 = vector.load %arg10[%c304, %c0_2] : memref<328x4xf32, #tpu.memory_space<vmem>>, vector<24x4xf32>
    tpu.vector_store %arg10[%c304, %c0_2], %2 {strides = array<i32>} : memref<328x4xf32, #tpu.memory_space<vmem>>, vector<24x4xf32>,
    %c0_3 = arith.constant 0 : index
    %c0_4 = arith.constant 0 : index
    %4 = vector.load %arg4[%c0_3, %c0_4] : memref<1x4xf32, #tpu.memory_space<vmem>>, vector<1x4xf32>
    %c0_5 = arith.constant 0 : index
    %c0_6 = arith.constant 0 : index
    %5 = vector.load %arg5[%c0_5, %c0_6] : memref<1x4xf32, #tpu.memory_space<vmem>>, vector<1x4xf32>
    %c0_7 = arith.constant 0 : index
    %c0_8 = arith.constant 0 : index
    %6 = vector.load %arg6[%c0_7, %c0_8] : memref<1x4xf32, #tpu.memory_space<vmem>>, vector<1x4xf32>
    %c0_9 = arith.constant 0 : index
    %c0_10 = arith.constant 0 : index
    %7 = vector.load %arg7[%c0_9, %c0_10] : memref<1x4xf32, #tpu.memory_space<vmem>>, vector<1x4xf32>
    %c0_i32 = arith.constant 0 : i32
    %c256_i32 = arith.constant 256 : i32
    %8 = arith.muli %c0_i32, %c256_i32 : i32
    %9 = tpu.assume_multiple %8, 8 : i32
    %cst_11 = arith.constant 0.000000e+00 : f32
    %10 = vector.broadcast %cst_11 : f32 to vector<256x4xf32>
    %c0_i32_12 = arith.constant 0 : i32
    %11 = arith.addi %c0_i32_12, %9 : i32
    %c0_13 = arith.constant 0 : index
    %12 = arith.index_cast %11 : i32 to index
    %c0_14 = arith.constant 0 : index
    %13 = vector.load %arg1[%c0_13, %12, %c0_14] : memref<1x328x4xf32, #tpu.memory_space<vmem>>, vector<1x256x4xf32>
    %14 = vector.shape_cast %13 : vector<1x256x4xf32> to vector<256x4xf32>
    %15 = arith.truncf %14 : vector<256x4xf32> to vector<256x4xbf16>
    %c0_15 = arith.constant 0 : index
    %c0_16 = arith.constant 0 : index
    %c0_17 = arith.constant 0 : index
    %16 = vector.load %arg2[%c0_15, %c0_16, %c0_17] : memref<9x4x4xbf16, #tpu.memory_space<vmem>>, vector<1x4x4xbf16>
    %17 = vector.shape_cast %16 : vector<1x4x4xbf16> to vector<4x4xbf16>
    %cst_18 = arith.constant dense<0.000000e+00> : vector<256x4xf32>
    %18 = tpu.matmul %15, %17, %cst_18 {dimension_numbers = #tpu.dot_dimension_numbers<[1], [0], [0], [1], [0, 0, 1, 1], [], []>} : vector<256x4xbf16>, vector<4x4xbf16>, vector<256x4xf32> -> vector<256x4xf32>
    %19 = arith.addf %10, %18 : vector<256x4xf32>
    %c1_i32 = arith.constant 1 : i32
    %20 = arith.addi %c1_i32, %9 : i32
    %c0_19 = arith.constant 0 : index
    %21 = arith.index_cast %20 : i32 to index
    %c0_20 = arith.constant 0 : index
    %22 = vector.load %arg1[%c0_19, %21, %c0_20] : memref<1x328x4xf32, #tpu.memory_space<vmem>>, vector<1x256x4xf32>
    %23 = vector.shape_cast %22 : vector<1x256x4xf32> to vector<256x4xf32>
    %24 = arith.truncf %23 : vector<256x4xf32> to vector<256x4xbf16>
    %c1 = arith.constant 1 : index
    %c0_21 = arith.constant 0 : index
    %c0_22 = arith.constant 0 : index
    %25 = vector.load %arg2[%c1, %c0_21, %c0_22] : memref<9x4x4xbf16, #tpu.memory_space<vmem>>, vector<1x4x4xbf16>
    %26 = vector.shape_cast %25 : vector<1x4x4xbf16> to vector<4x4xbf16>
    %cst_23 = arith.constant dense<0.000000e+00> : vector<256x4xf32>
    %27 = tpu.matmul %24, %26, %cst_23 {dimension_numbers = #tpu.dot_dimension_numbers<[1], [0], [0], [1], [0, 0, 1, 1], [], []>} : vector<256x4xbf16>, vector<4x4xbf16>, vector<256x4xf32> -> vector<256x4xf32>
    %28 = arith.addf %19, %27 : vector<256x4xf32>
    %c2_i32 = arith.constant 2 : i32
    %29 = arith.addi %c2_i32, %9 : i32
    %c0_24 = arith.constant 0 : index
    %30 = arith.index_cast %29 : i32 to index
    %c0_25 = arith.constant 0 : index
    %31 = vector.load %arg1[%c0_24, %30, %c0_25] : memref<1x328x4xf32, #tpu.memory_space<vmem>>, vector<1x256x4xf32>
    %32 = vector.shape_cast %31 : vector<1x256x4xf32> to vector<256x4xf32>
    %33 = arith.truncf %32 : vector<256x4xf32> to vector<256x4xbf16>
    %c2 = arith.constant 2 : index
    %c0_26 = arith.constant 0 : index
    %c0_27 = arith.constant 0 : index
    %34 = vector.load %arg2[%c2, %c0_26, %c0_27] : memref<9x4x4xbf16, #tpu.memory_space<vmem>>, vector<1x4x4xbf16>
    %35 = vector.shape_cast %34 : vector<1x4x4xbf16> to vector<4x4xbf16>
    %cst_28 = arith.constant dense<0.000000e+00> : vector<256x4xf32>
    %36 = tpu.matmul %33, %35, %cst_28 {dimension_numbers = #tpu.dot_dimension_numbers<[1], [0], [0], [1], [0, 0, 1, 1], [], []>} : vector<256x4xbf16>, vector<4x4xbf16>, vector<256x4xf32> -> vector<256x4xf32>
    %37 = arith.addf %28, %36 : vector<256x4xf32>
    %c18_i32 = arith.constant 18 : i32
    %38 = arith.addi %c18_i32, %9 : i32
    %c0_29 = arith.constant 0 : index
    %39 = arith.index_cast %38 : i32 to index
    %c0_30 = arith.constant 0 : index
    %40 = vector.load %arg1[%c0_29, %39, %c0_30] : memref<1x328x4xf32, #tpu.memory_space<vmem>>, vector<1x256x4xf32>
    %41 = vector.shape_cast %40 : vector<1x256x4xf32> to vector<256x4xf32>
    %42 = arith.truncf %41 : vector<256x4xf32> to vector<256x4xbf16>
    %c3 = arith.constant 3 : index
    %c0_31 = arith.constant 0 : index
    %c0_32 = arith.constant 0 : index
    %43 = vector.load %arg2[%c3, %c0_31, %c0_32] : memref<9x4x4xbf16, #tpu.memory_space<vmem>>, vector<1x4x4xbf16>
    %44 = vector.shape_cast %43 : vector<1x4x4xbf16> to vector<4x4xbf16>
    %cst_33 = arith.constant dense<0.000000e+00> : vector<256x4xf32>
    %45 = tpu.matmul %42, %44, %cst_33 {dimension_numbers = #tpu.dot_dimension_numbers<[1], [0], [0], [1], [0, 0, 1, 1], [], []>} : vector<256x4xbf16>, vector<4x4xbf16>, vector<256x4xf32> -> vector<256x4xf32>
    %46 = arith.addf %37, %45 : vector<256x4xf32>
    %c19_i32 = arith.constant 19 : i32
    %47 = arith.addi %c19_i32, %9 : i32
    %c0_34 = arith.constant 0 : index
    %48 = arith.index_cast %47 : i32 to index
    %c0_35 = arith.constant 0 : index
    %49 = vector.load %arg1[%c0_34, %48, %c0_35] : memref<1x328x4xf32, #tpu.memory_space<vmem>>, vector<1x256x4xf32>
    %50 = vector.shape_cast %49 : vector<1x256x4xf32> to vector<256x4xf32>
    %51 = arith.truncf %50 : vector<256x4xf32> to vector<256x4xbf16>
    %c4 = arith.constant 4 : index
    %c0_36 = arith.constant 0 : index
    %c0_37 = arith.constant 0 : index
    %52 = vector.load %arg2[%c4, %c0_36, %c0_37] : memref<9x4x4xbf16, #tpu.memory_space<vmem>>, vector<1x4x4xbf16>
    %53 = vector.shape_cast %52 : vector<1x4x4xbf16> to vector<4x4xbf16>
    %cst_38 = arith.constant dense<0.000000e+00> : vector<256x4xf32>
    %54 = tpu.matmul %51, %53, %cst_38 {dimension_numbers = #tpu.dot_dimension_numbers<[1], [0], [0], [1], [0, 0, 1, 1], [], []>} : vector<256x4xbf16>, vector<4x4xbf16>, vector<256x4xf32> -> vector<256x4xf32>
    %55 = arith.addf %46, %54 : vector<256x4xf32>
    %c20_i32 = arith.constant 20 : i32
    %56 = arith.addi %c20_i32, %9 : i32
    %c0_39 = arith.constant 0 : index
    %57 = arith.index_cast %56 : i32 to index
    %c0_40 = arith.constant 0 : index
    %58 = vector.load %arg1[%c0_39, %57, %c0_40] : memref<1x328x4xf32, #tpu.memory_space<vmem>>, vector<1x256x4xf32>
    %59 = vector.shape_cast %58 : vector<1x256x4xf32> to vector<256x4xf32>
    %60 = arith.truncf %59 : vector<256x4xf32> to vector<256x4xbf16>
    %c5 = arith.constant 5 : index
    %c0_41 = arith.constant 0 : index
    %c0_42 = arith.constant 0 : index
    %61 = vector.load %arg2[%c5, %c0_41, %c0_42] : memref<9x4x4xbf16, #tpu.memory_space<vmem>>, vector<1x4x4xbf16>
    %62 = vector.shape_cast %61 : vector<1x4x4xbf16> to vector<4x4xbf16>
    %cst_43 = arith.constant dense<0.000000e+00> : vector<256x4xf32>
    %63 = tpu.matmul %60, %62, %cst_43 {dimension_numbers = #tpu.dot_dimension_numbers<[1], [0], [0], [1], [0, 0, 1, 1], [], []>} : vector<256x4xbf16>, vector<4x4xbf16>, vector<256x4xf32> -> vector<256x4xf32>
    %64 = arith.addf %55, %63 : vector<256x4xf32>
    %c36_i32 = arith.constant 36 : i32
    %65 = arith.addi %c36_i32, %9 : i32
    %c0_44 = arith.constant 0 : index
    %66 = arith.index_cast %65 : i32 to index
    %c0_45 = arith.constant 0 : index
    %67 = vector.load %arg1[%c0_44, %66, %c0_45] : memref<1x328x4xf32, #tpu.memory_space<vmem>>, vector<1x256x4xf32>
    %68 = vector.shape_cast %67 : vector<1x256x4xf32> to vector<256x4xf32>
    %69 = arith.truncf %68 : vector<256x4xf32> to vector<256x4xbf16>
    %c6 = arith.constant 6 : index
    %c0_46 = arith.constant 0 : index
    %c0_47 = arith.constant 0 : index
    %70 = vector.load %arg2[%c6, %c0_46, %c0_47] : memref<9x4x4xbf16, #tpu.memory_space<vmem>>, vector<1x4x4xbf16>
    %71 = vector.shape_cast %70 : vector<1x4x4xbf16> to vector<4x4xbf16>
    %cst_48 = arith.constant dense<0.000000e+00> : vector<256x4xf32>
    %72 = tpu.matmul %69, %71, %cst_48 {dimension_numbers = #tpu.dot_dimension_numbers<[1], [0], [0], [1], [0, 0, 1, 1], [], []>} : vector<256x4xbf16>, vector<4x4xbf16>, vector<256x4xf32> -> vector<256x4xf32>
    %73 = arith.addf %64, %72 : vector<256x4xf32>
    %c37_i32 = arith.constant 37 : i32
    %74 = arith.addi %c37_i32, %9 : i32
    %c0_49 = arith.constant 0 : index
    %75 = arith.index_cast %74 : i32 to index
    %c0_50 = arith.constant 0 : index
    %76 = vector.load %arg1[%c0_49, %75, %c0_50] : memref<1x328x4xf32, #tpu.memory_space<vmem>>, vector<1x256x4xf32>
    %77 = vector.shape_cast %76 : vector<1x256x4xf32> to vector<256x4xf32>
    %78 = arith.truncf %77 : vector<256x4xf32> to vector<256x4xbf16>
    %c7 = arith.constant 7 : index
    %c0_51 = arith.constant 0 : index
    %c0_52 = arith.constant 0 : index
    %79 = vector.load %arg2[%c7, %c0_51, %c0_52] : memref<9x4x4xbf16, #tpu.memory_space<vmem>>, vector<1x4x4xbf16>
    %80 = vector.shape_cast %79 : vector<1x4x4xbf16> to vector<4x4xbf16>
    %cst_53 = arith.constant dense<0.000000e+00> : vector<256x4xf32>
    %81 = tpu.matmul %78, %80, %cst_53 {dimension_numbers = #tpu.dot_dimension_numbers<[1], [0], [0], [1], [0, 0, 1, 1], [], []>} : vector<256x4xbf16>, vector<4x4xbf16>, vector<256x4xf32> -> vector<256x4xf32>
    %82 = arith.addf %73, %81 : vector<256x4xf32>
    %c38_i32 = arith.constant 38 : i32
    %83 = arith.addi %c38_i32, %9 : i32
    %c0_54 = arith.constant 0 : index
    %84 = arith.index_cast %83 : i32 to index
    %c0_55 = arith.constant 0 : index
    %85 = vector.load %arg1[%c0_54, %84, %c0_55] : memref<1x328x4xf32, #tpu.memory_space<vmem>>, vector<1x256x4xf32>
    %86 = vector.shape_cast %85 : vector<1x256x4xf32> to vector<256x4xf32>
    %87 = arith.truncf %86 : vector<256x4xf32> to vector<256x4xbf16>
    %c8 = arith.constant 8 : index
    %c0_56 = arith.constant 0 : index
    %c0_57 = arith.constant 0 : index
    %88 = vector.load %arg2[%c8, %c0_56, %c0_57] : memref<9x4x4xbf16, #tpu.memory_space<vmem>>, vector<1x4x4xbf16>
    %89 = vector.shape_cast %88 : vector<1x4x4xbf16> to vector<4x4xbf16>
    %cst_58 = arith.constant dense<0.000000e+00> : vector<256x4xf32>
    %90 = tpu.matmul %87, %89, %cst_58 {dimension_numbers = #tpu.dot_dimension_numbers<[1], [0], [0], [1], [0, 0, 1, 1], [], []>} : vector<256x4xbf16>, vector<4x4xbf16>, vector<256x4xf32> -> vector<256x4xf32>
    %91 = arith.addf %82, %90 : vector<256x4xf32>
    %92 = vector.broadcast %4 : vector<1x4xf32> to vector<256x4xf32>
    %93 = arith.mulf %91, %92 : vector<256x4xf32>
    %94 = vector.broadcast %5 : vector<1x4xf32> to vector<256x4xf32>
    %95 = arith.addf %93, %94 : vector<256x4xf32>
    %cst_59 = arith.constant 0.000000e+00 : f32
    %96 = vector.broadcast %cst_59 : f32 to vector<256x4xf32>
    %97 = arith.maximumf %95, %96 : vector<256x4xf32>
    %98 = arith.index_cast %9 : i32 to index
    %c0_60 = arith.constant 0 : index
    %99 = vector.load %arg8[%98, %c0_60] : memref<288x1xf32, #tpu.memory_space<vmem>>, vector<256x1xf32>
    %100 = vector.broadcast %99 : vector<256x1xf32> to vector<256x4xf32>
    %101 = arith.mulf %97, %100 : vector<256x4xf32>
    %c19_i32_61 = arith.constant 19 : i32
    %102 = arith.addi %c19_i32_61, %9 : i32
    %103 = arith.index_cast %102 : i32 to index
    %c0_62 = arith.constant 0 : index
    %104 = vector.load %arg10[%103, %c0_62] : memref<328x4xf32, #tpu.memory_space<vmem>>, vector<256x4xf32>
    tpu.vector_store %arg10[%103, %c0_62], %101 {strides = array<i32>} : memref<328x4xf32, #tpu.memory_space<vmem>>, vector<256x4xf32>,
    %c1_i32_63 = arith.constant 1 : i32
    %cst_64 = arith.constant 0.000000e+00 : f32
    %105 = vector.broadcast %cst_64 : f32 to vector<32x4xf32>
    %c0_65 = arith.constant 0 : index
    %c256 = arith.constant 256 : index
    %c0_66 = arith.constant 0 : index
    %106 = vector.load %arg1[%c0_65, %c256, %c0_66] : memref<1x328x4xf32, #tpu.memory_space<vmem>>, vector<1x32x4xf32>
    %107 = vector.shape_cast %106 : vector<1x32x4xf32> to vector<32x4xf32>
    %108 = arith.truncf %107 : vector<32x4xf32> to vector<32x4xbf16>
    %c0_67 = arith.constant 0 : index
    %c0_68 = arith.constant 0 : index
    %c0_69 = arith.constant 0 : index
    %109 = vector.load %arg2[%c0_67, %c0_68, %c0_69] : memref<9x4x4xbf16, #tpu.memory_space<vmem>>, vector<1x4x4xbf16>
    %110 = vector.shape_cast %109 : vector<1x4x4xbf16> to vector<4x4xbf16>
    %cst_70 = arith.constant dense<0.000000e+00> : vector<32x4xf32>
    %111 = tpu.matmul %108, %110, %cst_70 {dimension_numbers = #tpu.dot_dimension_numbers<[1], [0], [0], [1], [0, 0, 1, 1], [], []>} : vector<32x4xbf16>, vector<4x4xbf16>, vector<32x4xf32> -> vector<32x4xf32>
    %112 = arith.addf %105, %111 : vector<32x4xf32>
    %c0_71 = arith.constant 0 : index
    %c257 = arith.constant 257 : index
    %c0_72 = arith.constant 0 : index
    %113 = vector.load %arg1[%c0_71, %c257, %c0_72] : memref<1x328x4xf32, #tpu.memory_space<vmem>>, vector<1x32x4xf32>
    %114 = vector.shape_cast %113 : vector<1x32x4xf32> to vector<32x4xf32>
    %115 = arith.truncf %114 : vector<32x4xf32> to vector<32x4xbf16>
    %c1_73 = arith.constant 1 : index
    %c0_74 = arith.constant 0 : index
    %c0_75 = arith.constant 0 : index
    %116 = vector.load %arg2[%c1_73, %c0_74, %c0_75] : memref<9x4x4xbf16, #tpu.memory_space<vmem>>, vector<1x4x4xbf16>
    %117 = vector.shape_cast %116 : vector<1x4x4xbf16> to vector<4x4xbf16>
    %cst_76 = arith.constant dense<0.000000e+00> : vector<32x4xf32>
    %118 = tpu.matmul %115, %117, %cst_76 {dimension_numbers = #tpu.dot_dimension_numbers<[1], [0], [0], [1], [0, 0, 1, 1], [], []>} : vector<32x4xbf16>, vector<4x4xbf16>, vector<32x4xf32> -> vector<32x4xf32>
    %119 = arith.addf %112, %118 : vector<32x4xf32>
    %c0_77 = arith.constant 0 : index
    %c258 = arith.constant 258 : index
    %c0_78 = arith.constant 0 : index
    %120 = vector.load %arg1[%c0_77, %c258, %c0_78] : memref<1x328x4xf32, #tpu.memory_space<vmem>>, vector<1x32x4xf32>
    %121 = vector.shape_cast %120 : vector<1x32x4xf32> to vector<32x4xf32>
    %122 = arith.truncf %121 : vector<32x4xf32> to vector<32x4xbf16>
    %c2_79 = arith.constant 2 : index
    %c0_80 = arith.constant 0 : index
    %c0_81 = arith.constant 0 : index
    %123 = vector.load %arg2[%c2_79, %c0_80, %c0_81] : memref<9x4x4xbf16, #tpu.memory_space<vmem>>, vector<1x4x4xbf16>
    %124 = vector.shape_cast %123 : vector<1x4x4xbf16> to vector<4x4xbf16>
    %cst_82 = arith.constant dense<0.000000e+00> : vector<32x4xf32>
    %125 = tpu.matmul %122, %124, %cst_82 {dimension_numbers = #tpu.dot_dimension_numbers<[1], [0], [0], [1], [0, 0, 1, 1], [], []>} : vector<32x4xbf16>, vector<4x4xbf16>, vector<32x4xf32> -> vector<32x4xf32>
    %126 = arith.addf %119, %125 : vector<32x4xf32>
    %c0_83 = arith.constant 0 : index
    %c274 = arith.constant 274 : index
    %c0_84 = arith.constant 0 : index
    %127 = vector.load %arg1[%c0_83, %c274, %c0_84] : memref<1x328x4xf32, #tpu.memory_space<vmem>>, vector<1x32x4xf32>
    %128 = vector.shape_cast %127 : vector<1x32x4xf32> to vector<32x4xf32>
    %129 = arith.truncf %128 : vector<32x4xf32> to vector<32x4xbf16>
    %c3_85 = arith.constant 3 : index
    %c0_86 = arith.constant 0 : index
    %c0_87 = arith.constant 0 : index
    %130 = vector.load %arg2[%c3_85, %c0_86, %c0_87] : memref<9x4x4xbf16, #tpu.memory_space<vmem>>, vector<1x4x4xbf16>
    %131 = vector.shape_cast %130 : vector<1x4x4xbf16> to vector<4x4xbf16>
    %cst_88 = arith.constant dense<0.000000e+00> : vector<32x4xf32>
    %132 = tpu.matmul %129, %131, %cst_88 {dimension_numbers = #tpu.dot_dimension_numbers<[1], [0], [0], [1], [0, 0, 1, 1], [], []>} : vector<32x4xbf16>, vector<4x4xbf16>, vector<32x4xf32> -> vector<32x4xf32>
    %133 = arith.addf %126, %132 : vector<32x4xf32>
    %c0_89 = arith.constant 0 : index
    %c275 = arith.constant 275 : index
    %c0_90 = arith.constant 0 : index
    %134 = vector.load %arg1[%c0_89, %c275, %c0_90] : memref<1x328x4xf32, #tpu.memory_space<vmem>>, vector<1x32x4xf32>
    %135 = vector.shape_cast %134 : vector<1x32x4xf32> to vector<32x4xf32>
    %136 = arith.truncf %135 : vector<32x4xf32> to vector<32x4xbf16>
    %c4_91 = arith.constant 4 : index
    %c0_92 = arith.constant 0 : index
    %c0_93 = arith.constant 0 : index
    %137 = vector.load %arg2[%c4_91, %c0_92, %c0_93] : memref<9x4x4xbf16, #tpu.memory_space<vmem>>, vector<1x4x4xbf16>
    %138 = vector.shape_cast %137 : vector<1x4x4xbf16> to vector<4x4xbf16>
    %cst_94 = arith.constant dense<0.000000e+00> : vector<32x4xf32>
    %139 = tpu.matmul %136, %138, %cst_94 {dimension_numbers = #tpu.dot_dimension_numbers<[1], [0], [0], [1], [0, 0, 1, 1], [], []>} : vector<32x4xbf16>, vector<4x4xbf16>, vector<32x4xf32> -> vector<32x4xf32>
    %140 = arith.addf %133, %139 : vector<32x4xf32>
    %c0_95 = arith.constant 0 : index
    %c276 = arith.constant 276 : index
    %c0_96 = arith.constant 0 : index
    %141 = vector.load %arg1[%c0_95, %c276, %c0_96] : memref<1x328x4xf32, #tpu.memory_space<vmem>>, vector<1x32x4xf32>
    %142 = vector.shape_cast %141 : vector<1x32x4xf32> to vector<32x4xf32>
    %143 = arith.truncf %142 : vector<32x4xf32> to vector<32x4xbf16>
    %c5_97 = arith.constant 5 : index
    %c0_98 = arith.constant 0 : index
    %c0_99 = arith.constant 0 : index
    %144 = vector.load %arg2[%c5_97, %c0_98, %c0_99] : memref<9x4x4xbf16, #tpu.memory_space<vmem>>, vector<1x4x4xbf16>
    %145 = vector.shape_cast %144 : vector<1x4x4xbf16> to vector<4x4xbf16>
    %cst_100 = arith.constant dense<0.000000e+00> : vector<32x4xf32>
    %146 = tpu.matmul %143, %145, %cst_100 {dimension_numbers = #tpu.dot_dimension_numbers<[1], [0], [0], [1], [0, 0, 1, 1], [], []>} : vector<32x4xbf16>, vector<4x4xbf16>, vector<32x4xf32> -> vector<32x4xf32>
    %147 = arith.addf %140, %146 : vector<32x4xf32>
    %c0_101 = arith.constant 0 : index
    %c292 = arith.constant 292 : index
    %c0_102 = arith.constant 0 : index
    %148 = vector.load %arg1[%c0_101, %c292, %c0_102] : memref<1x328x4xf32, #tpu.memory_space<vmem>>, vector<1x32x4xf32>
    %149 = vector.shape_cast %148 : vector<1x32x4xf32> to vector<32x4xf32>
    %150 = arith.truncf %149 : vector<32x4xf32> to vector<32x4xbf16>
    %c6_103 = arith.constant 6 : index
    %c0_104 = arith.constant 0 : index
    %c0_105 = arith.constant 0 : index
    %151 = vector.load %arg2[%c6_103, %c0_104, %c0_105] : memref<9x4x4xbf16, #tpu.memory_space<vmem>>, vector<1x4x4xbf16>
    %152 = vector.shape_cast %151 : vector<1x4x4xbf16> to vector<4x4xbf16>
    %cst_106 = arith.constant dense<0.000000e+00> : vector<32x4xf32>
    %153 = tpu.matmul %150, %152, %cst_106 {dimension_numbers = #tpu.dot_dimension_numbers<[1], [0], [0], [1], [0, 0, 1, 1], [], []>} : vector<32x4xbf16>, vector<4x4xbf16>, vector<32x4xf32> -> vector<32x4xf32>
    %154 = arith.addf %147, %153 : vector<32x4xf32>
    %c0_107 = arith.constant 0 : index
    %c293 = arith.constant 293 : index
    %c0_108 = arith.constant 0 : index
    %155 = vector.load %arg1[%c0_107, %c293, %c0_108] : memref<1x328x4xf32, #tpu.memory_space<vmem>>, vector<1x32x4xf32>
    %156 = vector.shape_cast %155 : vector<1x32x4xf32> to vector<32x4xf32>
    %157 = arith.truncf %156 : vector<32x4xf32> to vector<32x4xbf16>
    %c7_109 = arith.constant 7 : index
    %c0_110 = arith.constant 0 : index
    %c0_111 = arith.constant 0 : index
    %158 = vector.load %arg2[%c7_109, %c0_110, %c0_111] : memref<9x4x4xbf16, #tpu.memory_space<vmem>>, vector<1x4x4xbf16>
    %159 = vector.shape_cast %158 : vector<1x4x4xbf16> to vector<4x4xbf16>
    %cst_112 = arith.constant dense<0.000000e+00> : vector<32x4xf32>
    %160 = tpu.matmul %157, %159, %cst_112 {dimension_numbers = #tpu.dot_dimension_numbers<[1], [0], [0], [1], [0, 0, 1, 1], [], []>} : vector<32x4xbf16>, vector<4x4xbf16>, vector<32x4xf32> -> vector<32x4xf32>
    %161 = arith.addf %154, %160 : vector<32x4xf32>
    %c0_113 = arith.constant 0 : index
    %c294 = arith.constant 294 : index
    %c0_114 = arith.constant 0 : index
    %162 = vector.load %arg1[%c0_113, %c294, %c0_114] : memref<1x328x4xf32, #tpu.memory_space<vmem>>, vector<1x32x4xf32>
    %163 = vector.shape_cast %162 : vector<1x32x4xf32> to vector<32x4xf32>
    %164 = arith.truncf %163 : vector<32x4xf32> to vector<32x4xbf16>
    %c8_115 = arith.constant 8 : index
    %c0_116 = arith.constant 0 : index
    %c0_117 = arith.constant 0 : index
    %165 = vector.load %arg2[%c8_115, %c0_116, %c0_117] : memref<9x4x4xbf16, #tpu.memory_space<vmem>>, vector<1x4x4xbf16>
    %166 = vector.shape_cast %165 : vector<1x4x4xbf16> to vector<4x4xbf16>
    %cst_118 = arith.constant dense<0.000000e+00> : vector<32x4xf32>
    %167 = tpu.matmul %164, %166, %cst_118 {dimension_numbers = #tpu.dot_dimension_numbers<[1], [0], [0], [1], [0, 0, 1, 1], [], []>} : vector<32x4xbf16>, vector<4x4xbf16>, vector<32x4xf32> -> vector<32x4xf32>
    %168 = arith.addf %161, %167 : vector<32x4xf32>
    %169 = vector.broadcast %4 : vector<1x4xf32> to vector<32x4xf32>
    %170 = arith.mulf %168, %169 : vector<32x4xf32>
    %171 = vector.broadcast %5 : vector<1x4xf32> to vector<32x4xf32>
    %172 = arith.addf %170, %171 : vector<32x4xf32>
    %cst_119 = arith.constant 0.000000e+00 : f32
    %173 = vector.broadcast %cst_119 : f32 to vector<32x4xf32>
    %174 = arith.maximumf %172, %173 : vector<32x4xf32>
    %c256_120 = arith.constant 256 : index
    %c0_121 = arith.constant 0 : index
    %175 = vector.load %arg8[%c256_120, %c0_121] : memref<288x1xf32, #tpu.memory_space<vmem>>, vector<32x1xf32>
    %176 = vector.broadcast %175 : vector<32x1xf32> to vector<32x4xf32>
    %177 = arith.mulf %174, %176 : vector<32x4xf32>
    %c275_122 = arith.constant 275 : index
    %c0_123 = arith.constant 0 : index
    %178 = vector.load %arg10[%c275_122, %c0_123] : memref<328x4xf32, #tpu.memory_space<vmem>>, vector<32x4xf32>
    tpu.vector_store %arg10[%c275_122, %c0_123], %177 {strides = array<i32>} : memref<328x4xf32, #tpu.memory_space<vmem>>, vector<32x4xf32>,
    %c0_i32_124 = arith.constant 0 : i32
    %c256_i32_125 = arith.constant 256 : i32
    %179 = arith.muli %c0_i32_124, %c256_i32_125 : i32
    %180 = tpu.assume_multiple %179, 8 : i32
    %cst_126 = arith.constant 0.000000e+00 : f32
    %181 = vector.broadcast %cst_126 : f32 to vector<256x4xf32>
    %c0_i32_127 = arith.constant 0 : i32
    %182 = arith.addi %c0_i32_127, %180 : i32
    %183 = arith.index_cast %182 : i32 to index
    %c0_128 = arith.constant 0 : index
    %184 = vector.load %arg10[%183, %c0_128] : memref<328x4xf32, #tpu.memory_space<vmem>>, vector<256x4xf32>
    %185 = arith.truncf %184 : vector<256x4xf32> to vector<256x4xbf16>
    %c0_129 = arith.constant 0 : index
    %c0_130 = arith.constant 0 : index
    %c0_131 = arith.constant 0 : index
    %186 = vector.load %arg3[%c0_129, %c0_130, %c0_131] : memref<9x4x4xbf16, #tpu.memory_space<vmem>>, vector<1x4x4xbf16>
    %187 = vector.shape_cast %186 : vector<1x4x4xbf16> to vector<4x4xbf16>
    %cst_132 = arith.constant dense<0.000000e+00> : vector<256x4xf32>
    %188 = tpu.matmul %185, %187, %cst_132 {dimension_numbers = #tpu.dot_dimension_numbers<[1], [0], [0], [1], [0, 0, 1, 1], [], []>} : vector<256x4xbf16>, vector<4x4xbf16>, vector<256x4xf32> -> vector<256x4xf32>
    %189 = arith.addf %181, %188 : vector<256x4xf32>
    %c1_i32_133 = arith.constant 1 : i32
    %190 = arith.addi %c1_i32_133, %180 : i32
    %191 = arith.index_cast %190 : i32 to index
    %c0_134 = arith.constant 0 : index
    %192 = vector.load %arg10[%191, %c0_134] : memref<328x4xf32, #tpu.memory_space<vmem>>, vector<256x4xf32>
    %193 = arith.truncf %192 : vector<256x4xf32> to vector<256x4xbf16>
    %c1_135 = arith.constant 1 : index
    %c0_136 = arith.constant 0 : index
    %c0_137 = arith.constant 0 : index
    %194 = vector.load %arg3[%c1_135, %c0_136, %c0_137] : memref<9x4x4xbf16, #tpu.memory_space<vmem>>, vector<1x4x4xbf16>
    %195 = vector.shape_cast %194 : vector<1x4x4xbf16> to vector<4x4xbf16>
    %cst_138 = arith.constant dense<0.000000e+00> : vector<256x4xf32>
    %196 = tpu.matmul %193, %195, %cst_138 {dimension_numbers = #tpu.dot_dimension_numbers<[1], [0], [0], [1], [0, 0, 1, 1], [], []>} : vector<256x4xbf16>, vector<4x4xbf16>, vector<256x4xf32> -> vector<256x4xf32>
    %197 = arith.addf %189, %196 : vector<256x4xf32>
    %c2_i32_139 = arith.constant 2 : i32
    %198 = arith.addi %c2_i32_139, %180 : i32
    %199 = arith.index_cast %198 : i32 to index
    %c0_140 = arith.constant 0 : index
    %200 = vector.load %arg10[%199, %c0_140] : memref<328x4xf32, #tpu.memory_space<vmem>>, vector<256x4xf32>
    %201 = arith.truncf %200 : vector<256x4xf32> to vector<256x4xbf16>
    %c2_141 = arith.constant 2 : index
    %c0_142 = arith.constant 0 : index
    %c0_143 = arith.constant 0 : index
    %202 = vector.load %arg3[%c2_141, %c0_142, %c0_143] : memref<9x4x4xbf16, #tpu.memory_space<vmem>>, vector<1x4x4xbf16>
    %203 = vector.shape_cast %202 : vector<1x4x4xbf16> to vector<4x4xbf16>
    %cst_144 = arith.constant dense<0.000000e+00> : vector<256x4xf32>
    %204 = tpu.matmul %201, %203, %cst_144 {dimension_numbers = #tpu.dot_dimension_numbers<[1], [0], [0], [1], [0, 0, 1, 1], [], []>} : vector<256x4xbf16>, vector<4x4xbf16>, vector<256x4xf32> -> vector<256x4xf32>
    %205 = arith.addf %197, %204 : vector<256x4xf32>
    %c18_i32_145 = arith.constant 18 : i32
    %206 = arith.addi %c18_i32_145, %180 : i32
    %207 = arith.index_cast %206 : i32 to index
    %c0_146 = arith.constant 0 : index
    %208 = vector.load %arg10[%207, %c0_146] : memref<328x4xf32, #tpu.memory_space<vmem>>, vector<256x4xf32>
    %209 = arith.truncf %208 : vector<256x4xf32> to vector<256x4xbf16>
    %c3_147 = arith.constant 3 : index
    %c0_148 = arith.constant 0 : index
    %c0_149 = arith.constant 0 : index
    %210 = vector.load %arg3[%c3_147, %c0_148, %c0_149] : memref<9x4x4xbf16, #tpu.memory_space<vmem>>, vector<1x4x4xbf16>
    %211 = vector.shape_cast %210 : vector<1x4x4xbf16> to vector<4x4xbf16>
    %cst_150 = arith.constant dense<0.000000e+00> : vector<256x4xf32>
    %212 = tpu.matmul %209, %211, %cst_150 {dimension_numbers = #tpu.dot_dimension_numbers<[1], [0], [0], [1], [0, 0, 1, 1], [], []>} : vector<256x4xbf16>, vector<4x4xbf16>, vector<256x4xf32> -> vector<256x4xf32>
    %213 = arith.addf %205, %212 : vector<256x4xf32>
    %c19_i32_151 = arith.constant 19 : i32
    %214 = arith.addi %c19_i32_151, %180 : i32
    %215 = arith.index_cast %214 : i32 to index
    %c0_152 = arith.constant 0 : index
    %216 = vector.load %arg10[%215, %c0_152] : memref<328x4xf32, #tpu.memory_space<vmem>>, vector<256x4xf32>
    %217 = arith.truncf %216 : vector<256x4xf32> to vector<256x4xbf16>
    %c4_153 = arith.constant 4 : index
    %c0_154 = arith.constant 0 : index
    %c0_155 = arith.constant 0 : index
    %218 = vector.load %arg3[%c4_153, %c0_154, %c0_155] : memref<9x4x4xbf16, #tpu.memory_space<vmem>>, vector<1x4x4xbf16>
    %219 = vector.shape_cast %218 : vector<1x4x4xbf16> to vector<4x4xbf16>
    %cst_156 = arith.constant dense<0.000000e+00> : vector<256x4xf32>
    %220 = tpu.matmul %217, %219, %cst_156 {dimension_numbers = #tpu.dot_dimension_numbers<[1], [0], [0], [1], [0, 0, 1, 1], [], []>} : vector<256x4xbf16>, vector<4x4xbf16>, vector<256x4xf32> -> vector<256x4xf32>
    %221 = arith.addf %213, %220 : vector<256x4xf32>
    %c20_i32_157 = arith.constant 20 : i32
    %222 = arith.addi %c20_i32_157, %180 : i32
    %223 = arith.index_cast %222 : i32 to index
    %c0_158 = arith.constant 0 : index
    %224 = vector.load %arg10[%223, %c0_158] : memref<328x4xf32, #tpu.memory_space<vmem>>, vector<256x4xf32>
    %225 = arith.truncf %224 : vector<256x4xf32> to vector<256x4xbf16>
    %c5_159 = arith.constant 5 : index
    %c0_160 = arith.constant 0 : index
    %c0_161 = arith.constant 0 : index
    %226 = vector.load %arg3[%c5_159, %c0_160, %c0_161] : memref<9x4x4xbf16, #tpu.memory_space<vmem>>, vector<1x4x4xbf16>
    %227 = vector.shape_cast %226 : vector<1x4x4xbf16> to vector<4x4xbf16>
    %cst_162 = arith.constant dense<0.000000e+00> : vector<256x4xf32>
    %228 = tpu.matmul %225, %227, %cst_162 {dimension_numbers = #tpu.dot_dimension_numbers<[1], [0], [0], [1], [0, 0, 1, 1], [], []>} : vector<256x4xbf16>, vector<4x4xbf16>, vector<256x4xf32> -> vector<256x4xf32>
    %229 = arith.addf %221, %228 : vector<256x4xf32>
    %c36_i32_163 = arith.constant 36 : i32
    %230 = arith.addi %c36_i32_163, %180 : i32
    %231 = arith.index_cast %230 : i32 to index
    %c0_164 = arith.constant 0 : index
    %232 = vector.load %arg10[%231, %c0_164] : memref<328x4xf32, #tpu.memory_space<vmem>>, vector<256x4xf32>
    %233 = arith.truncf %232 : vector<256x4xf32> to vector<256x4xbf16>
    %c6_165 = arith.constant 6 : index
    %c0_166 = arith.constant 0 : index
    %c0_167 = arith.constant 0 : index
    %234 = vector.load %arg3[%c6_165, %c0_166, %c0_167] : memref<9x4x4xbf16, #tpu.memory_space<vmem>>, vector<1x4x4xbf16>
    %235 = vector.shape_cast %234 : vector<1x4x4xbf16> to vector<4x4xbf16>
    %cst_168 = arith.constant dense<0.000000e+00> : vector<256x4xf32>
    %236 = tpu.matmul %233, %235, %cst_168 {dimension_numbers = #tpu.dot_dimension_numbers<[1], [0], [0], [1], [0, 0, 1, 1], [], []>} : vector<256x4xbf16>, vector<4x4xbf16>, vector<256x4xf32> -> vector<256x4xf32>
    %237 = arith.addf %229, %236 : vector<256x4xf32>
    %c37_i32_169 = arith.constant 37 : i32
    %238 = arith.addi %c37_i32_169, %180 : i32
    %239 = arith.index_cast %238 : i32 to index
    %c0_170 = arith.constant 0 : index
    %240 = vector.load %arg10[%239, %c0_170] : memref<328x4xf32, #tpu.memory_space<vmem>>, vector<256x4xf32>
    %241 = arith.truncf %240 : vector<256x4xf32> to vector<256x4xbf16>
    %c7_171 = arith.constant 7 : index
    %c0_172 = arith.constant 0 : index
    %c0_173 = arith.constant 0 : index
    %242 = vector.load %arg3[%c7_171, %c0_172, %c0_173] : memref<9x4x4xbf16, #tpu.memory_space<vmem>>, vector<1x4x4xbf16>
    %243 = vector.shape_cast %242 : vector<1x4x4xbf16> to vector<4x4xbf16>
    %cst_174 = arith.constant dense<0.000000e+00> : vector<256x4xf32>
    %244 = tpu.matmul %241, %243, %cst_174 {dimension_numbers = #tpu.dot_dimension_numbers<[1], [0], [0], [1], [0, 0, 1, 1], [], []>} : vector<256x4xbf16>, vector<4x4xbf16>, vector<256x4xf32> -> vector<256x4xf32>
    %245 = arith.addf %237, %244 : vector<256x4xf32>
    %c38_i32_175 = arith.constant 38 : i32
    %246 = arith.addi %c38_i32_175, %180 : i32
    %247 = arith.index_cast %246 : i32 to index
    %c0_176 = arith.constant 0 : index
    %248 = vector.load %arg10[%247, %c0_176] : memref<328x4xf32, #tpu.memory_space<vmem>>, vector<256x4xf32>
    %249 = arith.truncf %248 : vector<256x4xf32> to vector<256x4xbf16>
    %c8_177 = arith.constant 8 : index
    %c0_178 = arith.constant 0 : index
    %c0_179 = arith.constant 0 : index
    %250 = vector.load %arg3[%c8_177, %c0_178, %c0_179] : memref<9x4x4xbf16, #tpu.memory_space<vmem>>, vector<1x4x4xbf16>
    %251 = vector.shape_cast %250 : vector<1x4x4xbf16> to vector<4x4xbf16>
    %cst_180 = arith.constant dense<0.000000e+00> : vector<256x4xf32>
    %252 = tpu.matmul %249, %251, %cst_180 {dimension_numbers = #tpu.dot_dimension_numbers<[1], [0], [0], [1], [0, 0, 1, 1], [], []>} : vector<256x4xbf16>, vector<4x4xbf16>, vector<256x4xf32> -> vector<256x4xf32>
    %253 = arith.addf %245, %252 : vector<256x4xf32>
    %c19_i32_181 = arith.constant 19 : i32
    %254 = arith.addi %c19_i32_181, %180 : i32
    %c0_182 = arith.constant 0 : index
    %255 = arith.index_cast %254 : i32 to index
    %c0_183 = arith.constant 0 : index
    %256 = vector.load %arg1[%c0_182, %255, %c0_183] : memref<1x328x4xf32, #tpu.memory_space<vmem>>, vector<1x256x4xf32>
    %257 = vector.shape_cast %256 : vector<1x256x4xf32> to vector<256x4xf32>
    %258 = vector.broadcast %6 : vector<1x4xf32> to vector<256x4xf32>
    %259 = arith.mulf %253, %258 : vector<256x4xf32>
    %260 = vector.broadcast %7 : vector<1x4xf32> to vector<256x4xf32>
    %261 = arith.addf %259, %260 : vector<256x4xf32>
    %262 = arith.addf %261, %257 : vector<256x4xf32>
    %cst_184 = arith.constant 0.000000e+00 : f32
    %263 = vector.broadcast %cst_184 : f32 to vector<256x4xf32>
    %264 = arith.maximumf %262, %263 : vector<256x4xf32>
    %c0_185 = arith.constant 0 : index
    %265 = arith.index_cast %180 : i32 to index
    %c0_186 = arith.constant 0 : index
    %266 = vector.load %arg9[%c0_185, %265, %c0_186] : memref<1x288x4xf32, #tpu.memory_space<vmem>>, vector<1x256x4xf32>
    %267 = vector.shape_cast %266 : vector<1x256x4xf32> to vector<256x4xf32>
    %268 = vector.shape_cast %264 : vector<256x4xf32> to vector<1x256x4xf32>
    tpu.vector_store %arg9[%c0_185, %265, %c0_186], %268 {strides = array<i32>} : memref<1x288x4xf32, #tpu.memory_space<vmem>>, vector<1x256x4xf32>,
    %c1_i32_187 = arith.constant 1 : i32
    %cst_188 = arith.constant 0.000000e+00 : f32
    %269 = vector.broadcast %cst_188 : f32 to vector<32x4xf32>
    %c256_189 = arith.constant 256 : index
    %c0_190 = arith.constant 0 : index
    %270 = vector.load %arg10[%c256_189, %c0_190] : memref<328x4xf32, #tpu.memory_space<vmem>>, vector<32x4xf32>
    %271 = arith.truncf %270 : vector<32x4xf32> to vector<32x4xbf16>
    %c0_191 = arith.constant 0 : index
    %c0_192 = arith.constant 0 : index
    %c0_193 = arith.constant 0 : index
    %272 = vector.load %arg3[%c0_191, %c0_192, %c0_193] : memref<9x4x4xbf16, #tpu.memory_space<vmem>>, vector<1x4x4xbf16>
    %273 = vector.shape_cast %272 : vector<1x4x4xbf16> to vector<4x4xbf16>
    %cst_194 = arith.constant dense<0.000000e+00> : vector<32x4xf32>
    %274 = tpu.matmul %271, %273, %cst_194 {dimension_numbers = #tpu.dot_dimension_numbers<[1], [0], [0], [1], [0, 0, 1, 1], [], []>} : vector<32x4xbf16>, vector<4x4xbf16>, vector<32x4xf32> -> vector<32x4xf32>
    %275 = arith.addf %269, %274 : vector<32x4xf32>
    %c257_195 = arith.constant 257 : index
    %c0_196 = arith.constant 0 : index
    %276 = vector.load %arg10[%c257_195, %c0_196] : memref<328x4xf32, #tpu.memory_space<vmem>>, vector<32x4xf32>
    %277 = arith.truncf %276 : vector<32x4xf32> to vector<32x4xbf16>
    %c1_197 = arith.constant 1 : index
    %c0_198 = arith.constant 0 : index
    %c0_199 = arith.constant 0 : index
    %278 = vector.load %arg3[%c1_197, %c0_198, %c0_199] : memref<9x4x4xbf16, #tpu.memory_space<vmem>>, vector<1x4x4xbf16>
    %279 = vector.shape_cast %278 : vector<1x4x4xbf16> to vector<4x4xbf16>
    %cst_200 = arith.constant dense<0.000000e+00> : vector<32x4xf32>
    %280 = tpu.matmul %277, %279, %cst_200 {dimension_numbers = #tpu.dot_dimension_numbers<[1], [0], [0], [1], [0, 0, 1, 1], [], []>} : vector<32x4xbf16>, vector<4x4xbf16>, vector<32x4xf32> -> vector<32x4xf32>
    %281 = arith.addf %275, %280 : vector<32x4xf32>
    %c258_201 = arith.constant 258 : index
    %c0_202 = arith.constant 0 : index
    %282 = vector.load %arg10[%c258_201, %c0_202] : memref<328x4xf32, #tpu.memory_space<vmem>>, vector<32x4xf32>
    %283 = arith.truncf %282 : vector<32x4xf32> to vector<32x4xbf16>
    %c2_203 = arith.constant 2 : index
    %c0_204 = arith.constant 0 : index
    %c0_205 = arith.constant 0 : index
    %284 = vector.load %arg3[%c2_203, %c0_204, %c0_205] : memref<9x4x4xbf16, #tpu.memory_space<vmem>>, vector<1x4x4xbf16>
    %285 = vector.shape_cast %284 : vector<1x4x4xbf16> to vector<4x4xbf16>
    %cst_206 = arith.constant dense<0.000000e+00> : vector<32x4xf32>
    %286 = tpu.matmul %283, %285, %cst_206 {dimension_numbers = #tpu.dot_dimension_numbers<[1], [0], [0], [1], [0, 0, 1, 1], [], []>} : vector<32x4xbf16>, vector<4x4xbf16>, vector<32x4xf32> -> vector<32x4xf32>
    %287 = arith.addf %281, %286 : vector<32x4xf32>
    %c274_207 = arith.constant 274 : index
    %c0_208 = arith.constant 0 : index
    %288 = vector.load %arg10[%c274_207, %c0_208] : memref<328x4xf32, #tpu.memory_space<vmem>>, vector<32x4xf32>
    %289 = arith.truncf %288 : vector<32x4xf32> to vector<32x4xbf16>
    %c3_209 = arith.constant 3 : index
    %c0_210 = arith.constant 0 : index
    %c0_211 = arith.constant 0 : index
    %290 = vector.load %arg3[%c3_209, %c0_210, %c0_211] : memref<9x4x4xbf16, #tpu.memory_space<vmem>>, vector<1x4x4xbf16>
    %291 = vector.shape_cast %290 : vector<1x4x4xbf16> to vector<4x4xbf16>
    %cst_212 = arith.constant dense<0.000000e+00> : vector<32x4xf32>
    %292 = tpu.matmul %289, %291, %cst_212 {dimension_numbers = #tpu.dot_dimension_numbers<[1], [0], [0], [1], [0, 0, 1, 1], [], []>} : vector<32x4xbf16>, vector<4x4xbf16>, vector<32x4xf32> -> vector<32x4xf32>
    %293 = arith.addf %287, %292 : vector<32x4xf32>
    %c275_213 = arith.constant 275 : index
    %c0_214 = arith.constant 0 : index
    %294 = vector.load %arg10[%c275_213, %c0_214] : memref<328x4xf32, #tpu.memory_space<vmem>>, vector<32x4xf32>
    %295 = arith.truncf %294 : vector<32x4xf32> to vector<32x4xbf16>
    %c4_215 = arith.constant 4 : index
    %c0_216 = arith.constant 0 : index
    %c0_217 = arith.constant 0 : index
    %296 = vector.load %arg3[%c4_215, %c0_216, %c0_217] : memref<9x4x4xbf16, #tpu.memory_space<vmem>>, vector<1x4x4xbf16>
    %297 = vector.shape_cast %296 : vector<1x4x4xbf16> to vector<4x4xbf16>
    %cst_218 = arith.constant dense<0.000000e+00> : vector<32x4xf32>
    %298 = tpu.matmul %295, %297, %cst_218 {dimension_numbers = #tpu.dot_dimension_numbers<[1], [0], [0], [1], [0, 0, 1, 1], [], []>} : vector<32x4xbf16>, vector<4x4xbf16>, vector<32x4xf32> -> vector<32x4xf32>
    %299 = arith.addf %293, %298 : vector<32x4xf32>
    %c276_219 = arith.constant 276 : index
    %c0_220 = arith.constant 0 : index
    %300 = vector.load %arg10[%c276_219, %c0_220] : memref<328x4xf32, #tpu.memory_space<vmem>>, vector<32x4xf32>
    %301 = arith.truncf %300 : vector<32x4xf32> to vector<32x4xbf16>
    %c5_221 = arith.constant 5 : index
    %c0_222 = arith.constant 0 : index
    %c0_223 = arith.constant 0 : index
    %302 = vector.load %arg3[%c5_221, %c0_222, %c0_223] : memref<9x4x4xbf16, #tpu.memory_space<vmem>>, vector<1x4x4xbf16>
    %303 = vector.shape_cast %302 : vector<1x4x4xbf16> to vector<4x4xbf16>
    %cst_224 = arith.constant dense<0.000000e+00> : vector<32x4xf32>
    %304 = tpu.matmul %301, %303, %cst_224 {dimension_numbers = #tpu.dot_dimension_numbers<[1], [0], [0], [1], [0, 0, 1, 1], [], []>} : vector<32x4xbf16>, vector<4x4xbf16>, vector<32x4xf32> -> vector<32x4xf32>
    %305 = arith.addf %299, %304 : vector<32x4xf32>
    %c292_225 = arith.constant 292 : index
    %c0_226 = arith.constant 0 : index
    %306 = vector.load %arg10[%c292_225, %c0_226] : memref<328x4xf32, #tpu.memory_space<vmem>>, vector<32x4xf32>
    %307 = arith.truncf %306 : vector<32x4xf32> to vector<32x4xbf16>
    %c6_227 = arith.constant 6 : index
    %c0_228 = arith.constant 0 : index
    %c0_229 = arith.constant 0 : index
    %308 = vector.load %arg3[%c6_227, %c0_228, %c0_229] : memref<9x4x4xbf16, #tpu.memory_space<vmem>>, vector<1x4x4xbf16>
    %309 = vector.shape_cast %308 : vector<1x4x4xbf16> to vector<4x4xbf16>
    %cst_230 = arith.constant dense<0.000000e+00> : vector<32x4xf32>
    %310 = tpu.matmul %307, %309, %cst_230 {dimension_numbers = #tpu.dot_dimension_numbers<[1], [0], [0], [1], [0, 0, 1, 1], [], []>} : vector<32x4xbf16>, vector<4x4xbf16>, vector<32x4xf32> -> vector<32x4xf32>
    %311 = arith.addf %305, %310 : vector<32x4xf32>
    %c293_231 = arith.constant 293 : index
    %c0_232 = arith.constant 0 : index
    %312 = vector.load %arg10[%c293_231, %c0_232] : memref<328x4xf32, #tpu.memory_space<vmem>>, vector<32x4xf32>
    %313 = arith.truncf %312 : vector<32x4xf32> to vector<32x4xbf16>
    %c7_233 = arith.constant 7 : index
    %c0_234 = arith.constant 0 : index
    %c0_235 = arith.constant 0 : index
    %314 = vector.load %arg3[%c7_233, %c0_234, %c0_235] : memref<9x4x4xbf16, #tpu.memory_space<vmem>>, vector<1x4x4xbf16>
    %315 = vector.shape_cast %314 : vector<1x4x4xbf16> to vector<4x4xbf16>
    %cst_236 = arith.constant dense<0.000000e+00> : vector<32x4xf32>
    %316 = tpu.matmul %313, %315, %cst_236 {dimension_numbers = #tpu.dot_dimension_numbers<[1], [0], [0], [1], [0, 0, 1, 1], [], []>} : vector<32x4xbf16>, vector<4x4xbf16>, vector<32x4xf32> -> vector<32x4xf32>
    %317 = arith.addf %311, %316 : vector<32x4xf32>
    %c294_237 = arith.constant 294 : index
    %c0_238 = arith.constant 0 : index
    %318 = vector.load %arg10[%c294_237, %c0_238] : memref<328x4xf32, #tpu.memory_space<vmem>>, vector<32x4xf32>
    %319 = arith.truncf %318 : vector<32x4xf32> to vector<32x4xbf16>
    %c8_239 = arith.constant 8 : index
    %c0_240 = arith.constant 0 : index
    %c0_241 = arith.constant 0 : index
    %320 = vector.load %arg3[%c8_239, %c0_240, %c0_241] : memref<9x4x4xbf16, #tpu.memory_space<vmem>>, vector<1x4x4xbf16>
    %321 = vector.shape_cast %320 : vector<1x4x4xbf16> to vector<4x4xbf16>
    %cst_242 = arith.constant dense<0.000000e+00> : vector<32x4xf32>
    %322 = tpu.matmul %319, %321, %cst_242 {dimension_numbers = #tpu.dot_dimension_numbers<[1], [0], [0], [1], [0, 0, 1, 1], [], []>} : vector<32x4xbf16>, vector<4x4xbf16>, vector<32x4xf32> -> vector<32x4xf32>
    %323 = arith.addf %317, %322 : vector<32x4xf32>
    %c0_243 = arith.constant 0 : index
    %c275_244 = arith.constant 275 : index
    %c0_245 = arith.constant 0 : index
    %324 = vector.load %arg1[%c0_243, %c275_244, %c0_245] : memref<1x328x4xf32, #tpu.memory_space<vmem>>, vector<1x32x4xf32>
    %325 = vector.shape_cast %324 : vector<1x32x4xf32> to vector<32x4xf32>
    %326 = vector.broadcast %6 : vector<1x4xf32> to vector<32x4xf32>
    %327 = arith.mulf %323, %326 : vector<32x4xf32>
    %328 = vector.broadcast %7 : vector<1x4xf32> to vector<32x4xf32>
    %329 = arith.addf %327, %328 : vector<32x4xf32>
    %330 = arith.addf %329, %325 : vector<32x4xf32>
    %cst_246 = arith.constant 0.000000e+00 : f32
    %331 = vector.broadcast %cst_246 : f32 to vector<32x4xf32>
    %332 = arith.maximumf %330, %331 : vector<32x4xf32>
    %c0_247 = arith.constant 0 : index
    %c256_248 = arith.constant 256 : index
    %c0_249 = arith.constant 0 : index
    %333 = vector.load %arg9[%c0_247, %c256_248, %c0_249] : memref<1x288x4xf32, #tpu.memory_space<vmem>>, vector<1x32x4xf32>
    %334 = vector.shape_cast %333 : vector<1x32x4xf32> to vector<32x4xf32>
    %335 = vector.shape_cast %332 : vector<32x4xf32> to vector<1x32x4xf32>
    tpu.vector_store %arg9[%c0_247, %c256_248, %c0_249], %335 {strides = array<i32>} : memref<1x288x4xf32, #tpu.memory_space<vmem>>, vector<1x32x4xf32>,
    return
  }
  func.func @transform_0(%arg0: i32) -> (i32, i32, i32) {
    %c0_i32 = arith.constant 0 : i32
    %c0_i32_0 = arith.constant 0 : i32
    %c0_i32_1 = arith.constant 0 : i32
    return %arg0, %c0_i32, %c0_i32_0 : i32, i32, i32
  }
  func.func @transform_1(%arg0: i32) -> (i32, i32, i32) {
    %c0_i32 = arith.constant 0 : i32
    %c0_i32_0 = arith.constant 0 : i32
    %c0_i32_1 = arith.constant 0 : i32
    %c0_i32_2 = arith.constant 0 : i32
    return %c0_i32, %c0_i32_0, %c0_i32_1 : i32, i32, i32
  }
  func.func @transform_2(%arg0: i32) -> (i32, i32, i32) {
    %c0_i32 = arith.constant 0 : i32
    %c0_i32_0 = arith.constant 0 : i32
    %c0_i32_1 = arith.constant 0 : i32
    %c0_i32_2 = arith.constant 0 : i32
    return %c0_i32, %c0_i32_0, %c0_i32_1 : i32, i32, i32
  }
  func.func @transform_3(%arg0: i32) -> (i32, i32) {
    %c0_i32 = arith.constant 0 : i32
    %c0_i32_0 = arith.constant 0 : i32
    %c0_i32_1 = arith.constant 0 : i32
    return %c0_i32, %c0_i32_0 : i32, i32
  }
  func.func @transform_4(%arg0: i32) -> (i32, i32) {
    %c0_i32 = arith.constant 0 : i32
    %c0_i32_0 = arith.constant 0 : i32
    %c0_i32_1 = arith.constant 0 : i32
    return %c0_i32, %c0_i32_0 : i32, i32
  }
  func.func @transform_5(%arg0: i32) -> (i32, i32) {
    %c0_i32 = arith.constant 0 : i32
    %c0_i32_0 = arith.constant 0 : i32
    %c0_i32_1 = arith.constant 0 : i32
    return %c0_i32, %c0_i32_0 : i32, i32
  }
  func.func @transform_6(%arg0: i32) -> (i32, i32) {
    %c0_i32 = arith.constant 0 : i32
    %c0_i32_0 = arith.constant 0 : i32
    %c0_i32_1 = arith.constant 0 : i32
    return %c0_i32, %c0_i32_0 : i32, i32
  }
  func.func @transform_7(%arg0: i32) -> (i32, i32) {
    %c0_i32 = arith.constant 0 : i32
    %c0_i32_0 = arith.constant 0 : i32
    %c0_i32_1 = arith.constant 0 : i32
    return %c0_i32, %c0_i32_0 : i32, i32
  }
  func.func @transform_8(%arg0: i32) -> (i32, i32, i32) {
    %c0_i32 = arith.constant 0 : i32
    %c0_i32_0 = arith.constant 0 : i32
    %c0_i32_1 = arith.constant 0 : i32
    return %arg0, %c0_i32, %c0_i32_0 : i32, i32, i32
  }
}

</mosaic_0001>

<llo_original>
// kernel: tpu_custom_call.1
$region0: #{tpu_custom_call.1}
  #allocation0 [shape = 'u32[]', space=smem, size = 0x4, offset = 0x4, fixed_abs, tag = 'smem constant byte address 0x4 - core index']
  #allocation1 [shape = 'u32[144,128]{1,0:T(1,128)}', space=vmem, size = 0x12000, scoped, tag = 'internal scratch']
  #allocation2 [shape = 'f32[328,4]{1,0:T(8,128)}', space=vmem, size = 0x29000, scoped, tag = 'scratch operand']
  %s0 = inlined_call_operand.vmem [shape: f32[2,328,4], index: 0, kind: input, shape index: {}]
  %s1 = inlined_call_operand.vmem [shape: bf16[9,4,4], index: 1, kind: input, shape index: {}]
  %s2 = inlined_call_operand.vmem [shape: bf16[9,4,4], index: 2, kind: input, shape index: {}]
  %s3 = inlined_call_operand.vmem [shape: f32[1,4], index: 3, kind: input, shape index: {}]
  %s4 = inlined_call_operand.vmem [shape: f32[1,4], index: 4, kind: input, shape index: {}]
  %s5 = inlined_call_operand.vmem [shape: f32[1,4], index: 5, kind: input, shape index: {}]
  %s6 = inlined_call_operand.vmem [shape: f32[1,4], index: 6, kind: input, shape index: {}]
  %s7 = inlined_call_operand.vmem [shape: f32[288,1], index: 7, kind: input, shape index: {}]
  %s8 = inlined_call_operand.vmem [shape: f32[2,288,4], index: 8, kind: output, shape index: {}]
  %s9 = sld [smem:[#allocation0]]
  $region65: #{tpu_custom_call.1} parent=0
    _
  %s11 = ssub.s32 1, %s9
  %s12 = scalar_select 0, %s11, %s9
  loop: start=0, step=1, limit=4
  $region2: #{tpu_custom_call.1} parent=0 // loop_pre_header
    _
  $region3: #{tpu_custom_call.1} parent=0 // loop_header
    %s14 = sphi 0, %s18
    %p15 = scmp.ge.s32.totalorder %s14, 4
    %s24 = sphi 0, %s26
    %s27 = sphi 0, %s24
    %s28 = sphi 0, %s27
    %s44 = sphi 0, %s28
    %s48 = sphi 0, %s48
    %s50 = sphi 0, %s48
    %s51 = sphi 0, %s50
    %s65 = sphi 0, %s51
    %s69 = sphi 0, %s69
    %s71 = sphi 0, %s69
    %s72 = sphi 0, %s71
    %s86 = sphi 0, %s72
    %s90 = sphi 0, %s90
    %s92 = sphi 0, %s90
    %s93 = sphi 0, %s92
    %s107 = sphi 0, %s93
    %s111 = sphi 0, %s111
    %s113 = sphi 0, %s111
    %s114 = sphi 0, %s113
    %s128 = sphi 0, %s114
    %s132 = sphi 0, %s132
    %s134 = sphi 0, %s132
    %s135 = sphi 0, %s134
    %s149 = sphi 0, %s135
    %s153 = sphi 0, %s153
    %s155 = sphi 0, %s153
    %s156 = sphi 0, %s155
    %s170 = sphi 0, %s156
    %s174 = sphi 0, %s174
    %s176 = sphi 0, %s174
    %s177 = sphi 0, %s176
    %s191 = sphi 0, %s177
    %s197 = sphi 0, %s199
    %s200 = sphi 0, %s197
    %s201 = sphi 0, %s200
    %s217 = sphi 0, %s201
  $region4: #{tpu_custom_call.1} parent=0 // loop_header_branch
    %17 = sbr.rel (%p15) target = $region8
  $region5: #{tpu_custom_call.1} parent=0 // loop_body
    %s19 = ssub.s32 %s14, 1
    %s20 = ssub.s32 %s14, 2
    %s21 = sadd.s32 %s14, 1
    %s22 = ssub.s32 %s14, %s21
    %p23 = scmp.eq.s32.totalorder %s22, 0
    %s25 = sadd.s32 %s24, 1
    %s26 = scalar_select %p23, %s24, %s25
    %p29 = pneg %p23
    %p30 = scmp.eq.s32.totalorder %s14, 1
    %p31 = por %p29, %p30
    %p32 = scmp.ne.s32.totalorder %s24, %s27
    %p33 = scmp.eq.s32.totalorder %s14, 0
    %p34 = por %p32, %p33
    %p35 = scmp.ne.s32.totalorder %s24, %s27
    %p36 = scmp.eq.s32.totalorder %s19, 1
    %p37 = por %p35, %p36
    %p38 = scmp.ne.s32.totalorder %s27, %s28
    %p39 = scmp.eq.s32.totalorder %s19, 0
    %p40 = por %p38, %p39
    %p41 = scmp.ne.s32.totalorder %s27, %s28
    %p42 = scmp.eq.s32.totalorder %s20, 1
    %p43 = por %p41, %p42
    %p45 = scmp.ne.s32.totalorder %s28, %s44
    %p46 = scmp.eq.s32.totalorder %s20, 0
    %p47 = por %p45, %p46
    %s49 = sadd.s32 %s48, 1
    %p52 = scmp.eq.s32.totalorder %s14, 1
    %p53 = scmp.ne.s32.totalorder %s48, %s50
    %p54 = scmp.eq.s32.totalorder %s14, 0
    %p55 = por %p53, %p54
    %p56 = scmp.ne.s32.totalorder %s48, %s50
    %p57 = scmp.eq.s32.totalorder %s19, 1
    %p58 = por %p56, %p57
    %p59 = scmp.ne.s32.totalorder %s50, %s51
    %p60 = scmp.eq.s32.totalorder %s19, 0
    %p61 = por %p59, %p60
    %p62 = scmp.ne.s32.totalorder %s50, %s51
    %p63 = scmp.eq.s32.totalorder %s20, 1
    %p64 = por %p62, %p63
    %p66 = scmp.ne.s32.totalorder %s51, %s65
    %p67 = scmp.eq.s32.totalorder %s20, 0
    %p68 = por %p66, %p67
    %s70 = sadd.s32 %s69, 1
    %p73 = scmp.eq.s32.totalorder %s14, 1
    %p74 = scmp.ne.s32.totalorder %s69, %s71
    %p75 = scmp.eq.s32.totalorder %s14, 0
    %p76 = por %p74, %p75
    %p77 = scmp.ne.s32.totalorder %s69, %s71
    %p78 = scmp.eq.s32.totalorder %s19, 1
    %p79 = por %p77, %p78
    %p80 = scmp.ne.s32.totalorder %s71, %s72
    %p81 = scmp.eq.s32.totalorder %s19, 0
    %p82 = por %p80, %p81
    %p83 = scmp.ne.s32.totalorder %s71, %s72
    %p84 = scmp.eq.s32.totalorder %s20, 1
    %p85 = por %p83, %p84
    %p87 = scmp.ne.s32.totalorder %s72, %s86
    %p88 = scmp.eq.s32.totalorder %s20, 0
    %p89 = por %p87, %p88
    %s91 = sadd.s32 %s90, 1
    %p94 = scmp.eq.s32.totalorder %s14, 1
    %p95 = scmp.ne.s32.totalorder %s90, %s92
    %p96 = scmp.eq.s32.totalorder %s14, 0
    %p97 = por %p95, %p96
    %p98 = scmp.ne.s32.totalorder %s90, %s92
    %p99 = scmp.eq.s32.totalorder %s19, 1
    %p100 = por %p98, %p99
    %p101 = scmp.ne.s32.totalorder %s92, %s93
    %p102 = scmp.eq.s32.totalorder %s19, 0
    %p103 = por %p101, %p102
    %p104 = scmp.ne.s32.totalorder %s92, %s93
    %p105 = scmp.eq.s32.totalorder %s20, 1
    %p106 = por %p104, %p105
    %p108 = scmp.ne.s32.totalorder %s93, %s107
    %p109 = scmp.eq.s32.totalorder %s20, 0
    %p110 = por %p108, %p109
    %s112 = sadd.s32 %s111, 1
    %p115 = scmp.eq.s32.totalorder %s14, 1
    %p116 = scmp.ne.s32.totalorder %s111, %s113
    %p117 = scmp.eq.s32.totalorder %s14, 0
    %p118 = por %p116, %p117
    %p119 = scmp.ne.s32.totalorder %s111, %s113
    %p120 = scmp.eq.s32.totalorder %s19, 1
    %p121 = por %p119, %p120
    %p122 = scmp.ne.s32.totalorder %s113, %s114
    %p123 = scmp.eq.s32.totalorder %s19, 0
    %p124 = por %p122, %p123
    %p125 = scmp.ne.s32.totalorder %s113, %s114
    %p126 = scmp.eq.s32.totalorder %s20, 1
    %p127 = por %p125, %p126
    %p129 = scmp.ne.s32.totalorder %s114, %s128
    %p130 = scmp.eq.s32.totalorder %s20, 0
    %p131 = por %p129, %p130
    %s133 = sadd.s32 %s132, 1
    %p136 = scmp.eq.s32.totalorder %s14, 1
    %p137 = scmp.ne.s32.totalorder %s132, %s134
    %p138 = scmp.eq.s32.totalorder %s14, 0
    %p139 = por %p137, %p138
    %p140 = scmp.ne.s32.totalorder %s132, %s134
    %p141 = scmp.eq.s32.totalorder %s19, 1
    %p142 = por %p140, %p141
    %p143 = scmp.ne.s32.totalorder %s134, %s135
    %p144 = scmp.eq.s32.totalorder %s19, 0
    %p145 = por %p143, %p144
    %p146 = scmp.ne.s32.totalorder %s134, %s135
    %p147 = scmp.eq.s32.totalorder %s20, 1
    %p148 = por %p146, %p147
    %p150 = scmp.ne.s32.totalorder %s135, %s149
    %p151 = scmp.eq.s32.totalorder %s20, 0
    %p152 = por %p150, %p151
    %s154 = sadd.s32 %s153, 1
    %p157 = scmp.eq.s32.totalorder %s14, 1
    %p158 = scmp.ne.s32.totalorder %s153, %s155
    %p159 = scmp.eq.s32.totalorder %s14, 0
    %p160 = por %p158, %p159
    %p161 = scmp.ne.s32.totalorder %s153, %s155
    %p162 = scmp.eq.s32.totalorder %s19, 1
    %p163 = por %p161, %p162
    %p164 = scmp.ne.s32.totalorder %s155, %s156
    %p165 = scmp.eq.s32.totalorder %s19, 0
    %p166 = por %p164, %p165
    %p167 = scmp.ne.s32.totalorder %s155, %s156
    %p168 = scmp.eq.s32.totalorder %s20, 1
    %p169 = por %p167, %p168
    %p171 = scmp.ne.s32.totalorder %s156, %s170
    %p172 = scmp.eq.s32.totalorder %s20, 0
    %p173 = por %p171, %p172
    %s175 = sadd.s32 %s174, 1
    %p178 = scmp.eq.s32.totalorder %s14, 1
    %p179 = scmp.ne.s32.totalorder %s174, %s176
    %p180 = scmp.eq.s32.totalorder %s14, 0
    %p181 = por %p179, %p180
    %p182 = scmp.ne.s32.totalorder %s174, %s176
    %p183 = scmp.eq.s32.totalorder %s19, 1
    %p184 = por %p182, %p183
    %p185 = scmp.ne.s32.totalorder %s176, %s177
    %p186 = scmp.eq.s32.totalorder %s19, 0
    %p187 = por %p185, %p186
    %p188 = scmp.ne.s32.totalorder %s176, %s177
    %p189 = scmp.eq.s32.totalorder %s20, 1
    %p190 = por %p188, %p189
    %p192 = scmp.ne.s32.totalorder %s177, %s191
    %p193 = scmp.eq.s32.totalorder %s20, 0
    %p194 = por %p192, %p193
    %s195 = ssub.s32 %s14, %s21
    %p196 = scmp.eq.s32.totalorder %s195, 0
    %s198 = sadd.s32 %s197, 1
    %s199 = scalar_select %p196, %s197, %s198
    %p202 = pneg %p196
    %p203 = scmp.eq.s32.totalorder %s14, 1
    %p204 = por %p202, %p203
    %p205 = scmp.ne.s32.totalorder %s197, %s200
    %p206 = scmp.eq.s32.totalorder %s14, 0
    %p207 = por %p205, %p206
    %p208 = scmp.ne.s32.totalorder %s197, %s200
    %p209 = scmp.eq.s32.totalorder %s19, 1
    %p210 = por %p208, %p209
    %p211 = scmp.ne.s32.totalorder %s200, %s201
    %p212 = scmp.eq.s32.totalorder %s19, 0
    %p213 = por %p211, %p212
    %p214 = scmp.ne.s32.totalorder %s200, %s201
    %p215 = scmp.eq.s32.totalorder %s20, 1
    %p216 = por %p214, %p215
    %p218 = scmp.ne.s32.totalorder %s201, %s217
    %p219 = scmp.eq.s32.totalorder %s20, 0
    %p220 = por %p218, %p219
    %p221 = scmp.le.s32.totalorder 1, %s14
    %p222 = scmp.lt.s32.totalorder %s14, 3
    %p223 = pnand %p221, %p222
    %p224 = pneg %p223
    // Predicated region
    $region9: #{tpu_custom_call.1} parent=5 // pred_check
      _
    $region10: #{tpu_custom_call.1} parent=5 // pred_check_branch
      %226 = sbr.rel (%p223) target = $region12
    $region11: #{tpu_custom_call.1} parent=5 // pred_region
      %s227 = ssub.s32 %s14, 1
      // Predicated region
      $region13: #{tpu_custom_call.1} parent=11 // pred_check
        %p228 = pneg %p61
      $region14: #{tpu_custom_call.1} parent=11 // pred_check_branch
        %230 = sbr.rel (%p228) target = $region16
      $region15: #{tpu_custom_call.1} parent=11 // pred_region
        _
      $region16: #{tpu_custom_call.1} parent=11 // pred_fallthru
        _
      // Predicated region
      $region17: #{tpu_custom_call.1} parent=11 // pred_check
        %p231 = pneg %p82
      $region18: #{tpu_custom_call.1} parent=11 // pred_check_branch
        %233 = sbr.rel (%p231) target = $region20
      $region19: #{tpu_custom_call.1} parent=11 // pred_region
        _
      $region20: #{tpu_custom_call.1} parent=11 // pred_fallthru
        _
      // Predicated region
      $region21: #{tpu_custom_call.1} parent=11 // pred_check
        %p234 = pneg %p103
      $region22: #{tpu_custom_call.1} parent=11 // pred_check_branch
        %236 = sbr.rel (%p234) target = $region24
      $region23: #{tpu_custom_call.1} parent=11 // pred_region
        _
      $region24: #{tpu_custom_call.1} parent=11 // pred_fallthru
        _
      // Predicated region
      $region25: #{tpu_custom_call.1} parent=11 // pred_check
        %p237 = pneg %p124
      $region26: #{tpu_custom_call.1} parent=11 // pred_check_branch
        %239 = sbr.rel (%p237) target = $region28
      $region27: #{tpu_custom_call.1} parent=11 // pred_region
        _
      $region28: #{tpu_custom_call.1} parent=11 // pred_fallthru
        _
      // Predicated region
      $region29: #{tpu_custom_call.1} parent=11 // pred_check
        %p240 = pneg %p145
      $region30: #{tpu_custom_call.1} parent=11 // pred_check_branch
        %242 = sbr.rel (%p240) target = $region32
      $region31: #{tpu_custom_call.1} parent=11 // pred_region
        _
      $region32: #{tpu_custom_call.1} parent=11 // pred_fallthru
        _
      // Predicated region
      $region33: #{tpu_custom_call.1} parent=11 // pred_check
        %p243 = pneg %p166
      $region34: #{tpu_custom_call.1} parent=11 // pred_check_branch
        %245 = sbr.rel (%p243) target = $region36
      $region35: #{tpu_custom_call.1} parent=11 // pred_region
        _
      $region36: #{tpu_custom_call.1} parent=11 // pred_fallthru
        _
      // Predicated region
      $region37: #{tpu_custom_call.1} parent=11 // pred_check
        %p246 = pneg %p187
      $region38: #{tpu_custom_call.1} parent=11 // pred_check_branch
        %248 = sbr.rel (%p246) target = $region40
      $region39: #{tpu_custom_call.1} parent=11 // pred_region
        _
      $region40: #{tpu_custom_call.1} parent=11 // pred_fallthru
        _
    $region12: #{tpu_custom_call.1} parent=5 // pred_fallthru
      _
    %p249 = scmp.lt.s32.totalorder %s14, 2
    // Predicated region
    $region41: #{tpu_custom_call.1} parent=5 // pred_check
      %p250 = pneg %p249
    $region42: #{tpu_custom_call.1} parent=5 // pred_check_branch
      %252 = sbr.rel (%p250) target = $region44
    $region43: #{tpu_custom_call.1} parent=5 // pred_region
      // Predicated region
      $region45: #{tpu_custom_call.1} parent=43 // pred_check
        %p253 = pneg %p34
      $region46: #{tpu_custom_call.1} parent=43 // pred_check_branch
        %255 = sbr.rel (%p253) target = $region48
      $region47: #{tpu_custom_call.1} parent=43 // pred_region
        %p256 = scmp.lt.s32.totalorder %s14, 1
        %s257 = scalar_select %p256, %s14, 1
        %s258 = smul.addr %s257, 41
        %s259 = smul.addr %s258, 8
        %s260 = scalar_lea.vmem %s0, %s259
      $region48: #{tpu_custom_call.1} parent=43 // pred_fallthru
        _
    $region44: #{tpu_custom_call.1} parent=5 // pred_fallthru
      _
    %p261 = scmp.le.s32.totalorder 1, %s14
    %p262 = scmp.lt.s32.totalorder %s14, 3
    %p263 = pnand %p261, %p262
    %p264 = pneg %p263
    // Predicated region
    $region49: #{tpu_custom_call.1} parent=5 // pred_check
      _
    $region50: #{tpu_custom_call.1} parent=5 // pred_check_branch
      %266 = sbr.rel (%p263) target = $region52
    $region51: #{tpu_custom_call.1} parent=5 // pred_region
      %s267 = ssub.s32 %s14, 1
      %p268 = scmp.lt.s32.totalorder %s19, 1
      %s269 = scalar_select %p268, %s19, 1
      %s270 = smul.addr %s269, 41
      %s271 = smul.addr %s270, 8
      %s272 = scalar_lea.vmem %s0, %s271
      %p273 = pneg %p40
      %p274 = pneg %p37
      %p275 = pneg %p61
      %p276 = pneg %p58
      %p277 = pneg %p82
      %p278 = pneg %p79
      %p279 = pneg %p103
      %p280 = pneg %p100
      %p281 = pneg %p124
      %p282 = pneg %p121
      %p283 = pneg %p145
      %p284 = pneg %p142
      %p285 = pneg %p166
      %p286 = pneg %p163
      %p287 = pneg %p187
      %p288 = pneg %p184
      %p289 = pneg %p213
      %p290 = pneg %p210
      %p291 = scmp.lt.s32.totalorder %s19, 1
      %s292 = scalar_select %p291, %s19, 1
      %s293 = smul.addr %s292, 36
      %s294 = smul.addr %s293, 8
      %s295 = scalar_lea.vmem %s8, %s294
      %p296 = scmp.lt.s32.totalorder %s19, 1
      %s297 = scalar_select %p296, %s19, 1
      %s298 = smul.addr %s297, 41
      %s299 = smul.addr %s298, 8
      %s300 = scalar_lea.vmem %s0, %s299
      %p301 = scmp.lt.s32.totalorder %s19, 1
      %s302 = scalar_select %p301, %s19, 1
      %s303 = smul.addr %s302, 36
      %s304 = smul.addr %s303, 8
      %s305 = scalar_lea.vmem %s8, %s304
      %vm307 = vcmask 31744
      %308 = vst.msk [vmem:[#allocation2] sm:$0xff] %vm307, 0.0
      %309 = vst.msk [vmem:[#allocation2 + $0x8] sm:$0xff] %vm307, 0.0
      %310 = vst.msk [vmem:[#allocation2 + $0x10] sm:$0xff] %vm307, 0.0
      %311 = vst.msk [vmem:[#allocation2 + $0x130] sm:$0xff] %vm307, 0.0
      %312 = vst.msk [vmem:[#allocation2 + $0x138] sm:$0xff] %vm307, 0.0
      %313 = vst.msk [vmem:[#allocation2 + $0x140] sm:$0xff] %vm307, 0.0
      %v314 = vld [vmem:[%s3] sm:$0x1]
      %v315 = vld [vmem:[%s4] sm:$0x1]
      %v316 = vld [vmem:[%s5] sm:$0x1]
      %v317 = vld [vmem:[%s6] sm:$0x1]
      %v318 = vld [vmem:[%s300] sm:$0xff]
      %v319 = vld [vmem:[%s300 + $0x8] sm:$0xff]
      %v320 = vld [vmem:[%s300 + $0x10] sm:$0xff]
      %v321 = vld [vmem:[%s300 + $0x18] sm:$0xff]
      %v322 = vld [vmem:[%s300 + $0x20] sm:$0xff]
      %v323 = vld [vmem:[%s300 + $0x28] sm:$0xff]
      %v324 = vld [vmem:[%s300 + $0x30] sm:$0xff]
      %v325 = vld [vmem:[%s300 + $0x38] sm:$0xff]
      %v326 = vld [vmem:[%s300 + $0x40] sm:$0xff]
      %v327 = vld [vmem:[%s300 + $0x48] sm:$0xff]
      %v328 = vld [vmem:[%s300 + $0x50] sm:$0xff]
      %v329 = vld [vmem:[%s300 + $0x58] sm:$0xff]
      %v330 = vld [vmem:[%s300 + $0x60] sm:$0xff]
      %v331 = vld [vmem:[%s300 + $0x68] sm:$0xff]
      %v332 = vld [vmem:[%s300 + $0x70] sm:$0xff]
      %v333 = vld [vmem:[%s300 + $0x78] sm:$0xff]
      %v334 = vld [vmem:[%s300 + $0x80] sm:$0xff]
      %v335 = vld [vmem:[%s300 + $0x88] sm:$0xff]
      %v336 = vld [vmem:[%s300 + $0x90] sm:$0xff]
      %v337 = vld [vmem:[%s300 + $0x98] sm:$0xff]
      %v338 = vld [vmem:[%s300 + $0xa0] sm:$0xff]
      %v339 = vld [vmem:[%s300 + $0xa8] sm:$0xff]
      %v340 = vld [vmem:[%s300 + $0xb0] sm:$0xff]
      %v341 = vld [vmem:[%s300 + $0xb8] sm:$0xff]
      %v342 = vld [vmem:[%s300 + $0xc0] sm:$0xff]
      %v343 = vld [vmem:[%s300 + $0xc8] sm:$0xff]
      %v344 = vld [vmem:[%s300 + $0xd0] sm:$0xff]
      %v345 = vld [vmem:[%s300 + $0xd8] sm:$0xff]
      %v346 = vld [vmem:[%s300 + $0xe0] sm:$0xff]
      %v347 = vld [vmem:[%s300 + $0xe8] sm:$0xff]
      %v348 = vld [vmem:[%s300 + $0xf0] sm:$0xff]
      %v349 = vld [vmem:[%s300 + $0xf8] sm:$0xff]
      %v350 = vpack.c.bf16 %v319, %v318
      %v351 = vpack.c.bf16 %v321, %v320
      %v352 = vpack.c.bf16 %v323, %v322
      %v353 = vpack.c.bf16 %v325, %v324
      %v354 = vpack.c.bf16 %v327, %v326
      %v355 = vpack.c.bf16 %v329, %v328
      %v356 = vpack.c.bf16 %v331, %v330
      %v357 = vpack.c.bf16 %v333, %v332
      %v358 = vpack.c.bf16 %v335, %v334
      %v359 = vpack.c.bf16 %v337, %v336
      %v360 = vpack.c.bf16 %v339, %v338
      %v361 = vpack.c.bf16 %v341, %v340
      %v362 = vpack.c.bf16 %v343, %v342
      %v363 = vpack.c.bf16 %v345, %v344
      %v364 = vpack.c.bf16 %v347, %v346
      %v365 = vpack.c.bf16 %v349, %v348
      %v366 = vld [vmem:[%s1] sm:$0x3]
      %s367 = sadd.s32 0, 1
      %s368 = scalar_lea.vmem %s300, %s367
      %v369 = vld [vmem:[%s368] sm:$0xff]
      %v370 = vld [vmem:[%s368 + $0x8] sm:$0xff]
      %v371 = vld [vmem:[%s368 + $0x10] sm:$0xff]
      %v372 = vld [vmem:[%s368 + $0x18] sm:$0xff]
      %v373 = vld [vmem:[%s368 + $0x20] sm:$0xff]
      %v374 = vld [vmem:[%s368 + $0x28] sm:$0xff]
      %v375 = vld [vmem:[%s368 + $0x30] sm:$0xff]
      %v376 = vld [vmem:[%s368 + $0x38] sm:$0xff]
      %v377 = vld [vmem:[%s368 + $0x40] sm:$0xff]
      %v378 = vld [vmem:[%s368 + $0x48] sm:$0xff]
      %v379 = vld [vmem:[%s368 + $0x50] sm:$0xff]
      %v380 = vld [vmem:[%s368 + $0x58] sm:$0xff]
      %v381 = vld [vmem:[%s368 + $0x60] sm:$0xff]
      %v382 = vld [vmem:[%s368 + $0x68] sm:$0xff]
      %v383 = vld [vmem:[%s368 + $0x70] sm:$0xff]
      %v384 = vld [vmem:[%s368 + $0x78] sm:$0xff]
      %v385 = vld [vmem:[%s368 + $0x80] sm:$0xff]
      %v386 = vld [vmem:[%s368 + $0x88] sm:$0xff]
      %v387 = vld [vmem:[%s368 + $0x90] sm:$0xff]
      %v388 = vld [vmem:[%s368 + $0x98] sm:$0xff]
      %v389 = vld [vmem:[%s368 + $0xa0] sm:$0xff]
      %v390 = vld [vmem:[%s368 + $0xa8] sm:$0xff]
      %v391 = vld [vmem:[%s368 + $0xb0] sm:$0xff]
      %v392 = vld [vmem:[%s368 + $0xb8] sm:$0xff]
      %v393 = vld [vmem:[%s368 + $0xc0] sm:$0xff]
      %v394 = vld [vmem:[%s368 + $0xc8] sm:$0xff]
      %v395 = vld [vmem:[%s368 + $0xd0] sm:$0xff]
      %v396 = vld [vmem:[%s368 + $0xd8] sm:$0xff]
      %v397 = vld [vmem:[%s368 + $0xe0] sm:$0xff]
      %v398 = vld [vmem:[%s368 + $0xe8] sm:$0xff]
      %v399 = vld [vmem:[%s368 + $0xf0] sm:$0xff]
      %v400 = vld [vmem:[%s368 + $0xf8] sm:$0xff]
      %v401 = vpack.c.bf16 %v370, %v369
      %v402 = vpack.c.bf16 %v372, %v371
      %v403 = vpack.c.bf16 %v374, %v373
      %v404 = vpack.c.bf16 %v376, %v375
      %v405 = vpack.c.bf16 %v378, %v377
      %v406 = vpack.c.bf16 %v380, %v379
      %v407 = vpack.c.bf16 %v382, %v381
      %v408 = vpack.c.bf16 %v384, %v383
      %v409 = vpack.c.bf16 %v386, %v385
      %v410 = vpack.c.bf16 %v388, %v387
      %v411 = vpack.c.bf16 %v390, %v389
      %v412 = vpack.c.bf16 %v392, %v391
      %v413 = vpack.c.bf16 %v394, %v393
      %v414 = vpack.c.bf16 %v396, %v395
      %v415 = vpack.c.bf16 %v398, %v397
      %v416 = vpack.c.bf16 %v400, %v399
      %s417 = scalar_lea.vmem %s1, 2
      %v418 = vld [vmem:[%s417] sm:$0x3]
      %v420 = vsel %vm307, %v401, 0
      %v423 = vsel %vm307, %v402, 0
      %v426 = vsel %vm307, %v403, 0
      %v429 = vsel %vm307, %v404, 0
      %v432 = vsel %vm307, %v405, 0
      %v435 = vsel %vm307, %v406, 0
      %v438 = vsel %vm307, %v407, 0
      %v441 = vsel %vm307, %v408, 0
      %v444 = vsel %vm307, %v409, 0
      %v447 = vsel %vm307, %v410, 0
      %v450 = vsel %vm307, %v411, 0
      %v453 = vsel %vm307, %v412, 0
      %v456 = vsel %vm307, %v413, 0
      %v459 = vsel %vm307, %v414, 0
      %v462 = vsel %vm307, %v415, 0
      %v465 = vsel %vm307, %v416, 0
      %vm467 = vcmask 1041408
      %v469 = vsel %vm467, %v418, 0
      %471 = vmatprep.subr.bf16.mxu0 0
      %472 = vmatpush1.bf16.msra.mxu0 %v469
      %473 = vmatprep.subr.bf16.mxu0 0
      %474 = vmatpush1.bf16.msra.mxu0 0
      %475 = vmatprep.subr.bf16.mxu0 0
      %476 = vmatpush1.bf16.msra.mxu0 0
      %477 = vmatprep.subr.bf16.mxu0 0
      %478 = vmatpush1.bf16.msra.mxu0 0
      %479 = vmatprep.subr.bf16.mxu0 0
      %480 = vmatpush1.bf16.msra.mxu0 0
      %481 = vmatprep.subr.bf16.mxu0 0
      %482 = vmatpush1.bf16.msra.mxu0 0
      %483 = vmatprep.subr.bf16.mxu0 0
      %484 = vmatpush1.bf16.msra.mxu0 0
      %485 = vmatprep.subr.bf16.mxu0 0
      %486 = vmatpush1.bf16.msra.mxu0 0
      %487 = vmatprep.subr.bf16.mxu0 0
      %488 = vmatpush1.bf16.msra.mxu0 0
      %489 = vmatprep.subr.bf16.mxu0 0
      %490 = vmatpush1.bf16.msra.mxu0 0
      %491 = vmatprep.subr.bf16.mxu0 0
      %492 = vmatpush1.bf16.msra.mxu0 0
      %493 = vmatprep.subr.bf16.mxu0 0
      %494 = vmatpush1.bf16.msra.mxu0 0
      %495 = vmatprep.subr.bf16.mxu0 0
      %496 = vmatpush1.bf16.msra.mxu0 0
      %497 = vmatprep.subr.bf16.mxu0 0
      %498 = vmatpush1.bf16.msra.mxu0 0
      %499 = vmatprep.subr.bf16.mxu0 0
      %500 = vmatpush1.bf16.msra.mxu0 0
      %501 = vmatprep.subr.bf16.mxu0 0
      %502 = vmatpush1.bf16.msra.mxu0 0
      %503 = vmatprep.mubr.bf16.mxu0 0
      %504 = vmatmul.mubr.bf16.gmra.mrb[0].mxu0 %v420
      %v505 = vpop.f32.mrb[0].mxu0
      %v506 = vadd.f32 0.0, %v505
      %v507 = vpop.f32.mrb[0].mxu0
      %v508 = vpop.f32.mrb[0].mxu0
      %v509 = vadd.f32 0.0, %v508
      %v510 = vpop.f32.mrb[0].mxu0
      %511 = vmatprep.mubr.bf16.mxu0 0
      %512 = vmatmul.mubr.bf16.gmra.mrb[0].mxu0 %v423
      %v513 = vpop.f32.mrb[0].mxu0
      %v514 = vadd.f32 0.0, %v513
      %v515 = vpop.f32.mrb[0].mxu0
      %v516 = vpop.f32.mrb[0].mxu0
      %v517 = vadd.f32 0.0, %v516
      %v518 = vpop.f32.mrb[0].mxu0
      %519 = vmatprep.mubr.bf16.mxu0 0
      %520 = vmatmul.mubr.bf16.gmra.mrb[0].mxu0 %v426
      %v521 = vpop.f32.mrb[0].mxu0
      %v522 = vadd.f32 0.0, %v521
      %v523 = vpop.f32.mrb[0].mxu0
      %v524 = vpop.f32.mrb[0].mxu0
      %v525 = vadd.f32 0.0, %v524
      %v526 = vpop.f32.mrb[0].mxu0
      %527 = vmatprep.mubr.bf16.mxu0 0
      %528 = vmatmul.mubr.bf16.gmra.mrb[0].mxu0 %v429
      %v529 = vpop.f32.mrb[0].mxu0
      %v530 = vadd.f32 0.0, %v529
      %v531 = vpop.f32.mrb[0].mxu0
      %v532 = vpop.f32.mrb[0].mxu0
      %v533 = vadd.f32 0.0, %v532
      %v534 = vpop.f32.mrb[0].mxu0
      %535 = vmatprep.mubr.bf16.mxu0 0
      %536 = vmatmul.mubr.bf16.gmra.mrb[0].mxu0 %v432
      %v537 = vpop.f32.mrb[0].mxu0
      %v538 = vadd.f32 0.0, %v537
      %v539 = vpop.f32.mrb[0].mxu0
      %v540 = vpop.f32.mrb[0].mxu0
      %v541 = vadd.f32 0.0, %v540
      %v542 = vpop.f32.mrb[0].mxu0
      %543 = vmatprep.mubr.bf16.mxu0 0
      %544 = vmatmul.mubr.bf16.gmra.mrb[0].mxu0 %v435
      %v545 = vpop.f32.mrb[0].mxu0
      %v546 = vadd.f32 0.0, %v545
      %v547 = vpop.f32.mrb[0].mxu0
      %v548 = vpop.f32.mrb[0].mxu0
      %v549 = vadd.f32 0.0, %v548
      %v550 = vpop.f32.mrb[0].mxu0
      %551 = vmatprep.mubr.bf16.mxu0 0
      %552 = vmatmul.mubr.bf16.gmra.mrb[0].mxu0 %v438
      %v553 = vpop.f32.mrb[0].mxu0
      %v554 = vadd.f32 0.0, %v553
      %v555 = vpop.f32.mrb[0].mxu0
      %v556 = vpop.f32.mrb[0].mxu0
      %v557 = vadd.f32 0.0, %v556
      %v558 = vpop.f32.mrb[0].mxu0
      %559 = vmatprep.mubr.bf16.mxu0 0
      %560 = vmatmul.mubr.bf16.gmra.mrb[0].mxu0 %v441
      %v561 = vpop.f32.mrb[0].mxu0
      %v562 = vadd.f32 0.0, %v561
      %v563 = vpop.f32.mrb[0].mxu0
      %v564 = vpop.f32.mrb[0].mxu0
      %v565 = vadd.f32 0.0, %v564
      %v566 = vpop.f32.mrb[0].mxu0
      %567 = vmatprep.mubr.bf16.mxu0 0
      %568 = vmatmul.mubr.bf16.gmra.mrb[0].mxu0 %v444
      %v569 = vpop.f32.mrb[0].mxu0
      %v570 = vadd.f32 0.0, %v569
      %v571 = vpop.f32.mrb[0].mxu0
      %v572 = vpop.f32.mrb[0].mxu0
      %v573 = vadd.f32 0.0, %v572
      %v574 = vpop.f32.mrb[0].mxu0
      %575 = vmatprep.mubr.bf16.mxu0 0
      %576 = vmatmul.mubr.bf16.gmra.mrb[0].mxu0 %v447
      %v577 = vpop.f32.mrb[0].mxu0
      %v578 = vadd.f32 0.0, %v577
      %v579 = vpop.f32.mrb[0].mxu0
      %v580 = vpop.f32.mrb[0].mxu0
      %v581 = vadd.f32 0.0, %v580
      %v582 = vpop.f32.mrb[0].mxu0
      %583 = vmatprep.mubr.bf16.mxu0 0
      %584 = vmatmul.mubr.bf16.gmra.mrb[0].mxu0 %v450
      %v585 = vpop.f32.mrb[0].mxu0
      %v586 = vadd.f32 0.0, %v585
      %v587 = vpop.f32.mrb[0].mxu0
      %v588 = vpop.f32.mrb[0].mxu0
      %v589 = vadd.f32 0.0, %v588
      %v590 = vpop.f32.mrb[0].mxu0
      %591 = vmatprep.mubr.bf16.mxu0 0
      %592 = vmatmul.mubr.bf16.gmra.mrb[0].mxu0 %v453
      %v593 = vpop.f32.mrb[0].mxu0
      %v594 = vadd.f32 0.0, %v593
      %v595 = vpop.f32.mrb[0].mxu0
      %v596 = vpop.f32.mrb[0].mxu0
      %v597 = vadd.f32 0.0, %v596
      %v598 = vpop.f32.mrb[0].mxu0
      %599 = vmatprep.mubr.bf16.mxu0 0
      %600 = vmatmul.mubr.bf16.gmra.mrb[0].mxu0 %v456
      %v601 = vpop.f32.mrb[0].mxu0
      %v602 = vadd.f32 0.0, %v601
      %v603 = vpop.f32.mrb[0].mxu0
      %v604 = vpop.f32.mrb[0].mxu0
      %v605 = vadd.f32 0.0, %v604
      %v606 = vpop.f32.mrb[0].mxu0
      %607 = vmatprep.mubr.bf16.mxu0 0
      %608 = vmatmul.mubr.bf16.gmra.mrb[0].mxu0 %v459
      %v609 = vpop.f32.mrb[0].mxu0
      %v610 = vadd.f32 0.0, %v609
      %v611 = vpop.f32.mrb[0].mxu0
      %v612 = vpop.f32.mrb[0].mxu0
      %v613 = vadd.f32 0.0, %v612
      %v614 = vpop.f32.mrb[0].mxu0
      %615 = vmatprep.mubr.bf16.mxu0 0
      %616 = vmatmul.mubr.bf16.gmra.mrb[0].mxu0 %v462
      %v617 = vpop.f32.mrb[0].mxu0
      %v618 = vadd.f32 0.0, %v617
      %v619 = vpop.f32.mrb[0].mxu0
      %v620 = vpop.f32.mrb[0].mxu0
      %v621 = vadd.f32 0.0, %v620
      %v622 = vpop.f32.mrb[0].mxu0
      %623 = vmatprep.mubr.bf16.mxu0 0
      %624 = vmatmul.mubr.bf16.gmra.mrb[0].mxu0 %v465
      %v625 = vpop.f32.mrb[0].mxu0
      %v626 = vadd.f32 0.0, %v625
      %v627 = vpop.f32.mrb[0].mxu0
      %v628 = vpop.f32.mrb[0].mxu0
      %v629 = vadd.f32 0.0, %v628
      %v630 = vpop.f32.mrb[0].mxu0
      %631 = vdwg.mxu0
      %v633 = vsel %vm307, %v350, 0
      %v636 = vsel %vm307, %v351, 0
      %v639 = vsel %vm307, %v352, 0
      %v642 = vsel %vm307, %v353, 0
      %v645 = vsel %vm307, %v354, 0
      %v648 = vsel %vm307, %v355, 0
      %v651 = vsel %vm307, %v356, 0
      %v654 = vsel %vm307, %v357, 0
      %v657 = vsel %vm307, %v358, 0
      %v660 = vsel %vm307, %v359, 0
      %v663 = vsel %vm307, %v360, 0
      %v666 = vsel %vm307, %v361, 0
      %v669 = vsel %vm307, %v362, 0
      %v672 = vsel %vm307, %v363, 0
      %v675 = vsel %vm307, %v364, 0
      %v678 = vsel %vm307, %v365, 0
      %v681 = vsel %vm467, %v366, 0
      %683 = vmatprep.subr.bf16.mxu0 0
      %684 = vmatpush1.bf16.msra.mxu0 %v681
      %685 = vmatprep.subr.bf16.mxu0 0
      %686 = vmatpush1.bf16.msra.mxu0 0
      %687 = vmatprep.subr.bf16.mxu0 0
      %688 = vmatpush1.bf16.msra.mxu0 0
      %689 = vmatprep.subr.bf16.mxu0 0
      %690 = vmatpush1.bf16.msra.mxu0 0
      %691 = vmatprep.subr.bf16.mxu0 0
      %692 = vmatpush1.bf16.msra.mxu0 0
      %693 = vmatprep.subr.bf16.mxu0 0
      %694 = vmatpush1.bf16.msra.mxu0 0
      %695 = vmatprep.subr.bf16.mxu0 0
      %696 = vmatpush1.bf16.msra.mxu0 0
      %697 = vmatprep.subr.bf16.mxu0 0
      %698 = vmatpush1.bf16.msra.mxu0 0
      %699 = vmatprep.subr.bf16.mxu0 0
      %700 = vmatpush1.bf16.msra.mxu0 0
      %701 = vmatprep.subr.bf16.mxu0 0
      %702 = vmatpush1.bf16.msra.mxu0 0
      %703 = vmatprep.subr.bf16.mxu0 0
      %704 = vmatpush1.bf16.msra.mxu0 0
      %705 = vmatprep.subr.bf16.mxu0 0
      %706 = vmatpush1.bf16.msra.mxu0 0
      %707 = vmatprep.subr.bf16.mxu0 0
      %708 = vmatpush1.bf16.msra.mxu0 0
      %709 = vmatprep.subr.bf16.mxu0 0
      %710 = vmatpush1.bf16.msra.mxu0 0
      %711 = vmatprep.subr.bf16.mxu0 0
      %712 = vmatpush1.bf16.msra.mxu0 0
      %713 = vmatprep.subr.bf16.mxu0 0
      %714 = vmatpush1.bf16.msra.mxu0 0
      %715 = vmatprep.mubr.bf16.mxu0 0
      %716 = vmatmul.mubr.bf16.gmra.mrb[0].mxu0 %v633
      %v717 = vpop.f32.mrb[0].mxu0
      %v718 = vadd.f32 %v506, %v717
      %v719 = vpop.f32.mrb[0].mxu0
      %v720 = vpop.f32.mrb[0].mxu0
      %v721 = vadd.f32 %v509, %v720
      %v722 = vpop.f32.mrb[0].mxu0
      %723 = vmatprep.mubr.bf16.mxu0 0
      %724 = vmatmul.mubr.bf16.gmra.mrb[0].mxu0 %v636
      %v725 = vpop.f32.mrb[0].mxu0
      %v726 = vadd.f32 %v514, %v725
      %v727 = vpop.f32.mrb[0].mxu0
      %v728 = vpop.f32.mrb[0].mxu0
      %v729 = vadd.f32 %v517, %v728
      %v730 = vpop.f32.mrb[0].mxu0
      %731 = vmatprep.mubr.bf16.mxu0 0
      %732 = vmatmul.mubr.bf16.gmra.mrb[0].mxu0 %v639
      %v733 = vpop.f32.mrb[0].mxu0
      %v734 = vadd.f32 %v522, %v733
      %v735 = vpop.f32.mrb[0].mxu0
      %v736 = vpop.f32.mrb[0].mxu0
      %v737 = vadd.f32 %v525, %v736
      %v738 = vpop.f32.mrb[0].mxu0
      %739 = vmatprep.mubr.bf16.mxu0 0
      %740 = vmatmul.mubr.bf16.gmra.mrb[0].mxu0 %v642
      %v741 = vpop.f32.mrb[0].mxu0
      %v742 = vadd.f32 %v530, %v741
      %v743 = vpop.f32.mrb[0].mxu0
      %v744 = vpop.f32.mrb[0].mxu0
      %v745 = vadd.f32 %v533, %v744
      %v746 = vpop.f32.mrb[0].mxu0
      %747 = vmatprep.mubr.bf16.mxu0 0
      %748 = vmatmul.mubr.bf16.gmra.mrb[0].mxu0 %v645
      %v749 = vpop.f32.mrb[0].mxu0
      %v750 = vadd.f32 %v538, %v749
      %v751 = vpop.f32.mrb[0].mxu0
      %v752 = vpop.f32.mrb[0].mxu0
      %v753 = vadd.f32 %v541, %v752
      %v754 = vpop.f32.mrb[0].mxu0
      %755 = vmatprep.mubr.bf16.mxu0 0
      %756 = vmatmul.mubr.bf16.gmra.mrb[0].mxu0 %v648
      %v757 = vpop.f32.mrb[0].mxu0
      %v758 = vadd.f32 %v546, %v757
      %v759 = vpop.f32.mrb[0].mxu0
      %v760 = vpop.f32.mrb[0].mxu0
      %v761 = vadd.f32 %v549, %v760
      %v762 = vpop.f32.mrb[0].mxu0
      %763 = vmatprep.mubr.bf16.mxu0 0
      %764 = vmatmul.mubr.bf16.gmra.mrb[0].mxu0 %v651
      %v765 = vpop.f32.mrb[0].mxu0
      %v766 = vadd.f32 %v554, %v765
      %v767 = vpop.f32.mrb[0].mxu0
      %v768 = vpop.f32.mrb[0].mxu0
      %v769 = vadd.f32 %v557, %v768
      %v770 = vpop.f32.mrb[0].mxu0
      %771 = vmatprep.mubr.bf16.mxu0 0
      %772 = vmatmul.mubr.bf16.gmra.mrb[0].mxu0 %v654
      %v773 = vpop.f32.mrb[0].mxu0
      %v774 = vadd.f32 %v562, %v773
      %v775 = vpop.f32.mrb[0].mxu0
      %v776 = vpop.f32.mrb[0].mxu0
      %v777 = vadd.f32 %v565, %v776
      %v778 = vpop.f32.mrb[0].mxu0
      %779 = vmatprep.mubr.bf16.mxu0 0
      %780 = vmatmul.mubr.bf16.gmra.mrb[0].mxu0 %v657
      %v781 = vpop.f32.mrb[0].mxu0
      %v782 = vadd.f32 %v570, %v781
      %v783 = vpop.f32.mrb[0].mxu0
      %v784 = vpop.f32.mrb[0].mxu0
      %v785 = vadd.f32 %v573, %v784
      %v786 = vpop.f32.mrb[0].mxu0
      %787 = vmatprep.mubr.bf16.mxu0 0
      %788 = vmatmul.mubr.bf16.gmra.mrb[0].mxu0 %v660
      %v789 = vpop.f32.mrb[0].mxu0
      %v790 = vadd.f32 %v578, %v789
      %v791 = vpop.f32.mrb[0].mxu0
      %v792 = vpop.f32.mrb[0].mxu0
      %v793 = vadd.f32 %v581, %v792
      %v794 = vpop.f32.mrb[0].mxu0
      %795 = vmatprep.mubr.bf16.mxu0 0
      %796 = vmatmul.mubr.bf16.gmra.mrb[0].mxu0 %v663
      %v797 = vpop.f32.mrb[0].mxu0
      %v798 = vadd.f32 %v586, %v797
      %v799 = vpop.f32.mrb[0].mxu0
      %v800 = vpop.f32.mrb[0].mxu0
      %v801 = vadd.f32 %v589, %v800
      %v802 = vpop.f32.mrb[0].mxu0
      %803 = vmatprep.mubr.bf16.mxu0 0
      %804 = vmatmul.mubr.bf16.gmra.mrb[0].mxu0 %v666
      %v805 = vpop.f32.mrb[0].mxu0
      %v806 = vadd.f32 %v594, %v805
      %v807 = vpop.f32.mrb[0].mxu0
      %v808 = vpop.f32.mrb[0].mxu0
      %v809 = vadd.f32 %v597, %v808
      %v810 = vpop.f32.mrb[0].mxu0
      %811 = vmatprep.mubr.bf16.mxu0 0
      %812 = vmatmul.mubr.bf16.gmra.mrb[0].mxu0 %v669
      %v813 = vpop.f32.mrb[0].mxu0
      %v814 = vadd.f32 %v602, %v813
      %v815 = vpop.f32.mrb[0].mxu0
      %v816 = vpop.f32.mrb[0].mxu0
      %v817 = vadd.f32 %v605, %v816
      %v818 = vpop.f32.mrb[0].mxu0
      %819 = vmatprep.mubr.bf16.mxu0 0
      %820 = vmatmul.mubr.bf16.gmra.mrb[0].mxu0 %v672
      %v821 = vpop.f32.mrb[0].mxu0
      %v822 = vadd.f32 %v610, %v821
      %v823 = vpop.f32.mrb[0].mxu0
      %v824 = vpop.f32.mrb[0].mxu0
      %v825 = vadd.f32 %v613, %v824
      %v826 = vpop.f32.mrb[0].mxu0
      %827 = vmatprep.mubr.bf16.mxu0 0
      %828 = vmatmul.mubr.bf16.gmra.mrb[0].mxu0 %v675
      %v829 = vpop.f32.mrb[0].mxu0
      %v830 = vadd.f32 %v618, %v829
      %v831 = vpop.f32.mrb[0].mxu0
      %v832 = vpop.f32.mrb[0].mxu0
      %v833 = vadd.f32 %v621, %v832
      %v834 = vpop.f32.mrb[0].mxu0
      %835 = vmatprep.mubr.bf16.mxu0 0
      %836 = vmatmul.mubr.bf16.gmra.mrb[0].mxu0 %v678
      %v837 = vpop.f32.mrb[0].mxu0
      %v838 = vadd.f32 %v626, %v837
      %v839 = vpop.f32.mrb[0].mxu0
      %v840 = vpop.f32.mrb[0].mxu0
      %v841 = vadd.f32 %v629, %v840
      %v842 = vpop.f32.mrb[0].mxu0
      %843 = vdwg.mxu0
      %s844 = sadd.s32 0, 2
      %s845 = scalar_lea.vmem %s300, %s844
      %v846 = vld [vmem:[%s845] sm:$0xff]
      %v847 = vld [vmem:[%s845 + $0x8] sm:$0xff]
      %v848 = vld [vmem:[%s845 + $0x10] sm:$0xff]
      %v849 = vld [vmem:[%s845 + $0x18] sm:$0xff]
      %v850 = vld [vmem:[%s845 + $0x20] sm:$0xff]
      %v851 = vld [vmem:[%s845 + $0x28] sm:$0xff]
      %v852 = vld [vmem:[%s845 + $0x30] sm:$0xff]
      %v853 = vld [vmem:[%s845 + $0x38] sm:$0xff]
      %v854 = vld [vmem:[%s845 + $0x40] sm:$0xff]
      %v855 = vld [vmem:[%s845 + $0x48] sm:$0xff]
      %v856 = vld [vmem:[%s845 + $0x50] sm:$0xff]
      %v857 = vld [vmem:[%s845 + $0x58] sm:$0xff]
      %v858 = vld [vmem:[%s845 + $0x60] sm:$0xff]
      %v859 = vld [vmem:[%s845 + $0x68] sm:$0xff]
      %v860 = vld [vmem:[%s845 + $0x70] sm:$0xff]
      %v861 = vld [vmem:[%s845 + $0x78] sm:$0xff]
      %v862 = vld [vmem:[%s845 + $0x80] sm:$0xff]
      %v863 = vld [vmem:[%s845 + $0x88] sm:$0xff]
      %v864 = vld [vmem:[%s845 + $0x90] sm:$0xff]
      %v865 = vld [vmem:[%s845 + $0x98] sm:$0xff]
      %v866 = vld [vmem:[%s845 + $0xa0] sm:$0xff]
      %v867 = vld [vmem:[%s845 + $0xa8] sm:$0xff]
      %v868 = vld [vmem:[%s845 + $0xb0] sm:$0xff]
      %v869 = vld [vmem:[%s845 + $0xb8] sm:$0xff]
      %v870 = vld [vmem:[%s845 + $0xc0] sm:$0xff]
      %v871 = vld [vmem:[%s845 + $0xc8] sm:$0xff]
      %v872 = vld [vmem:[%s845 + $0xd0] sm:$0xff]
      %v873 = vld [vmem:[%s845 + $0xd8] sm:$0xff]
      %v874 = vld [vmem:[%s845 + $0xe0] sm:$0xff]
      %v875 = vld [vmem:[%s845 + $0xe8] sm:$0xff]
      %v876 = vld [vmem:[%s845 + $0xf0] sm:$0xff]
      %v877 = vld [vmem:[%s845 + $0xf8] sm:$0xff]
      %v878 = vpack.c.bf16 %v847, %v846
      %v879 = vpack.c.bf16 %v849, %v848
      %v880 = vpack.c.bf16 %v851, %v850
      %v881 = vpack.c.bf16 %v853, %v852
      %v882 = vpack.c.bf16 %v855, %v854
      %v883 = vpack.c.bf16 %v857, %v856
      %v884 = vpack.c.bf16 %v859, %v858
      %v885 = vpack.c.bf16 %v861, %v860
      %v886 = vpack.c.bf16 %v863, %v862
      %v887 = vpack.c.bf16 %v865, %v864
      %v888 = vpack.c.bf16 %v867, %v866
      %v889 = vpack.c.bf16 %v869, %v868
      %v890 = vpack.c.bf16 %v871, %v870
      %v891 = vpack.c.bf16 %v873, %v872
      %v892 = vpack.c.bf16 %v875, %v874
      %v893 = vpack.c.bf16 %v877, %v876
      %s894 = scalar_lea.vmem %s1, 4
      %v895 = vld [vmem:[%s894] sm:$0x3]
      %v897 = vsel %vm307, %v878, 0
      %v900 = vsel %vm307, %v879, 0
      %v903 = vsel %vm307, %v880, 0
      %v906 = vsel %vm307, %v881, 0
      %v909 = vsel %vm307, %v882, 0
      %v912 = vsel %vm307, %v883, 0
      %v915 = vsel %vm307, %v884, 0
      %v918 = vsel %vm307, %v885, 0
      %v921 = vsel %vm307, %v886, 0
      %v924 = vsel %vm307, %v887, 0
      %v927 = vsel %vm307, %v888, 0
      %v930 = vsel %vm307, %v889, 0
      %v933 = vsel %vm307, %v890, 0
      %v936 = vsel %vm307, %v891, 0
      %v939 = vsel %vm307, %v892, 0
      %v942 = vsel %vm307, %v893, 0
      %v945 = vsel %vm467, %v895, 0
      %947 = vmatprep.subr.bf16.mxu0 0
      %948 = vmatpush1.bf16.msra.mxu0 %v945
      %949 = vmatprep.subr.bf16.mxu0 0
      %950 = vmatpush1.bf16.msra.mxu0 0
      %951 = vmatprep.subr.bf16.mxu0 0
      %952 = vmatpush1.bf16.msra.mxu0 0
      %953 = vmatprep.subr.bf16.mxu0 0
      %954 = vmatpush1.bf16.msra.mxu0 0
      %955 = vmatprep.subr.bf16.mxu0 0
      %956 = vmatpush1.bf16.msra.mxu0 0
      %957 = vmatprep.subr.bf16.mxu0 0
      %958 = vmatpush1.bf16.msra.mxu0 0
      %959 = vmatprep.subr.bf16.mxu0 0
      %960 = vmatpush1.bf16.msra.mxu0 0
      %961 = vmatprep.subr.bf16.mxu0 0
      %962 = vmatpush1.bf16.msra.mxu0 0
      %963 = vmatprep.subr.bf16.mxu0 0
      %964 = vmatpush1.bf16.msra.mxu0 0
      %965 = vmatprep.subr.bf16.mxu0 0
      %966 = vmatpush1.bf16.msra.mxu0 0
      %967 = vmatprep.subr.bf16.mxu0 0
      %968 = vmatpush1.bf16.msra.mxu0 0
      %969 = vmatprep.subr.bf16.mxu0 0
      %970 = vmatpush1.bf16.msra.mxu0 0
      %971 = vmatprep.subr.bf16.mxu0 0
      %972 = vmatpush1.bf16.msra.mxu0 0
      %973 = vmatprep.subr.bf16.mxu0 0
      %974 = vmatpush1.bf16.msra.mxu0 0
      %975 = vmatprep.subr.bf16.mxu0 0
      %976 = vmatpush1.bf16.msra.mxu0 0
      %977 = vmatprep.subr.bf16.mxu0 0
      %978 = vmatpush1.bf16.msra.mxu0 0
      %979 = vmatprep.mubr.bf16.mxu0 0
      %980 = vmatmul.mubr.bf16.gmra.mrb[0].mxu0 %v897
      %v981 = vpop.f32.mrb[0].mxu0
      %v982 = vadd.f32 0.0, %v981
      %v983 = vpop.f32.mrb[0].mxu0
      %v984 = vpop.f32.mrb[0].mxu0
      %v985 = vadd.f32 0.0, %v984
      %v986 = vpop.f32.mrb[0].mxu0
      %987 = vmatprep.mubr.bf16.mxu0 0
      %988 = vmatmul.mubr.bf16.gmra.mrb[0].mxu0 %v900
      %v989 = vpop.f32.mrb[0].mxu0
      %v990 = vadd.f32 0.0, %v989
      %v991 = vpop.f32.mrb[0].mxu0
      %v992 = vpop.f32.mrb[0].mxu0
      %v993 = vadd.f32 0.0, %v992
      %v994 = vpop.f32.mrb[0].mxu0
      %995 = vmatprep.mubr.bf16.mxu0 0
      %996 = vmatmul.mubr.bf16.gmra.mrb[0].mxu0 %v903
      %v997 = vpop.f32.mrb[0].mxu0
      %v998 = vadd.f32 0.0, %v997
      %v999 = vpop.f32.mrb[0].mxu0
      %v1000 = vpop.f32.mrb[0].mxu0
      %v1001 = vadd.f32 0.0, %v1000
      %v1002 = vpop.f32.mrb[0].mxu0
      %1003 = vmatprep.mubr.bf16.mxu0 0
      %1004 = vmatmul.mubr.bf16.gmra.mrb[0].mxu0 %v906
      %v1005 = vpop.f32.mrb[0].mxu0
      %v1006 = vadd.f32 0.0, %v1005
      %v1007 = vpop.f32.mrb[0].mxu0
      %v1008 = vpop.f32.mrb[0].mxu0
      %v1009 = vadd.f32 0.0, %v1008
      %v1010 = vpop.f32.mrb[0].mxu0
      %1011 = vmatprep.mubr.bf16.mxu0 0
      %1012 = vmatmul.mubr.bf16.gmra.mrb[0].mxu0 %v909
      %v1013 = vpop.f32.mrb[0].mxu0
      %v1014 = vadd.f32 0.0, %v1013
      %v1015 = vpop.f32.mrb[0].mxu0
      %v1016 = vpop.f32.mrb[0].mxu0
      %v1017 = vadd.f32 0.0, %v1016
      %v1018 = vpop.f32.mrb[0].mxu0
      %1019 = vmatprep.mubr.bf16.mxu0 0
      %1020 = vmatmul.mubr.bf16.gmra.mrb[0].mxu0 %v912
      %v1021 = vpop.f32.mrb[0].mxu0
      %v1022 = vadd.f32 0.0, %v1021
      %v1023 = vpop.f32.mrb[0].mxu0
      %v1024 = vpop.f32.mrb[0].mxu0
      %v1025 = vadd.f32 0.0, %v1024
      %v1026 = vpop.f32.mrb[0].mxu0
      %1027 = vmatprep.mubr.bf16.mxu0 0
      %1028 = vmatmul.mubr.bf16.gmra.mrb[0].mxu0 %v915
      %v1029 = vpop.f32.mrb[0].mxu0
      %v1030 = vadd.f32 0.0, %v1029
      %v1031 = vpop.f32.mrb[0].mxu0
      %v1032 = vpop.f32.mrb[0].mxu0
      %v1033 = vadd.f32 0.0, %v1032
      %v1034 = vpop.f32.mrb[0].mxu0
      %1035 = vmatprep.mubr.bf16.mxu0 0
      %1036 = vmatmul.mubr.bf16.gmra.mrb[0].mxu0 %v918
      %v1037 = vpop.f32.mrb[0].mxu0
      %v1038 = vadd.f32 0.0, %v1037
      %v1039 = vpop.f32.mrb[0].mxu0
      %v1040 = vpop.f32.mrb[0].mxu0
      %v1041 = vadd.f32 0.0, %v1040
      %v1042 = vpop.f32.mrb[0].mxu0
      %1043 = vmatprep.mubr.bf16.mxu0 0
      %1044 = vmatmul.mubr.bf16.gmra.mrb[0].mxu0 %v921
      %v1045 = vpop.f32.mrb[0].mxu0
      %v1046 = vadd.f32 0.0, %v1045
      %v1047 = vpop.f32.mrb[0].mxu0
      %v1048 = vpop.f32.mrb[0].mxu0
      %v1049 = vadd.f32 0.0, %v1048
      %v1050 = vpop.f32.mrb[0].mxu0
      %1051 = vmatprep.mubr.bf16.mxu0 0
      %1052 = vmatmul.mubr.bf16.gmra.mrb[0].mxu0 %v924
      %v1053 = vpop.f32.mrb[0].mxu0
      %v1054 = vadd.f32 0.0, %v1053
      %v1055 = vpop.f32.mrb[0].mxu0
      %v1056 = vpop.f32.mrb[0].mxu0
      %v1057 = vadd.f32 0.0, %v1056
      %v1058 = vpop.f32.mrb[0].mxu0
      %1059 = vmatprep.mubr.bf16.mxu0 0
      %1060 = vmatmul.mubr.bf16.gmra.mrb[0].mxu0 %v927
      %v1061 = vpop.f32.mrb[0].mxu0
      %v1062 = vadd.f32 0.0, %v1061
      %v1063 = vpop.f32.mrb[0].mxu0
      %v1064 = vpop.f32.mrb[0].mxu0
      %v1065 = vadd.f32 0.0, %v1064
      %v1066 = vpop.f32.mrb[0].mxu0
      %1067 = vmatprep.mubr.bf16.mxu0 0
      %1068 = vmatmul.mubr.bf16.gmra.mrb[0].mxu0 %v930
      %v1069 = vpop.f32.mrb[0].mxu0
      %v1070 = vadd.f32 0.0, %v1069
      %v1071 = vpop.f32.mrb[0].mxu0
      %v1072 = vpop.f32.mrb[0].mxu0
      %v1073 = vadd.f32 0.0, %v1072
      %v1074 = vpop.f32.mrb[0].mxu0
      %1075 = vmatprep.mubr.bf16.mxu0 0
      %1076 = vmatmul.mubr.bf16.gmra.mrb[0].mxu0 %v933
      %v1077 = vpop.f32.mrb[0].mxu0
      %v1078 = vadd.f32 0.0, %v1077
      %v1079 = vpop.f32.mrb[0].mxu0
      %v1080 = vpop.f32.mrb[0].mxu0
      %v1081 = vadd.f32 0.0, %v1080
      %v1082 = vpop.f32.mrb[0].mxu0
      %1083 = vmatprep.mubr.bf16.mxu0 0
      %1084 = vmatmul.mubr.bf16.gmra.mrb[0].mxu0 %v936
      %v1085 = vpop.f32.mrb[0].mxu0
      %v1086 = vadd.f32 0.0, %v1085
      %v1087 = vpop.f32.mrb[0].mxu0
      %v1088 = vpop.f32.mrb[0].mxu0
      %v1089 = vadd.f32 0.0, %v1088
      %v1090 = vpop.f32.mrb[0].mxu0
      %1091 = vmatprep.mubr.bf16.mxu0 0
      %1092 = vmatmul.mubr.bf16.gmra.mrb[0].mxu0 %v939
      %v1093 = vpop.f32.mrb[0].mxu0
      %v1094 = vadd.f32 0.0, %v1093
      %v1095 = vpop.f32.mrb[0].mxu0
      %v1096 = vpop.f32.mrb[0].mxu0
      %v1097 = vadd.f32 0.0, %v1096
      %v1098 = vpop.f32.mrb[0].mxu0
      %1099 = vmatprep.mubr.bf16.mxu0 0
      %1100 = vmatmul.mubr.bf16.gmra.mrb[0].mxu0 %v942
      %v1101 = vpop.f32.mrb[0].mxu0
      %v1102 = vadd.f32 0.0, %v1101
      %v1103 = vpop.f32.mrb[0].mxu0
      %v1104 = vpop.f32.mrb[0].mxu0
      %v1105 = vadd.f32 0.0, %v1104
      %v1106 = vpop.f32.mrb[0].mxu0
      %1107 = vdwg.mxu0
      %v1108 = vadd.f32 %v718, %v982
      %v1109 = vadd.f32 %v721, %v985
      %v1110 = vadd.f32 %v726, %v990
      %v1111 = vadd.f32 %v729, %v993
      %v1112 = vadd.f32 %v734, %v998
      %v1113 = vadd.f32 %v737, %v1001
      %v1114 = vadd.f32 %v742, %v1006
      %v1115 = vadd.f32 %v745, %v1009
      %v1116 = vadd.f32 %v750, %v1014
      %v1117 = vadd.f32 %v753, %v1017
      %v1118 = vadd.f32 %v758, %v1022
      %v1119 = vadd.f32 %v761, %v1025
      %v1120 = vadd.f32 %v766, %v1030
      %v1121 = vadd.f32 %v769, %v1033
      %v1122 = vadd.f32 %v774, %v1038
      %v1123 = vadd.f32 %v777, %v1041
      %v1124 = vadd.f32 %v782, %v1046
      %v1125 = vadd.f32 %v785, %v1049
      %v1126 = vadd.f32 %v790, %v1054
      %v1127 = vadd.f32 %v793, %v1057
      %v1128 = vadd.f32 %v798, %v1062
      %v1129 = vadd.f32 %v801, %v1065
      %v1130 = vadd.f32 %v806, %v1070
      %v1131 = vadd.f32 %v809, %v1073
      %v1132 = vadd.f32 %v814, %v1078
      %v1133 = vadd.f32 %v817, %v1081
      %v1134 = vadd.f32 %v822, %v1086
      %v1135 = vadd.f32 %v825, %v1089
      %v1136 = vadd.f32 %v830, %v1094
      %v1137 = vadd.f32 %v833, %v1097
      %v1138 = vadd.f32 %v838, %v1102
      %v1139 = vadd.f32 %v841, %v1105
      %s1140 = sadd.s32 0, 18
      %s1141 = scalar_lea.vmem %s300, %s1140
      %v1142 = vld [vmem:[%s1141] sm:$0xff]
      %v1143 = vld [vmem:[%s1141 + $0x8] sm:$0xff]
      %v1144 = vld [vmem:[%s1141 + $0x10] sm:$0xff]
      %v1145 = vld [vmem:[%s1141 + $0x18] sm:$0xff]
      %v1146 = vld [vmem:[%s1141 + $0x20] sm:$0xff]
      %v1147 = vld [vmem:[%s1141 + $0x28] sm:$0xff]
      %v1148 = vld [vmem:[%s1141 + $0x30] sm:$0xff]
      %v1149 = vld [vmem:[%s1141 + $0x38] sm:$0xff]
      %v1150 = vld [vmem:[%s1141 + $0x40] sm:$0xff]
      %v1151 = vld [vmem:[%s1141 + $0x48] sm:$0xff]
      %v1152 = vld [vmem:[%s1141 + $0x50] sm:$0xff]
      %v1153 = vld [vmem:[%s1141 + $0x58] sm:$0xff]
      %v1154 = vld [vmem:[%s1141 + $0x60] sm:$0xff]
      %v1155 = vld [vmem:[%s1141 + $0x68] sm:$0xff]
      %v1156 = vld [vmem:[%s1141 + $0x70] sm:$0xff]
      %v1157 = vld [vmem:[%s1141 + $0x78] sm:$0xff]
      %v1158 = vld [vmem:[%s1141 + $0x80] sm:$0xff]
      %v1159 = vld [vmem:[%s1141 + $0x88] sm:$0xff]
      %v1160 = vld [vmem:[%s1141 + $0x90] sm:$0xff]
      %v1161 = vld [vmem:[%s1141 + $0x98] sm:$0xff]
      %v1162 = vld [vmem:[%s1141 + $0xa0] sm:$0xff]
      %v1163 = vld [vmem:[%s1141 + $0xa8] sm:$0xff]
      %v1164 = vld [vmem:[%s1141 + $0xb0] sm:$0xff]
      %v1165 = vld [vmem:[%s1141 + $0xb8] sm:$0xff]
      %v1166 = vld [vmem:[%s1141 + $0xc0] sm:$0xff]
      %v1167 = vld [vmem:[%s1141 + $0xc8] sm:$0xff]
      %v1168 = vld [vmem:[%s1141 + $0xd0] sm:$0xff]
      %v1169 = vld [vmem:[%s1141 + $0xd8] sm:$0xff]
      %v1170 = vld [vmem:[%s1141 + $0xe0] sm:$0xff]
      %v1171 = vld [vmem:[%s1141 + $0xe8] sm:$0xff]
      %v1172 = vld [vmem:[%s1141 + $0xf0] sm:$0xff]
      %v1173 = vld [vmem:[%s1141 + $0xf8] sm:$0xff]
      %v1174 = vpack.c.bf16 %v1143, %v1142
      %v1175 = vpack.c.bf16 %v1145, %v1144
      %v1176 = vpack.c.bf16 %v1147, %v1146
      %v1177 = vpack.c.bf16 %v1149, %v1148
      %v1178 = vpack.c.bf16 %v1151, %v1150
      %v1179 = vpack.c.bf16 %v1153, %v1152
      %v1180 = vpack.c.bf16 %v1155, %v1154
      %v1181 = vpack.c.bf16 %v1157, %v1156
      %v1182 = vpack.c.bf16 %v1159, %v1158
      %v1183 = vpack.c.bf16 %v1161, %v1160
      %v1184 = vpack.c.bf16 %v1163, %v1162
      %v1185 = vpack.c.bf16 %v1165, %v1164
      %v1186 = vpack.c.bf16 %v1167, %v1166
      %v1187 = vpack.c.bf16 %v1169, %v1168
      %v1188 = vpack.c.bf16 %v1171, %v1170
      %v1189 = vpack.c.bf16 %v1173, %v1172
      %s1190 = scalar_lea.vmem %s1, 6
      %v1191 = vld [vmem:[%s1190] sm:$0x3]
      %v1193 = vsel %vm307, %v1174, 0
      %v1196 = vsel %vm307, %v1175, 0
      %v1199 = vsel %vm307, %v1176, 0
      %v1202 = vsel %vm307, %v1177, 0
      %v1205 = vsel %vm307, %v1178, 0
      %v1208 = vsel %vm307, %v1179, 0
      %v1211 = vsel %vm307, %v1180, 0
      %v1214 = vsel %vm307, %v1181, 0
      %v1217 = vsel %vm307, %v1182, 0
      %v1220 = vsel %vm307, %v1183, 0
      %v1223 = vsel %vm307, %v1184, 0
      %v1226 = vsel %vm307, %v1185, 0
      %v1229 = vsel %vm307, %v1186, 0
      %v1232 = vsel %vm307, %v1187, 0
      %v1235 = vsel %vm307, %v1188, 0
      %v1238 = vsel %vm307, %v1189, 0
      %v1241 = vsel %vm467, %v1191, 0
      %1243 = vmatprep.subr.bf16.mxu0 0
      %1244 = vmatpush1.bf16.msra.mxu0 %v1241
      %1245 = vmatprep.subr.bf16.mxu0 0
      %1246 = vmatpush1.bf16.msra.mxu0 0
      %1247 = vmatprep.subr.bf16.mxu0 0
      %1248 = vmatpush1.bf16.msra.mxu0 0
      %1249 = vmatprep.subr.bf16.mxu0 0
      %1250 = vmatpush1.bf16.msra.mxu0 0
      %1251 = vmatprep.subr.bf16.mxu0 0
      %1252 = vmatpush1.bf16.msra.mxu0 0
      %1253 = vmatprep.subr.bf16.mxu0 0
      %1254 = vmatpush1.bf16.msra.mxu0 0
      %1255 = vmatprep.subr.bf16.mxu0 0
      %1256 = vmatpush1.bf16.msra.mxu0 0
      %1257 = vmatprep.subr.bf16.mxu0 0
      %1258 = vmatpush1.bf16.msra.mxu0 0
      %1259 = vmatprep.subr.bf16.mxu0 0
      %1260 = vmatpush1.bf16.msra.mxu0 0
      %1261 = vmatprep.subr.bf16.mxu0 0
      %1262 = vmatpush1.bf16.msra.mxu0 0
      %1263 = vmatprep.subr.bf16.mxu0 0
      %1264 = vmatpush1.bf16.msra.mxu0 0
      %1265 = vmatprep.subr.bf16.mxu0 0
      %1266 = vmatpush1.bf16.msra.mxu0 0
      %1267 = vmatprep.subr.bf16.mxu0 0
      %1268 = vmatpush1.bf16.msra.mxu0 0
      %1269 = vmatprep.subr.bf16.mxu0 0
      %1270 = vmatpush1.bf16.msra.mxu0 0
      %1271 = vmatprep.subr.bf16.mxu0 0
      %1272 = vmatpush1.bf16.msra.mxu0 0
      %1273 = vmatprep.subr.bf16.mxu0 0
      %1274 = vmatpush1.bf16.msra.mxu0 0
      %1275 = vmatprep.mubr.bf16.mxu0 0
      %1276 = vmatmul.mubr.bf16.gmra.mrb[0].mxu0 %v1193
      %v1277 = vpop.f32.mrb[0].mxu0
      %v1278 = vadd.f32 0.0, %v1277
      %v1279 = vpop.f32.mrb[0].mxu0
      %v1280 = vpop.f32.mrb[0].mxu0
      %v1281 = vadd.f32 0.0, %v1280
      %v1282 = vpop.f32.mrb[0].mxu0
      %1283 = vmatprep.mubr.bf16.mxu0 0
      %1284 = vmatmul.mubr.bf16.gmra.mrb[0].mxu0 %v1196
      %v1285 = vpop.f32.mrb[0].mxu0
      %v1286 = vadd.f32 0.0, %v1285
      %v1287 = vpop.f32.mrb[0].mxu0
      %v1288 = vpop.f32.mrb[0].mxu0
      %v1289 = vadd.f32 0.0, %v1288
      %v1290 = vpop.f32.mrb[0].mxu0
      %1291 = vmatprep.mubr.bf16.mxu0 0
      %1292 = vmatmul.mubr.bf16.gmra.mrb[0].mxu0 %v1199
      %v1293 = vpop.f32.mrb[0].mxu0
      %v1294 = vadd.f32 0.0, %v1293
      %v1295 = vpop.f32.mrb[0].mxu0
      %v1296 = vpop.f32.mrb[0].mxu0
      %v1297 = vadd.f32 0.0, %v1296
      %v1298 = vpop.f32.mrb[0].mxu0
      %1299 = vmatprep.mubr.bf16.mxu0 0
      %1300 = vmatmul.mubr.bf16.gmra.mrb[0].mxu0 %v1202
      %v1301 = vpop.f32.mrb[0].mxu0
      %v1302 = vadd.f32 0.0, %v1301
      %v1303 = vpop.f32.mrb[0].mxu0
      %v1304 = vpop.f32.mrb[0].mxu0
      %v1305 = vadd.f32 0.0, %v1304
      %v1306 = vpop.f32.mrb[0].mxu0
      %1307 = vmatprep.mubr.bf16.mxu0 0
      %1308 = vmatmul.mubr.bf16.gmra.mrb[0].mxu0 %v1205
      %v1309 = vpop.f32.mrb[0].mxu0
      %v1310 = vadd.f32 0.0, %v1309
      %v1311 = vpop.f32.mrb[0].mxu0
      %v1312 = vpop.f32.mrb[0].mxu0
      %v1313 = vadd.f32 0.0, %v1312
      %v1314 = vpop.f32.mrb[0].mxu0
      %1315 = vmatprep.mubr.bf16.mxu0 0
      %1316 = vmatmul.mubr.bf16.gmra.mrb[0].mxu0 %v1208
      %v1317 = vpop.f32.mrb[0].mxu0
      %v1318 = vadd.f32 0.0, %v1317
      %v1319 = vpop.f32.mrb[0].mxu0
      %v1320 = vpop.f32.mrb[0].mxu0
      %v1321 = vadd.f32 0.0, %v1320
      %v1322 = vpop.f32.mrb[0].mxu0
      %1323 = vmatprep.mubr.bf16.mxu0 0
      %1324 = vmatmul.mubr.bf16.gmra.mrb[0].mxu0 %v1211
      %v1325 = vpop.f32.mrb[0].mxu0
      %v1326 = vadd.f32 0.0, %v1325
      %v1327 = vpop.f32.mrb[0].mxu0
      %v1328 = vpop.f32.mrb[0].mxu0
      %v1329 = vadd.f32 0.0, %v1328
      %v1330 = vpop.f32.mrb[0].mxu0
      %1331 = vmatprep.mubr.bf16.mxu0 0
      %1332 = vmatmul.mubr.bf16.gmra.mrb[0].mxu0 %v1214
      %v1333 = vpop.f32.mrb[0].mxu0
      %v1334 = vadd.f32 0.0, %v1333
      %v1335 = vpop.f32.mrb[0].mxu0
      %v1336 = vpop.f32.mrb[0].mxu0
      %v1337 = vadd.f32 0.0, %v1336
      %v1338 = vpop.f32.mrb[0].mxu0
      %1339 = vmatprep.mubr.bf16.mxu0 0
      %1340 = vmatmul.mubr.bf16.gmra.mrb[0].mxu0 %v1217
      %v1341 = vpop.f32.mrb[0].mxu0
      %v1342 = vadd.f32 0.0, %v1341
      %v1343 = vpop.f32.mrb[0].mxu0
      %v1344 = vpop.f32.mrb[0].mxu0
      %v1345 = vadd.f32 0.0, %v1344
      %v1346 = vpop.f32.mrb[0].mxu0
      %1347 = vmatprep.mubr.bf16.mxu0 0
      %1348 = vmatmul.mubr.bf16.gmra.mrb[0].mxu0 %v1220
      %v1349 = vpop.f32.mrb[0].mxu0
      %v1350 = vadd.f32 0.0, %v1349
      %v1351 = vpop.f32.mrb[0].mxu0
      %v1352 = vpop.f32.mrb[0].mxu0
      %v1353 = vadd.f32 0.0, %v1352
      %v1354 = vpop.f32.mrb[0].mxu0
      %1355 = vmatprep.mubr.bf16.mxu0 0
      %1356 = vmatmul.mubr.bf16.gmra.mrb[0].mxu0 %v1223
      %v1357 = vpop.f32.mrb[0].mxu0
      %v1358 = vadd.f32 0.0, %v1357
      %v1359 = vpop.f32.mrb[0].mxu0
      %v1360 = vpop.f32.mrb[0].mxu0
      %v1361 = vadd.f32 0.0, %v1360
      %v1362 = vpop.f32.mrb[0].mxu0
      %1363 = vmatprep.mubr.bf16.mxu0 0
      %1364 = vmatmul.mubr.bf16.gmra.mrb[0].mxu0 %v1226
      %v1365 = vpop.f32.mrb[0].mxu0
      %v1366 = vadd.f32 0.0, %v1365
      %v1367 = vpop.f32.mrb[0].mxu0
      %v1368 = vpop.f32.mrb[0].mxu0
      %v1369 = vadd.f32 0.0, %v1368
      %v1370 = vpop.f32.mrb[0].mxu0
      %1371 = vmatprep.mubr.bf16.mxu0 0
      %1372 = vmatmul.mubr.bf16.gmra.mrb[0].mxu0 %v1229
      %v1373 = vpop.f32.mrb[0].mxu0
      %v1374 = vadd.f32 0.0, %v1373
      %v1375 = vpop.f32.mrb[0].mxu0
      %v1376 = vpop.f32.mrb[0].mxu0
      %v1377 = vadd.f32 0.0, %v1376
      %v1378 = vpop.f32.mrb[0].mxu0
      %1379 = vmatprep.mubr.bf16.mxu0 0
      %1380 = vmatmul.mubr.bf16.gmra.mrb[0].mxu0 %v1232
      %v1381 = vpop.f32.mrb[0].mxu0
      %v1382 = vadd.f32 0.0, %v1381
      %v1383 = vpop.f32.mrb[0].mxu0
      %v1384 = vpop.f32.mrb[0].mxu0
      %v1385 = vadd.f32 0.0, %v1384
      %v1386 = vpop.f32.mrb[0].mxu0
      %1387 = vmatprep.mubr.bf16.mxu0 0
      %1388 = vmatmul.mubr.bf16.gmra.mrb[0].mxu0 %v1235
      %v1389 = vpop.f32.mrb[0].mxu0
      %v1390 = vadd.f32 0.0, %v1389
      %v1391 = vpop.f32.mrb[0].mxu0
      %v1392 = vpop.f32.mrb[0].mxu0
      %v1393 = vadd.f32 0.0, %v1392
      %v1394 = vpop.f32.mrb[0].mxu0
      %1395 = vmatprep.mubr.bf16.mxu0 0
      %1396 = vmatmul.mubr.bf16.gmra.mrb[0].mxu0 %v1238
      %v1397 = vpop.f32.mrb[0].mxu0
      %v1398 = vadd.f32 0.0, %v1397
      %v1399 = vpop.f32.mrb[0].mxu0
      %v1400 = vpop.f32.mrb[0].mxu0
      %v1401 = vadd.f32 0.0, %v1400
      %v1402 = vpop.f32.mrb[0].mxu0
      %1403 = vdwg.mxu0
      %v1404 = vadd.f32 %v1108, %v1278
      %v1405 = vadd.f32 %v1109, %v1281
      %v1406 = vadd.f32 %v1110, %v1286
      %v1407 = vadd.f32 %v1111, %v1289
      %v1408 = vadd.f32 %v1112, %v1294
      %v1409 = vadd.f32 %v1113, %v1297
      %v1410 = vadd.f32 %v1114, %v1302
      %v1411 = vadd.f32 %v1115, %v1305
      %v1412 = vadd.f32 %v1116, %v1310
      %v1413 = vadd.f32 %v1117, %v1313
      %v1414 = vadd.f32 %v1118, %v1318
      %v1415 = vadd.f32 %v1119, %v1321
      %v1416 = vadd.f32 %v1120, %v1326
      %v1417 = vadd.f32 %v1121, %v1329
      %v1418 = vadd.f32 %v1122, %v1334
      %v1419 = vadd.f32 %v1123, %v1337
      %v1420 = vadd.f32 %v1124, %v1342
      %v1421 = vadd.f32 %v1125, %v1345
      %v1422 = vadd.f32 %v1126, %v1350
      %v1423 = vadd.f32 %v1127, %v1353
      %v1424 = vadd.f32 %v1128, %v1358
      %v1425 = vadd.f32 %v1129, %v1361
      %v1426 = vadd.f32 %v1130, %v1366
      %v1427 = vadd.f32 %v1131, %v1369
      %v1428 = vadd.f32 %v1132, %v1374
      %v1429 = vadd.f32 %v1133, %v1377
      %v1430 = vadd.f32 %v1134, %v1382
      %v1431 = vadd.f32 %v1135, %v1385
      %v1432 = vadd.f32 %v1136, %v1390
      %v1433 = vadd.f32 %v1137, %v1393
      %v1434 = vadd.f32 %v1138, %v1398
      %v1435 = vadd.f32 %v1139, %v1401
      %s1436 = sadd.s32 0, 19
      %s1437 = scalar_lea.vmem %s300, %s1436
      %v1438 = vld [vmem:[%s1437] sm:$0xff]
      %v1439 = vld [vmem:[%s1437 + $0x8] sm:$0xff]
      %v1440 = vld [vmem:[%s1437 + $0x10] sm:$0xff]
      %v1441 = vld [vmem:[%s1437 + $0x18] sm:$0xff]
      %v1442 = vld [vmem:[%s1437 + $0x20] sm:$0xff]
      %v1443 = vld [vmem:[%s1437 + $0x28] sm:$0xff]
      %v1444 = vld [vmem:[%s1437 + $0x30] sm:$0xff]
      %v1445 = vld [vmem:[%s1437 + $0x38] sm:$0xff]
      %v1446 = vld [vmem:[%s1437 + $0x40] sm:$0xff]
      %v1447 = vld [vmem:[%s1437 + $0x48] sm:$0xff]
      %v1448 = vld [vmem:[%s1437 + $0x50] sm:$0xff]
      %v1449 = vld [vmem:[%s1437 + $0x58] sm:$0xff]
      %v1450 = vld [vmem:[%s1437 + $0x60] sm:$0xff]
      %v1451 = vld [vmem:[%s1437 + $0x68] sm:$0xff]
      %v1452 = vld [vmem:[%s1437 + $0x70] sm:$0xff]
      %v1453 = vld [vmem:[%s1437 + $0x78] sm:$0xff]
      %v1454 = vld [vmem:[%s1437 + $0x80] sm:$0xff]
      %v1455 = vld [vmem:[%s1437 + $0x88] sm:$0xff]
      %v1456 = vld [vmem:[%s1437 + $0x90] sm:$0xff]
      %v1457 = vld [vmem:[%s1437 + $0x98] sm:$0xff]
      %v1458 = vld [vmem:[%s1437 + $0xa0] sm:$0xff]
      %v1459 = vld [vmem:[%s1437 + $0xa8] sm:$0xff]
      %v1460 = vld [vmem:[%s1437 + $0xb0] sm:$0xff]
      %v1461 = vld [vmem:[%s1437 + $0xb8] sm:$0xff]
      %v1462 = vld [vmem:[%s1437 + $0xc0] sm:$0xff]
      %v1463 = vld [vmem:[%s1437 + $0xc8] sm:$0xff]
      %v1464 = vld [vmem:[%s1437 + $0xd0] sm:$0xff]
      %v1465 = vld [vmem:[%s1437 + $0xd8] sm:$0xff]
      %v1466 = vld [vmem:[%s1437 + $0xe0] sm:$0xff]
      %v1467 = vld [vmem:[%s1437 + $0xe8] sm:$0xff]
      %v1468 = vld [vmem:[%s1437 + $0xf0] sm:$0xff]
      %v1469 = vld [vmem:[%s1437 + $0xf8] sm:$0xff]
      %v1470 = vpack.c.bf16 %v1439, %v1438
      %v1471 = vpack.c.bf16 %v1441, %v1440
      %v1472 = vpack.c.bf16 %v1443, %v1442
      %v1473 = vpack.c.bf16 %v1445, %v1444
      %v1474 = vpack.c.bf16 %v1447, %v1446
      %v1475 = vpack.c.bf16 %v1449, %v1448
      %v1476 = vpack.c.bf16 %v1451, %v1450
      %v1477 = vpack.c.bf16 %v1453, %v1452
      %v1478 = vpack.c.bf16 %v1455, %v1454
      %v1479 = vpack.c.bf16 %v1457, %v1456
      %v1480 = vpack.c.bf16 %v1459, %v1458
      %v1481 = vpack.c.bf16 %v1461, %v1460
      %v1482 = vpack.c.bf16 %v1463, %v1462
      %v1483 = vpack.c.bf16 %v1465, %v1464
      %v1484 = vpack.c.bf16 %v1467, %v1466
      %v1485 = vpack.c.bf16 %v1469, %v1468
      %s1486 = scalar_lea.vmem %s1, 8
      %v1487 = vld [vmem:[%s1486] sm:$0x3]
      %v1489 = vsel %vm307, %v1470, 0
      %v1492 = vsel %vm307, %v1471, 0
      %v1495 = vsel %vm307, %v1472, 0
      %v1498 = vsel %vm307, %v1473, 0
      %v1501 = vsel %vm307, %v1474, 0
      %v1504 = vsel %vm307, %v1475, 0
      %v1507 = vsel %vm307, %v1476, 0
      %v1510 = vsel %vm307, %v1477, 0
      %v1513 = vsel %vm307, %v1478, 0
      %v1516 = vsel %vm307, %v1479, 0
      %v1519 = vsel %vm307, %v1480, 0
      %v1522 = vsel %vm307, %v1481, 0
      %v1525 = vsel %vm307, %v1482, 0
      %v1528 = vsel %vm307, %v1483, 0
      %v1531 = vsel %vm307, %v1484, 0
      %v1534 = vsel %vm307, %v1485, 0
      %v1537 = vsel %vm467, %v1487, 0
      %1539 = vmatprep.subr.bf16.mxu0 0
      %1540 = vmatpush1.bf16.msra.mxu0 %v1537
      %1541 = vmatprep.subr.bf16.mxu0 0
      %1542 = vmatpush1.bf16.msra.mxu0 0
      %1543 = vmatprep.subr.bf16.mxu0 0
      %1544 = vmatpush1.bf16.msra.mxu0 0
      %1545 = vmatprep.subr.bf16.mxu0 0
      %1546 = vmatpush1.bf16.msra.mxu0 0
      %1547 = vmatprep.subr.bf16.mxu0 0
      %1548 = vmatpush1.bf16.msra.mxu0 0
      %1549 = vmatprep.subr.bf16.mxu0 0
      %1550 = vmatpush1.bf16.msra.mxu0 0
      %1551 = vmatprep.subr.bf16.mxu0 0
      %1552 = vmatpush1.bf16.msra.mxu0 0
      %1553 = vmatprep.subr.bf16.mxu0 0
      %1554 = vmatpush1.bf16.msra.mxu0 0
      %1555 = vmatprep.subr.bf16.mxu0 0
      %1556 = vmatpush1.bf16.msra.mxu0 0
      %1557 = vmatprep.subr.bf16.mxu0 0
      %1558 = vmatpush1.bf16.msra.mxu0 0
      %1559 = vmatprep.subr.bf16.mxu0 0
      %1560 = vmatpush1.bf16.msra.mxu0 0
      %1561 = vmatprep.subr.bf16.mxu0 0
      %1562 = vmatpush1.bf16.msra.mxu0 0
      %1563 = vmatprep.subr.bf16.mxu0 0
      %1564 = vmatpush1.bf16.msra.mxu0 0
      %1565 = vmatprep.subr.bf16.mxu0 0
      %1566 = vmatpush1.bf16.msra.mxu0 0
      %1567 = vmatprep.subr.bf16.mxu0 0
      %1568 = vmatpush1.bf16.msra.mxu0 0
      %1569 = vmatprep.subr.bf16.mxu0 0
      %1570 = vmatpush1.bf16.msra.mxu0 0
      %1571 = vmatprep.mubr.bf16.mxu0 0
      %1572 = vmatmul.mubr.bf16.gmra.mrb[0].mxu0 %v1489
      %v1573 = vpop.f32.mrb[0].mxu0
      %v1574 = vadd.f32 0.0, %v1573
      %v1575 = vpop.f32.mrb[0].mxu0
      %v1576 = vpop.f32.mrb[0].mxu0
      %v1577 = vadd.f32 0.0, %v1576
      %v1578 = vpop.f32.mrb[0].mxu0
      %1579 = vmatprep.mubr.bf16.mxu0 0
      %1580 = vmatmul.mubr.bf16.gmra.mrb[0].mxu0 %v1492
      %v1581 = vpop.f32.mrb[0].mxu0
      %v1582 = vadd.f32 0.0, %v1581
      %v1583 = vpop.f32.mrb[0].mxu0
      %v1584 = vpop.f32.mrb[0].mxu0
      %v1585 = vadd.f32 0.0, %v1584
      %v1586 = vpop.f32.mrb[0].mxu0
      %1587 = vmatprep.mubr.bf16.mxu0 0
      %1588 = vmatmul.mubr.bf16.gmra.mrb[0].mxu0 %v1495
      %v1589 = vpop.f32.mrb[0].mxu0
      %v1590 = vadd.f32 0.0, %v1589
      %v1591 = vpop.f32.mrb[0].mxu0
      %v1592 = vpop.f32.mrb[0].mxu0
      %v1593 = vadd.f32 0.0, %v1592
      %v1594 = vpop.f32.mrb[0].mxu0
      %1595 = vmatprep.mubr.bf16.mxu0 0
      %1596 = vmatmul.mubr.bf16.gmra.mrb[0].mxu0 %v1498
      %v1597 = vpop.f32.mrb[0].mxu0
      %v1598 = vadd.f32 0.0, %v1597
      %v1599 = vpop.f32.mrb[0].mxu0
      %v1600 = vpop.f32.mrb[0].mxu0
      %v1601 = vadd.f32 0.0, %v1600
      %v1602 = vpop.f32.mrb[0].mxu0
      %1603 = vmatprep.mubr.bf16.mxu0 0
      %1604 = vmatmul.mubr.bf16.gmra.mrb[0].mxu0 %v1501
      %v1605 = vpop.f32.mrb[0].mxu0
      %v1606 = vadd.f32 0.0, %v1605
      %v1607 = vpop.f32.mrb[0].mxu0
      %v1608 = vpop.f32.mrb[0].mxu0
      %v1609 = vadd.f32 0.0, %v1608
      %v1610 = vpop.f32.mrb[0].mxu0
      %1611 = vmatprep.mubr.bf16.mxu0 0
      %1612 = vmatmul.mubr.bf16.gmra.mrb[0].mxu0 %v1504
      %v1613 = vpop.f32.mrb[0].mxu0
      %v1614 = vadd.f32 0.0, %v1613
      %v1615 = vpop.f32.mrb[0].mxu0
      %v1616 = vpop.f32.mrb[0].mxu0
      %v1617 = vadd.f32 0.0, %v1616
      %v1618 = vpop.f32.mrb[0].mxu0
      %1619 = vmatprep.mubr.bf16.mxu0 0
      %1620 = vmatmul.mubr.bf16.gmra.mrb[0].mxu0 %v1507
      %v1621 = vpop.f32.mrb[0].mxu0
      %v1622 = vadd.f32 0.0, %v1621
      %v1623 = vpop.f32.mrb[0].mxu0
      %v1624 = vpop.f32.mrb[0].mxu0
      %v1625 = vadd.f32 0.0, %v1624
      %v1626 = vpop.f32.mrb[0].mxu0
      %1627 = vmatprep.mubr.bf16.mxu0 0
      %1628 = vmatmul.mubr.bf16.gmra.mrb[0].mxu0 %v1510
      %v1629 = vpop.f32.mrb[0].mxu0
      %v1630 = vadd.f32 0.0, %v1629
      %v1631 = vpop.f32.mrb[0].mxu0
      %v1632 = vpop.f32.mrb[0].mxu0
      %v1633 = vadd.f32 0.0, %v1632
      %v1634 = vpop.f32.mrb[0].mxu0
      %1635 = vmatprep.mubr.bf16.mxu0 0
      %1636 = vmatmul.mubr.bf16.gmra.mrb[0].mxu0 %v1513
      %v1637 = vpop.f32.mrb[0].mxu0
      %v1638 = vadd.f32 0.0, %v1637
      %v1639 = vpop.f32.mrb[0].mxu0
      %v1640 = vpop.f32.mrb[0].mxu0
      %v1641 = vadd.f32 0.0, %v1640
      %v1642 = vpop.f32.mrb[0].mxu0
      %1643 = vmatprep.mubr.bf16.mxu0 0
      %1644 = vmatmul.mubr.bf16.gmra.mrb[0].mxu0 %v1516
      %v1645 = vpop.f32.mrb[0].mxu0
      %v1646 = vadd.f32 0.0, %v1645
      %v1647 = vpop.f32.mrb[0].mxu0
      %v1648 = vpop.f32.mrb[0].mxu0
      %v1649 = vadd.f32 0.0, %v1648
      %v1650 = vpop.f32.mrb[0].mxu0
      %1651 = vmatprep.mubr.bf16.mxu0 0
      %1652 = vmatmul.mubr.bf16.gmra.mrb[0].mxu0 %v1519
      %v1653 = vpop.f32.mrb[0].mxu0
      %v1654 = vadd.f32 0.0, %v1653
      %v1655 = vpop.f32.mrb[0].mxu0
      %v1656 = vpop.f32.mrb[0].mxu0
      %v1657 = vadd.f32 0.0, %v1656
      %v1658 = vpop.f32.mrb[0].mxu0
      %1659 = vmatprep.mubr.bf16.mxu0 0
      %1660 = vmatmul.mubr.bf16.gmra.mrb[0].mxu0 %v1522
      %v1661 = vpop.f32.mrb[0].mxu0
      %v1662 = vadd.f32 0.0, %v1661
      %v1663 = vpop.f32.mrb[0].mxu0
      %v1664 = vpop.f32.mrb[0].mxu0
      %v1665 = vadd.f32 0.0, %v1664
      %v1666 = vpop.f32.mrb[0].mxu0
      %1667 = vmatprep.mubr.bf16.mxu0 0
      %1668 = vmatmul.mubr.bf16.gmra.mrb[0].mxu0 %v1525
      %v1669 = vpop.f32.mrb[0].mxu0
      %v1670 = vadd.f32 0.0, %v1669
      %v1671 = vpop.f32.mrb[0].mxu0
      %v1672 = vpop.f32.mrb[0].mxu0
      %v1673 = vadd.f32 0.0, %v1672
      %v1674 = vpop.f32.mrb[0].mxu0
      %1675 = vmatprep.mubr.bf16.mxu0 0
      %1676 = vmatmul.mubr.bf16.gmra.mrb[0].mxu0 %v1528
      %v1677 = vpop.f32.mrb[0].mxu0
      %v1678 = vadd.f32 0.0, %v1677
      %v1679 = vpop.f32.mrb[0].mxu0
      %v1680 = vpop.f32.mrb[0].mxu0
      %v1681 = vadd.f32 0.0, %v1680
      %v1682 = vpop.f32.mrb[0].mxu0
      %1683 = vmatprep.mubr.bf16.mxu0 0
      %1684 = vmatmul.mubr.bf16.gmra.mrb[0].mxu0 %v1531
      %v1685 = vpop.f32.mrb[0].mxu0
      %v1686 = vadd.f32 0.0, %v1685
      %v1687 = vpop.f32.mrb[0].mxu0
      %v1688 = vpop.f32.mrb[0].mxu0
      %v1689 = vadd.f32 0.0, %v1688
      %v1690 = vpop.f32.mrb[0].mxu0
      %1691 = vmatprep.mubr.bf16.mxu0 0
      %1692 = vmatmul.mubr.bf16.gmra.mrb[0].mxu0 %v1534
      %v1693 = vpop.f32.mrb[0].mxu0
      %v1694 = vadd.f32 0.0, %v1693
      %v1695 = vpop.f32.mrb[0].mxu0
      %v1696 = vpop.f32.mrb[0].mxu0
      %v1697 = vadd.f32 0.0, %v1696
      %v1698 = vpop.f32.mrb[0].mxu0
      %1699 = vdwg.mxu0
      %v1700 = vadd.f32 %v1404, %v1574
      %v1701 = vadd.f32 %v1405, %v1577
      %v1702 = vadd.f32 %v1406, %v1582
      %v1703 = vadd.f32 %v1407, %v1585
      %v1704 = vadd.f32 %v1408, %v1590
      %v1705 = vadd.f32 %v1409, %v1593
      %v1706 = vadd.f32 %v1410, %v1598
      %v1707 = vadd.f32 %v1411, %v1601
      %v1708 = vadd.f32 %v1412, %v1606
      %v1709 = vadd.f32 %v1413, %v1609
      %v1710 = vadd.f32 %v1414, %v1614
      %v1711 = vadd.f32 %v1415, %v1617
      %v1712 = vadd.f32 %v1416, %v1622
      %v1713 = vadd.f32 %v1417, %v1625
      %v1714 = vadd.f32 %v1418, %v1630
      %v1715 = vadd.f32 %v1419, %v1633
      %v1716 = vadd.f32 %v1420, %v1638
      %v1717 = vadd.f32 %v1421, %v1641
      %v1718 = vadd.f32 %v1422, %v1646
      %v1719 = vadd.f32 %v1423, %v1649
      %v1720 = vadd.f32 %v1424, %v1654
      %v1721 = vadd.f32 %v1425, %v1657
      %v1722 = vadd.f32 %v1426, %v1662
      %v1723 = vadd.f32 %v1427, %v1665
      %v1724 = vadd.f32 %v1428, %v1670
      %v1725 = vadd.f32 %v1429, %v1673
      %v1726 = vadd.f32 %v1430, %v1678
      %v1727 = vadd.f32 %v1431, %v1681
      %v1728 = vadd.f32 %v1432, %v1686
      %v1729 = vadd.f32 %v1433, %v1689
      %v1730 = vadd.f32 %v1434, %v1694
      %v1731 = vadd.f32 %v1435, %v1697
      %s1732 = sadd.s32 0, 20
      %s1733 = scalar_lea.vmem %s300, %s1732
      %v1734 = vld [vmem:[%s1733] sm:$0xff]
      %v1735 = vld [vmem:[%s1733 + $0x8] sm:$0xff]
      %v1736 = vld [vmem:[%s1733 + $0x10] sm:$0xff]
      %v1737 = vld [vmem:[%s1733 + $0x18] sm:$0xff]
      %v1738 = vld [vmem:[%s1733 + $0x20] sm:$0xff]
      %v1739 = vld [vmem:[%s1733 + $0x28] sm:$0xff]
      %v1740 = vld [vmem:[%s1733 + $0x30] sm:$0xff]
      %v1741 = vld [vmem:[%s1733 + $0x38] sm:$0xff]
      %v1742 = vld [vmem:[%s1733 + $0x40] sm:$0xff]
      %v1743 = vld [vmem:[%s1733 + $0x48] sm:$0xff]
      %v1744 = vld [vmem:[%s1733 + $0x50] sm:$0xff]
      %v1745 = vld [vmem:[%s1733 + $0x58] sm:$0xff]
      %v1746 = vld [vmem:[%s1733 + $0x60] sm:$0xff]
      %v1747 = vld [vmem:[%s1733 + $0x68] sm:$0xff]
      %v1748 = vld [vmem:[%s1733 + $0x70] sm:$0xff]
      %v1749 = vld [vmem:[%s1733 + $0x78] sm:$0xff]
      %v1750 = vld [vmem:[%s1733 + $0x80] sm:$0xff]
      %v1751 = vld [vmem:[%s1733 + $0x88] sm:$0xff]
      %v1752 = vld [vmem:[%s1733 + $0x90] sm:$0xff]
      %v1753 = vld [vmem:[%s1733 + $0x98] sm:$0xff]
      %v1754 = vld [vmem:[%s1733 + $0xa0] sm:$0xff]
      %v1755 = vld [vmem:[%s1733 + $0xa8] sm:$0xff]
      %v1756 = vld [vmem:[%s1733 + $0xb0] sm:$0xff]
      %v1757 = vld [vmem:[%s1733 + $0xb8] sm:$0xff]
      %v1758 = vld [vmem:[%s1733 + $0xc0] sm:$0xff]
      %v1759 = vld [vmem:[%s1733 + $0xc8] sm:$0xff]
      %v1760 = vld [vmem:[%s1733 + $0xd0] sm:$0xff]
      %v1761 = vld [vmem:[%s1733 + $0xd8] sm:$0xff]
      %v1762 = vld [vmem:[%s1733 + $0xe0] sm:$0xff]
      %v1763 = vld [vmem:[%s1733 + $0xe8] sm:$0xff]
      %v1764 = vld [vmem:[%s1733 + $0xf0] sm:$0xff]
      %v1765 = vld [vmem:[%s1733 + $0xf8] sm:$0xff]
      %v1766 = vpack.c.bf16 %v1735, %v1734
      %v1767 = vpack.c.bf16 %v1737, %v1736
      %v1768 = vpack.c.bf16 %v1739, %v1738
      %v1769 = vpack.c.bf16 %v1741, %v1740
      %v1770 = vpack.c.bf16 %v1743, %v1742
      %v1771 = vpack.c.bf16 %v1745, %v1744
      %v1772 = vpack.c.bf16 %v1747, %v1746
      %v1773 = vpack.c.bf16 %v1749, %v1748
      %v1774 = vpack.c.bf16 %v1751, %v1750
      %v1775 = vpack.c.bf16 %v1753, %v1752
      %v1776 = vpack.c.bf16 %v1755, %v1754
      %v1777 = vpack.c.bf16 %v1757, %v1756
      %v1778 = vpack.c.bf16 %v1759, %v1758
      %v1779 = vpack.c.bf16 %v1761, %v1760
      %v1780 = vpack.c.bf16 %v1763, %v1762
      %v1781 = vpack.c.bf16 %v1765, %v1764
      %s1782 = scalar_lea.vmem %s1, 10
      %v1783 = vld [vmem:[%s1782] sm:$0x3]
      %v1785 = vsel %vm307, %v1766, 0
      %v1788 = vsel %vm307, %v1767, 0
      %v1791 = vsel %vm307, %v1768, 0
      %v1794 = vsel %vm307, %v1769, 0
      %v1797 = vsel %vm307, %v1770, 0
      %v1800 = vsel %vm307, %v1771, 0
      %v1803 = vsel %vm307, %v1772, 0
      %v1806 = vsel %vm307, %v1773, 0
      %v1809 = vsel %vm307, %v1774, 0
      %v1812 = vsel %vm307, %v1775, 0
      %v1815 = vsel %vm307, %v1776, 0
      %v1818 = vsel %vm307, %v1777, 0
      %v1821 = vsel %vm307, %v1778, 0
      %v1824 = vsel %vm307, %v1779, 0
      %v1827 = vsel %vm307, %v1780, 0
      %v1830 = vsel %vm307, %v1781, 0
      %v1833 = vsel %vm467, %v1783, 0
      %1835 = vmatprep.subr.bf16.mxu0 0
      %1836 = vmatpush1.bf16.msra.mxu0 %v1833
      %1837 = vmatprep.subr.bf16.mxu0 0
      %1838 = vmatpush1.bf16.msra.mxu0 0
      %1839 = vmatprep.subr.bf16.mxu0 0
      %1840 = vmatpush1.bf16.msra.mxu0 0
      %1841 = vmatprep.subr.bf16.mxu0 0
      %1842 = vmatpush1.bf16.msra.mxu0 0
      %1843 = vmatprep.subr.bf16.mxu0 0
      %1844 = vmatpush1.bf16.msra.mxu0 0
      %1845 = vmatprep.subr.bf16.mxu0 0
      %1846 = vmatpush1.bf16.msra.mxu0 0
      %1847 = vmatprep.subr.bf16.mxu0 0
      %1848 = vmatpush1.bf16.msra.mxu0 0
      %1849 = vmatprep.subr.bf16.mxu0 0
      %1850 = vmatpush1.bf16.msra.mxu0 0
      %1851 = vmatprep.subr.bf16.mxu0 0
      %1852 = vmatpush1.bf16.msra.mxu0 0
      %1853 = vmatprep.subr.bf16.mxu0 0
      %1854 = vmatpush1.bf16.msra.mxu0 0
      %1855 = vmatprep.subr.bf16.mxu0 0
      %1856 = vmatpush1.bf16.msra.mxu0 0
      %1857 = vmatprep.subr.bf16.mxu0 0
      %1858 = vmatpush1.bf16.msra.mxu0 0
      %1859 = vmatprep.subr.bf16.mxu0 0
      %1860 = vmatpush1.bf16.msra.mxu0 0
      %1861 = vmatprep.subr.bf16.mxu0 0
      %1862 = vmatpush1.bf16.msra.mxu0 0
      %1863 = vmatprep.subr.bf16.mxu0 0
      %1864 = vmatpush1.bf16.msra.mxu0 0
      %1865 = vmatprep.subr.bf16.mxu0 0
      %1866 = vmatpush1.bf16.msra.mxu0 0
      %1867 = vmatprep.mubr.bf16.mxu0 0
      %1868 = vmatmul.mubr.bf16.gmra.mrb[0].mxu0 %v1785
      %v1869 = vpop.f32.mrb[0].mxu0
      %v1870 = vadd.f32 0.0, %v1869
      %v1871 = vpop.f32.mrb[0].mxu0
      %v1872 = vpop.f32.mrb[0].mxu0
      %v1873 = vadd.f32 0.0, %v1872
      %v1874 = vpop.f32.mrb[0].mxu0
      %1875 = vmatprep.mubr.bf16.mxu0 0
      %1876 = vmatmul.mubr.bf16.gmra.mrb[0].mxu0 %v1788
      %v1877 = vpop.f32.mrb[0].mxu0
      %v1878 = vadd.f32 0.0, %v1877
      %v1879 = vpop.f32.mrb[0].mxu0
      %v1880 = vpop.f32.mrb[0].mxu0
      %v1881 = vadd.f32 0.0, %v1880
      %v1882 = vpop.f32.mrb[0].mxu0
      %1883 = vmatprep.mubr.bf16.mxu0 0
      %1884 = vmatmul.mubr.bf16.gmra.mrb[0].mxu0 %v1791
      %v1885 = vpop.f32.mrb[0].mxu0
      %v1886 = vadd.f32 0.0, %v1885
      %v1887 = vpop.f32.mrb[0].mxu0
      %v1888 = vpop.f32.mrb[0].mxu0
      %v1889 = vadd.f32 0.0, %v1888
      %v1890 = vpop.f32.mrb[0].mxu0
      %1891 = vmatprep.mubr.bf16.mxu0 0
      %1892 = vmatmul.mubr.bf16.gmra.mrb[0].mxu0 %v1794
      %v1893 = vpop.f32.mrb[0].mxu0
      %v1894 = vadd.f32 0.0, %v1893
      %v1895 = vpop.f32.mrb[0].mxu0
      %v1896 = vpop.f32.mrb[0].mxu0
      %v1897 = vadd.f32 0.0, %v1896
      %v1898 = vpop.f32.mrb[0].mxu0
      %1899 = vmatprep.mubr.bf16.mxu0 0
      %1900 = vmatmul.mubr.bf16.gmra.mrb[0].mxu0 %v1797
      %v1901 = vpop.f32.mrb[0].mxu0
      %v1902 = vadd.f32 0.0, %v1901
      %v1903 = vpop.f32.mrb[0].mxu0
      %v1904 = vpop.f32.mrb[0].mxu0
      %v1905 = vadd.f32 0.0, %v1904
      %v1906 = vpop.f32.mrb[0].mxu0
      %1907 = vmatprep.mubr.bf16.mxu0 0
      %1908 = vmatmul.mubr.bf16.gmra.mrb[0].mxu0 %v1800
      %v1909 = vpop.f32.mrb[0].mxu0
      %v1910 = vadd.f32 0.0, %v1909
      %v1911 = vpop.f32.mrb[0].mxu0
      %v1912 = vpop.f32.mrb[0].mxu0
      %v1913 = vadd.f32 0.0, %v1912
      %v1914 = vpop.f32.mrb[0].mxu0
      %1915 = vmatprep.mubr.bf16.mxu0 0
      %1916 = vmatmul.mubr.bf16.gmra.mrb[0].mxu0 %v1803
      %v1917 = vpop.f32.mrb[0].mxu0
      %v1918 = vadd.f32 0.0, %v1917
      %v1919 = vpop.f32.mrb[0].mxu0
      %v1920 = vpop.f32.mrb[0].mxu0
      %v1921 = vadd.f32 0.0, %v1920
      %v1922 = vpop.f32.mrb[0].mxu0
      %1923 = vmatprep.mubr.bf16.mxu0 0
      %1924 = vmatmul.mubr.bf16.gmra.mrb[0].mxu0 %v1806
      %v1925 = vpop.f32.mrb[0].mxu0
      %v1926 = vadd.f32 0.0, %v1925
      %v1927 = vpop.f32.mrb[0].mxu0
      %v1928 = vpop.f32.mrb[0].mxu0
      %v1929 = vadd.f32 0.0, %v1928
      %v1930 = vpop.f32.mrb[0].mxu0
      %1931 = vmatprep.mubr.bf16.mxu0 0
      %1932 = vmatmul.mubr.bf16.gmra.mrb[0].mxu0 %v1809
      %v1933 = vpop.f32.mrb[0].mxu0
      %v1934 = vadd.f32 0.0, %v1933
      %v1935 = vpop.f32.mrb[0].mxu0
      %v1936 = vpop.f32.mrb[0].mxu0
      %v1937 = vadd.f32 0.0, %v1936
      %v1938 = vpop.f32.mrb[0].mxu0
      %1939 = vmatprep.mubr.bf16.mxu0 0
      %1940 = vmatmul.mubr.bf16.gmra.mrb[0].mxu0 %v1812
      %v1941 = vpop.f32.mrb[0].mxu0
      %v1942 = vadd.f32 0.0, %v1941
      %v1943 = vpop.f32.mrb[0].mxu0
      %v1944 = vpop.f32.mrb[0].mxu0
      %v1945 = vadd.f32 0.0, %v1944
      %v1946 = vpop.f32.mrb[0].mxu0
      %1947 = vmatprep.mubr.bf16.mxu0 0
      %1948 = vmatmul.mubr.bf16.gmra.mrb[0].mxu0 %v1815
      %v1949 = vpop.f32.mrb[0].mxu0
      %v1950 = vadd.f32 0.0, %v1949
      %v1951 = vpop.f32.mrb[0].mxu0
      %v1952 = vpop.f32.mrb[0].mxu0
      %v1953 = vadd.f32 0.0, %v1952
      %v1954 = vpop.f32.mrb[0].mxu0
      %1955 = vmatprep.mubr.bf16.mxu0 0
      %1956 = vmatmul.mubr.bf16.gmra.mrb[0].mxu0 %v1818
      %v1957 = vpop.f32.mrb[0].mxu0
      %v1958 = vadd.f32 0.0, %v1957
      %v1959 = vpop.f32.mrb[0].mxu0
      %v1960 = vpop.f32.mrb[0].mxu0
      %v1961 = vadd.f32 0.0, %v1960
      %v1962 = vpop.f32.mrb[0].mxu0
      %1963 = vmatprep.mubr.bf16.mxu0 0
      %1964 = vmatmul.mubr.bf16.gmra.mrb[0].mxu0 %v1821
      %v1965 = vpop.f32.mrb[0].mxu0
      %v1966 = vadd.f32 0.0, %v1965
      %v1967 = vpop.f32.mrb[0].mxu0
      %v1968 = vpop.f32.mrb[0].mxu0
      %v1969 = vadd.f32 0.0, %v1968
      %v1970 = vpop.f32.mrb[0].mxu0
      %1971 = vmatprep.mubr.bf16.mxu0 0
      %1972 = vmatmul.mubr.bf16.gmra.mrb[0].mxu0 %v1824
      %v1973 = vpop.f32.mrb[0].mxu0
      %v1974 = vadd.f32 0.0, %v1973
      %v1975 = vpop.f32.mrb[0].mxu0
      %v1976 = vpop.f32.mrb[0].mxu0
      %v1977 = vadd.f32 0.0, %v1976
      %v1978 = vpop.f32.mrb[0].mxu0
      %1979 = vmatprep.mubr.bf16.mxu0 0
      %1980 = vmatmul.mubr.bf16.gmra.mrb[0].mxu0 %v1827
      %v1981 = vpop.f32.mrb[0].mxu0
      %v1982 = vadd.f32 0.0, %v1981
      %v1983 = vpop.f32.mrb[0].mxu0
      %v1984 = vpop.f32.mrb[0].mxu0
      %v1985 = vadd.f32 0.0, %v1984
      %v1986 = vpop.f32.mrb[0].mxu0
      %1987 = vmatprep.mubr.bf16.mxu0 0
      %1988 = vmatmul.mubr.bf16.gmra.mrb[0].mxu0 %v1830
      %v1989 = vpop.f32.mrb[0].mxu0
      %v1990 = vadd.f32 0.0, %v1989
      %v1991 = vpop.f32.mrb[0].mxu0
      %v1992 = vpop.f32.mrb[0].mxu0
      %v1993 = vadd.f32 0.0, %v1992
      %v1994 = vpop.f32.mrb[0].mxu0
      %1995 = vdwg.mxu0
      %v1996 = vadd.f32 %v1700, %v1870
      %v1997 = vadd.f32 %v1701, %v1873
      %v1998 = vadd.f32 %v1702, %v1878
      %v1999 = vadd.f32 %v1703, %v1881
      %v2000 = vadd.f32 %v1704, %v1886
      %v2001 = vadd.f32 %v1705, %v1889
      %v2002 = vadd.f32 %v1706, %v1894
      %v2003 = vadd.f32 %v1707, %v1897
      %v2004 = vadd.f32 %v1708, %v1902
      %v2005 = vadd.f32 %v1709, %v1905
      %v2006 = vadd.f32 %v1710, %v1910
      %v2007 = vadd.f32 %v1711, %v1913
      %v2008 = vadd.f32 %v1712, %v1918
      %v2009 = vadd.f32 %v1713, %v1921
      %v2010 = vadd.f32 %v1714, %v1926
      %v2011 = vadd.f32 %v1715, %v1929
      %v2012 = vadd.f32 %v1716, %v1934
      %v2013 = vadd.f32 %v1717, %v1937
      %v2014 = vadd.f32 %v1718, %v1942
      %v2015 = vadd.f32 %v1719, %v1945
      %v2016 = vadd.f32 %v1720, %v1950
      %v2017 = vadd.f32 %v1721, %v1953
      %v2018 = vadd.f32 %v1722, %v1958
      %v2019 = vadd.f32 %v1723, %v1961
      %v2020 = vadd.f32 %v1724, %v1966
      %v2021 = vadd.f32 %v1725, %v1969
      %v2022 = vadd.f32 %v1726, %v1974
      %v2023 = vadd.f32 %v1727, %v1977
      %v2024 = vadd.f32 %v1728, %v1982
      %v2025 = vadd.f32 %v1729, %v1985
      %v2026 = vadd.f32 %v1730, %v1990
      %v2027 = vadd.f32 %v1731, %v1993
      %s2028 = sadd.s32 0, 36
      %s2029 = scalar_lea.vmem %s300, %s2028
      %v2030 = vld [vmem:[%s2029] sm:$0xff]
      %v2031 = vld [vmem:[%s2029 + $0x8] sm:$0xff]
      %v2032 = vld [vmem:[%s2029 + $0x10] sm:$0xff]
      %v2033 = vld [vmem:[%s2029 + $0x18] sm:$0xff]
      %v2034 = vld [vmem:[%s2029 + $0x20] sm:$0xff]
      %v2035 = vld [vmem:[%s2029 + $0x28] sm:$0xff]
      %v2036 = vld [vmem:[%s2029 + $0x30] sm:$0xff]
      %v2037 = vld [vmem:[%s2029 + $0x38] sm:$0xff]
      %v2038 = vld [vmem:[%s2029 + $0x40] sm:$0xff]
      %v2039 = vld [vmem:[%s2029 + $0x48] sm:$0xff]
      %v2040 = vld [vmem:[%s2029 + $0x50] sm:$0xff]
      %v2041 = vld [vmem:[%s2029 + $0x58] sm:$0xff]
      %v2042 = vld [vmem:[%s2029 + $0x60] sm:$0xff]
      %v2043 = vld [vmem:[%s2029 + $0x68] sm:$0xff]
      %v2044 = vld [vmem:[%s2029 + $0x70] sm:$0xff]
      %v2045 = vld [vmem:[%s2029 + $0x78] sm:$0xff]
      %v2046 = vld [vmem:[%s2029 + $0x80] sm:$0xff]
      %v2047 = vld [vmem:[%s2029 + $0x88] sm:$0xff]
      %v2048 = vld [vmem:[%s2029 + $0x90] sm:$0xff]
      %v2049 = vld [vmem:[%s2029 + $0x98] sm:$0xff]
      %v2050 = vld [vmem:[%s2029 + $0xa0] sm:$0xff]
      %v2051 = vld [vmem:[%s2029 + $0xa8] sm:$0xff]
      %v2052 = vld [vmem:[%s2029 + $0xb0] sm:$0xff]
      %v2053 = vld [vmem:[%s2029 + $0xb8] sm:$0xff]
      %v2054 = vld [vmem:[%s2029 + $0xc0] sm:$0xff]
      %v2055 = vld [vmem:[%s2029 + $0xc8] sm:$0xff]
      %v2056 = vld [vmem:[%s2029 + $0xd0] sm:$0xff]
      %v2057 = vld [vmem:[%s2029 + $0xd8] sm:$0xff]
      %v2058 = vld [vmem:[%s2029 + $0xe0] sm:$0xff]
      %v2059 = vld [vmem:[%s2029 + $0xe8] sm:$0xff]
      %v2060 = vld [vmem:[%s2029 + $0xf0] sm:$0xff]
      %v2061 = vld [vmem:[%s2029 + $0xf8] sm:$0xff]
      %v2062 = vpack.c.bf16 %v2031, %v2030
      %v2063 = vpack.c.bf16 %v2033, %v2032
      %v2064 = vpack.c.bf16 %v2035, %v2034
      %v2065 = vpack.c.bf16 %v2037, %v2036
      %v2066 = vpack.c.bf16 %v2039, %v2038
      %v2067 = vpack.c.bf16 %v2041, %v2040
      %v2068 = vpack.c.bf16 %v2043, %v2042
      %v2069 = vpack.c.bf16 %v2045, %v2044
      %v2070 = vpack.c.bf16 %v2047, %v2046
      %v2071 = vpack.c.bf16 %v2049, %v2048
      %v2072 = vpack.c.bf16 %v2051, %v2050
      %v2073 = vpack.c.bf16 %v2053, %v2052
      %v2074 = vpack.c.bf16 %v2055, %v2054
      %v2075 = vpack.c.bf16 %v2057, %v2056
      %v2076 = vpack.c.bf16 %v2059, %v2058
      %v2077 = vpack.c.bf16 %v2061, %v2060
      %s2078 = scalar_lea.vmem %s1, 12
      %v2079 = vld [vmem:[%s2078] sm:$0x3]
      %v2081 = vsel %vm307, %v2062, 0
      %v2084 = vsel %vm307, %v2063, 0
      %v2087 = vsel %vm307, %v2064, 0
      %v2090 = vsel %vm307, %v2065, 0
      %v2093 = vsel %vm307, %v2066, 0
      %v2096 = vsel %vm307, %v2067, 0
      %v2099 = vsel %vm307, %v2068, 0
      %v2102 = vsel %vm307, %v2069, 0
      %v2105 = vsel %vm307, %v2070, 0
      %v2108 = vsel %vm307, %v2071, 0
      %v2111 = vsel %vm307, %v2072, 0
      %v2114 = vsel %vm307, %v2073, 0
      %v2117 = vsel %vm307, %v2074, 0
      %v2120 = vsel %vm307, %v2075, 0
      %v2123 = vsel %vm307, %v2076, 0
      %v2126 = vsel %vm307, %v2077, 0
      %v2129 = vsel %vm467, %v2079, 0
      %2131 = vmatprep.subr.bf16.mxu0 0
      %2132 = vmatpush1.bf16.msra.mxu0 %v2129
      %2133 = vmatprep.subr.bf16.mxu0 0
      %2134 = vmatpush1.bf16.msra.mxu0 0
      %2135 = vmatprep.subr.bf16.mxu0 0
      %2136 = vmatpush1.bf16.msra.mxu0 0
      %2137 = vmatprep.subr.bf16.mxu0 0
      %2138 = vmatpush1.bf16.msra.mxu0 0
      %2139 = vmatprep.subr.bf16.mxu0 0
      %2140 = vmatpush1.bf16.msra.mxu0 0
      %2141 = vmatprep.subr.bf16.mxu0 0
      %2142 = vmatpush1.bf16.msra.mxu0 0
      %2143 = vmatprep.subr.bf16.mxu0 0
      %2144 = vmatpush1.bf16.msra.mxu0 0
      %2145 = vmatprep.subr.bf16.mxu0 0
      %2146 = vmatpush1.bf16.msra.mxu0 0
      %2147 = vmatprep.subr.bf16.mxu0 0
      %2148 = vmatpush1.bf16.msra.mxu0 0
      %2149 = vmatprep.subr.bf16.mxu0 0
      %2150 = vmatpush1.bf16.msra.mxu0 0
      %2151 = vmatprep.subr.bf16.mxu0 0
      %2152 = vmatpush1.bf16.msra.mxu0 0
      %2153 = vmatprep.subr.bf16.mxu0 0
      %2154 = vmatpush1.bf16.msra.mxu0 0
      %2155 = vmatprep.subr.bf16.mxu0 0
      %2156 = vmatpush1.bf16.msra.mxu0 0
      %2157 = vmatprep.subr.bf16.mxu0 0
      %2158 = vmatpush1.bf16.msra.mxu0 0
      %2159 = vmatprep.subr.bf16.mxu0 0
      %2160 = vmatpush1.bf16.msra.mxu0 0
      %2161 = vmatprep.subr.bf16.mxu0 0
      %2162 = vmatpush1.bf16.msra.mxu0 0
      %2163 = vmatprep.mubr.bf16.mxu0 0
      %2164 = vmatmul.mubr.bf16.gmra.mrb[0].mxu0 %v2081
      %v2165 = vpop.f32.mrb[0].mxu0
      %v2166 = vadd.f32 0.0, %v2165
      %v2167 = vpop.f32.mrb[0].mxu0
      %v2168 = vpop.f32.mrb[0].mxu0
      %v2169 = vadd.f32 0.0, %v2168
      %v2170 = vpop.f32.mrb[0].mxu0
      %2171 = vmatprep.mubr.bf16.mxu0 0
      %2172 = vmatmul.mubr.bf16.gmra.mrb[0].mxu0 %v2084
      %v2173 = vpop.f32.mrb[0].mxu0
      %v2174 = vadd.f32 0.0, %v2173
      %v2175 = vpop.f32.mrb[0].mxu0
      %v2176 = vpop.f32.mrb[0].mxu0
      %v2177 = vadd.f32 0.0, %v2176
      %v2178 = vpop.f32.mrb[0].mxu0
      %2179 = vmatprep.mubr.bf16.mxu0 0
      %2180 = vmatmul.mubr.bf16.gmra.mrb[0].mxu0 %v2087
      %v2181 = vpop.f32.mrb[0].mxu0
      %v2182 = vadd.f32 0.0, %v2181
      %v2183 = vpop.f32.mrb[0].mxu0
      %v2184 = vpop.f32.mrb[0].mxu0
      %v2185 = vadd.f32 0.0, %v2184
      %v2186 = vpop.f32.mrb[0].mxu0
      %2187 = vmatprep.mubr.bf16.mxu0 0
      %2188 = vmatmul.mubr.bf16.gmra.mrb[0].mxu0 %v2090
      %v2189 = vpop.f32.mrb[0].mxu0
      %v2190 = vadd.f32 0.0, %v2189
      %v2191 = vpop.f32.mrb[0].mxu0
      %v2192 = vpop.f32.mrb[0].mxu0
      %v2193 = vadd.f32 0.0, %v2192
      %v2194 = vpop.f32.mrb[0].mxu0
      %2195 = vmatprep.mubr.bf16.mxu0 0
      %2196 = vmatmul.mubr.bf16.gmra.mrb[0].mxu0 %v2093
      %v2197 = vpop.f32.mrb[0].mxu0
      %v2198 = vadd.f32 0.0, %v2197
      %v2199 = vpop.f32.mrb[0].mxu0
      %v2200 = vpop.f32.mrb[0].mxu0
      %v2201 = vadd.f32 0.0, %v2200
      %v2202 = vpop.f32.mrb[0].mxu0
      %2203 = vmatprep.mubr.bf16.mxu0 0
      %2204 = vmatmul.mubr.bf16.gmra.mrb[0].mxu0 %v2096
      %v2205 = vpop.f32.mrb[0].mxu0
      %v2206 = vadd.f32 0.0, %v2205
      %v2207 = vpop.f32.mrb[0].mxu0
      %v2208 = vpop.f32.mrb[0].mxu0
      %v2209 = vadd.f32 0.0, %v2208
      %v2210 = vpop.f32.mrb[0].mxu0
      %2211 = vmatprep.mubr.bf16.mxu0 0
      %2212 = vmatmul.mubr.bf16.gmra.mrb[0].mxu0 %v2099
      %v2213 = vpop.f32.mrb[0].mxu0
      %v2214 = vadd.f32 0.0, %v2213
      %v2215 = vpop.f32.mrb[0].mxu0
      %v2216 = vpop.f32.mrb[0].mxu0
      %v2217 = vadd.f32 0.0, %v2216
      %v2218 = vpop.f32.mrb[0].mxu0
      %2219 = vmatprep.mubr.bf16.mxu0 0
      %2220 = vmatmul.mubr.bf16.gmra.mrb[0].mxu0 %v2102
      %v2221 = vpop.f32.mrb[0].mxu0
      %v2222 = vadd.f32 0.0, %v2221
      %v2223 = vpop.f32.mrb[0].mxu0
      %v2224 = vpop.f32.mrb[0].mxu0
      %v2225 = vadd.f32 0.0, %v2224
      %v2226 = vpop.f32.mrb[0].mxu0
      %2227 = vmatprep.mubr.bf16.mxu0 0
      %2228 = vmatmul.mubr.bf16.gmra.mrb[0].mxu0 %v2105
      %v2229 = vpop.f32.mrb[0].mxu0
      %v2230 = vadd.f32 0.0, %v2229
      %v2231 = vpop.f32.mrb[0].mxu0
      %v2232 = vpop.f32.mrb[0].mxu0
      %v2233 = vadd.f32 0.0, %v2232
      %v2234 = vpop.f32.mrb[0].mxu0
      %2235 = vmatprep.mubr.bf16.mxu0 0
      %2236 = vmatmul.mubr.bf16.gmra.mrb[0].mxu0 %v2108
      %v2237 = vpop.f32.mrb[0].mxu0
      %v2238 = vadd.f32 0.0, %v2237
      %v2239 = vpop.f32.mrb[0].mxu0
      %v2240 = vpop.f32.mrb[0].mxu0
      %v2241 = vadd.f32 0.0, %v2240
      %v2242 = vpop.f32.mrb[0].mxu0
      %2243 = vmatprep.mubr.bf16.mxu0 0
      %2244 = vmatmul.mubr.bf16.gmra.mrb[0].mxu0 %v2111
      %v2245 = vpop.f32.mrb[0].mxu0
      %v2246 = vadd.f32 0.0, %v2245
      %v2247 = vpop.f32.mrb[0].mxu0
      %v2248 = vpop.f32.mrb[0].mxu0
      %v2249 = vadd.f32 0.0, %v2248
      %v2250 = vpop.f32.mrb[0].mxu0
      %2251 = vmatprep.mubr.bf16.mxu0 0
      %2252 = vmatmul.mubr.bf16.gmra.mrb[0].mxu0 %v2114
      %v2253 = vpop.f32.mrb[0].mxu0
      %v2254 = vadd.f32 0.0, %v2253
      %v2255 = vpop.f32.mrb[0].mxu0
      %v2256 = vpop.f32.mrb[0].mxu0
      %v2257 = vadd.f32 0.0, %v2256
      %v2258 = vpop.f32.mrb[0].mxu0
      %2259 = vmatprep.mubr.bf16.mxu0 0
      %2260 = vmatmul.mubr.bf16.gmra.mrb[0].mxu0 %v2117
      %v2261 = vpop.f32.mrb[0].mxu0
      %v2262 = vadd.f32 0.0, %v2261
      %v2263 = vpop.f32.mrb[0].mxu0
      %v2264 = vpop.f32.mrb[0].mxu0
      %v2265 = vadd.f32 0.0, %v2264
      %v2266 = vpop.f32.mrb[0].mxu0
      %2267 = vmatprep.mubr.bf16.mxu0 0
      %2268 = vmatmul.mubr.bf16.gmra.mrb[0].mxu0 %v2120
      %v2269 = vpop.f32.mrb[0].mxu0
      %v2270 = vadd.f32 0.0, %v2269
      %v2271 = vpop.f32.mrb[0].mxu0
      %v2272 = vpop.f32.mrb[0].mxu0
      %v2273 = vadd.f32 0.0, %v2272
      %v2274 = vpop.f32.mrb[0].mxu0
      %2275 = vmatprep.mubr.bf16.mxu0 0
      %2276 = vmatmul.mubr.bf16.gmra.mrb[0].mxu0 %v2123
      %v2277 = vpop.f32.mrb[0].mxu0
      %v2278 = vadd.f32 0.0, %v2277
      %v2279 = vpop.f32.mrb[0].mxu0
      %v2280 = vpop.f32.mrb[0].mxu0
      %v2281 = vadd.f32 0.0, %v2280
      %v2282 = vpop.f32.mrb[0].mxu0
      %2283 = vmatprep.mubr.bf16.mxu0 0
      %2284 = vmatmul.mubr.bf16.gmra.mrb[0].mxu0 %v2126
      %v2285 = vpop.f32.mrb[0].mxu0
      %v2286 = vadd.f32 0.0, %v2285
      %v2287 = vpop.f32.mrb[0].mxu0
      %v2288 = vpop.f32.mrb[0].mxu0
      %v2289 = vadd.f32 0.0, %v2288
      %v2290 = vpop.f32.mrb[0].mxu0
      %2291 = vdwg.mxu0
      %v2292 = vadd.f32 %v1996, %v2166
      %v2293 = vadd.f32 %v1997, %v2169
      %v2294 = vadd.f32 %v1998, %v2174
      %v2295 = vadd.f32 %v1999, %v2177
      %v2296 = vadd.f32 %v2000, %v2182
      %v2297 = vadd.f32 %v2001, %v2185
      %v2298 = vadd.f32 %v2002, %v2190
      %v2299 = vadd.f32 %v2003, %v2193
      %v2300 = vadd.f32 %v2004, %v2198
      %v2301 = vadd.f32 %v2005, %v2201
      %v2302 = vadd.f32 %v2006, %v2206
      %v2303 = vadd.f32 %v2007, %v2209
      %v2304 = vadd.f32 %v2008, %v2214
      %v2305 = vadd.f32 %v2009, %v2217
      %v2306 = vadd.f32 %v2010, %v2222
      %v2307 = vadd.f32 %v2011, %v2225
      %v2308 = vadd.f32 %v2012, %v2230
      %v2309 = vadd.f32 %v2013, %v2233
      %v2310 = vadd.f32 %v2014, %v2238
      %v2311 = vadd.f32 %v2015, %v2241
      %v2312 = vadd.f32 %v2016, %v2246
      %v2313 = vadd.f32 %v2017, %v2249
      %v2314 = vadd.f32 %v2018, %v2254
      %v2315 = vadd.f32 %v2019, %v2257
      %v2316 = vadd.f32 %v2020, %v2262
      %v2317 = vadd.f32 %v2021, %v2265
      %v2318 = vadd.f32 %v2022, %v2270
      %v2319 = vadd.f32 %v2023, %v2273
      %v2320 = vadd.f32 %v2024, %v2278
      %v2321 = vadd.f32 %v2025, %v2281
      %v2322 = vadd.f32 %v2026, %v2286
      %v2323 = vadd.f32 %v2027, %v2289
      %s2324 = sadd.s32 0, 37
      %s2325 = scalar_lea.vmem %s300, %s2324
      %v2326 = vld [vmem:[%s2325] sm:$0xff]
      %v2327 = vld [vmem:[%s2325 + $0x8] sm:$0xff]
      %v2328 = vld [vmem:[%s2325 + $0x10] sm:$0xff]
      %v2329 = vld [vmem:[%s2325 + $0x18] sm:$0xff]
      %v2330 = vld [vmem:[%s2325 + $0x20] sm:$0xff]
      %v2331 = vld [vmem:[%s2325 + $0x28] sm:$0xff]
      %v2332 = vld [vmem:[%s2325 + $0x30] sm:$0xff]
      %v2333 = vld [vmem:[%s2325 + $0x38] sm:$0xff]
      %v2334 = vld [vmem:[%s2325 + $0x40] sm:$0xff]
      %v2335 = vld [vmem:[%s2325 + $0x48] sm:$0xff]
      %v2336 = vld [vmem:[%s2325 + $0x50] sm:$0xff]
      %v2337 = vld [vmem:[%s2325 + $0x58] sm:$0xff]
      %v2338 = vld [vmem:[%s2325 + $0x60] sm:$0xff]
      %v2339 = vld [vmem:[%s2325 + $0x68] sm:$0xff]
      %v2340 = vld [vmem:[%s2325 + $0x70] sm:$0xff]
      %v2341 = vld [vmem:[%s2325 + $0x78] sm:$0xff]
      %v2342 = vld [vmem:[%s2325 + $0x80] sm:$0xff]
      %v2343 = vld [vmem:[%s2325 + $0x88] sm:$0xff]
      %v2344 = vld [vmem:[%s2325 + $0x90] sm:$0xff]
      %v2345 = vld [vmem:[%s2325 + $0x98] sm:$0xff]
      %v2346 = vld [vmem:[%s2325 + $0xa0] sm:$0xff]
      %v2347 = vld [vmem:[%s2325 + $0xa8] sm:$0xff]
      %v2348 = vld [vmem:[%s2325 + $0xb0] sm:$0xff]
      %v2349 = vld [vmem:[%s2325 + $0xb8] sm:$0xff]
      %v2350 = vld [vmem:[%s2325 + $0xc0] sm:$0xff]
      %v2351 = vld [vmem:[%s2325 + $0xc8] sm:$0xff]
      %v2352 = vld [vmem:[%s2325 + $0xd0] sm:$0xff]
      %v2353 = vld [vmem:[%s2325 + $0xd8] sm:$0xff]
      %v2354 = vld [vmem:[%s2325 + $0xe0] sm:$0xff]
      %v2355 = vld [vmem:[%s2325 + $0xe8] sm:$0xff]
      %v2356 = vld [vmem:[%s2325 + $0xf0] sm:$0xff]
      %v2357 = vld [vmem:[%s2325 + $0xf8] sm:$0xff]
      %v2358 = vpack.c.bf16 %v2327, %v2326
      %v2359 = vpack.c.bf16 %v2329, %v2328
      %v2360 = vpack.c.bf16 %v2331, %v2330
      %v2361 = vpack.c.bf16 %v2333, %v2332
      %v2362 = vpack.c.bf16 %v2335, %v2334
      %v2363 = vpack.c.bf16 %v2337, %v2336
      %v2364 = vpack.c.bf16 %v2339, %v2338
      %v2365 = vpack.c.bf16 %v2341, %v2340
      %v2366 = vpack.c.bf16 %v2343, %v2342
      %v2367 = vpack.c.bf16 %v2345, %v2344
      %v2368 = vpack.c.bf16 %v2347, %v2346
      %v2369 = vpack.c.bf16 %v2349, %v2348
      %v2370 = vpack.c.bf16 %v2351, %v2350
      %v2371 = vpack.c.bf16 %v2353, %v2352
      %v2372 = vpack.c.bf16 %v2355, %v2354
      %v2373 = vpack.c.bf16 %v2357, %v2356
      %s2374 = scalar_lea.vmem %s1, 14
      %v2375 = vld [vmem:[%s2374] sm:$0x3]
      %v2377 = vsel %vm307, %v2358, 0
      %v2380 = vsel %vm307, %v2359, 0
      %v2383 = vsel %vm307, %v2360, 0
      %v2386 = vsel %vm307, %v2361, 0
      %v2389 = vsel %vm307, %v2362, 0
      %v2392 = vsel %vm307, %v2363, 0
      %v2395 = vsel %vm307, %v2364, 0
      %v2398 = vsel %vm307, %v2365, 0
      %v2401 = vsel %vm307, %v2366, 0
      %v2404 = vsel %vm307, %v2367, 0
      %v2407 = vsel %vm307, %v2368, 0
      %v2410 = vsel %vm307, %v2369, 0
      %v2413 = vsel %vm307, %v2370, 0
      %v2416 = vsel %vm307, %v2371, 0
      %v2419 = vsel %vm307, %v2372, 0
      %v2422 = vsel %vm307, %v2373, 0
      %v2425 = vsel %vm467, %v2375, 0
      %2427 = vmatprep.subr.bf16.mxu0 0
      %2428 = vmatpush1.bf16.msra.mxu0 %v2425
      %2429 = vmatprep.subr.bf16.mxu0 0
      %2430 = vmatpush1.bf16.msra.mxu0 0
      %2431 = vmatprep.subr.bf16.mxu0 0
      %2432 = vmatpush1.bf16.msra.mxu0 0
      %2433 = vmatprep.subr.bf16.mxu0 0
      %2434 = vmatpush1.bf16.msra.mxu0 0
      %2435 = vmatprep.subr.bf16.mxu0 0
      %2436 = vmatpush1.bf16.msra.mxu0 0
      %2437 = vmatprep.subr.bf16.mxu0 0
      %2438 = vmatpush1.bf16.msra.mxu0 0
      %2439 = vmatprep.subr.bf16.mxu0 0
      %2440 = vmatpush1.bf16.msra.mxu0 0
      %2441 = vmatprep.subr.bf16.mxu0 0
      %2442 = vmatpush1.bf16.msra.mxu0 0
      %2443 = vmatprep.subr.bf16.mxu0 0
      %2444 = vmatpush1.bf16.msra.mxu0 0
      %2445 = vmatprep.subr.bf16.mxu0 0
      %2446 = vmatpush1.bf16.msra.mxu0 0
      %2447 = vmatprep.subr.bf16.mxu0 0
      %2448 = vmatpush1.bf16.msra.mxu0 0
      %2449 = vmatprep.subr.bf16.mxu0 0
      %2450 = vmatpush1.bf16.msra.mxu0 0
      %2451 = vmatprep.subr.bf16.mxu0 0
      %2452 = vmatpush1.bf16.msra.mxu0 0
      %2453 = vmatprep.subr.bf16.mxu0 0
      %2454 = vmatpush1.bf16.msra.mxu0 0
      %2455 = vmatprep.subr.bf16.mxu0 0
      %2456 = vmatpush1.bf16.msra.mxu0 0
      %2457 = vmatprep.subr.bf16.mxu0 0
      %2458 = vmatpush1.bf16.msra.mxu0 0
      %2459 = vmatprep.mubr.bf16.mxu0 0
      %2460 = vmatmul.mubr.bf16.gmra.mrb[0].mxu0 %v2377
      %v2461 = vpop.f32.mrb[0].mxu0
      %v2462 = vadd.f32 0.0, %v2461
      %v2463 = vpop.f32.mrb[0].mxu0
      %v2464 = vpop.f32.mrb[0].mxu0
      %v2465 = vadd.f32 0.0, %v2464
      %v2466 = vpop.f32.mrb[0].mxu0
      %2467 = vmatprep.mubr.bf16.mxu0 0
      %2468 = vmatmul.mubr.bf16.gmra.mrb[0].mxu0 %v2380
      %v2469 = vpop.f32.mrb[0].mxu0
      %v2470 = vadd.f32 0.0, %v2469
      %v2471 = vpop.f32.mrb[0].mxu0
      %v2472 = vpop.f32.mrb[0].mxu0
      %v2473 = vadd.f32 0.0, %v2472
      %v2474 = vpop.f32.mrb[0].mxu0
      %2475 = vmatprep.mubr.bf16.mxu0 0
      %2476 = vmatmul.mubr.bf16.gmra.mrb[0].mxu0 %v2383
      %v2477 = vpop.f32.mrb[0].mxu0
      %v2478 = vadd.f32 0.0, %v2477
      %v2479 = vpop.f32.mrb[0].mxu0
      %v2480 = vpop.f32.mrb[0].mxu0
      %v2481 = vadd.f32 0.0, %v2480
      %v2482 = vpop.f32.mrb[0].mxu0
      %2483 = vmatprep.mubr.bf16.mxu0 0
      %2484 = vmatmul.mubr.bf16.gmra.mrb[0].mxu0 %v2386
      %v2485 = vpop.f32.mrb[0].mxu0
      %v2486 = vadd.f32 0.0, %v2485
      %v2487 = vpop.f32.mrb[0].mxu0
      %v2488 = vpop.f32.mrb[0].mxu0
      %v2489 = vadd.f32 0.0, %v2488
      %v2490 = vpop.f32.mrb[0].mxu0
      %2491 = vmatprep.mubr.bf16.mxu0 0
      %2492 = vmatmul.mubr.bf16.gmra.mrb[0].mxu0 %v2389
      %v2493 = vpop.f32.mrb[0].mxu0
      %v2494 = vadd.f32 0.0, %v2493
      %v2495 = vpop.f32.mrb[0].mxu0
      %v2496 = vpop.f32.mrb[0].mxu0
      %v2497 = vadd.f32 0.0, %v2496
      %v2498 = vpop.f32.mrb[0].mxu0
      %2499 = vmatprep.mubr.bf16.mxu0 0
      %2500 = vmatmul.mubr.bf16.gmra.mrb[0].mxu0 %v2392
      %v2501 = vpop.f32.mrb[0].mxu0
      %v2502 = vadd.f32 0.0, %v2501
      %v2503 = vpop.f32.mrb[0].mxu0
      %v2504 = vpop.f32.mrb[0].mxu0
      %v2505 = vadd.f32 0.0, %v2504
      %v2506 = vpop.f32.mrb[0].mxu0
      %2507 = vmatprep.mubr.bf16.mxu0 0
      %2508 = vmatmul.mubr.bf16.gmra.mrb[0].mxu0 %v2395
      %v2509 = vpop.f32.mrb[0].mxu0
      %v2510 = vadd.f32 0.0, %v2509
      %v2511 = vpop.f32.mrb[0].mxu0
      %v2512 = vpop.f32.mrb[0].mxu0
      %v2513 = vadd.f32 0.0, %v2512
      %v2514 = vpop.f32.mrb[0].mxu0
      %2515 = vmatprep.mubr.bf16.mxu0 0
      %2516 = vmatmul.mubr.bf16.gmra.mrb[0].mxu0 %v2398
      %v2517 = vpop.f32.mrb[0].mxu0
      %v2518 = vadd.f32 0.0, %v2517
      %v2519 = vpop.f32.mrb[0].mxu0
      %v2520 = vpop.f32.mrb[0].mxu0
      %v2521 = vadd.f32 0.0, %v2520
      %v2522 = vpop.f32.mrb[0].mxu0
      %2523 = vmatprep.mubr.bf16.mxu0 0
      %2524 = vmatmul.mubr.bf16.gmra.mrb[0].mxu0 %v2401
      %v2525 = vpop.f32.mrb[0].mxu0
      %v2526 = vadd.f32 0.0, %v2525
      %v2527 = vpop.f32.mrb[0].mxu0
      %v2528 = vpop.f32.mrb[0].mxu0
      %v2529 = vadd.f32 0.0, %v2528
      %v2530 = vpop.f32.mrb[0].mxu0
      %2531 = vmatprep.mubr.bf16.mxu0 0
      %2532 = vmatmul.mubr.bf16.gmra.mrb[0].mxu0 %v2404
      %v2533 = vpop.f32.mrb[0].mxu0
      %v2534 = vadd.f32 0.0, %v2533
      %v2535 = vpop.f32.mrb[0].mxu0
      %v2536 = vpop.f32.mrb[0].mxu0
      %v2537 = vadd.f32 0.0, %v2536
      %v2538 = vpop.f32.mrb[0].mxu0
      %2539 = vmatprep.mubr.bf16.mxu0 0
      %2540 = vmatmul.mubr.bf16.gmra.mrb[0].mxu0 %v2407
      %v2541 = vpop.f32.mrb[0].mxu0
      %v2542 = vadd.f32 0.0, %v2541
      %v2543 = vpop.f32.mrb[0].mxu0
      %v2544 = vpop.f32.mrb[0].mxu0
      %v2545 = vadd.f32 0.0, %v2544
      %v2546 = vpop.f32.mrb[0].mxu0
      %2547 = vmatprep.mubr.bf16.mxu0 0
      %2548 = vmatmul.mubr.bf16.gmra.mrb[0].mxu0 %v2410
      %v2549 = vpop.f32.mrb[0].mxu0
      %v2550 = vadd.f32 0.0, %v2549
      %v2551 = vpop.f32.mrb[0].mxu0
      %v2552 = vpop.f32.mrb[0].mxu0
      %v2553 = vadd.f32 0.0, %v2552
      %v2554 = vpop.f32.mrb[0].mxu0
      %2555 = vmatprep.mubr.bf16.mxu0 0
      %2556 = vmatmul.mubr.bf16.gmra.mrb[0].mxu0 %v2413
      %v2557 = vpop.f32.mrb[0].mxu0
      %v2558 = vadd.f32 0.0, %v2557
      %v2559 = vpop.f32.mrb[0].mxu0
      %v2560 = vpop.f32.mrb[0].mxu0
      %v2561 = vadd.f32 0.0, %v2560
      %v2562 = vpop.f32.mrb[0].mxu0
      %2563 = vmatprep.mubr.bf16.mxu0 0
      %2564 = vmatmul.mubr.bf16.gmra.mrb[0].mxu0 %v2416
      %v2565 = vpop.f32.mrb[0].mxu0
      %v2566 = vadd.f32 0.0, %v2565
      %v2567 = vpop.f32.mrb[0].mxu0
      %v2568 = vpop.f32.mrb[0].mxu0
      %v2569 = vadd.f32 0.0, %v2568
      %v2570 = vpop.f32.mrb[0].mxu0
      %2571 = vmatprep.mubr.bf16.mxu0 0
      %2572 = vmatmul.mubr.bf16.gmra.mrb[0].mxu0 %v2419
      %v2573 = vpop.f32.mrb[0].mxu0
      %v2574 = vadd.f32 0.0, %v2573
      %v2575 = vpop.f32.mrb[0].mxu0
      %v2576 = vpop.f32.mrb[0].mxu0
      %v2577 = vadd.f32 0.0, %v2576
      %v2578 = vpop.f32.mrb[0].mxu0
      %2579 = vmatprep.mubr.bf16.mxu0 0
      %2580 = vmatmul.mubr.bf16.gmra.mrb[0].mxu0 %v2422
      %v2581 = vpop.f32.mrb[0].mxu0
      %v2582 = vadd.f32 0.0, %v2581
      %v2583 = vpop.f32.mrb[0].mxu0
      %v2584 = vpop.f32.mrb[0].mxu0
      %v2585 = vadd.f32 0.0, %v2584
      %v2586 = vpop.f32.mrb[0].mxu0
      %2587 = vdwg.mxu0
      %v2588 = vadd.f32 %v2292, %v2462
      %v2589 = vadd.f32 %v2293, %v2465
      %v2590 = vadd.f32 %v2294, %v2470
      %v2591 = vadd.f32 %v2295, %v2473
      %v2592 = vadd.f32 %v2296, %v2478
      %v2593 = vadd.f32 %v2297, %v2481
      %v2594 = vadd.f32 %v2298, %v2486
      %v2595 = vadd.f32 %v2299, %v2489
      %v2596 = vadd.f32 %v2300, %v2494
      %v2597 = vadd.f32 %v2301, %v2497
      %v2598 = vadd.f32 %v2302, %v2502
      %v2599 = vadd.f32 %v2303, %v2505
      %v2600 = vadd.f32 %v2304, %v2510
      %v2601 = vadd.f32 %v2305, %v2513
      %v2602 = vadd.f32 %v2306, %v2518
      %v2603 = vadd.f32 %v2307, %v2521
      %v2604 = vadd.f32 %v2308, %v2526
      %v2605 = vadd.f32 %v2309, %v2529
      %v2606 = vadd.f32 %v2310, %v2534
      %v2607 = vadd.f32 %v2311, %v2537
      %v2608 = vadd.f32 %v2312, %v2542
      %v2609 = vadd.f32 %v2313, %v2545
      %v2610 = vadd.f32 %v2314, %v2550
      %v2611 = vadd.f32 %v2315, %v2553
      %v2612 = vadd.f32 %v2316, %v2558
      %v2613 = vadd.f32 %v2317, %v2561
      %v2614 = vadd.f32 %v2318, %v2566
      %v2615 = vadd.f32 %v2319, %v2569
      %v2616 = vadd.f32 %v2320, %v2574
      %v2617 = vadd.f32 %v2321, %v2577
      %v2618 = vadd.f32 %v2322, %v2582
      %v2619 = vadd.f32 %v2323, %v2585
      %s2620 = sadd.s32 0, 38
      %s2621 = scalar_lea.vmem %s300, %s2620
      %v2622 = vld [vmem:[%s2621] sm:$0xff]
      %v2623 = vld [vmem:[%s2621 + $0x8] sm:$0xff]
      %v2624 = vld [vmem:[%s2621 + $0x10] sm:$0xff]
      %v2625 = vld [vmem:[%s2621 + $0x18] sm:$0xff]
      %v2626 = vld [vmem:[%s2621 + $0x20] sm:$0xff]
      %v2627 = vld [vmem:[%s2621 + $0x28] sm:$0xff]
      %v2628 = vld [vmem:[%s2621 + $0x30] sm:$0xff]
      %v2629 = vld [vmem:[%s2621 + $0x38] sm:$0xff]
      %v2630 = vld [vmem:[%s2621 + $0x40] sm:$0xff]
      %v2631 = vld [vmem:[%s2621 + $0x48] sm:$0xff]
      %v2632 = vld [vmem:[%s2621 + $0x50] sm:$0xff]
      %v2633 = vld [vmem:[%s2621 + $0x58] sm:$0xff]
      %v2634 = vld [vmem:[%s2621 + $0x60] sm:$0xff]
      %v2635 = vld [vmem:[%s2621 + $0x68] sm:$0xff]
      %v2636 = vld [vmem:[%s2621 + $0x70] sm:$0xff]
      %v2637 = vld [vmem:[%s2621 + $0x78] sm:$0xff]
      %v2638 = vld [vmem:[%s2621 + $0x80] sm:$0xff]
      %v2639 = vld [vmem:[%s2621 + $0x88] sm:$0xff]
      %v2640 = vld [vmem:[%s2621 + $0x90] sm:$0xff]
      %v2641 = vld [vmem:[%s2621 + $0x98] sm:$0xff]
      %v2642 = vld [vmem:[%s2621 + $0xa0] sm:$0xff]
      %v2643 = vld [vmem:[%s2621 + $0xa8] sm:$0xff]
      %v2644 = vld [vmem:[%s2621 + $0xb0] sm:$0xff]
      %v2645 = vld [vmem:[%s2621 + $0xb8] sm:$0xff]
      %v2646 = vld [vmem:[%s2621 + $0xc0] sm:$0xff]
      %v2647 = vld [vmem:[%s2621 + $0xc8] sm:$0xff]
      %v2648 = vld [vmem:[%s2621 + $0xd0] sm:$0xff]
      %v2649 = vld [vmem:[%s2621 + $0xd8] sm:$0xff]
      %v2650 = vld [vmem:[%s2621 + $0xe0] sm:$0xff]
      %v2651 = vld [vmem:[%s2621 + $0xe8] sm:$0xff]
      %v2652 = vld [vmem:[%s2621 + $0xf0] sm:$0xff]
      %v2653 = vld [vmem:[%s2621 + $0xf8] sm:$0xff]
      %v2654 = vpack.c.bf16 %v2623, %v2622
      %v2655 = vpack.c.bf16 %v2625, %v2624
      %v2656 = vpack.c.bf16 %v2627, %v2626
      %v2657 = vpack.c.bf16 %v2629, %v2628
      %v2658 = vpack.c.bf16 %v2631, %v2630
      %v2659 = vpack.c.bf16 %v2633, %v2632
      %v2660 = vpack.c.bf16 %v2635, %v2634
      %v2661 = vpack.c.bf16 %v2637, %v2636
      %v2662 = vpack.c.bf16 %v2639, %v2638
      %v2663 = vpack.c.bf16 %v2641, %v2640
      %v2664 = vpack.c.bf16 %v2643, %v2642
      %v2665 = vpack.c.bf16 %v2645, %v2644
      %v2666 = vpack.c.bf16 %v2647, %v2646
      %v2667 = vpack.c.bf16 %v2649, %v2648
      %v2668 = vpack.c.bf16 %v2651, %v2650
      %v2669 = vpack.c.bf16 %v2653, %v2652
      %s2670 = scalar_lea.vmem %s1, 16
      %v2671 = vld [vmem:[%s2670] sm:$0x3]
      %v2673 = vsel %vm307, %v2654, 0
      %v2676 = vsel %vm307, %v2655, 0
      %v2679 = vsel %vm307, %v2656, 0
      %v2682 = vsel %vm307, %v2657, 0
      %v2685 = vsel %vm307, %v2658, 0
      %v2688 = vsel %vm307, %v2659, 0
      %v2691 = vsel %vm307, %v2660, 0
      %v2694 = vsel %vm307, %v2661, 0
      %v2697 = vsel %vm307, %v2662, 0
      %v2700 = vsel %vm307, %v2663, 0
      %v2703 = vsel %vm307, %v2664, 0
      %v2706 = vsel %vm307, %v2665, 0
      %v2709 = vsel %vm307, %v2666, 0
      %v2712 = vsel %vm307, %v2667, 0
      %v2715 = vsel %vm307, %v2668, 0
      %v2718 = vsel %vm307, %v2669, 0
      %v2721 = vsel %vm467, %v2671, 0
      %2723 = vmatprep.subr.bf16.mxu0 0
      %2724 = vmatpush1.bf16.msra.mxu0 %v2721
      %2725 = vmatprep.subr.bf16.mxu0 0
      %2726 = vmatpush1.bf16.msra.mxu0 0
      %2727 = vmatprep.subr.bf16.mxu0 0
      %2728 = vmatpush1.bf16.msra.mxu0 0
      %2729 = vmatprep.subr.bf16.mxu0 0
      %2730 = vmatpush1.bf16.msra.mxu0 0
      %2731 = vmatprep.subr.bf16.mxu0 0
      %2732 = vmatpush1.bf16.msra.mxu0 0
      %2733 = vmatprep.subr.bf16.mxu0 0
      %2734 = vmatpush1.bf16.msra.mxu0 0
      %2735 = vmatprep.subr.bf16.mxu0 0
      %2736 = vmatpush1.bf16.msra.mxu0 0
      %2737 = vmatprep.subr.bf16.mxu0 0
      %2738 = vmatpush1.bf16.msra.mxu0 0
      %2739 = vmatprep.subr.bf16.mxu0 0
      %2740 = vmatpush1.bf16.msra.mxu0 0
      %2741 = vmatprep.subr.bf16.mxu0 0
      %2742 = vmatpush1.bf16.msra.mxu0 0
      %2743 = vmatprep.subr.bf16.mxu0 0
      %2744 = vmatpush1.bf16.msra.mxu0 0
      %2745 = vmatprep.subr.bf16.mxu0 0
      %2746 = vmatpush1.bf16.msra.mxu0 0
      %2747 = vmatprep.subr.bf16.mxu0 0
      %2748 = vmatpush1.bf16.msra.mxu0 0
      %2749 = vmatprep.subr.bf16.mxu0 0
      %2750 = vmatpush1.bf16.msra.mxu0 0
      %2751 = vmatprep.subr.bf16.mxu0 0
      %2752 = vmatpush1.bf16.msra.mxu0 0
      %2753 = vmatprep.subr.bf16.mxu0 0
      %2754 = vmatpush1.bf16.msra.mxu0 0
      %2755 = vmatprep.mubr.bf16.mxu0 0
      %2756 = vmatmul.mubr.bf16.gmra.mrb[0].mxu0 %v2673
      %v2757 = vpop.f32.mrb[0].mxu0
      %v2758 = vadd.f32 0.0, %v2757
      %v2759 = vpop.f32.mrb[0].mxu0
      %v2760 = vpop.f32.mrb[0].mxu0
      %v2761 = vadd.f32 0.0, %v2760
      %v2762 = vpop.f32.mrb[0].mxu0
      %2763 = vmatprep.mubr.bf16.mxu0 0
      %2764 = vmatmul.mubr.bf16.gmra.mrb[0].mxu0 %v2676
      %v2765 = vpop.f32.mrb[0].mxu0
      %v2766 = vadd.f32 0.0, %v2765
      %v2767 = vpop.f32.mrb[0].mxu0
      %v2768 = vpop.f32.mrb[0].mxu0
      %v2769 = vadd.f32 0.0, %v2768
      %v2770 = vpop.f32.mrb[0].mxu0
      %2771 = vmatprep.mubr.bf16.mxu0 0
      %2772 = vmatmul.mubr.bf16.gmra.mrb[0].mxu0 %v2679
      %v2773 = vpop.f32.mrb[0].mxu0
      %v2774 = vadd.f32 0.0, %v2773
      %v2775 = vpop.f32.mrb[0].mxu0
      %v2776 = vpop.f32.mrb[0].mxu0
      %v2777 = vadd.f32 0.0, %v2776
      %v2778 = vpop.f32.mrb[0].mxu0
      %2779 = vmatprep.mubr.bf16.mxu0 0
      %2780 = vmatmul.mubr.bf16.gmra.mrb[0].mxu0 %v2682
      %v2781 = vpop.f32.mrb[0].mxu0
      %v2782 = vadd.f32 0.0, %v2781
      %v2783 = vpop.f32.mrb[0].mxu0
      %v2784 = vpop.f32.mrb[0].mxu0
      %v2785 = vadd.f32 0.0, %v2784
      %v2786 = vpop.f32.mrb[0].mxu0
      %2787 = vmatprep.mubr.bf16.mxu0 0
      %2788 = vmatmul.mubr.bf16.gmra.mrb[0].mxu0 %v2685
      %v2789 = vpop.f32.mrb[0].mxu0
      %v2790 = vadd.f32 0.0, %v2789
      %v2791 = vpop.f32.mrb[0].mxu0
      %v2792 = vpop.f32.mrb[0].mxu0
      %v2793 = vadd.f32 0.0, %v2792
      %v2794 = vpop.f32.mrb[0].mxu0
      %2795 = vmatprep.mubr.bf16.mxu0 0
      %2796 = vmatmul.mubr.bf16.gmra.mrb[0].mxu0 %v2688
      %v2797 = vpop.f32.mrb[0].mxu0
      %v2798 = vadd.f32 0.0, %v2797
      %v2799 = vpop.f32.mrb[0].mxu0
      %v2800 = vpop.f32.mrb[0].mxu0
      %v2801 = vadd.f32 0.0, %v2800
      %v2802 = vpop.f32.mrb[0].mxu0
      %2803 = vmatprep.mubr.bf16.mxu0 0
      %2804 = vmatmul.mubr.bf16.gmra.mrb[0].mxu0 %v2691
      %v2805 = vpop.f32.mrb[0].mxu0
      %v2806 = vadd.f32 0.0, %v2805
      %v2807 = vpop.f32.mrb[0].mxu0
      %v2808 = vpop.f32.mrb[0].mxu0
      %v2809 = vadd.f32 0.0, %v2808
      %v2810 = vpop.f32.mrb[0].mxu0
      %2811 = vmatprep.mubr.bf16.mxu0 0
      %2812 = vmatmul.mubr.bf16.gmra.mrb[0].mxu0 %v2694
      %v2813 = vpop.f32.mrb[0].mxu0
      %v2814 = vadd.f32 0.0, %v2813
      %v2815 = vpop.f32.mrb[0].mxu0
      %v2816 = vpop.f32.mrb[0].mxu0
      %v2817 = vadd.f32 0.0, %v2816
      %v2818 = vpop.f32.mrb[0].mxu0
      %2819 = vmatprep.mubr.bf16.mxu0 0
      %2820 = vmatmul.mubr.bf16.gmra.mrb[0].mxu0 %v2697
      %v2821 = vpop.f32.mrb[0].mxu0
      %v2822 = vadd.f32 0.0, %v2821
      %v2823 = vpop.f32.mrb[0].mxu0
      %v2824 = vpop.f32.mrb[0].mxu0
      %v2825 = vadd.f32 0.0, %v2824
      %v2826 = vpop.f32.mrb[0].mxu0
      %2827 = vmatprep.mubr.bf16.mxu0 0
      %2828 = vmatmul.mubr.bf16.gmra.mrb[0].mxu0 %v2700
      %v2829 = vpop.f32.mrb[0].mxu0
      %v2830 = vadd.f32 0.0, %v2829
      %v2831 = vpop.f32.mrb[0].mxu0
      %v2832 = vpop.f32.mrb[0].mxu0
      %v2833 = vadd.f32 0.0, %v2832
      %v2834 = vpop.f32.mrb[0].mxu0
      %2835 = vmatprep.mubr.bf16.mxu0 0
      %2836 = vmatmul.mubr.bf16.gmra.mrb[0].mxu0 %v2703
      %v2837 = vpop.f32.mrb[0].mxu0
      %v2838 = vadd.f32 0.0, %v2837
      %v2839 = vpop.f32.mrb[0].mxu0
      %v2840 = vpop.f32.mrb[0].mxu0
      %v2841 = vadd.f32 0.0, %v2840
      %v2842 = vpop.f32.mrb[0].mxu0
      %2843 = vmatprep.mubr.bf16.mxu0 0
      %2844 = vmatmul.mubr.bf16.gmra.mrb[0].mxu0 %v2706
      %v2845 = vpop.f32.mrb[0].mxu0
      %v2846 = vadd.f32 0.0, %v2845
      %v2847 = vpop.f32.mrb[0].mxu0
      %v2848 = vpop.f32.mrb[0].mxu0
      %v2849 = vadd.f32 0.0, %v2848
      %v2850 = vpop.f32.mrb[0].mxu0
      %2851 = vmatprep.mubr.bf16.mxu0 0
      %2852 = vmatmul.mubr.bf16.gmra.mrb[0].mxu0 %v2709
      %v2853 = vpop.f32.mrb[0].mxu0
      %v2854 = vadd.f32 0.0, %v2853
      %v2855 = vpop.f32.mrb[0].mxu0
      %v2856 = vpop.f32.mrb[0].mxu0
      %v2857 = vadd.f32 0.0, %v2856
      %v2858 = vpop.f32.mrb[0].mxu0
      %2859 = vmatprep.mubr.bf16.mxu0 0
      %2860 = vmatmul.mubr.bf16.gmra.mrb[0].mxu0 %v2712
      %v2861 = vpop.f32.mrb[0].mxu0
      %v2862 = vadd.f32 0.0, %v2861
      %v2863 = vpop.f32.mrb[0].mxu0
      %v2864 = vpop.f32.mrb[0].mxu0
      %v2865 = vadd.f32 0.0, %v2864
      %v2866 = vpop.f32.mrb[0].mxu0
      %2867 = vmatprep.mubr.bf16.mxu0 0
      %2868 = vmatmul.mubr.bf16.gmra.mrb[0].mxu0 %v2715
      %v2869 = vpop.f32.mrb[0].mxu0
      %v2870 = vadd.f32 0.0, %v2869
      %v2871 = vpop.f32.mrb[0].mxu0
      %v2872 = vpop.f32.mrb[0].mxu0
      %v2873 = vadd.f32 0.0, %v2872
      %v2874 = vpop.f32.mrb[0].mxu0
      %2875 = vmatprep.mubr.bf16.mxu0 0
      %2876 = vmatmul.mubr.bf16.gmra.mrb[0].mxu0 %v2718
      %v2877 = vpop.f32.mrb[0].mxu0
      %v2878 = vadd.f32 0.0, %v2877
      %v2879 = vpop.f32.mrb[0].mxu0
      %v2880 = vpop.f32.mrb[0].mxu0
      %v2881 = vadd.f32 0.0, %v2880
      %v2882 = vpop.f32.mrb[0].mxu0
      %2883 = vdwg.mxu0
      %v2884 = vadd.f32 %v2588, %v2758
      %v2885 = vadd.f32 %v2589, %v2761
      %v2886 = vadd.f32 %v2590, %v2766
      %v2887 = vadd.f32 %v2591, %v2769
      %v2888 = vadd.f32 %v2592, %v2774
      %v2889 = vadd.f32 %v2593, %v2777
      %v2890 = vadd.f32 %v2594, %v2782
      %v2891 = vadd.f32 %v2595, %v2785
      %v2892 = vadd.f32 %v2596, %v2790
      %v2893 = vadd.f32 %v2597, %v2793
      %v2894 = vadd.f32 %v2598, %v2798
      %v2895 = vadd.f32 %v2599, %v2801
      %v2896 = vadd.f32 %v2600, %v2806
      %v2897 = vadd.f32 %v2601, %v2809
      %v2898 = vadd.f32 %v2602, %v2814
      %v2899 = vadd.f32 %v2603, %v2817
      %v2900 = vadd.f32 %v2604, %v2822
      %v2901 = vadd.f32 %v2605, %v2825
      %v2902 = vadd.f32 %v2606, %v2830
      %v2903 = vadd.f32 %v2607, %v2833
      %v2904 = vadd.f32 %v2608, %v2838
      %v2905 = vadd.f32 %v2609, %v2841
      %v2906 = vadd.f32 %v2610, %v2846
      %v2907 = vadd.f32 %v2611, %v2849
      %v2908 = vadd.f32 %v2612, %v2854
      %v2909 = vadd.f32 %v2613, %v2857
      %v2910 = vadd.f32 %v2614, %v2862
      %v2911 = vadd.f32 %v2615, %v2865
      %v2912 = vadd.f32 %v2616, %v2870
      %v2913 = vadd.f32 %v2617, %v2873
      %v2914 = vadd.f32 %v2618, %v2878
      %v2915 = vadd.f32 %v2619, %v2881
      %v2917 = vlaneseq
      %v2918 = vshrl.u32 %v2917, 7
      %v2919 = vsub.s32 0, %v2918
      %v2920 = vrot.slane %v314, %v2919
      %v2922 = vmul.f32 %v2884, %v2920
      %v2923 = vmul.f32 %v2885, %v2920
      %v2924 = vmul.f32 %v2886, %v2920
      %v2925 = vmul.f32 %v2887, %v2920
      %v2926 = vmul.f32 %v2888, %v2920
      %v2927 = vmul.f32 %v2889, %v2920
      %v2928 = vmul.f32 %v2890, %v2920
      %v2929 = vmul.f32 %v2891, %v2920
      %v2930 = vmul.f32 %v2892, %v2920
      %v2931 = vmul.f32 %v2893, %v2920
      %v2932 = vmul.f32 %v2894, %v2920
      %v2933 = vmul.f32 %v2895, %v2920
      %v2934 = vmul.f32 %v2896, %v2920
      %v2935 = vmul.f32 %v2897, %v2920
      %v2936 = vmul.f32 %v2898, %v2920
      %v2937 = vmul.f32 %v2899, %v2920
      %v2938 = vmul.f32 %v2900, %v2920
      %v2939 = vmul.f32 %v2901, %v2920
      %v2940 = vmul.f32 %v2902, %v2920
      %v2941 = vmul.f32 %v2903, %v2920
      %v2942 = vmul.f32 %v2904, %v2920
      %v2943 = vmul.f32 %v2905, %v2920
      %v2944 = vmul.f32 %v2906, %v2920
      %v2945 = vmul.f32 %v2907, %v2920
      %v2946 = vmul.f32 %v2908, %v2920
      %v2947 = vmul.f32 %v2909, %v2920
      %v2948 = vmul.f32 %v2910, %v2920
      %v2949 = vmul.f32 %v2911, %v2920
      %v2950 = vmul.f32 %v2912, %v2920
      %v2951 = vmul.f32 %v2913, %v2920
      %v2952 = vmul.f32 %v2914, %v2920
      %v2953 = vmul.f32 %v2915, %v2920
      %v2955 = vlaneseq
      %v2956 = vshrl.u32 %v2955, 7
      %v2957 = vsub.s32 0, %v2956
      %v2958 = vrot.slane %v315, %v2957
      %v2960 = vadd.f32 %v2922, %v2958
      %v2961 = vadd.f32 %v2923, %v2958
      %v2962 = vadd.f32 %v2924, %v2958
      %v2963 = vadd.f32 %v2925, %v2958
      %v2964 = vadd.f32 %v2926, %v2958
      %v2965 = vadd.f32 %v2927, %v2958
      %v2966 = vadd.f32 %v2928, %v2958
      %v2967 = vadd.f32 %v2929, %v2958
      %v2968 = vadd.f32 %v2930, %v2958
      %v2969 = vadd.f32 %v2931, %v2958
      %v2970 = vadd.f32 %v2932, %v2958
      %v2971 = vadd.f32 %v2933, %v2958
      %v2972 = vadd.f32 %v2934, %v2958
      %v2973 = vadd.f32 %v2935, %v2958
      %v2974 = vadd.f32 %v2936, %v2958
      %v2975 = vadd.f32 %v2937, %v2958
      %v2976 = vadd.f32 %v2938, %v2958
      %v2977 = vadd.f32 %v2939, %v2958
      %v2978 = vadd.f32 %v2940, %v2958
      %v2979 = vadd.f32 %v2941, %v2958
      %v2980 = vadd.f32 %v2942, %v2958
      %v2981 = vadd.f32 %v2943, %v2958
      %v2982 = vadd.f32 %v2944, %v2958
      %v2983 = vadd.f32 %v2945, %v2958
      %v2984 = vadd.f32 %v2946, %v2958
      %v2985 = vadd.f32 %v2947, %v2958
      %v2986 = vadd.f32 %v2948, %v2958
      %v2987 = vadd.f32 %v2949, %v2958
      %v2988 = vadd.f32 %v2950, %v2958
      %v2989 = vadd.f32 %v2951, %v2958
      %v2990 = vadd.f32 %v2952, %v2958
      %v2991 = vadd.f32 %v2953, %v2958
      %v2992 = vmax.f32 %v2960, 0.0
      %v2993 = vmax.f32 %v2961, 0.0
      %v2994 = vmax.f32 %v2962, 0.0
      %v2995 = vmax.f32 %v2963, 0.0
      %v2996 = vmax.f32 %v2964, 0.0
      %v2997 = vmax.f32 %v2965, 0.0
      %v2998 = vmax.f32 %v2966, 0.0
      %v2999 = vmax.f32 %v2967, 0.0
      %v3000 = vmax.f32 %v2968, 0.0
      %v3001 = vmax.f32 %v2969, 0.0
      %v3002 = vmax.f32 %v2970, 0.0
      %v3003 = vmax.f32 %v2971, 0.0
      %v3004 = vmax.f32 %v2972, 0.0
      %v3005 = vmax.f32 %v2973, 0.0
      %v3006 = vmax.f32 %v2974, 0.0
      %v3007 = vmax.f32 %v2975, 0.0
      %v3008 = vmax.f32 %v2976, 0.0
      %v3009 = vmax.f32 %v2977, 0.0
      %v3010 = vmax.f32 %v2978, 0.0
      %v3011 = vmax.f32 %v2979, 0.0
      %v3012 = vmax.f32 %v2980, 0.0
      %v3013 = vmax.f32 %v2981, 0.0
      %v3014 = vmax.f32 %v2982, 0.0
      %v3015 = vmax.f32 %v2983, 0.0
      %v3016 = vmax.f32 %v2984, 0.0
      %v3017 = vmax.f32 %v2985, 0.0
      %v3018 = vmax.f32 %v2986, 0.0
      %v3019 = vmax.f32 %v2987, 0.0
      %v3020 = vmax.f32 %v2988, 0.0
      %v3021 = vmax.f32 %v2989, 0.0
      %v3022 = vmax.f32 %v2990, 0.0
      %v3023 = vmax.f32 %v2991, 0.0
      %v3024 = vld [vmem:[%s7] sm:$0xff]
      %v3025 = vld [vmem:[%s7 + $0x8] sm:$0xff]
      %v3026 = vld [vmem:[%s7 + $0x10] sm:$0xff]
      %v3027 = vld [vmem:[%s7 + $0x18] sm:$0xff]
      %v3028 = vld [vmem:[%s7 + $0x20] sm:$0xff]
      %v3029 = vld [vmem:[%s7 + $0x28] sm:$0xff]
      %v3030 = vld [vmem:[%s7 + $0x30] sm:$0xff]
      %v3031 = vld [vmem:[%s7 + $0x38] sm:$0xff]
      %v3032 = vld [vmem:[%s7 + $0x40] sm:$0xff]
      %v3033 = vld [vmem:[%s7 + $0x48] sm:$0xff]
      %v3034 = vld [vmem:[%s7 + $0x50] sm:$0xff]
      %v3035 = vld [vmem:[%s7 + $0x58] sm:$0xff]
      %v3036 = vld [vmem:[%s7 + $0x60] sm:$0xff]
      %v3037 = vld [vmem:[%s7 + $0x68] sm:$0xff]
      %v3038 = vld [vmem:[%s7 + $0x70] sm:$0xff]
      %v3039 = vld [vmem:[%s7 + $0x78] sm:$0xff]
      %v3040 = vld [vmem:[%s7 + $0x80] sm:$0xff]
      %v3041 = vld [vmem:[%s7 + $0x88] sm:$0xff]
      %v3042 = vld [vmem:[%s7 + $0x90] sm:$0xff]
      %v3043 = vld [vmem:[%s7 + $0x98] sm:$0xff]
      %v3044 = vld [vmem:[%s7 + $0xa0] sm:$0xff]
      %v3045 = vld [vmem:[%s7 + $0xa8] sm:$0xff]
      %v3046 = vld [vmem:[%s7 + $0xb0] sm:$0xff]
      %v3047 = vld [vmem:[%s7 + $0xb8] sm:$0xff]
      %v3048 = vld [vmem:[%s7 + $0xc0] sm:$0xff]
      %v3049 = vld [vmem:[%s7 + $0xc8] sm:$0xff]
      %v3050 = vld [vmem:[%s7 + $0xd0] sm:$0xff]
      %v3051 = vld [vmem:[%s7 + $0xd8] sm:$0xff]
      %v3052 = vld [vmem:[%s7 + $0xe0] sm:$0xff]
      %v3053 = vld [vmem:[%s7 + $0xe8] sm:$0xff]
      %v3054 = vld [vmem:[%s7 + $0xf0] sm:$0xff]
      %v3055 = vld [vmem:[%s7 + $0xf8] sm:$0xff]
      %3057 = vset.pattern.permute.xlu0 0
      %3058 = vperm.xlu0 %3057, %v3024
      %v3059 = vpop.permute.xlu0 %3058
      %3062 = vset.pattern.permute.xlu0 0
      %3063 = vperm.xlu0 %3062, %v3025
      %v3064 = vpop.permute.xlu0 %3063
      %3067 = vset.pattern.permute.xlu0 0
      %3068 = vperm.xlu0 %3067, %v3026
      %v3069 = vpop.permute.xlu0 %3068
      %3072 = vset.pattern.permute.xlu0 0
      %3073 = vperm.xlu0 %3072, %v3027
      %v3074 = vpop.permute.xlu0 %3073
      %3077 = vset.pattern.permute.xlu0 0
      %3078 = vperm.xlu0 %3077, %v3028
      %v3079 = vpop.permute.xlu0 %3078
      %3082 = vset.pattern.permute.xlu0 0
      %3083 = vperm.xlu0 %3082, %v3029
      %v3084 = vpop.permute.xlu0 %3083
      %3087 = vset.pattern.permute.xlu0 0
      %3088 = vperm.xlu0 %3087, %v3030
      %v3089 = vpop.permute.xlu0 %3088
      %3092 = vset.pattern.permute.xlu0 0
      %3093 = vperm.xlu0 %3092, %v3031
      %v3094 = vpop.permute.xlu0 %3093
      %3097 = vset.pattern.permute.xlu0 0
      %3098 = vperm.xlu0 %3097, %v3032
      %v3099 = vpop.permute.xlu0 %3098
      %3102 = vset.pattern.permute.xlu0 0
      %3103 = vperm.xlu0 %3102, %v3033
      %v3104 = vpop.permute.xlu0 %3103
      %3107 = vset.pattern.permute.xlu0 0
      %3108 = vperm.xlu0 %3107, %v3034
      %v3109 = vpop.permute.xlu0 %3108
      %3112 = vset.pattern.permute.xlu0 0
      %3113 = vperm.xlu0 %3112, %v3035
      %v3114 = vpop.permute.xlu0 %3113
      %3117 = vset.pattern.permute.xlu0 0
      %3118 = vperm.xlu0 %3117, %v3036
      %v3119 = vpop.permute.xlu0 %3118
      %3122 = vset.pattern.permute.xlu0 0
      %3123 = vperm.xlu0 %3122, %v3037
      %v3124 = vpop.permute.xlu0 %3123
      %3127 = vset.pattern.permute.xlu0 0
      %3128 = vperm.xlu0 %3127, %v3038
      %v3129 = vpop.permute.xlu0 %3128
      %3132 = vset.pattern.permute.xlu0 0
      %3133 = vperm.xlu0 %3132, %v3039
      %v3134 = vpop.permute.xlu0 %3133
      %3137 = vset.pattern.permute.xlu0 0
      %3138 = vperm.xlu0 %3137, %v3040
      %v3139 = vpop.permute.xlu0 %3138
      %3142 = vset.pattern.permute.xlu0 0
      %3143 = vperm.xlu0 %3142, %v3041
      %v3144 = vpop.permute.xlu0 %3143
      %3147 = vset.pattern.permute.xlu0 0
      %3148 = vperm.xlu0 %3147, %v3042
      %v3149 = vpop.permute.xlu0 %3148
      %3152 = vset.pattern.permute.xlu0 0
      %3153 = vperm.xlu0 %3152, %v3043
      %v3154 = vpop.permute.xlu0 %3153
      %3157 = vset.pattern.permute.xlu0 0
      %3158 = vperm.xlu0 %3157, %v3044
      %v3159 = vpop.permute.xlu0 %3158
      %3162 = vset.pattern.permute.xlu0 0
      %3163 = vperm.xlu0 %3162, %v3045
      %v3164 = vpop.permute.xlu0 %3163
      %3167 = vset.pattern.permute.xlu0 0
      %3168 = vperm.xlu0 %3167, %v3046
      %v3169 = vpop.permute.xlu0 %3168
      %3172 = vset.pattern.permute.xlu0 0
      %3173 = vperm.xlu0 %3172, %v3047
      %v3174 = vpop.permute.xlu0 %3173
      %3177 = vset.pattern.permute.xlu0 0
      %3178 = vperm.xlu0 %3177, %v3048
      %v3179 = vpop.permute.xlu0 %3178
      %3182 = vset.pattern.permute.xlu0 0
      %3183 = vperm.xlu0 %3182, %v3049
      %v3184 = vpop.permute.xlu0 %3183
      %3187 = vset.pattern.permute.xlu0 0
      %3188 = vperm.xlu0 %3187, %v3050
      %v3189 = vpop.permute.xlu0 %3188
      %3192 = vset.pattern.permute.xlu0 0
      %3193 = vperm.xlu0 %3192, %v3051
      %v3194 = vpop.permute.xlu0 %3193
      %3197 = vset.pattern.permute.xlu0 0
      %3198 = vperm.xlu0 %3197, %v3052
      %v3199 = vpop.permute.xlu0 %3198
      %3202 = vset.pattern.permute.xlu0 0
      %3203 = vperm.xlu0 %3202, %v3053
      %v3204 = vpop.permute.xlu0 %3203
      %3207 = vset.pattern.permute.xlu0 0
      %3208 = vperm.xlu0 %3207, %v3054
      %v3209 = vpop.permute.xlu0 %3208
      %3212 = vset.pattern.permute.xlu0 0
      %3213 = vperm.xlu0 %3212, %v3055
      %v3214 = vpop.permute.xlu0 %3213
      %v3216 = vmul.f32 %v2992, %v3059
      %v3217 = vmul.f32 %v2993, %v3064
      %v3218 = vmul.f32 %v2994, %v3069
      %v3219 = vmul.f32 %v2995, %v3074
      %v3220 = vmul.f32 %v2996, %v3079
      %v3221 = vmul.f32 %v2997, %v3084
      %v3222 = vmul.f32 %v2998, %v3089
      %v3223 = vmul.f32 %v2999, %v3094
      %v3224 = vmul.f32 %v3000, %v3099
      %v3225 = vmul.f32 %v3001, %v3104
      %v3226 = vmul.f32 %v3002, %v3109
      %v3227 = vmul.f32 %v3003, %v3114
      %v3228 = vmul.f32 %v3004, %v3119
      %v3229 = vmul.f32 %v3005, %v3124
      %v3230 = vmul.f32 %v3006, %v3129
      %v3231 = vmul.f32 %v3007, %v3134
      %v3232 = vmul.f32 %v3008, %v3139
      %v3233 = vmul.f32 %v3009, %v3144
      %v3234 = vmul.f32 %v3010, %v3149
      %v3235 = vmul.f32 %v3011, %v3154
      %v3236 = vmul.f32 %v3012, %v3159
      %v3237 = vmul.f32 %v3013, %v3164
      %v3238 = vmul.f32 %v3014, %v3169
      %v3239 = vmul.f32 %v3015, %v3174
      %v3240 = vmul.f32 %v3016, %v3179
      %v3241 = vmul.f32 %v3017, %v3184
      %v3242 = vmul.f32 %v3018, %v3189
      %v3243 = vmul.f32 %v3019, %v3194
      %v3244 = vmul.f32 %v3020, %v3199
      %v3245 = vmul.f32 %v3021, %v3204
      %v3246 = vmul.f32 %v3022, %v3209
      %v3247 = vmul.f32 %v3023, %v3214
      %s3248 = scalar_lea.vmem [#allocation2], %s1436
      %3249 = vst.msk [vmem:[%s3248] sm:$0xff] %vm307, %v3216
      %3250 = vst.msk [vmem:[%s3248 + $0x8] sm:$0xff] %vm307, %v3217
      %3251 = vst.msk [vmem:[%s3248 + $0x10] sm:$0xff] %vm307, %v3218
      %3252 = vst.msk [vmem:[%s3248 + $0x18] sm:$0xff] %vm307, %v3219
      %3253 = vst.msk [vmem:[%s3248 + $0x20] sm:$0xff] %vm307, %v3220
      %3254 = vst.msk [vmem:[%s3248 + $0x28] sm:$0xff] %vm307, %v3221
      %3255 = vst.msk [vmem:[%s3248 + $0x30] sm:$0xff] %vm307, %v3222
      %3256 = vst.msk [vmem:[%s3248 + $0x38] sm:$0xff] %vm307, %v3223
      %3257 = vst.msk [vmem:[%s3248 + $0x40] sm:$0xff] %vm307, %v3224
      %3258 = vst.msk [vmem:[%s3248 + $0x48] sm:$0xff] %vm307, %v3225
      %3259 = vst.msk [vmem:[%s3248 + $0x50] sm:$0xff] %vm307, %v3226
      %3260 = vst.msk [vmem:[%s3248 + $0x58] sm:$0xff] %vm307, %v3227
      %3261 = vst.msk [vmem:[%s3248 + $0x60] sm:$0xff] %vm307, %v3228
      %3262 = vst.msk [vmem:[%s3248 + $0x68] sm:$0xff] %vm307, %v3229
      %3263 = vst.msk [vmem:[%s3248 + $0x70] sm:$0xff] %vm307, %v3230
      %3264 = vst.msk [vmem:[%s3248 + $0x78] sm:$0xff] %vm307, %v3231
      %3265 = vst.msk [vmem:[%s3248 + $0x80] sm:$0xff] %vm307, %v3232
      %3266 = vst.msk [vmem:[%s3248 + $0x88] sm:$0xff] %vm307, %v3233
      %3267 = vst.msk [vmem:[%s3248 + $0x90] sm:$0xff] %vm307, %v3234
      %3268 = vst.msk [vmem:[%s3248 + $0x98] sm:$0xff] %vm307, %v3235
      %3269 = vst.msk [vmem:[%s3248 + $0xa0] sm:$0xff] %vm307, %v3236
      %3270 = vst.msk [vmem:[%s3248 + $0xa8] sm:$0xff] %vm307, %v3237
      %3271 = vst.msk [vmem:[%s3248 + $0xb0] sm:$0xff] %vm307, %v3238
      %3272 = vst.msk [vmem:[%s3248 + $0xb8] sm:$0xff] %vm307, %v3239
      %3273 = vst.msk [vmem:[%s3248 + $0xc0] sm:$0xff] %vm307, %v3240
      %3274 = vst.msk [vmem:[%s3248 + $0xc8] sm:$0xff] %vm307, %v3241
      %3275 = vst.msk [vmem:[%s3248 + $0xd0] sm:$0xff] %vm307, %v3242
      %3276 = vst.msk [vmem:[%s3248 + $0xd8] sm:$0xff] %vm307, %v3243
      %3277 = vst.msk [vmem:[%s3248 + $0xe0] sm:$0xff] %vm307, %v3244
      %3278 = vst.msk [vmem:[%s3248 + $0xe8] sm:$0xff] %vm307, %v3245
      %3279 = vst.msk [vmem:[%s3248 + $0xf0] sm:$0xff] %vm307, %v3246
      %3280 = vst.msk [vmem:[%s3248 + $0xf8] sm:$0xff] %vm307, %v3247
      %v3281 = vld [vmem:[%s300 + $0x100] sm:$0xff]
      %v3282 = vld [vmem:[%s300 + $0x108] sm:$0xff]
      %v3283 = vld [vmem:[%s300 + $0x110] sm:$0xff]
      %v3284 = vld [vmem:[%s300 + $0x118] sm:$0xff]
      %v3285 = vpack.c.bf16 %v3282, %v3281
      %v3286 = vpack.c.bf16 %v3284, %v3283
      %v3287 = vld [vmem:[%s1] sm:$0x3]
      %v3288 = vld [vmem:[%s300 + $0x101] sm:$0xff]
      %v3289 = vld [vmem:[%s300 + $0x109] sm:$0xff]
      %v3290 = vld [vmem:[%s300 + $0x111] sm:$0xff]
      %v3291 = vld [vmem:[%s300 + $0x119] sm:$0xff]
      %v3292 = vpack.c.bf16 %v3289, %v3288
      %v3293 = vpack.c.bf16 %v3291, %v3290
      %v3294 = vld [vmem:[%s417] sm:$0x3]
      %v3296 = vsel %vm307, %v3292, 0
      %v3299 = vsel %vm307, %v3293, 0
      %v3302 = vsel %vm467, %v3294, 0
      %3304 = vmatprep.subr.bf16.mxu0 0
      %3305 = vmatpush1.bf16.msra.mxu0 %v3302
      %3306 = vmatprep.subr.bf16.mxu0 0
      %3307 = vmatpush1.bf16.msra.mxu0 0
      %3308 = vmatprep.subr.bf16.mxu0 0
      %3309 = vmatpush1.bf16.msra.mxu0 0
      %3310 = vmatprep.subr.bf16.mxu0 0
      %3311 = vmatpush1.bf16.msra.mxu0 0
      %3312 = vmatprep.subr.bf16.mxu0 0
      %3313 = vmatpush1.bf16.msra.mxu0 0
      %3314 = vmatprep.subr.bf16.mxu0 0
      %3315 = vmatpush1.bf16.msra.mxu0 0
      %3316 = vmatprep.subr.bf16.mxu0 0
      %3317 = vmatpush1.bf16.msra.mxu0 0
      %3318 = vmatprep.subr.bf16.mxu0 0
      %3319 = vmatpush1.bf16.msra.mxu0 0
      %3320 = vmatprep.subr.bf16.mxu0 0
      %3321 = vmatpush1.bf16.msra.mxu0 0
      %3322 = vmatprep.subr.bf16.mxu0 0
      %3323 = vmatpush1.bf16.msra.mxu0 0
      %3324 = vmatprep.subr.bf16.mxu0 0
      %3325 = vmatpush1.bf16.msra.mxu0 0
      %3326 = vmatprep.subr.bf16.mxu0 0
      %3327 = vmatpush1.bf16.msra.mxu0 0
      %3328 = vmatprep.subr.bf16.mxu0 0
      %3329 = vmatpush1.bf16.msra.mxu0 0
      %3330 = vmatprep.subr.bf16.mxu0 0
      %3331 = vmatpush1.bf16.msra.mxu0 0
      %3332 = vmatprep.subr.bf16.mxu0 0
      %3333 = vmatpush1.bf16.msra.mxu0 0
      %3334 = vmatprep.subr.bf16.mxu0 0
      %3335 = vmatpush1.bf16.msra.mxu0 0
      %3336 = vmatprep.mubr.bf16.mxu0 0
      %3337 = vmatmul.mubr.bf16.gmra.mrb[0].mxu0 %v3296
      %v3338 = vpop.f32.mrb[0].mxu0
      %v3339 = vadd.f32 0.0, %v3338
      %v3340 = vpop.f32.mrb[0].mxu0
      %v3341 = vpop.f32.mrb[0].mxu0
      %v3342 = vadd.f32 0.0, %v3341
      %v3343 = vpop.f32.mrb[0].mxu0
      %3344 = vmatprep.mubr.bf16.mxu0 0
      %3345 = vmatmul.mubr.bf16.gmra.mrb[0].mxu0 %v3299
      %v3346 = vpop.f32.mrb[0].mxu0
      %v3347 = vadd.f32 0.0, %v3346
      %v3348 = vpop.f32.mrb[0].mxu0
      %v3349 = vpop.f32.mrb[0].mxu0
      %v3350 = vadd.f32 0.0, %v3349
      %v3351 = vpop.f32.mrb[0].mxu0
      %3352 = vdwg.mxu0
      %v3354 = vsel %vm307, %v3285, 0
      %v3357 = vsel %vm307, %v3286, 0
      %v3360 = vsel %vm467, %v3287, 0
      %3362 = vmatprep.subr.bf16.mxu0 0
      %3363 = vmatpush1.bf16.msra.mxu0 %v3360
      %3364 = vmatprep.subr.bf16.mxu0 0
      %3365 = vmatpush1.bf16.msra.mxu0 0
      %3366 = vmatprep.subr.bf16.mxu0 0
      %3367 = vmatpush1.bf16.msra.mxu0 0
      %3368 = vmatprep.subr.bf16.mxu0 0
      %3369 = vmatpush1.bf16.msra.mxu0 0
      %3370 = vmatprep.subr.bf16.mxu0 0
      %3371 = vmatpush1.bf16.msra.mxu0 0
      %3372 = vmatprep.subr.bf16.mxu0 0
      %3373 = vmatpush1.bf16.msra.mxu0 0
      %3374 = vmatprep.subr.bf16.mxu0 0
      %3375 = vmatpush1.bf16.msra.mxu0 0
      %3376 = vmatprep.subr.bf16.mxu0 0
      %3377 = vmatpush1.bf16.msra.mxu0 0
      %3378 = vmatprep.subr.bf16.mxu0 0
      %3379 = vmatpush1.bf16.msra.mxu0 0
      %3380 = vmatprep.subr.bf16.mxu0 0
      %3381 = vmatpush1.bf16.msra.mxu0 0
      %3382 = vmatprep.subr.bf16.mxu0 0
      %3383 = vmatpush1.bf16.msra.mxu0 0
      %3384 = vmatprep.subr.bf16.mxu0 0
      %3385 = vmatpush1.bf16.msra.mxu0 0
      %3386 = vmatprep.subr.bf16.mxu0 0
      %3387 = vmatpush1.bf16.msra.mxu0 0
      %3388 = vmatprep.subr.bf16.mxu0 0
      %3389 = vmatpush1.bf16.msra.mxu0 0
      %3390 = vmatprep.subr.bf16.mxu0 0
      %3391 = vmatpush1.bf16.msra.mxu0 0
      %3392 = vmatprep.subr.bf16.mxu0 0
      %3393 = vmatpush1.bf16.msra.mxu0 0
      %3394 = vmatprep.mubr.bf16.mxu0 0
      %3395 = vmatmul.mubr.bf16.gmra.mrb[0].mxu0 %v3354
      %v3396 = vpop.f32.mrb[0].mxu0
      %v3397 = vadd.f32 %v3339, %v3396
      %v3398 = vpop.f32.mrb[0].mxu0
      %v3399 = vpop.f32.mrb[0].mxu0
      %v3400 = vadd.f32 %v3342, %v3399
      %v3401 = vpop.f32.mrb[0].mxu0
      %3402 = vmatprep.mubr.bf16.mxu0 0
      %3403 = vmatmul.mubr.bf16.gmra.mrb[0].mxu0 %v3357
      %v3404 = vpop.f32.mrb[0].mxu0
      %v3405 = vadd.f32 %v3347, %v3404
      %v3406 = vpop.f32.mrb[0].mxu0
      %v3407 = vpop.f32.mrb[0].mxu0
      %v3408 = vadd.f32 %v3350, %v3407
      %v3409 = vpop.f32.mrb[0].mxu0
      %3410 = vdwg.mxu0
      %v3411 = vld [vmem:[%s300 + $0x102] sm:$0xff]
      %v3412 = vld [vmem:[%s300 + $0x10a] sm:$0xff]
      %v3413 = vld [vmem:[%s300 + $0x112] sm:$0xff]
      %v3414 = vld [vmem:[%s300 + $0x11a] sm:$0xff]
      %v3415 = vpack.c.bf16 %v3412, %v3411
      %v3416 = vpack.c.bf16 %v3414, %v3413
      %v3417 = vld [vmem:[%s894] sm:$0x3]
      %v3419 = vsel %vm307, %v3415, 0
      %v3422 = vsel %vm307, %v3416, 0
      %v3425 = vsel %vm467, %v3417, 0
      %3427 = vmatprep.subr.bf16.mxu0 0
      %3428 = vmatpush1.bf16.msra.mxu0 %v3425
      %3429 = vmatprep.subr.bf16.mxu0 0
      %3430 = vmatpush1.bf16.msra.mxu0 0
      %3431 = vmatprep.subr.bf16.mxu0 0
      %3432 = vmatpush1.bf16.msra.mxu0 0
      %3433 = vmatprep.subr.bf16.mxu0 0
      %3434 = vmatpush1.bf16.msra.mxu0 0
      %3435 = vmatprep.subr.bf16.mxu0 0
      %3436 = vmatpush1.bf16.msra.mxu0 0
      %3437 = vmatprep.subr.bf16.mxu0 0
      %3438 = vmatpush1.bf16.msra.mxu0 0
      %3439 = vmatprep.subr.bf16.mxu0 0
      %3440 = vmatpush1.bf16.msra.mxu0 0
      %3441 = vmatprep.subr.bf16.mxu0 0
      %3442 = vmatpush1.bf16.msra.mxu0 0
      %3443 = vmatprep.subr.bf16.mxu0 0
      %3444 = vmatpush1.bf16.msra.mxu0 0
      %3445 = vmatprep.subr.bf16.mxu0 0
      %3446 = vmatpush1.bf16.msra.mxu0 0
      %3447 = vmatprep.subr.bf16.mxu0 0
      %3448 = vmatpush1.bf16.msra.mxu0 0
      %3449 = vmatprep.subr.bf16.mxu0 0
      %3450 = vmatpush1.bf16.msra.mxu0 0
      %3451 = vmatprep.subr.bf16.mxu0 0
      %3452 = vmatpush1.bf16.msra.mxu0 0
      %3453 = vmatprep.subr.bf16.mxu0 0
      %3454 = vmatpush1.bf16.msra.mxu0 0
      %3455 = vmatprep.subr.bf16.mxu0 0
      %3456 = vmatpush1.bf16.msra.mxu0 0
      %3457 = vmatprep.subr.bf16.mxu0 0
      %3458 = vmatpush1.bf16.msra.mxu0 0
      %3459 = vmatprep.mubr.bf16.mxu0 0
      %3460 = vmatmul.mubr.bf16.gmra.mrb[0].mxu0 %v3419
      %v3461 = vpop.f32.mrb[0].mxu0
      %v3462 = vadd.f32 0.0, %v3461
      %v3463 = vpop.f32.mrb[0].mxu0
      %v3464 = vpop.f32.mrb[0].mxu0
      %v3465 = vadd.f32 0.0, %v3464
      %v3466 = vpop.f32.mrb[0].mxu0
      %3467 = vmatprep.mubr.bf16.mxu0 0
      %3468 = vmatmul.mubr.bf16.gmra.mrb[0].mxu0 %v3422
      %v3469 = vpop.f32.mrb[0].mxu0
      %v3470 = vadd.f32 0.0, %v3469
      %v3471 = vpop.f32.mrb[0].mxu0
      %v3472 = vpop.f32.mrb[0].mxu0
      %v3473 = vadd.f32 0.0, %v3472
      %v3474 = vpop.f32.mrb[0].mxu0
      %3475 = vdwg.mxu0
      %v3476 = vadd.f32 %v3397, %v3462
      %v3477 = vadd.f32 %v3400, %v3465
      %v3478 = vadd.f32 %v3405, %v3470
      %v3479 = vadd.f32 %v3408, %v3473
      %v3480 = vld [vmem:[%s300 + $0x112] sm:$0xff]
      %v3481 = vld [vmem:[%s300 + $0x11a] sm:$0xff]
      %v3482 = vld [vmem:[%s300 + $0x122] sm:$0xff]
      %v3483 = vld [vmem:[%s300 + $0x12a] sm:$0xff]
      %v3484 = vpack.c.bf16 %v3481, %v3480
      %v3485 = vpack.c.bf16 %v3483, %v3482
      %v3486 = vld [vmem:[%s1190] sm:$0x3]
      %v3488 = vsel %vm307, %v3484, 0
      %v3491 = vsel %vm307, %v3485, 0
      %v3494 = vsel %vm467, %v3486, 0
      %3496 = vmatprep.subr.bf16.mxu0 0
      %3497 = vmatpush1.bf16.msra.mxu0 %v3494
      %3498 = vmatprep.subr.bf16.mxu0 0
      %3499 = vmatpush1.bf16.msra.mxu0 0
      %3500 = vmatprep.subr.bf16.mxu0 0
      %3501 = vmatpush1.bf16.msra.mxu0 0
      %3502 = vmatprep.subr.bf16.mxu0 0
      %3503 = vmatpush1.bf16.msra.mxu0 0
      %3504 = vmatprep.subr.bf16.mxu0 0
      %3505 = vmatpush1.bf16.msra.mxu0 0
      %3506 = vmatprep.subr.bf16.mxu0 0
      %3507 = vmatpush1.bf16.msra.mxu0 0
      %3508 = vmatprep.subr.bf16.mxu0 0
      %3509 = vmatpush1.bf16.msra.mxu0 0
      %3510 = vmatprep.subr.bf16.mxu0 0
      %3511 = vmatpush1.bf16.msra.mxu0 0
      %3512 = vmatprep.subr.bf16.mxu0 0
      %3513 = vmatpush1.bf16.msra.mxu0 0
      %3514 = vmatprep.subr.bf16.mxu0 0
      %3515 = vmatpush1.bf16.msra.mxu0 0
      %3516 = vmatprep.subr.bf16.mxu0 0
      %3517 = vmatpush1.bf16.msra.mxu0 0
      %3518 = vmatprep.subr.bf16.mxu0 0
      %3519 = vmatpush1.bf16.msra.mxu0 0
      %3520 = vmatprep.subr.bf16.mxu0 0
      %3521 = vmatpush1.bf16.msra.mxu0 0
      %3522 = vmatprep.subr.bf16.mxu0 0
      %3523 = vmatpush1.bf16.msra.mxu0 0
      %3524 = vmatprep.subr.bf16.mxu0 0
      %3525 = vmatpush1.bf16.msra.mxu0 0
      %3526 = vmatprep.subr.bf16.mxu0 0
      %3527 = vmatpush1.bf16.msra.mxu0 0
      %3528 = vmatprep.mubr.bf16.mxu0 0
      %3529 = vmatmul.mubr.bf16.gmra.mrb[0].mxu0 %v3488
      %v3530 = vpop.f32.mrb[0].mxu0
      %v3531 = vadd.f32 0.0, %v3530
      %v3532 = vpop.f32.mrb[0].mxu0
      %v3533 = vpop.f32.mrb[0].mxu0
      %v3534 = vadd.f32 0.0, %v3533
      %v3535 = vpop.f32.mrb[0].mxu0
      %3536 = vmatprep.mubr.bf16.mxu0 0
      %3537 = vmatmul.mubr.bf16.gmra.mrb[0].mxu0 %v3491
      %v3538 = vpop.f32.mrb[0].mxu0
      %v3539 = vadd.f32 0.0, %v3538
      %v3540 = vpop.f32.mrb[0].mxu0
      %v3541 = vpop.f32.mrb[0].mxu0
      %v3542 = vadd.f32 0.0, %v3541
      %v3543 = vpop.f32.mrb[0].mxu0
      %3544 = vdwg.mxu0
      %v3545 = vadd.f32 %v3476, %v3531
      %v3546 = vadd.f32 %v3477, %v3534
      %v3547 = vadd.f32 %v3478, %v3539
      %v3548 = vadd.f32 %v3479, %v3542
      %v3549 = vld [vmem:[%s300 + $0x113] sm:$0xff]
      %v3550 = vld [vmem:[%s300 + $0x11b] sm:$0xff]
      %v3551 = vld [vmem:[%s300 + $0x123] sm:$0xff]
      %v3552 = vld [vmem:[%s300 + $0x12b] sm:$0xff]
      %v3553 = vpack.c.bf16 %v3550, %v3549
      %v3554 = vpack.c.bf16 %v3552, %v3551
      %v3555 = vld [vmem:[%s1486] sm:$0x3]
      %v3557 = vsel %vm307, %v3553, 0
      %v3560 = vsel %vm307, %v3554, 0
      %v3563 = vsel %vm467, %v3555, 0
      %3565 = vmatprep.subr.bf16.mxu0 0
      %3566 = vmatpush1.bf16.msra.mxu0 %v3563
      %3567 = vmatprep.subr.bf16.mxu0 0
      %3568 = vmatpush1.bf16.msra.mxu0 0
      %3569 = vmatprep.subr.bf16.mxu0 0
      %3570 = vmatpush1.bf16.msra.mxu0 0
      %3571 = vmatprep.subr.bf16.mxu0 0
      %3572 = vmatpush1.bf16.msra.mxu0 0
      %3573 = vmatprep.subr.bf16.mxu0 0
      %3574 = vmatpush1.bf16.msra.mxu0 0
      %3575 = vmatprep.subr.bf16.mxu0 0
      %3576 = vmatpush1.bf16.msra.mxu0 0
      %3577 = vmatprep.subr.bf16.mxu0 0
      %3578 = vmatpush1.bf16.msra.mxu0 0
      %3579 = vmatprep.subr.bf16.mxu0 0
      %3580 = vmatpush1.bf16.msra.mxu0 0
      %3581 = vmatprep.subr.bf16.mxu0 0
      %3582 = vmatpush1.bf16.msra.mxu0 0
      %3583 = vmatprep.subr.bf16.mxu0 0
      %3584 = vmatpush1.bf16.msra.mxu0 0
      %3585 = vmatprep.subr.bf16.mxu0 0
      %3586 = vmatpush1.bf16.msra.mxu0 0
      %3587 = vmatprep.subr.bf16.mxu0 0
      %3588 = vmatpush1.bf16.msra.mxu0 0
      %3589 = vmatprep.subr.bf16.mxu0 0
      %3590 = vmatpush1.bf16.msra.mxu0 0
      %3591 = vmatprep.subr.bf16.mxu0 0
      %3592 = vmatpush1.bf16.msra.mxu0 0
      %3593 = vmatprep.subr.bf16.mxu0 0
      %3594 = vmatpush1.bf16.msra.mxu0 0
      %3595 = vmatprep.subr.bf16.mxu0 0
      %3596 = vmatpush1.bf16.msra.mxu0 0
      %3597 = vmatprep.mubr.bf16.mxu0 0
      %3598 = vmatmul.mubr.bf16.gmra.mrb[0].mxu0 %v3557
      %v3599 = vpop.f32.mrb[0].mxu0
      %v3600 = vadd.f32 0.0, %v3599
      %v3601 = vpop.f32.mrb[0].mxu0
      %v3602 = vpop.f32.mrb[0].mxu0
      %v3603 = vadd.f32 0.0, %v3602
      %v3604 = vpop.f32.mrb[0].mxu0
      %3605 = vmatprep.mubr.bf16.mxu0 0
      %3606 = vmatmul.mubr.bf16.gmra.mrb[0].mxu0 %v3560
      %v3607 = vpop.f32.mrb[0].mxu0
      %v3608 = vadd.f32 0.0, %v3607
      %v3609 = vpop.f32.mrb[0].mxu0
      %v3610 = vpop.f32.mrb[0].mxu0
      %v3611 = vadd.f32 0.0, %v3610
      %v3612 = vpop.f32.mrb[0].mxu0
      %3613 = vdwg.mxu0
      %v3614 = vadd.f32 %v3545, %v3600
      %v3615 = vadd.f32 %v3546, %v3603
      %v3616 = vadd.f32 %v3547, %v3608
      %v3617 = vadd.f32 %v3548, %v3611
      %v3618 = vld [vmem:[%s300 + $0x114] sm:$0xff]
      %v3619 = vld [vmem:[%s300 + $0x11c] sm:$0xff]
      %v3620 = vld [vmem:[%s300 + $0x124] sm:$0xff]
      %v3621 = vld [vmem:[%s300 + $0x12c] sm:$0xff]
      %v3622 = vpack.c.bf16 %v3619, %v3618
      %v3623 = vpack.c.bf16 %v3621, %v3620
      %v3624 = vld [vmem:[%s1782] sm:$0x3]
      %v3626 = vsel %vm307, %v3622, 0
      %v3629 = vsel %vm307, %v3623, 0
      %v3632 = vsel %vm467, %v3624, 0
      %3634 = vmatprep.subr.bf16.mxu0 0
      %3635 = vmatpush1.bf16.msra.mxu0 %v3632
      %3636 = vmatprep.subr.bf16.mxu0 0
      %3637 = vmatpush1.bf16.msra.mxu0 0
      %3638 = vmatprep.subr.bf16.mxu0 0
      %3639 = vmatpush1.bf16.msra.mxu0 0
      %3640 = vmatprep.subr.bf16.mxu0 0
      %3641 = vmatpush1.bf16.msra.mxu0 0
      %3642 = vmatprep.subr.bf16.mxu0 0
      %3643 = vmatpush1.bf16.msra.mxu0 0
      %3644 = vmatprep.subr.bf16.mxu0 0
      %3645 = vmatpush1.bf16.msra.mxu0 0
      %3646 = vmatprep.subr.bf16.mxu0 0
      %3647 = vmatpush1.bf16.msra.mxu0 0
      %3648 = vmatprep.subr.bf16.mxu0 0
      %3649 = vmatpush1.bf16.msra.mxu0 0
      %3650 = vmatprep.subr.bf16.mxu0 0
      %3651 = vmatpush1.bf16.msra.mxu0 0
      %3652 = vmatprep.subr.bf16.mxu0 0
      %3653 = vmatpush1.bf16.msra.mxu0 0
      %3654 = vmatprep.subr.bf16.mxu0 0
      %3655 = vmatpush1.bf16.msra.mxu0 0
      %3656 = vmatprep.subr.bf16.mxu0 0
      %3657 = vmatpush1.bf16.msra.mxu0 0
      %3658 = vmatprep.subr.bf16.mxu0 0
      %3659 = vmatpush1.bf16.msra.mxu0 0
      %3660 = vmatprep.subr.bf16.mxu0 0
      %3661 = vmatpush1.bf16.msra.mxu0 0
      %3662 = vmatprep.subr.bf16.mxu0 0
      %3663 = vmatpush1.bf16.msra.mxu0 0
      %3664 = vmatprep.subr.bf16.mxu0 0
      %3665 = vmatpush1.bf16.msra.mxu0 0
      %3666 = vmatprep.mubr.bf16.mxu0 0
      %3667 = vmatmul.mubr.bf16.gmra.mrb[0].mxu0 %v3626
      %v3668 = vpop.f32.mrb[0].mxu0
      %v3669 = vadd.f32 0.0, %v3668
      %v3670 = vpop.f32.mrb[0].mxu0
      %v3671 = vpop.f32.mrb[0].mxu0
      %v3672 = vadd.f32 0.0, %v3671
      %v3673 = vpop.f32.mrb[0].mxu0
      %3674 = vmatprep.mubr.bf16.mxu0 0
      %3675 = vmatmul.mubr.bf16.gmra.mrb[0].mxu0 %v3629
      %v3676 = vpop.f32.mrb[0].mxu0
      %v3677 = vadd.f32 0.0, %v3676
      %v3678 = vpop.f32.mrb[0].mxu0
      %v3679 = vpop.f32.mrb[0].mxu0
      %v3680 = vadd.f32 0.0, %v3679
      %v3681 = vpop.f32.mrb[0].mxu0
      %3682 = vdwg.mxu0
      %v3683 = vadd.f32 %v3614, %v3669
      %v3684 = vadd.f32 %v3615, %v3672
      %v3685 = vadd.f32 %v3616, %v3677
      %v3686 = vadd.f32 %v3617, %v3680
      %v3687 = vld [vmem:[%s300 + $0x124] sm:$0xff]
      %v3688 = vld [vmem:[%s300 + $0x12c] sm:$0xff]
      %v3689 = vld [vmem:[%s300 + $0x134] sm:$0xff]
      %v3690 = vld [vmem:[%s300 + $0x13c] sm:$0xff]
      %v3691 = vpack.c.bf16 %v3688, %v3687
      %v3692 = vpack.c.bf16 %v3690, %v3689
      %v3693 = vld [vmem:[%s2078] sm:$0x3]
      %v3695 = vsel %vm307, %v3691, 0
      %v3698 = vsel %vm307, %v3692, 0
      %v3701 = vsel %vm467, %v3693, 0
      %3703 = vmatprep.subr.bf16.mxu0 0
      %3704 = vmatpush1.bf16.msra.mxu0 %v3701
      %3705 = vmatprep.subr.bf16.mxu0 0
      %3706 = vmatpush1.bf16.msra.mxu0 0
      %3707 = vmatprep.subr.bf16.mxu0 0
      %3708 = vmatpush1.bf16.msra.mxu0 0
      %3709 = vmatprep.subr.bf16.mxu0 0
      %3710 = vmatpush1.bf16.msra.mxu0 0
      %3711 = vmatprep.subr.bf16.mxu0 0
      %3712 = vmatpush1.bf16.msra.mxu0 0
      %3713 = vmatprep.subr.bf16.mxu0 0
      %3714 = vmatpush1.bf16.msra.mxu0 0
      %3715 = vmatprep.subr.bf16.mxu0 0
      %3716 = vmatpush1.bf16.msra.mxu0 0
      %3717 = vmatprep.subr.bf16.mxu0 0
      %3718 = vmatpush1.bf16.msra.mxu0 0
      %3719 = vmatprep.subr.bf16.mxu0 0
      %3720 = vmatpush1.bf16.msra.mxu0 0
      %3721 = vmatprep.subr.bf16.mxu0 0
      %3722 = vmatpush1.bf16.msra.mxu0 0
      %3723 = vmatprep.subr.bf16.mxu0 0
      %3724 = vmatpush1.bf16.msra.mxu0 0
      %3725 = vmatprep.subr.bf16.mxu0 0
      %3726 = vmatpush1.bf16.msra.mxu0 0
      %3727 = vmatprep.subr.bf16.mxu0 0
      %3728 = vmatpush1.bf16.msra.mxu0 0
      %3729 = vmatprep.subr.bf16.mxu0 0
      %3730 = vmatpush1.bf16.msra.mxu0 0
      %3731 = vmatprep.subr.bf16.mxu0 0
      %3732 = vmatpush1.bf16.msra.mxu0 0
      %3733 = vmatprep.subr.bf16.mxu0 0
      %3734 = vmatpush1.bf16.msra.mxu0 0
      %3735 = vmatprep.mubr.bf16.mxu0 0
      %3736 = vmatmul.mubr.bf16.gmra.mrb[0].mxu0 %v3695
      %v3737 = vpop.f32.mrb[0].mxu0
      %v3738 = vadd.f32 0.0, %v3737
      %v3739 = vpop.f32.mrb[0].mxu0
      %v3740 = vpop.f32.mrb[0].mxu0
      %v3741 = vadd.f32 0.0, %v3740
      %v3742 = vpop.f32.mrb[0].mxu0
      %3743 = vmatprep.mubr.bf16.mxu0 0
      %3744 = vmatmul.mubr.bf16.gmra.mrb[0].mxu0 %v3698
      %v3745 = vpop.f32.mrb[0].mxu0
      %v3746 = vadd.f32 0.0, %v3745
      %v3747 = vpop.f32.mrb[0].mxu0
      %v3748 = vpop.f32.mrb[0].mxu0
      %v3749 = vadd.f32 0.0, %v3748
      %v3750 = vpop.f32.mrb[0].mxu0
      %3751 = vdwg.mxu0
      %v3752 = vadd.f32 %v3683, %v3738
      %v3753 = vadd.f32 %v3684, %v3741
      %v3754 = vadd.f32 %v3685, %v3746
      %v3755 = vadd.f32 %v3686, %v3749
      %v3756 = vld [vmem:[%s300 + $0x125] sm:$0xff]
      %v3757 = vld [vmem:[%s300 + $0x12d] sm:$0xff]
      %v3758 = vld [vmem:[%s300 + $0x135] sm:$0xff]
      %v3759 = vld [vmem:[%s300 + $0x13d] sm:$0xff]
      %v3760 = vpack.c.bf16 %v3757, %v3756
      %v3761 = vpack.c.bf16 %v3759, %v3758
      %v3762 = vld [vmem:[%s2374] sm:$0x3]
      %v3764 = vsel %vm307, %v3760, 0
      %v3767 = vsel %vm307, %v3761, 0
      %v3770 = vsel %vm467, %v3762, 0
      %3772 = vmatprep.subr.bf16.mxu0 0
      %3773 = vmatpush1.bf16.msra.mxu0 %v3770
      %3774 = vmatprep.subr.bf16.mxu0 0
      %3775 = vmatpush1.bf16.msra.mxu0 0
      %3776 = vmatprep.subr.bf16.mxu0 0
      %3777 = vmatpush1.bf16.msra.mxu0 0
      %3778 = vmatprep.subr.bf16.mxu0 0
      %3779 = vmatpush1.bf16.msra.mxu0 0
      %3780 = vmatprep.subr.bf16.mxu0 0
      %3781 = vmatpush1.bf16.msra.mxu0 0
      %3782 = vmatprep.subr.bf16.mxu0 0
      %3783 = vmatpush1.bf16.msra.mxu0 0
      %3784 = vmatprep.subr.bf16.mxu0 0
      %3785 = vmatpush1.bf16.msra.mxu0 0
      %3786 = vmatprep.subr.bf16.mxu0 0
      %3787 = vmatpush1.bf16.msra.mxu0 0
      %3788 = vmatprep.subr.bf16.mxu0 0
      %3789 = vmatpush1.bf16.msra.mxu0 0
      %3790 = vmatprep.subr.bf16.mxu0 0
      %3791 = vmatpush1.bf16.msra.mxu0 0
      %3792 = vmatprep.subr.bf16.mxu0 0
      %3793 = vmatpush1.bf16.msra.mxu0 0
      %3794 = vmatprep.subr.bf16.mxu0 0
      %3795 = vmatpush1.bf16.msra.mxu0 0
      %3796 = vmatprep.subr.bf16.mxu0 0
      %3797 = vmatpush1.bf16.msra.mxu0 0
      %3798 = vmatprep.subr.bf16.mxu0 0
      %3799 = vmatpush1.bf16.msra.mxu0 0
      %3800 = vmatprep.subr.bf16.mxu0 0
      %3801 = vmatpush1.bf16.msra.mxu0 0
      %3802 = vmatprep.subr.bf16.mxu0 0
      %3803 = vmatpush1.bf16.msra.mxu0 0
      %3804 = vmatprep.mubr.bf16.mxu0 0
      %3805 = vmatmul.mubr.bf16.gmra.mrb[0].mxu0 %v3764
      %v3806 = vpop.f32.mrb[0].mxu0
      %v3807 = vadd.f32 0.0, %v3806
      %v3808 = vpop.f32.mrb[0].mxu0
      %v3809 = vpop.f32.mrb[0].mxu0
      %v3810 = vadd.f32 0.0, %v3809
      %v3811 = vpop.f32.mrb[0].mxu0
      %3812 = vmatprep.mubr.bf16.mxu0 0
      %3813 = vmatmul.mubr.bf16.gmra.mrb[0].mxu0 %v3767
      %v3814 = vpop.f32.mrb[0].mxu0
      %v3815 = vadd.f32 0.0, %v3814
      %v3816 = vpop.f32.mrb[0].mxu0
      %v3817 = vpop.f32.mrb[0].mxu0
      %v3818 = vadd.f32 0.0, %v3817
      %v3819 = vpop.f32.mrb[0].mxu0
      %3820 = vdwg.mxu0
      %v3821 = vadd.f32 %v3752, %v3807
      %v3822 = vadd.f32 %v3753, %v3810
      %v3823 = vadd.f32 %v3754, %v3815
      %v3824 = vadd.f32 %v3755, %v3818
      %v3825 = vld [vmem:[%s300 + $0x126] sm:$0xff]
      %v3826 = vld [vmem:[%s300 + $0x12e] sm:$0xff]
      %v3827 = vld [vmem:[%s300 + $0x136] sm:$0xff]
      %v3828 = vld [vmem:[%s300 + $0x13e] sm:$0xff]
      %v3829 = vpack.c.bf16 %v3826, %v3825
      %v3830 = vpack.c.bf16 %v3828, %v3827
      %v3831 = vld [vmem:[%s2670] sm:$0x3]
      %v3833 = vsel %vm307, %v3829, 0
      %v3836 = vsel %vm307, %v3830, 0
      %v3839 = vsel %vm467, %v3831, 0
      %3841 = vmatprep.subr.bf16.mxu0 0
      %3842 = vmatpush1.bf16.msra.mxu0 %v3839
      %3843 = vmatprep.subr.bf16.mxu0 0
      %3844 = vmatpush1.bf16.msra.mxu0 0
      %3845 = vmatprep.subr.bf16.mxu0 0
      %3846 = vmatpush1.bf16.msra.mxu0 0
      %3847 = vmatprep.subr.bf16.mxu0 0
      %3848 = vmatpush1.bf16.msra.mxu0 0
      %3849 = vmatprep.subr.bf16.mxu0 0
      %3850 = vmatpush1.bf16.msra.mxu0 0
      %3851 = vmatprep.subr.bf16.mxu0 0
      %3852 = vmatpush1.bf16.msra.mxu0 0
      %3853 = vmatprep.subr.bf16.mxu0 0
      %3854 = vmatpush1.bf16.msra.mxu0 0
      %3855 = vmatprep.subr.bf16.mxu0 0
      %3856 = vmatpush1.bf16.msra.mxu0 0
      %3857 = vmatprep.subr.bf16.mxu0 0
      %3858 = vmatpush1.bf16.msra.mxu0 0
      %3859 = vmatprep.subr.bf16.mxu0 0
      %3860 = vmatpush1.bf16.msra.mxu0 0
      %3861 = vmatprep.subr.bf16.mxu0 0
      %3862 = vmatpush1.bf16.msra.mxu0 0
      %3863 = vmatprep.subr.bf16.mxu0 0
      %3864 = vmatpush1.bf16.msra.mxu0 0
      %3865 = vmatprep.subr.bf16.mxu0 0
      %3866 = vmatpush1.bf16.msra.mxu0 0
      %3867 = vmatprep.subr.bf16.mxu0 0
      %3868 = vmatpush1.bf16.msra.mxu0 0
      %3869 = vmatprep.subr.bf16.mxu0 0
      %3870 = vmatpush1.bf16.msra.mxu0 0
      %3871 = vmatprep.subr.bf16.mxu0 0
      %3872 = vmatpush1.bf16.msra.mxu0 0
      %3873 = vmatprep.mubr.bf16.mxu0 0
      %3874 = vmatmul.mubr.bf16.gmra.mrb[0].mxu0 %v3833
      %v3875 = vpop.f32.mrb[0].mxu0
      %v3876 = vadd.f32 0.0, %v3875
      %v3877 = vpop.f32.mrb[0].mxu0
      %v3878 = vpop.f32.mrb[0].mxu0
      %v3879 = vadd.f32 0.0, %v3878
      %v3880 = vpop.f32.mrb[0].mxu0
      %3881 = vmatprep.mubr.bf16.mxu0 0
      %3882 = vmatmul.mubr.bf16.gmra.mrb[0].mxu0 %v3836
      %v3883 = vpop.f32.mrb[0].mxu0
      %v3884 = vadd.f32 0.0, %v3883
      %v3885 = vpop.f32.mrb[0].mxu0
      %v3886 = vpop.f32.mrb[0].mxu0
      %v3887 = vadd.f32 0.0, %v3886
      %v3888 = vpop.f32.mrb[0].mxu0
      %3889 = vdwg.mxu0
      %v3890 = vadd.f32 %v3821, %v3876
      %v3891 = vadd.f32 %v3822, %v3879
      %v3892 = vadd.f32 %v3823, %v3884
      %v3893 = vadd.f32 %v3824, %v3887
      %v3894 = vmul.f32 %v3890, %v2920
      %v3895 = vmul.f32 %v3891, %v2920
      %v3896 = vmul.f32 %v3892, %v2920
      %v3897 = vmul.f32 %v3893, %v2920
      %v3898 = vadd.f32 %v3894, %v2958
      %v3899 = vadd.f32 %v3895, %v2958
      %v3900 = vadd.f32 %v3896, %v2958
      %v3901 = vadd.f32 %v3897, %v2958
      %v3902 = vmax.f32 %v3898, 0.0
      %v3903 = vmax.f32 %v3899, 0.0
      %v3904 = vmax.f32 %v3900, 0.0
      %v3905 = vmax.f32 %v3901, 0.0
      %v3906 = vld [vmem:[%s7 + $0x100] sm:$0xff]
      %v3907 = vld [vmem:[%s7 + $0x108] sm:$0xff]
      %v3908 = vld [vmem:[%s7 + $0x110] sm:$0xff]
      %v3909 = vld [vmem:[%s7 + $0x118] sm:$0xff]
      %3911 = vset.pattern.permute.xlu0 0
      %3912 = vperm.xlu0 %3911, %v3906
      %v3913 = vpop.permute.xlu0 %3912
      %3916 = vset.pattern.permute.xlu0 0
      %3917 = vperm.xlu0 %3916, %v3907
      %v3918 = vpop.permute.xlu0 %3917
      %3921 = vset.pattern.permute.xlu0 0
      %3922 = vperm.xlu0 %3921, %v3908
      %v3923 = vpop.permute.xlu0 %3922
      %3926 = vset.pattern.permute.xlu0 0
      %3927 = vperm.xlu0 %3926, %v3909
      %v3928 = vpop.permute.xlu0 %3927
      %v3930 = vmul.f32 %v3902, %v3913
      %v3931 = vmul.f32 %v3903, %v3918
      %v3932 = vmul.f32 %v3904, %v3923
      %v3933 = vmul.f32 %v3905, %v3928
      %3934 = vst.msk [vmem:[#allocation2 + $0x113] sm:$0xff] %vm307, %v3930
      %3935 = vst.msk [vmem:[#allocation2 + $0x11b] sm:$0xff] %vm307, %v3931
      %3936 = vst.msk [vmem:[#allocation2 + $0x123] sm:$0xff] %vm307, %v3932
      %3937 = vst.msk [vmem:[#allocation2 + $0x12b] sm:$0xff] %vm307, %v3933
      %v3938 = vld [vmem:[#allocation2] sm:$0xff]
      %v3939 = vld [vmem:[#allocation2 + $0x8] sm:$0xff]
      %v3940 = vld [vmem:[#allocation2 + $0x10] sm:$0xff]
      %v3941 = vld [vmem:[#allocation2 + $0x18] sm:$0xff]
      %v3942 = vld [vmem:[#allocation2 + $0x20] sm:$0xff]
      %v3943 = vld [vmem:[#allocation2 + $0x28] sm:$0xff]
      %v3944 = vld [vmem:[#allocation2 + $0x30] sm:$0xff]
      %v3945 = vld [vmem:[#allocation2 + $0x38] sm:$0xff]
      %v3946 = vld [vmem:[#allocation2 + $0x40] sm:$0xff]
      %v3947 = vld [vmem:[#allocation2 + $0x48] sm:$0xff]
      %v3948 = vld [vmem:[#allocation2 + $0x50] sm:$0xff]
      %v3949 = vld [vmem:[#allocation2 + $0x58] sm:$0xff]
      %v3950 = vld [vmem:[#allocation2 + $0x60] sm:$0xff]
      %v3951 = vld [vmem:[#allocation2 + $0x68] sm:$0xff]
      %v3952 = vld [vmem:[#allocation2 + $0x70] sm:$0xff]
      %v3953 = vld [vmem:[#allocation2 + $0x78] sm:$0xff]
      %v3954 = vld [vmem:[#allocation2 + $0x80] sm:$0xff]
      %v3955 = vld [vmem:[#allocation2 + $0x88] sm:$0xff]
      %v3956 = vld [vmem:[#allocation2 + $0x90] sm:$0xff]
      %v3957 = vld [vmem:[#allocation2 + $0x98] sm:$0xff]
      %v3958 = vld [vmem:[#allocation2 + $0xa0] sm:$0xff]
      %v3959 = vld [vmem:[#allocation2 + $0xa8] sm:$0xff]
      %v3960 = vld [vmem:[#allocation2 + $0xb0] sm:$0xff]
      %v3961 = vld [vmem:[#allocation2 + $0xb8] sm:$0xff]
      %v3962 = vld [vmem:[#allocation2 + $0xc0] sm:$0xff]
      %v3963 = vld [vmem:[#allocation2 + $0xc8] sm:$0xff]
      %v3964 = vld [vmem:[#allocation2 + $0xd0] sm:$0xff]
      %v3965 = vld [vmem:[#allocation2 + $0xd8] sm:$0xff]
      %v3966 = vld [vmem:[#allocation2 + $0xe0] sm:$0xff]
      %v3967 = vld [vmem:[#allocation2 + $0xe8] sm:$0xff]
      %v3968 = vld [vmem:[#allocation2 + $0xf0] sm:$0xff]
      %v3969 = vld [vmem:[#allocation2 + $0xf8] sm:$0xff]
      %v3970 = vpack.c.bf16 %v3939, %v3938
      %v3971 = vpack.c.bf16 %v3941, %v3940
      %v3972 = vpack.c.bf16 %v3943, %v3942
      %v3973 = vpack.c.bf16 %v3945, %v3944
      %v3974 = vpack.c.bf16 %v3947, %v3946
      %v3975 = vpack.c.bf16 %v3949, %v3948
      %v3976 = vpack.c.bf16 %v3951, %v3950
      %v3977 = vpack.c.bf16 %v3953, %v3952
      %v3978 = vpack.c.bf16 %v3955, %v3954
      %v3979 = vpack.c.bf16 %v3957, %v3956
      %v3980 = vpack.c.bf16 %v3959, %v3958
      %v3981 = vpack.c.bf16 %v3961, %v3960
      %v3982 = vpack.c.bf16 %v3963, %v3962
      %v3983 = vpack.c.bf16 %v3965, %v3964
      %v3984 = vpack.c.bf16 %v3967, %v3966
      %v3985 = vpack.c.bf16 %v3969, %v3968
      %v3986 = vld [vmem:[%s2] sm:$0x3]
      %s3987 = scalar_lea.vmem [#allocation2], %s367
      %v3988 = vld [vmem:[%s3987] sm:$0xff]
      %v3989 = vld [vmem:[%s3987 + $0x8] sm:$0xff]
      %v3990 = vld [vmem:[%s3987 + $0x10] sm:$0xff]
      %v3991 = vld [vmem:[%s3987 + $0x18] sm:$0xff]
      %v3992 = vld [vmem:[%s3987 + $0x20] sm:$0xff]
      %v3993 = vld [vmem:[%s3987 + $0x28] sm:$0xff]
      %v3994 = vld [vmem:[%s3987 + $0x30] sm:$0xff]
      %v3995 = vld [vmem:[%s3987 + $0x38] sm:$0xff]
      %v3996 = vld [vmem:[%s3987 + $0x40] sm:$0xff]
      %v3997 = vld [vmem:[%s3987 + $0x48] sm:$0xff]
      %v3998 = vld [vmem:[%s3987 + $0x50] sm:$0xff]
      %v3999 = vld [vmem:[%s3987 + $0x58] sm:$0xff]
      %v4000 = vld [vmem:[%s3987 + $0x60] sm:$0xff]
      %v4001 = vld [vmem:[%s3987 + $0x68] sm:$0xff]
      %v4002 = vld [vmem:[%s3987 + $0x70] sm:$0xff]
      %v4003 = vld [vmem:[%s3987 + $0x78] sm:$0xff]
      %v4004 = vld [vmem:[%s3987 + $0x80] sm:$0xff]
      %v4005 = vld [vmem:[%s3987 + $0x88] sm:$0xff]
      %v4006 = vld [vmem:[%s3987 + $0x90] sm:$0xff]
      %v4007 = vld [vmem:[%s3987 + $0x98] sm:$0xff]
      %v4008 = vld [vmem:[%s3987 + $0xa0] sm:$0xff]
      %v4009 = vld [vmem:[%s3987 + $0xa8] sm:$0xff]
      %v4010 = vld [vmem:[%s3987 + $0xb0] sm:$0xff]
      %v4011 = vld [vmem:[%s3987 + $0xb8] sm:$0xff]
      %v4012 = vld [vmem:[%s3987 + $0xc0] sm:$0xff]
      %v4013 = vld [vmem:[%s3987 + $0xc8] sm:$0xff]
      %v4014 = vld [vmem:[%s3987 + $0xd0] sm:$0xff]
      %v4015 = vld [vmem:[%s3987 + $0xd8] sm:$0xff]
      %v4016 = vld [vmem:[%s3987 + $0xe0] sm:$0xff]
      %v4017 = vld [vmem:[%s3987 + $0xe8] sm:$0xff]
      %v4018 = vld [vmem:[%s3987 + $0xf0] sm:$0xff]
      %v4019 = vld [vmem:[%s3987 + $0xf8] sm:$0xff]
      %v4020 = vpack.c.bf16 %v3989, %v3988
      %v4021 = vpack.c.bf16 %v3991, %v3990
      %v4022 = vpack.c.bf16 %v3993, %v3992
      %v4023 = vpack.c.bf16 %v3995, %v3994
      %v4024 = vpack.c.bf16 %v3997, %v3996
      %v4025 = vpack.c.bf16 %v3999, %v3998
      %v4026 = vpack.c.bf16 %v4001, %v4000
      %v4027 = vpack.c.bf16 %v4003, %v4002
      %v4028 = vpack.c.bf16 %v4005, %v4004
      %v4029 = vpack.c.bf16 %v4007, %v4006
      %v4030 = vpack.c.bf16 %v4009, %v4008
      %v4031 = vpack.c.bf16 %v4011, %v4010
      %v4032 = vpack.c.bf16 %v4013, %v4012
      %v4033 = vpack.c.bf16 %v4015, %v4014
      %v4034 = vpack.c.bf16 %v4017, %v4016
      %v4035 = vpack.c.bf16 %v4019, %v4018
      %s4036 = scalar_lea.vmem %s2, 2
      %v4037 = vld [vmem:[%s4036] sm:$0x3]
      %v4039 = vsel %vm307, %v4020, 0
      %v4042 = vsel %vm307, %v4021, 0
      %v4045 = vsel %vm307, %v4022, 0
      %v4048 = vsel %vm307, %v4023, 0
      %v4051 = vsel %vm307, %v4024, 0
      %v4054 = vsel %vm307, %v4025, 0
      %v4057 = vsel %vm307, %v4026, 0
      %v4060 = vsel %vm307, %v4027, 0
      %v4063 = vsel %vm307, %v4028, 0
      %v4066 = vsel %vm307, %v4029, 0
      %v4069 = vsel %vm307, %v4030, 0
      %v4072 = vsel %vm307, %v4031, 0
      %v4075 = vsel %vm307, %v4032, 0
      %v4078 = vsel %vm307, %v4033, 0
      %v4081 = vsel %vm307, %v4034, 0
      %v4084 = vsel %vm307, %v4035, 0
      %v4087 = vsel %vm467, %v4037, 0
      %4089 = vmatprep.subr.bf16.mxu0 0
      %4090 = vmatpush1.bf16.msra.mxu0 %v4087
      %4091 = vmatprep.subr.bf16.mxu0 0
      %4092 = vmatpush1.bf16.msra.mxu0 0
      %4093 = vmatprep.subr.bf16.mxu0 0
      %4094 = vmatpush1.bf16.msra.mxu0 0
      %4095 = vmatprep.subr.bf16.mxu0 0
      %4096 = vmatpush1.bf16.msra.mxu0 0
      %4097 = vmatprep.subr.bf16.mxu0 0
      %4098 = vmatpush1.bf16.msra.mxu0 0
      %4099 = vmatprep.subr.bf16.mxu0 0
      %4100 = vmatpush1.bf16.msra.mxu0 0
      %4101 = vmatprep.subr.bf16.mxu0 0
      %4102 = vmatpush1.bf16.msra.mxu0 0
      %4103 = vmatprep.subr.bf16.mxu0 0
      %4104 = vmatpush1.bf16.msra.mxu0 0
      %4105 = vmatprep.subr.bf16.mxu0 0
      %4106 = vmatpush1.bf16.msra.mxu0 0
      %4107 = vmatprep.subr.bf16.mxu0 0
      %4108 = vmatpush1.bf16.msra.mxu0 0
      %4109 = vmatprep.subr.bf16.mxu0 0
      %4110 = vmatpush1.bf16.msra.mxu0 0
      %4111 = vmatprep.subr.bf16.mxu0 0
      %4112 = vmatpush1.bf16.msra.mxu0 0
      %4113 = vmatprep.subr.bf16.mxu0 0
      %4114 = vmatpush1.bf16.msra.mxu0 0
      %4115 = vmatprep.subr.bf16.mxu0 0
      %4116 = vmatpush1.bf16.msra.mxu0 0
      %4117 = vmatprep.subr.bf16.mxu0 0
      %4118 = vmatpush1.bf16.msra.mxu0 0
      %4119 = vmatprep.subr.bf16.mxu0 0
      %4120 = vmatpush1.bf16.msra.mxu0 0
      %4121 = vmatprep.mubr.bf16.mxu0 0
      %4122 = vmatmul.mubr.bf16.gmra.mrb[0].mxu0 %v4039
      %v4123 = vpop.f32.mrb[0].mxu0
      %v4124 = vadd.f32 0.0, %v4123
      %v4125 = vpop.f32.mrb[0].mxu0
      %v4126 = vpop.f32.mrb[0].mxu0
      %v4127 = vadd.f32 0.0, %v4126
      %v4128 = vpop.f32.mrb[0].mxu0
      %4129 = vmatprep.mubr.bf16.mxu0 0
      %4130 = vmatmul.mubr.bf16.gmra.mrb[0].mxu0 %v4042
      %v4131 = vpop.f32.mrb[0].mxu0
      %v4132 = vadd.f32 0.0, %v4131
      %v4133 = vpop.f32.mrb[0].mxu0
      %v4134 = vpop.f32.mrb[0].mxu0
      %v4135 = vadd.f32 0.0, %v4134
      %v4136 = vpop.f32.mrb[0].mxu0
      %4137 = vmatprep.mubr.bf16.mxu0 0
      %4138 = vmatmul.mubr.bf16.gmra.mrb[0].mxu0 %v4045
      %v4139 = vpop.f32.mrb[0].mxu0
      %v4140 = vadd.f32 0.0, %v4139
      %v4141 = vpop.f32.mrb[0].mxu0
      %v4142 = vpop.f32.mrb[0].mxu0
      %v4143 = vadd.f32 0.0, %v4142
      %v4144 = vpop.f32.mrb[0].mxu0
      %4145 = vmatprep.mubr.bf16.mxu0 0
      %4146 = vmatmul.mubr.bf16.gmra.mrb[0].mxu0 %v4048
      %v4147 = vpop.f32.mrb[0].mxu0
      %v4148 = vadd.f32 0.0, %v4147
      %v4149 = vpop.f32.mrb[0].mxu0
      %v4150 = vpop.f32.mrb[0].mxu0
      %v4151 = vadd.f32 0.0, %v4150
      %v4152 = vpop.f32.mrb[0].mxu0
      %4153 = vmatprep.mubr.bf16.mxu0 0
      %4154 = vmatmul.mubr.bf16.gmra.mrb[0].mxu0 %v4051
      %v4155 = vpop.f32.mrb[0].mxu0
      %v4156 = vadd.f32 0.0, %v4155
      %v4157 = vpop.f32.mrb[0].mxu0
      %v4158 = vpop.f32.mrb[0].mxu0
      %v4159 = vadd.f32 0.0, %v4158
      %v4160 = vpop.f32.mrb[0].mxu0
      %4161 = vmatprep.mubr.bf16.mxu0 0
      %4162 = vmatmul.mubr.bf16.gmra.mrb[0].mxu0 %v4054
      %v4163 = vpop.f32.mrb[0].mxu0
      %v4164 = vadd.f32 0.0, %v4163
      %v4165 = vpop.f32.mrb[0].mxu0
      %v4166 = vpop.f32.mrb[0].mxu0
      %v4167 = vadd.f32 0.0, %v4166
      %v4168 = vpop.f32.mrb[0].mxu0
      %4169 = vmatprep.mubr.bf16.mxu0 0
      %4170 = vmatmul.mubr.bf16.gmra.mrb[0].mxu0 %v4057
      %v4171 = vpop.f32.mrb[0].mxu0
      %v4172 = vadd.f32 0.0, %v4171
      %v4173 = vpop.f32.mrb[0].mxu0
      %v4174 = vpop.f32.mrb[0].mxu0
      %v4175 = vadd.f32 0.0, %v4174
      %v4176 = vpop.f32.mrb[0].mxu0
      %4177 = vmatprep.mubr.bf16.mxu0 0
      %4178 = vmatmul.mubr.bf16.gmra.mrb[0].mxu0 %v4060
      %v4179 = vpop.f32.mrb[0].mxu0
      %v4180 = vadd.f32 0.0, %v4179
      %v4181 = vpop.f32.mrb[0].mxu0
      %v4182 = vpop.f32.mrb[0].mxu0
      %v4183 = vadd.f32 0.0, %v4182
      %v4184 = vpop.f32.mrb[0].mxu0
      %4185 = vmatprep.mubr.bf16.mxu0 0
      %4186 = vmatmul.mubr.bf16.gmra.mrb[0].mxu0 %v4063
      %v4187 = vpop.f32.mrb[0].mxu0
      %v4188 = vadd.f32 0.0, %v4187
      %v4189 = vpop.f32.mrb[0].mxu0
      %v4190 = vpop.f32.mrb[0].mxu0
      %v4191 = vadd.f32 0.0, %v4190
      %v4192 = vpop.f32.mrb[0].mxu0
      %4193 = vmatprep.mubr.bf16.mxu0 0
      %4194 = vmatmul.mubr.bf16.gmra.mrb[0].mxu0 %v4066
      %v4195 = vpop.f32.mrb[0].mxu0
      %v4196 = vadd.f32 0.0, %v4195
      %v4197 = vpop.f32.mrb[0].mxu0
      %v4198 = vpop.f32.mrb[0].mxu0
      %v4199 = vadd.f32 0.0, %v4198
      %v4200 = vpop.f32.mrb[0].mxu0
      %4201 = vmatprep.mubr.bf16.mxu0 0
      %4202 = vmatmul.mubr.bf16.gmra.mrb[0].mxu0 %v4069
      %v4203 = vpop.f32.mrb[0].mxu0
      %v4204 = vadd.f32 0.0, %v4203
      %v4205 = vpop.f32.mrb[0].mxu0
      %v4206 = vpop.f32.mrb[0].mxu0
      %v4207 = vadd.f32 0.0, %v4206
      %v4208 = vpop.f32.mrb[0].mxu0
      %4209 = vmatprep.mubr.bf16.mxu0 0
      %4210 = vmatmul.mubr.bf16.gmra.mrb[0].mxu0 %v4072
      %v4211 = vpop.f32.mrb[0].mxu0
      %v4212 = vadd.f32 0.0, %v4211
      %v4213 = vpop.f32.mrb[0].mxu0
      %v4214 = vpop.f32.mrb[0].mxu0
      %v4215 = vadd.f32 0.0, %v4214
      %v4216 = vpop.f32.mrb[0].mxu0
      %4217 = vmatprep.mubr.bf16.mxu0 0
      %4218 = vmatmul.mubr.bf16.gmra.mrb[0].mxu0 %v4075
      %v4219 = vpop.f32.mrb[0].mxu0
      %v4220 = vadd.f32 0.0, %v4219
      %v4221 = vpop.f32.mrb[0].mxu0
      %v4222 = vpop.f32.mrb[0].mxu0
      %v4223 = vadd.f32 0.0, %v4222
      %v4224 = vpop.f32.mrb[0].mxu0
      %4225 = vmatprep.mubr.bf16.mxu0 0
      %4226 = vmatmul.mubr.bf16.gmra.mrb[0].mxu0 %v4078
      %v4227 = vpop.f32.mrb[0].mxu0
      %v4228 = vadd.f32 0.0, %v4227
      %v4229 = vpop.f32.mrb[0].mxu0
      %v4230 = vpop.f32.mrb[0].mxu0
      %v4231 = vadd.f32 0.0, %v4230
      %v4232 = vpop.f32.mrb[0].mxu0
      %4233 = vmatprep.mubr.bf16.mxu0 0
      %4234 = vmatmul.mubr.bf16.gmra.mrb[0].mxu0 %v4081
      %v4235 = vpop.f32.mrb[0].mxu0
      %v4236 = vadd.f32 0.0, %v4235
      %v4237 = vpop.f32.mrb[0].mxu0
      %v4238 = vpop.f32.mrb[0].mxu0
      %v4239 = vadd.f32 0.0, %v4238
      %v4240 = vpop.f32.mrb[0].mxu0
      %4241 = vmatprep.mubr.bf16.mxu0 0
      %4242 = vmatmul.mubr.bf16.gmra.mrb[0].mxu0 %v4084
      %v4243 = vpop.f32.mrb[0].mxu0
      %v4244 = vadd.f32 0.0, %v4243
      %v4245 = vpop.f32.mrb[0].mxu0
      %v4246 = vpop.f32.mrb[0].mxu0
      %v4247 = vadd.f32 0.0, %v4246
      %v4248 = vpop.f32.mrb[0].mxu0
      %4249 = vdwg.mxu0
      %v4251 = vsel %vm307, %v3970, 0
      %v4254 = vsel %vm307, %v3971, 0
      %v4257 = vsel %vm307, %v3972, 0
      %v4260 = vsel %vm307, %v3973, 0
      %v4263 = vsel %vm307, %v3974, 0
      %v4266 = vsel %vm307, %v3975, 0
      %v4269 = vsel %vm307, %v3976, 0
      %v4272 = vsel %vm307, %v3977, 0
      %v4275 = vsel %vm307, %v3978, 0
      %v4278 = vsel %vm307, %v3979, 0
      %v4281 = vsel %vm307, %v3980, 0
      %v4284 = vsel %vm307, %v3981, 0
      %v4287 = vsel %vm307, %v3982, 0
      %v4290 = vsel %vm307, %v3983, 0
      %v4293 = vsel %vm307, %v3984, 0
      %v4296 = vsel %vm307, %v3985, 0
      %v4299 = vsel %vm467, %v3986, 0
      %4301 = vmatprep.subr.bf16.mxu0 0
      %4302 = vmatpush1.bf16.msra.mxu0 %v4299
      %4303 = vmatprep.subr.bf16.mxu0 0
      %4304 = vmatpush1.bf16.msra.mxu0 0
      %4305 = vmatprep.subr.bf16.mxu0 0
      %4306 = vmatpush1.bf16.msra.mxu0 0
      %4307 = vmatprep.subr.bf16.mxu0 0
      %4308 = vmatpush1.bf16.msra.mxu0 0
      %4309 = vmatprep.subr.bf16.mxu0 0
      %4310 = vmatpush1.bf16.msra.mxu0 0
      %4311 = vmatprep.subr.bf16.mxu0 0
      %4312 = vmatpush1.bf16.msra.mxu0 0
      %4313 = vmatprep.subr.bf16.mxu0 0
      %4314 = vmatpush1.bf16.msra.mxu0 0
      %4315 = vmatprep.subr.bf16.mxu0 0
      %4316 = vmatpush1.bf16.msra.mxu0 0
      %4317 = vmatprep.subr.bf16.mxu0 0
      %4318 = vmatpush1.bf16.msra.mxu0 0
      %4319 = vmatprep.subr.bf16.mxu0 0
      %4320 = vmatpush1.bf16.msra.mxu0 0
      %4321 = vmatprep.subr.bf16.mxu0 0
      %4322 = vmatpush1.bf16.msra.mxu0 0
      %4323 = vmatprep.subr.bf16.mxu0 0
      %4324 = vmatpush1.bf16.msra.mxu0 0
      %4325 = vmatprep.subr.bf16.mxu0 0
      %4326 = vmatpush1.bf16.msra.mxu0 0
      %4327 = vmatprep.subr.bf16.mxu0 0
      %4328 = vmatpush1.bf16.msra.mxu0 0
      %4329 = vmatprep.subr.bf16.mxu0 0
      %4330 = vmatpush1.bf16.msra.mxu0 0
      %4331 = vmatprep.subr.bf16.mxu0 0
      %4332 = vmatpush1.bf16.msra.mxu0 0
      %4333 = vmatprep.mubr.bf16.mxu0 0
      %4334 = vmatmul.mubr.bf16.gmra.mrb[0].mxu0 %v4251
      %v4335 = vpop.f32.mrb[0].mxu0
      %v4336 = vadd.f32 %v4124, %v4335
      %v4337 = vpop.f32.mrb[0].mxu0
      %v4338 = vpop.f32.mrb[0].mxu0
      %v4339 = vadd.f32 %v4127, %v4338
      %v4340 = vpop.f32.mrb[0].mxu0
      %4341 = vmatprep.mubr.bf16.mxu0 0
      %4342 = vmatmul.mubr.bf16.gmra.mrb[0].mxu0 %v4254
      %v4343 = vpop.f32.mrb[0].mxu0
      %v4344 = vadd.f32 %v4132, %v4343
      %v4345 = vpop.f32.mrb[0].mxu0
      %v4346 = vpop.f32.mrb[0].mxu0
      %v4347 = vadd.f32 %v4135, %v4346
      %v4348 = vpop.f32.mrb[0].mxu0
      %4349 = vmatprep.mubr.bf16.mxu0 0
      %4350 = vmatmul.mubr.bf16.gmra.mrb[0].mxu0 %v4257
      %v4351 = vpop.f32.mrb[0].mxu0
      %v4352 = vadd.f32 %v4140, %v4351
      %v4353 = vpop.f32.mrb[0].mxu0
      %v4354 = vpop.f32.mrb[0].mxu0
      %v4355 = vadd.f32 %v4143, %v4354
      %v4356 = vpop.f32.mrb[0].mxu0
      %4357 = vmatprep.mubr.bf16.mxu0 0
      %4358 = vmatmul.mubr.bf16.gmra.mrb[0].mxu0 %v4260
      %v4359 = vpop.f32.mrb[0].mxu0
      %v4360 = vadd.f32 %v4148, %v4359
      %v4361 = vpop.f32.mrb[0].mxu0
      %v4362 = vpop.f32.mrb[0].mxu0
      %v4363 = vadd.f32 %v4151, %v4362
      %v4364 = vpop.f32.mrb[0].mxu0
      %4365 = vmatprep.mubr.bf16.mxu0 0
      %4366 = vmatmul.mubr.bf16.gmra.mrb[0].mxu0 %v4263
      %v4367 = vpop.f32.mrb[0].mxu0
      %v4368 = vadd.f32 %v4156, %v4367
      %v4369 = vpop.f32.mrb[0].mxu0
      %v4370 = vpop.f32.mrb[0].mxu0
      %v4371 = vadd.f32 %v4159, %v4370
      %v4372 = vpop.f32.mrb[0].mxu0
      %4373 = vmatprep.mubr.bf16.mxu0 0
      %4374 = vmatmul.mubr.bf16.gmra.mrb[0].mxu0 %v4266
      %v4375 = vpop.f32.mrb[0].mxu0
      %v4376 = vadd.f32 %v4164, %v4375
      %v4377 = vpop.f32.mrb[0].mxu0
      %v4378 = vpop.f32.mrb[0].mxu0
      %v4379 = vadd.f32 %v4167, %v4378
      %v4380 = vpop.f32.mrb[0].mxu0
      %4381 = vmatprep.mubr.bf16.mxu0 0
      %4382 = vmatmul.mubr.bf16.gmra.mrb[0].mxu0 %v4269
      %v4383 = vpop.f32.mrb[0].mxu0
      %v4384 = vadd.f32 %v4172, %v4383
      %v4385 = vpop.f32.mrb[0].mxu0
      %v4386 = vpop.f32.mrb[0].mxu0
      %v4387 = vadd.f32 %v4175, %v4386
      %v4388 = vpop.f32.mrb[0].mxu0
      %4389 = vmatprep.mubr.bf16.mxu0 0
      %4390 = vmatmul.mubr.bf16.gmra.mrb[0].mxu0 %v4272
      %v4391 = vpop.f32.mrb[0].mxu0
      %v4392 = vadd.f32 %v4180, %v4391
      %v4393 = vpop.f32.mrb[0].mxu0
      %v4394 = vpop.f32.mrb[0].mxu0
      %v4395 = vadd.f32 %v4183, %v4394
      %v4396 = vpop.f32.mrb[0].mxu0
      %4397 = vmatprep.mubr.bf16.mxu0 0
      %4398 = vmatmul.mubr.bf16.gmra.mrb[0].mxu0 %v4275
      %v4399 = vpop.f32.mrb[0].mxu0
      %v4400 = vadd.f32 %v4188, %v4399
      %v4401 = vpop.f32.mrb[0].mxu0
      %v4402 = vpop.f32.mrb[0].mxu0
      %v4403 = vadd.f32 %v4191, %v4402
      %v4404 = vpop.f32.mrb[0].mxu0
      %4405 = vmatprep.mubr.bf16.mxu0 0
      %4406 = vmatmul.mubr.bf16.gmra.mrb[0].mxu0 %v4278
      %v4407 = vpop.f32.mrb[0].mxu0
      %v4408 = vadd.f32 %v4196, %v4407
      %v4409 = vpop.f32.mrb[0].mxu0
      %v4410 = vpop.f32.mrb[0].mxu0
      %v4411 = vadd.f32 %v4199, %v4410
      %v4412 = vpop.f32.mrb[0].mxu0
      %4413 = vmatprep.mubr.bf16.mxu0 0
      %4414 = vmatmul.mubr.bf16.gmra.mrb[0].mxu0 %v4281
      %v4415 = vpop.f32.mrb[0].mxu0
      %v4416 = vadd.f32 %v4204, %v4415
      %v4417 = vpop.f32.mrb[0].mxu0
      %v4418 = vpop.f32.mrb[0].mxu0
      %v4419 = vadd.f32 %v4207, %v4418
      %v4420 = vpop.f32.mrb[0].mxu0
      %4421 = vmatprep.mubr.bf16.mxu0 0
      %4422 = vmatmul.mubr.bf16.gmra.mrb[0].mxu0 %v4284
      %v4423 = vpop.f32.mrb[0].mxu0
      %v4424 = vadd.f32 %v4212, %v4423
      %v4425 = vpop.f32.mrb[0].mxu0
      %v4426 = vpop.f32.mrb[0].mxu0
      %v4427 = vadd.f32 %v4215, %v4426
      %v4428 = vpop.f32.mrb[0].mxu0
      %4429 = vmatprep.mubr.bf16.mxu0 0
      %4430 = vmatmul.mubr.bf16.gmra.mrb[0].mxu0 %v4287
      %v4431 = vpop.f32.mrb[0].mxu0
      %v4432 = vadd.f32 %v4220, %v4431
      %v4433 = vpop.f32.mrb[0].mxu0
      %v4434 = vpop.f32.mrb[0].mxu0
      %v4435 = vadd.f32 %v4223, %v4434
      %v4436 = vpop.f32.mrb[0].mxu0
      %4437 = vmatprep.mubr.bf16.mxu0 0
      %4438 = vmatmul.mubr.bf16.gmra.mrb[0].mxu0 %v4290
      %v4439 = vpop.f32.mrb[0].mxu0
      %v4440 = vadd.f32 %v4228, %v4439
      %v4441 = vpop.f32.mrb[0].mxu0
      %v4442 = vpop.f32.mrb[0].mxu0
      %v4443 = vadd.f32 %v4231, %v4442
      %v4444 = vpop.f32.mrb[0].mxu0
      %4445 = vmatprep.mubr.bf16.mxu0 0
      %4446 = vmatmul.mubr.bf16.gmra.mrb[0].mxu0 %v4293
      %v4447 = vpop.f32.mrb[0].mxu0
      %v4448 = vadd.f32 %v4236, %v4447
      %v4449 = vpop.f32.mrb[0].mxu0
      %v4450 = vpop.f32.mrb[0].mxu0
      %v4451 = vadd.f32 %v4239, %v4450
      %v4452 = vpop.f32.mrb[0].mxu0
      %4453 = vmatprep.mubr.bf16.mxu0 0
      %4454 = vmatmul.mubr.bf16.gmra.mrb[0].mxu0 %v4296
      %v4455 = vpop.f32.mrb[0].mxu0
      %v4456 = vadd.f32 %v4244, %v4455
      %v4457 = vpop.f32.mrb[0].mxu0
      %v4458 = vpop.f32.mrb[0].mxu0
      %v4459 = vadd.f32 %v4247, %v4458
      %v4460 = vpop.f32.mrb[0].mxu0
      %4461 = vdwg.mxu0
      %s4462 = scalar_lea.vmem [#allocation2], %s844
      %v4463 = vld [vmem:[%s4462] sm:$0xff]
      %v4464 = vld [vmem:[%s4462 + $0x8] sm:$0xff]
      %v4465 = vld [vmem:[%s4462 + $0x10] sm:$0xff]
      %v4466 = vld [vmem:[%s4462 + $0x18] sm:$0xff]
      %v4467 = vld [vmem:[%s4462 + $0x20] sm:$0xff]
      %v4468 = vld [vmem:[%s4462 + $0x28] sm:$0xff]
      %v4469 = vld [vmem:[%s4462 + $0x30] sm:$0xff]
      %v4470 = vld [vmem:[%s4462 + $0x38] sm:$0xff]
      %v4471 = vld [vmem:[%s4462 + $0x40] sm:$0xff]
      %v4472 = vld [vmem:[%s4462 + $0x48] sm:$0xff]
      %v4473 = vld [vmem:[%s4462 + $0x50] sm:$0xff]
      %v4474 = vld [vmem:[%s4462 + $0x58] sm:$0xff]
      %v4475 = vld [vmem:[%s4462 + $0x60] sm:$0xff]
      %v4476 = vld [vmem:[%s4462 + $0x68] sm:$0xff]
      %v4477 = vld [vmem:[%s4462 + $0x70] sm:$0xff]
      %v4478 = vld [vmem:[%s4462 + $0x78] sm:$0xff]
      %v4479 = vld [vmem:[%s4462 + $0x80] sm:$0xff]
      %v4480 = vld [vmem:[%s4462 + $0x88] sm:$0xff]
      %v4481 = vld [vmem:[%s4462 + $0x90] sm:$0xff]
      %v4482 = vld [vmem:[%s4462 + $0x98] sm:$0xff]
      %v4483 = vld [vmem:[%s4462 + $0xa0] sm:$0xff]
      %v4484 = vld [vmem:[%s4462 + $0xa8] sm:$0xff]
      %v4485 = vld [vmem:[%s4462 + $0xb0] sm:$0xff]
      %v4486 = vld [vmem:[%s4462 + $0xb8] sm:$0xff]
      %v4487 = vld [vmem:[%s4462 + $0xc0] sm:$0xff]
      %v4488 = vld [vmem:[%s4462 + $0xc8] sm:$0xff]
      %v4489 = vld [vmem:[%s4462 + $0xd0] sm:$0xff]
      %v4490 = vld [vmem:[%s4462 + $0xd8] sm:$0xff]
      %v4491 = vld [vmem:[%s4462 + $0xe0] sm:$0xff]
      %v4492 = vld [vmem:[%s4462 + $0xe8] sm:$0xff]
      %v4493 = vld [vmem:[%s4462 + $0xf0] sm:$0xff]
      %v4494 = vld [vmem:[%s4462 + $0xf8] sm:$0xff]
      %v4495 = vpack.c.bf16 %v4464, %v4463
      %v4496 = vpack.c.bf16 %v4466, %v4465
      %v4497 = vpack.c.bf16 %v4468, %v4467
      %v4498 = vpack.c.bf16 %v4470, %v4469
      %v4499 = vpack.c.bf16 %v4472, %v4471
      %v4500 = vpack.c.bf16 %v4474, %v4473
      %v4501 = vpack.c.bf16 %v4476, %v4475
      %v4502 = vpack.c.bf16 %v4478, %v4477
      %v4503 = vpack.c.bf16 %v4480, %v4479
      %v4504 = vpack.c.bf16 %v4482, %v4481
      %v4505 = vpack.c.bf16 %v4484, %v4483
      %v4506 = vpack.c.bf16 %v4486, %v4485
      %v4507 = vpack.c.bf16 %v4488, %v4487
      %v4508 = vpack.c.bf16 %v4490, %v4489
      %v4509 = vpack.c.bf16 %v4492, %v4491
      %v4510 = vpack.c.bf16 %v4494, %v4493
      %s4511 = scalar_lea.vmem %s2, 4
      %v4512 = vld [vmem:[%s4511] sm:$0x3]
      %v4514 = vsel %vm307, %v4495, 0
      %v4517 = vsel %vm307, %v4496, 0
      %v4520 = vsel %vm307, %v4497, 0
      %v4523 = vsel %vm307, %v4498, 0
      %v4526 = vsel %vm307, %v4499, 0
      %v4529 = vsel %vm307, %v4500, 0
      %v4532 = vsel %vm307, %v4501, 0
      %v4535 = vsel %vm307, %v4502, 0
      %v4538 = vsel %vm307, %v4503, 0
      %v4541 = vsel %vm307, %v4504, 0
      %v4544 = vsel %vm307, %v4505, 0
      %v4547 = vsel %vm307, %v4506, 0
      %v4550 = vsel %vm307, %v4507, 0
      %v4553 = vsel %vm307, %v4508, 0
      %v4556 = vsel %vm307, %v4509, 0
      %v4559 = vsel %vm307, %v4510, 0
      %v4562 = vsel %vm467, %v4512, 0
      %4564 = vmatprep.subr.bf16.mxu0 0
      %4565 = vmatpush1.bf16.msra.mxu0 %v4562
      %4566 = vmatprep.subr.bf16.mxu0 0
      %4567 = vmatpush1.bf16.msra.mxu0 0
      %4568 = vmatprep.subr.bf16.mxu0 0
      %4569 = vmatpush1.bf16.msra.mxu0 0
      %4570 = vmatprep.subr.bf16.mxu0 0
      %4571 = vmatpush1.bf16.msra.mxu0 0
      %4572 = vmatprep.subr.bf16.mxu0 0
      %4573 = vmatpush1.bf16.msra.mxu0 0
      %4574 = vmatprep.subr.bf16.mxu0 0
      %4575 = vmatpush1.bf16.msra.mxu0 0
      %4576 = vmatprep.subr.bf16.mxu0 0
      %4577 = vmatpush1.bf16.msra.mxu0 0
      %4578 = vmatprep.subr.bf16.mxu0 0
      %4579 = vmatpush1.bf16.msra.mxu0 0
      %4580 = vmatprep.subr.bf16.mxu0 0
      %4581 = vmatpush1.bf16.msra.mxu0 0
      %4582 = vmatprep.subr.bf16.mxu0 0
      %4583 = vmatpush1.bf16.msra.mxu0 0
      %4584 = vmatprep.subr.bf16.mxu0 0
      %4585 = vmatpush1.bf16.msra.mxu0 0
      %4586 = vmatprep.subr.bf16.mxu0 0
      %4587 = vmatpush1.bf16.msra.mxu0 0
      %4588 = vmatprep.subr.bf16.mxu0 0
      %4589 = vmatpush1.bf16.msra.mxu0 0
      %4590 = vmatprep.subr.bf16.mxu0 0
      %4591 = vmatpush1.bf16.msra.mxu0 0
      %4592 = vmatprep.subr.bf16.mxu0 0
      %4593 = vmatpush1.bf16.msra.mxu0 0
      %4594 = vmatprep.subr.bf16.mxu0 0
      %4595 = vmatpush1.bf16.msra.mxu0 0
      %4596 = vmatprep.mubr.bf16.mxu0 0
      %4597 = vmatmul.mubr.bf16.gmra.mrb[0].mxu0 %v4514
      %v4598 = vpop.f32.mrb[0].mxu0
      %v4599 = vadd.f32 0.0, %v4598
      %v4600 = vpop.f32.mrb[0].mxu0
      %v4601 = vpop.f32.mrb[0].mxu0
      %v4602 = vadd.f32 0.0, %v4601
      %v4603 = vpop.f32.mrb[0].mxu0
      %4604 = vmatprep.mubr.bf16.mxu0 0
      %4605 = vmatmul.mubr.bf16.gmra.mrb[0].mxu0 %v4517
      %v4606 = vpop.f32.mrb[0].mxu0
      %v4607 = vadd.f32 0.0, %v4606
      %v4608 = vpop.f32.mrb[0].mxu0
      %v4609 = vpop.f32.mrb[0].mxu0
      %v4610 = vadd.f32 0.0, %v4609
      %v4611 = vpop.f32.mrb[0].mxu0
      %4612 = vmatprep.mubr.bf16.mxu0 0
      %4613 = vmatmul.mubr.bf16.gmra.mrb[0].mxu0 %v4520
      %v4614 = vpop.f32.mrb[0].mxu0
      %v4615 = vadd.f32 0.0, %v4614
      %v4616 = vpop.f32.mrb[0].mxu0
      %v4617 = vpop.f32.mrb[0].mxu0
      %v4618 = vadd.f32 0.0, %v4617
      %v4619 = vpop.f32.mrb[0].mxu0
      %4620 = vmatprep.mubr.bf16.mxu0 0
      %4621 = vmatmul.mubr.bf16.gmra.mrb[0].mxu0 %v4523
      %v4622 = vpop.f32.mrb[0].mxu0
      %v4623 = vadd.f32 0.0, %v4622
      %v4624 = vpop.f32.mrb[0].mxu0
      %v4625 = vpop.f32.mrb[0].mxu0
      %v4626 = vadd.f32 0.0, %v4625
      %v4627 = vpop.f32.mrb[0].mxu0
      %4628 = vmatprep.mubr.bf16.mxu0 0
      %4629 = vmatmul.mubr.bf16.gmra.mrb[0].mxu0 %v4526
      %v4630 = vpop.f32.mrb[0].mxu0
      %v4631 = vadd.f32 0.0, %v4630
      %v4632 = vpop.f32.mrb[0].mxu0
      %v4633 = vpop.f32.mrb[0].mxu0
      %v4634 = vadd.f32 0.0, %v4633
      %v4635 = vpop.f32.mrb[0].mxu0
      %4636 = vmatprep.mubr.bf16.mxu0 0
      %4637 = vmatmul.mubr.bf16.gmra.mrb[0].mxu0 %v4529
      %v4638 = vpop.f32.mrb[0].mxu0
      %v4639 = vadd.f32 0.0, %v4638
      %v4640 = vpop.f32.mrb[0].mxu0
      %v4641 = vpop.f32.mrb[0].mxu0
      %v4642 = vadd.f32 0.0, %v4641
      %v4643 = vpop.f32.mrb[0].mxu0
      %4644 = vmatprep.mubr.bf16.mxu0 0
      %4645 = vmatmul.mubr.bf16.gmra.mrb[0].mxu0 %v4532
      %v4646 = vpop.f32.mrb[0].mxu0
      %v4647 = vadd.f32 0.0, %v4646
      %v4648 = vpop.f32.mrb[0].mxu0
      %v4649 = vpop.f32.mrb[0].mxu0
      %v4650 = vadd.f32 0.0, %v4649
      %v4651 = vpop.f32.mrb[0].mxu0
      %4652 = vmatprep.mubr.bf16.mxu0 0
      %4653 = vmatmul.mubr.bf16.gmra.mrb[0].mxu0 %v4535
      %v4654 = vpop.f32.mrb[0].mxu0
      %v4655 = vadd.f32 0.0, %v4654
      %v4656 = vpop.f32.mrb[0].mxu0
      %v4657 = vpop.f32.mrb[0].mxu0
      %v4658 = vadd.f32 0.0, %v4657
      %v4659 = vpop.f32.mrb[0].mxu0
      %4660 = vmatprep.mubr.bf16.mxu0 0
      %4661 = vmatmul.mubr.bf16.gmra.mrb[0].mxu0 %v4538
      %v4662 = vpop.f32.mrb[0].mxu0
      %v4663 = vadd.f32 0.0, %v4662
      %v4664 = vpop.f32.mrb[0].mxu0
      %v4665 = vpop.f32.mrb[0].mxu0
      %v4666 = vadd.f32 0.0, %v4665
      %v4667 = vpop.f32.mrb[0].mxu0
      %4668 = vmatprep.mubr.bf16.mxu0 0
      %4669 = vmatmul.mubr.bf16.gmra.mrb[0].mxu0 %v4541
      %v4670 = vpop.f32.mrb[0].mxu0
      %v4671 = vadd.f32 0.0, %v4670
      %v4672 = vpop.f32.mrb[0].mxu0
      %v4673 = vpop.f32.mrb[0].mxu0
      %v4674 = vadd.f32 0.0, %v4673
      %v4675 = vpop.f32.mrb[0].mxu0
      %4676 = vmatprep.mubr.bf16.mxu0 0
      %4677 = vmatmul.mubr.bf16.gmra.mrb[0].mxu0 %v4544
      %v4678 = vpop.f32.mrb[0].mxu0
      %v4679 = vadd.f32 0.0, %v4678
      %v4680 = vpop.f32.mrb[0].mxu0
      %v4681 = vpop.f32.mrb[0].mxu0
      %v4682 = vadd.f32 0.0, %v4681
      %v4683 = vpop.f32.mrb[0].mxu0
      %4684 = vmatprep.mubr.bf16.mxu0 0
      %4685 = vmatmul.mubr.bf16.gmra.mrb[0].mxu0 %v4547
      %v4686 = vpop.f32.mrb[0].mxu0
      %v4687 = vadd.f32 0.0, %v4686
      %v4688 = vpop.f32.mrb[0].mxu0
      %v4689 = vpop.f32.mrb[0].mxu0
      %v4690 = vadd.f32 0.0, %v4689
      %v4691 = vpop.f32.mrb[0].mxu0
      %4692 = vmatprep.mubr.bf16.mxu0 0
      %4693 = vmatmul.mubr.bf16.gmra.mrb[0].mxu0 %v4550
      %v4694 = vpop.f32.mrb[0].mxu0
      %v4695 = vadd.f32 0.0, %v4694
      %v4696 = vpop.f32.mrb[0].mxu0
      %v4697 = vpop.f32.mrb[0].mxu0
      %v4698 = vadd.f32 0.0, %v4697
      %v4699 = vpop.f32.mrb[0].mxu0
      %4700 = vmatprep.mubr.bf16.mxu0 0
      %4701 = vmatmul.mubr.bf16.gmra.mrb[0].mxu0 %v4553
      %v4702 = vpop.f32.mrb[0].mxu0
      %v4703 = vadd.f32 0.0, %v4702
      %v4704 = vpop.f32.mrb[0].mxu0
      %v4705 = vpop.f32.mrb[0].mxu0
      %v4706 = vadd.f32 0.0, %v4705
      %v4707 = vpop.f32.mrb[0].mxu0
      %4708 = vmatprep.mubr.bf16.mxu0 0
      %4709 = vmatmul.mubr.bf16.gmra.mrb[0].mxu0 %v4556
      %v4710 = vpop.f32.mrb[0].mxu0
      %v4711 = vadd.f32 0.0, %v4710
      %v4712 = vpop.f32.mrb[0].mxu0
      %v4713 = vpop.f32.mrb[0].mxu0
      %v4714 = vadd.f32 0.0, %v4713
      %v4715 = vpop.f32.mrb[0].mxu0
      %4716 = vmatprep.mubr.bf16.mxu0 0
      %4717 = vmatmul.mubr.bf16.gmra.mrb[0].mxu0 %v4559
      %v4718 = vpop.f32.mrb[0].mxu0
      %v4719 = vadd.f32 0.0, %v4718
      %v4720 = vpop.f32.mrb[0].mxu0
      %v4721 = vpop.f32.mrb[0].mxu0
      %v4722 = vadd.f32 0.0, %v4721
      %v4723 = vpop.f32.mrb[0].mxu0
      %4724 = vdwg.mxu0
      %v4725 = vadd.f32 %v4336, %v4599
      %v4726 = vadd.f32 %v4339, %v4602
      %v4727 = vadd.f32 %v4344, %v4607
      %v4728 = vadd.f32 %v4347, %v4610
      %v4729 = vadd.f32 %v4352, %v4615
      %v4730 = vadd.f32 %v4355, %v4618
      %v4731 = vadd.f32 %v4360, %v4623
      %v4732 = vadd.f32 %v4363, %v4626
      %v4733 = vadd.f32 %v4368, %v4631
      %v4734 = vadd.f32 %v4371, %v4634
      %v4735 = vadd.f32 %v4376, %v4639
      %v4736 = vadd.f32 %v4379, %v4642
      %v4737 = vadd.f32 %v4384, %v4647
      %v4738 = vadd.f32 %v4387, %v4650
      %v4739 = vadd.f32 %v4392, %v4655
      %v4740 = vadd.f32 %v4395, %v4658
      %v4741 = vadd.f32 %v4400, %v4663
      %v4742 = vadd.f32 %v4403, %v4666
      %v4743 = vadd.f32 %v4408, %v4671
      %v4744 = vadd.f32 %v4411, %v4674
      %v4745 = vadd.f32 %v4416, %v4679
      %v4746 = vadd.f32 %v4419, %v4682
      %v4747 = vadd.f32 %v4424, %v4687
      %v4748 = vadd.f32 %v4427, %v4690
      %v4749 = vadd.f32 %v4432, %v4695
      %v4750 = vadd.f32 %v4435, %v4698
      %v4751 = vadd.f32 %v4440, %v4703
      %v4752 = vadd.f32 %v4443, %v4706
      %v4753 = vadd.f32 %v4448, %v4711
      %v4754 = vadd.f32 %v4451, %v4714
      %v4755 = vadd.f32 %v4456, %v4719
      %v4756 = vadd.f32 %v4459, %v4722
      %s4757 = scalar_lea.vmem [#allocation2], %s1140
      %v4758 = vld [vmem:[%s4757] sm:$0xff]
      %v4759 = vld [vmem:[%s4757 + $0x8] sm:$0xff]
      %v4760 = vld [vmem:[%s4757 + $0x10] sm:$0xff]
      %v4761 = vld [vmem:[%s4757 + $0x18] sm:$0xff]
      %v4762 = vld [vmem:[%s4757 + $0x20] sm:$0xff]
      %v4763 = vld [vmem:[%s4757 + $0x28] sm:$0xff]
      %v4764 = vld [vmem:[%s4757 + $0x30] sm:$0xff]
      %v4765 = vld [vmem:[%s4757 + $0x38] sm:$0xff]
      %v4766 = vld [vmem:[%s4757 + $0x40] sm:$0xff]
      %v4767 = vld [vmem:[%s4757 + $0x48] sm:$0xff]
      %v4768 = vld [vmem:[%s4757 + $0x50] sm:$0xff]
      %v4769 = vld [vmem:[%s4757 + $0x58] sm:$0xff]
      %v4770 = vld [vmem:[%s4757 + $0x60] sm:$0xff]
      %v4771 = vld [vmem:[%s4757 + $0x68] sm:$0xff]
      %v4772 = vld [vmem:[%s4757 + $0x70] sm:$0xff]
      %v4773 = vld [vmem:[%s4757 + $0x78] sm:$0xff]
      %v4774 = vld [vmem:[%s4757 + $0x80] sm:$0xff]
      %v4775 = vld [vmem:[%s4757 + $0x88] sm:$0xff]
      %v4776 = vld [vmem:[%s4757 + $0x90] sm:$0xff]
      %v4777 = vld [vmem:[%s4757 + $0x98] sm:$0xff]
      %v4778 = vld [vmem:[%s4757 + $0xa0] sm:$0xff]
      %v4779 = vld [vmem:[%s4757 + $0xa8] sm:$0xff]
      %v4780 = vld [vmem:[%s4757 + $0xb0] sm:$0xff]
      %v4781 = vld [vmem:[%s4757 + $0xb8] sm:$0xff]
      %v4782 = vld [vmem:[%s4757 + $0xc0] sm:$0xff]
      %v4783 = vld [vmem:[%s4757 + $0xc8] sm:$0xff]
      %v4784 = vld [vmem:[%s4757 + $0xd0] sm:$0xff]
      %v4785 = vld [vmem:[%s4757 + $0xd8] sm:$0xff]
      %v4786 = vld [vmem:[%s4757 + $0xe0] sm:$0xff]
      %v4787 = vld [vmem:[%s4757 + $0xe8] sm:$0xff]
      %v4788 = vld [vmem:[%s4757 + $0xf0] sm:$0xff]
      %v4789 = vld [vmem:[%s4757 + $0xf8] sm:$0xff]
      %v4790 = vpack.c.bf16 %v4759, %v4758
      %v4791 = vpack.c.bf16 %v4761, %v4760
      %v4792 = vpack.c.bf16 %v4763, %v4762
      %v4793 = vpack.c.bf16 %v4765, %v4764
      %v4794 = vpack.c.bf16 %v4767, %v4766
      %v4795 = vpack.c.bf16 %v4769, %v4768
      %v4796 = vpack.c.bf16 %v4771, %v4770
      %v4797 = vpack.c.bf16 %v4773, %v4772
      %v4798 = vpack.c.bf16 %v4775, %v4774
      %v4799 = vpack.c.bf16 %v4777, %v4776
      %v4800 = vpack.c.bf16 %v4779, %v4778
      %v4801 = vpack.c.bf16 %v4781, %v4780
      %v4802 = vpack.c.bf16 %v4783, %v4782
      %v4803 = vpack.c.bf16 %v4785, %v4784
      %v4804 = vpack.c.bf16 %v4787, %v4786
      %v4805 = vpack.c.bf16 %v4789, %v4788
      %s4806 = scalar_lea.vmem %s2, 6
      %v4807 = vld [vmem:[%s4806] sm:$0x3]
      %v4809 = vsel %vm307, %v4790, 0
      %v4812 = vsel %vm307, %v4791, 0
      %v4815 = vsel %vm307, %v4792, 0
      %v4818 = vsel %vm307, %v4793, 0
      %v4821 = vsel %vm307, %v4794, 0
      %v4824 = vsel %vm307, %v4795, 0
      %v4827 = vsel %vm307, %v4796, 0
      %v4830 = vsel %vm307, %v4797, 0
      %v4833 = vsel %vm307, %v4798, 0
      %v4836 = vsel %vm307, %v4799, 0
      %v4839 = vsel %vm307, %v4800, 0
      %v4842 = vsel %vm307, %v4801, 0
      %v4845 = vsel %vm307, %v4802, 0
      %v4848 = vsel %vm307, %v4803, 0
      %v4851 = vsel %vm307, %v4804, 0
      %v4854 = vsel %vm307, %v4805, 0
      %v4857 = vsel %vm467, %v4807, 0
      %4859 = vmatprep.subr.bf16.mxu0 0
      %4860 = vmatpush1.bf16.msra.mxu0 %v4857
      %4861 = vmatprep.subr.bf16.mxu0 0
      %4862 = vmatpush1.bf16.msra.mxu0 0
      %4863 = vmatprep.subr.bf16.mxu0 0
      %4864 = vmatpush1.bf16.msra.mxu0 0
      %4865 = vmatprep.subr.bf16.mxu0 0
      %4866 = vmatpush1.bf16.msra.mxu0 0
      %4867 = vmatprep.subr.bf16.mxu0 0
      %4868 = vmatpush1.bf16.msra.mxu0 0
      %4869 = vmatprep.subr.bf16.mxu0 0
      %4870 = vmatpush1.bf16.msra.mxu0 0
      %4871 = vmatprep.subr.bf16.mxu0 0
      %4872 = vmatpush1.bf16.msra.mxu0 0
      %4873 = vmatprep.subr.bf16.mxu0 0
      %4874 = vmatpush1.bf16.msra.mxu0 0
      %4875 = vmatprep.subr.bf16.mxu0 0
      %4876 = vmatpush1.bf16.msra.mxu0 0
      %4877 = vmatprep.subr.bf16.mxu0 0
      %4878 = vmatpush1.bf16.msra.mxu0 0
      %4879 = vmatprep.subr.bf16.mxu0 0
      %4880 = vmatpush1.bf16.msra.mxu0 0
      %4881 = vmatprep.subr.bf16.mxu0 0
      %4882 = vmatpush1.bf16.msra.mxu0 0
      %4883 = vmatprep.subr.bf16.mxu0 0
      %4884 = vmatpush1.bf16.msra.mxu0 0
      %4885 = vmatprep.subr.bf16.mxu0 0
      %4886 = vmatpush1.bf16.msra.mxu0 0
      %4887 = vmatprep.subr.bf16.mxu0 0
      %4888 = vmatpush1.bf16.msra.mxu0 0
      %4889 = vmatprep.subr.bf16.mxu0 0
      %4890 = vmatpush1.bf16.msra.mxu0 0
      %4891 = vmatprep.mubr.bf16.mxu0 0
      %4892 = vmatmul.mubr.bf16.gmra.mrb[0].mxu0 %v4809
      %v4893 = vpop.f32.mrb[0].mxu0
      %v4894 = vadd.f32 0.0, %v4893
      %v4895 = vpop.f32.mrb[0].mxu0
      %v4896 = vpop.f32.mrb[0].mxu0
      %v4897 = vadd.f32 0.0, %v4896
      %v4898 = vpop.f32.mrb[0].mxu0
      %4899 = vmatprep.mubr.bf16.mxu0 0
      %4900 = vmatmul.mubr.bf16.gmra.mrb[0].mxu0 %v4812
      %v4901 = vpop.f32.mrb[0].mxu0
      %v4902 = vadd.f32 0.0, %v4901
      %v4903 = vpop.f32.mrb[0].mxu0
      %v4904 = vpop.f32.mrb[0].mxu0
      %v4905 = vadd.f32 0.0, %v4904
      %v4906 = vpop.f32.mrb[0].mxu0
      %4907 = vmatprep.mubr.bf16.mxu0 0
      %4908 = vmatmul.mubr.bf16.gmra.mrb[0].mxu0 %v4815
      %v4909 = vpop.f32.mrb[0].mxu0
      %v4910 = vadd.f32 0.0, %v4909
      %v4911 = vpop.f32.mrb[0].mxu0
      %v4912 = vpop.f32.mrb[0].mxu0
      %v4913 = vadd.f32 0.0, %v4912
      %v4914 = vpop.f32.mrb[0].mxu0
      %4915 = vmatprep.mubr.bf16.mxu0 0
      %4916 = vmatmul.mubr.bf16.gmra.mrb[0].mxu0 %v4818
      %v4917 = vpop.f32.mrb[0].mxu0
      %v4918 = vadd.f32 0.0, %v4917
      %v4919 = vpop.f32.mrb[0].mxu0
      %v4920 = vpop.f32.mrb[0].mxu0
      %v4921 = vadd.f32 0.0, %v4920
      %v4922 = vpop.f32.mrb[0].mxu0
      %4923 = vmatprep.mubr.bf16.mxu0 0
      %4924 = vmatmul.mubr.bf16.gmra.mrb[0].mxu0 %v4821
      %v4925 = vpop.f32.mrb[0].mxu0
      %v4926 = vadd.f32 0.0, %v4925
      %v4927 = vpop.f32.mrb[0].mxu0
      %v4928 = vpop.f32.mrb[0].mxu0
      %v4929 = vadd.f32 0.0, %v4928
      %v4930 = vpop.f32.mrb[0].mxu0
      %4931 = vmatprep.mubr.bf16.mxu0 0
      %4932 = vmatmul.mubr.bf16.gmra.mrb[0].mxu0 %v4824
      %v4933 = vpop.f32.mrb[0].mxu0
      %v4934 = vadd.f32 0.0, %v4933
      %v4935 = vpop.f32.mrb[0].mxu0
      %v4936 = vpop.f32.mrb[0].mxu0
      %v4937 = vadd.f32 0.0, %v4936
      %v4938 = vpop.f32.mrb[0].mxu0
      %4939 = vmatprep.mubr.bf16.mxu0 0
      %4940 = vmatmul.mubr.bf16.gmra.mrb[0].mxu0 %v4827
      %v4941 = vpop.f32.mrb[0].mxu0
      %v4942 = vadd.f32 0.0, %v4941
      %v4943 = vpop.f32.mrb[0].mxu0
      %v4944 = vpop.f32.mrb[0].mxu0
      %v4945 = vadd.f32 0.0, %v4944
      %v4946 = vpop.f32.mrb[0].mxu0
      %4947 = vmatprep.mubr.bf16.mxu0 0
      %4948 = vmatmul.mubr.bf16.gmra.mrb[0].mxu0 %v4830
      %v4949 = vpop.f32.mrb[0].mxu0
      %v4950 = vadd.f32 0.0, %v4949
      %v4951 = vpop.f32.mrb[0].mxu0
      %v4952 = vpop.f32.mrb[0].mxu0
      %v4953 = vadd.f32 0.0, %v4952
      %v4954 = vpop.f32.mrb[0].mxu0
      %4955 = vmatprep.mubr.bf16.mxu0 0
      %4956 = vmatmul.mubr.bf16.gmra.mrb[0].mxu0 %v4833
      %v4957 = vpop.f32.mrb[0].mxu0
      %v4958 = vadd.f32 0.0, %v4957
      %v4959 = vpop.f32.mrb[0].mxu0
      %v4960 = vpop.f32.mrb[0].mxu0
      %v4961 = vadd.f32 0.0, %v4960
      %v4962 = vpop.f32.mrb[0].mxu0
      %4963 = vmatprep.mubr.bf16.mxu0 0
      %4964 = vmatmul.mubr.bf16.gmra.mrb[0].mxu0 %v4836
      %v4965 = vpop.f32.mrb[0].mxu0
      %v4966 = vadd.f32 0.0, %v4965
      %v4967 = vpop.f32.mrb[0].mxu0
      %v4968 = vpop.f32.mrb[0].mxu0
      %v4969 = vadd.f32 0.0, %v4968
      %v4970 = vpop.f32.mrb[0].mxu0
      %4971 = vmatprep.mubr.bf16.mxu0 0
      %4972 = vmatmul.mubr.bf16.gmra.mrb[0].mxu0 %v4839
      %v4973 = vpop.f32.mrb[0].mxu0
      %v4974 = vadd.f32 0.0, %v4973
      %v4975 = vpop.f32.mrb[0].mxu0
      %v4976 = vpop.f32.mrb[0].mxu0
      %v4977 = vadd.f32 0.0, %v4976
      %v4978 = vpop.f32.mrb[0].mxu0
      %4979 = vmatprep.mubr.bf16.mxu0 0
      %4980 = vmatmul.mubr.bf16.gmra.mrb[0].mxu0 %v4842
      %v4981 = vpop.f32.mrb[0].mxu0
      %v4982 = vadd.f32 0.0, %v4981
      %v4983 = vpop.f32.mrb[0].mxu0
      %v4984 = vpop.f32.mrb[0].mxu0
      %v4985 = vadd.f32 0.0, %v4984
      %v4986 = vpop.f32.mrb[0].mxu0
      %4987 = vmatprep.mubr.bf16.mxu0 0
      %4988 = vmatmul.mubr.bf16.gmra.mrb[0].mxu0 %v4845
      %v4989 = vpop.f32.mrb[0].mxu0
      %v4990 = vadd.f32 0.0, %v4989
      %v4991 = vpop.f32.mrb[0].mxu0
      %v4992 = vpop.f32.mrb[0].mxu0
      %v4993 = vadd.f32 0.0, %v4992
      %v4994 = vpop.f32.mrb[0].mxu0
      %4995 = vmatprep.mubr.bf16.mxu0 0
      %4996 = vmatmul.mubr.bf16.gmra.mrb[0].mxu0 %v4848
      %v4997 = vpop.f32.mrb[0].mxu0
      %v4998 = vadd.f32 0.0, %v4997
      %v4999 = vpop.f32.mrb[0].mxu0
      %v5000 = vpop.f32.mrb[0].mxu0
      %v5001 = vadd.f32 0.0, %v5000
      %v5002 = vpop.f32.mrb[0].mxu0
      %5003 = vmatprep.mubr.bf16.mxu0 0
      %5004 = vmatmul.mubr.bf16.gmra.mrb[0].mxu0 %v4851
      %v5005 = vpop.f32.mrb[0].mxu0
      %v5006 = vadd.f32 0.0, %v5005
      %v5007 = vpop.f32.mrb[0].mxu0
      %v5008 = vpop.f32.mrb[0].mxu0
      %v5009 = vadd.f32 0.0, %v5008
      %v5010 = vpop.f32.mrb[0].mxu0
      %5011 = vmatprep.mubr.bf16.mxu0 0
      %5012 = vmatmul.mubr.bf16.gmra.mrb[0].mxu0 %v4854
      %v5013 = vpop.f32.mrb[0].mxu0
      %v5014 = vadd.f32 0.0, %v5013
      %v5015 = vpop.f32.mrb[0].mxu0
      %v5016 = vpop.f32.mrb[0].mxu0
      %v5017 = vadd.f32 0.0, %v5016
      %v5018 = vpop.f32.mrb[0].mxu0
      %5019 = vdwg.mxu0
      %v5020 = vadd.f32 %v4725, %v4894
      %v5021 = vadd.f32 %v4726, %v4897
      %v5022 = vadd.f32 %v4727, %v4902
      %v5023 = vadd.f32 %v4728, %v4905
      %v5024 = vadd.f32 %v4729, %v4910
      %v5025 = vadd.f32 %v4730, %v4913
      %v5026 = vadd.f32 %v4731, %v4918
      %v5027 = vadd.f32 %v4732, %v4921
      %v5028 = vadd.f32 %v4733, %v4926
      %v5029 = vadd.f32 %v4734, %v4929
      %v5030 = vadd.f32 %v4735, %v4934
      %v5031 = vadd.f32 %v4736, %v4937
      %v5032 = vadd.f32 %v4737, %v4942
      %v5033 = vadd.f32 %v4738, %v4945
      %v5034 = vadd.f32 %v4739, %v4950
      %v5035 = vadd.f32 %v4740, %v4953
      %v5036 = vadd.f32 %v4741, %v4958
      %v5037 = vadd.f32 %v4742, %v4961
      %v5038 = vadd.f32 %v4743, %v4966
      %v5039 = vadd.f32 %v4744, %v4969
      %v5040 = vadd.f32 %v4745, %v4974
      %v5041 = vadd.f32 %v4746, %v4977
      %v5042 = vadd.f32 %v4747, %v4982
      %v5043 = vadd.f32 %v4748, %v4985
      %v5044 = vadd.f32 %v4749, %v4990
      %v5045 = vadd.f32 %v4750, %v4993
      %v5046 = vadd.f32 %v4751, %v4998
      %v5047 = vadd.f32 %v4752, %v5001
      %v5048 = vadd.f32 %v4753, %v5006
      %v5049 = vadd.f32 %v4754, %v5009
      %v5050 = vadd.f32 %v4755, %v5014
      %v5051 = vadd.f32 %v4756, %v5017
      %v5052 = vld [vmem:[%s3248] sm:$0xff]
      %v5053 = vld [vmem:[%s3248 + $0x8] sm:$0xff]
      %v5054 = vld [vmem:[%s3248 + $0x10] sm:$0xff]
      %v5055 = vld [vmem:[%s3248 + $0x18] sm:$0xff]
      %v5056 = vld [vmem:[%s3248 + $0x20] sm:$0xff]
      %v5057 = vld [vmem:[%s3248 + $0x28] sm:$0xff]
      %v5058 = vld [vmem:[%s3248 + $0x30] sm:$0xff]
      %v5059 = vld [vmem:[%s3248 + $0x38] sm:$0xff]
      %v5060 = vld [vmem:[%s3248 + $0x40] sm:$0xff]
      %v5061 = vld [vmem:[%s3248 + $0x48] sm:$0xff]
      %v5062 = vld [vmem:[%s3248 + $0x50] sm:$0xff]
      %v5063 = vld [vmem:[%s3248 + $0x58] sm:$0xff]
      %v5064 = vld [vmem:[%s3248 + $0x60] sm:$0xff]
      %v5065 = vld [vmem:[%s3248 + $0x68] sm:$0xff]
      %v5066 = vld [vmem:[%s3248 + $0x70] sm:$0xff]
      %v5067 = vld [vmem:[%s3248 + $0x78] sm:$0xff]
      %v5068 = vld [vmem:[%s3248 + $0x80] sm:$0xff]
      %v5069 = vld [vmem:[%s3248 + $0x88] sm:$0xff]
      %v5070 = vld [vmem:[%s3248 + $0x90] sm:$0xff]
      %v5071 = vld [vmem:[%s3248 + $0x98] sm:$0xff]
      %v5072 = vld [vmem:[%s3248 + $0xa0] sm:$0xff]
      %v5073 = vld [vmem:[%s3248 + $0xa8] sm:$0xff]
      %v5074 = vld [vmem:[%s3248 + $0xb0] sm:$0xff]
      %v5075 = vld [vmem:[%s3248 + $0xb8] sm:$0xff]
      %v5076 = vld [vmem:[%s3248 + $0xc0] sm:$0xff]
      %v5077 = vld [vmem:[%s3248 + $0xc8] sm:$0xff]
      %v5078 = vld [vmem:[%s3248 + $0xd0] sm:$0xff]
      %v5079 = vld [vmem:[%s3248 + $0xd8] sm:$0xff]
      %v5080 = vld [vmem:[%s3248 + $0xe0] sm:$0xff]
      %v5081 = vld [vmem:[%s3248 + $0xe8] sm:$0xff]
      %v5082 = vld [vmem:[%s3248 + $0xf0] sm:$0xff]
      %v5083 = vld [vmem:[%s3248 + $0xf8] sm:$0xff]
      %v5084 = vpack.c.bf16 %v5053, %v5052
      %v5085 = vpack.c.bf16 %v5055, %v5054
      %v5086 = vpack.c.bf16 %v5057, %v5056
      %v5087 = vpack.c.bf16 %v5059, %v5058
      %v5088 = vpack.c.bf16 %v5061, %v5060
      %v5089 = vpack.c.bf16 %v5063, %v5062
      %v5090 = vpack.c.bf16 %v5065, %v5064
      %v5091 = vpack.c.bf16 %v5067, %v5066
      %v5092 = vpack.c.bf16 %v5069, %v5068
      %v5093 = vpack.c.bf16 %v5071, %v5070
      %v5094 = vpack.c.bf16 %v5073, %v5072
      %v5095 = vpack.c.bf16 %v5075, %v5074
      %v5096 = vpack.c.bf16 %v5077, %v5076
      %v5097 = vpack.c.bf16 %v5079, %v5078
      %v5098 = vpack.c.bf16 %v5081, %v5080
      %v5099 = vpack.c.bf16 %v5083, %v5082
      %s5100 = scalar_lea.vmem %s2, 8
      %v5101 = vld [vmem:[%s5100] sm:$0x3]
      %v5103 = vsel %vm307, %v5084, 0
      %v5106 = vsel %vm307, %v5085, 0
      %v5109 = vsel %vm307, %v5086, 0
      %v5112 = vsel %vm307, %v5087, 0
      %v5115 = vsel %vm307, %v5088, 0
      %v5118 = vsel %vm307, %v5089, 0
      %v5121 = vsel %vm307, %v5090, 0
      %v5124 = vsel %vm307, %v5091, 0
      %v5127 = vsel %vm307, %v5092, 0
      %v5130 = vsel %vm307, %v5093, 0
      %v5133 = vsel %vm307, %v5094, 0
      %v5136 = vsel %vm307, %v5095, 0
      %v5139 = vsel %vm307, %v5096, 0
      %v5142 = vsel %vm307, %v5097, 0
      %v5145 = vsel %vm307, %v5098, 0
      %v5148 = vsel %vm307, %v5099, 0
      %v5151 = vsel %vm467, %v5101, 0
      %5153 = vmatprep.subr.bf16.mxu0 0
      %5154 = vmatpush1.bf16.msra.mxu0 %v5151
      %5155 = vmatprep.subr.bf16.mxu0 0
      %5156 = vmatpush1.bf16.msra.mxu0 0
      %5157 = vmatprep.subr.bf16.mxu0 0
      %5158 = vmatpush1.bf16.msra.mxu0 0
      %5159 = vmatprep.subr.bf16.mxu0 0
      %5160 = vmatpush1.bf16.msra.mxu0 0
      %5161 = vmatprep.subr.bf16.mxu0 0
      %5162 = vmatpush1.bf16.msra.mxu0 0
      %5163 = vmatprep.subr.bf16.mxu0 0
      %5164 = vmatpush1.bf16.msra.mxu0 0
      %5165 = vmatprep.subr.bf16.mxu0 0
      %5166 = vmatpush1.bf16.msra.mxu0 0
      %5167 = vmatprep.subr.bf16.mxu0 0
      %5168 = vmatpush1.bf16.msra.mxu0 0
      %5169 = vmatprep.subr.bf16.mxu0 0
      %5170 = vmatpush1.bf16.msra.mxu0 0
      %5171 = vmatprep.subr.bf16.mxu0 0
      %5172 = vmatpush1.bf16.msra.mxu0 0
      %5173 = vmatprep.subr.bf16.mxu0 0
      %5174 = vmatpush1.bf16.msra.mxu0 0
      %5175 = vmatprep.subr.bf16.mxu0 0
      %5176 = vmatpush1.bf16.msra.mxu0 0
      %5177 = vmatprep.subr.bf16.mxu0 0
      %5178 = vmatpush1.bf16.msra.mxu0 0
      %5179 = vmatprep.subr.bf16.mxu0 0
      %5180 = vmatpush1.bf16.msra.mxu0 0
      %5181 = vmatprep.subr.bf16.mxu0 0
      %5182 = vmatpush1.bf16.msra.mxu0 0
      %5183 = vmatprep.subr.bf16.mxu0 0
      %5184 = vmatpush1.bf16.msra.mxu0 0
      %5185 = vmatprep.mubr.bf16.mxu0 0
      %5186 = vmatmul.mubr.bf16.gmra.mrb[0].mxu0 %v5103
      %v5187 = vpop.f32.mrb[0].mxu0
      %v5188 = vadd.f32 0.0, %v5187
      %v5189 = vpop.f32.mrb[0].mxu0
      %v5190 = vpop.f32.mrb[0].mxu0
      %v5191 = vadd.f32 0.0, %v5190
      %v5192 = vpop.f32.mrb[0].mxu0
      %5193 = vmatprep.mubr.bf16.mxu0 0
      %5194 = vmatmul.mubr.bf16.gmra.mrb[0].mxu0 %v5106
      %v5195 = vpop.f32.mrb[0].mxu0
      %v5196 = vadd.f32 0.0, %v5195
      %v5197 = vpop.f32.mrb[0].mxu0
      %v5198 = vpop.f32.mrb[0].mxu0
      %v5199 = vadd.f32 0.0, %v5198
      %v5200 = vpop.f32.mrb[0].mxu0
      %5201 = vmatprep.mubr.bf16.mxu0 0
      %5202 = vmatmul.mubr.bf16.gmra.mrb[0].mxu0 %v5109
      %v5203 = vpop.f32.mrb[0].mxu0
      %v5204 = vadd.f32 0.0, %v5203
      %v5205 = vpop.f32.mrb[0].mxu0
      %v5206 = vpop.f32.mrb[0].mxu0
      %v5207 = vadd.f32 0.0, %v5206
      %v5208 = vpop.f32.mrb[0].mxu0
      %5209 = vmatprep.mubr.bf16.mxu0 0
      %5210 = vmatmul.mubr.bf16.gmra.mrb[0].mxu0 %v5112
      %v5211 = vpop.f32.mrb[0].mxu0
      %v5212 = vadd.f32 0.0, %v5211
      %v5213 = vpop.f32.mrb[0].mxu0
      %v5214 = vpop.f32.mrb[0].mxu0
      %v5215 = vadd.f32 0.0, %v5214
      %v5216 = vpop.f32.mrb[0].mxu0
      %5217 = vmatprep.mubr.bf16.mxu0 0
      %5218 = vmatmul.mubr.bf16.gmra.mrb[0].mxu0 %v5115
      %v5219 = vpop.f32.mrb[0].mxu0
      %v5220 = vadd.f32 0.0, %v5219
      %v5221 = vpop.f32.mrb[0].mxu0
      %v5222 = vpop.f32.mrb[0].mxu0
      %v5223 = vadd.f32 0.0, %v5222
      %v5224 = vpop.f32.mrb[0].mxu0
      %5225 = vmatprep.mubr.bf16.mxu0 0
      %5226 = vmatmul.mubr.bf16.gmra.mrb[0].mxu0 %v5118
      %v5227 = vpop.f32.mrb[0].mxu0
      %v5228 = vadd.f32 0.0, %v5227
      %v5229 = vpop.f32.mrb[0].mxu0
      %v5230 = vpop.f32.mrb[0].mxu0
      %v5231 = vadd.f32 0.0, %v5230
      %v5232 = vpop.f32.mrb[0].mxu0
      %5233 = vmatprep.mubr.bf16.mxu0 0
      %5234 = vmatmul.mubr.bf16.gmra.mrb[0].mxu0 %v5121
      %v5235 = vpop.f32.mrb[0].mxu0
      %v5236 = vadd.f32 0.0, %v5235
      %v5237 = vpop.f32.mrb[0].mxu0
      %v5238 = vpop.f32.mrb[0].mxu0
      %v5239 = vadd.f32 0.0, %v5238
      %v5240 = vpop.f32.mrb[0].mxu0
      %5241 = vmatprep.mubr.bf16.mxu0 0
      %5242 = vmatmul.mubr.bf16.gmra.mrb[0].mxu0 %v5124
      %v5243 = vpop.f32.mrb[0].mxu0
      %v5244 = vadd.f32 0.0, %v5243
      %v5245 = vpop.f32.mrb[0].mxu0
      %v5246 = vpop.f32.mrb[0].mxu0
      %v5247 = vadd.f32 0.0, %v5246
      %v5248 = vpop.f32.mrb[0].mxu0
      %5249 = vmatprep.mubr.bf16.mxu0 0
      %5250 = vmatmul.mubr.bf16.gmra.mrb[0].mxu0 %v5127
      %v5251 = vpop.f32.mrb[0].mxu0
      %v5252 = vadd.f32 0.0, %v5251
      %v5253 = vpop.f32.mrb[0].mxu0
      %v5254 = vpop.f32.mrb[0].mxu0
      %v5255 = vadd.f32 0.0, %v5254
      %v5256 = vpop.f32.mrb[0].mxu0
      %5257 = vmatprep.mubr.bf16.mxu0 0
      %5258 = vmatmul.mubr.bf16.gmra.mrb[0].mxu0 %v5130
      %v5259 = vpop.f32.mrb[0].mxu0
      %v5260 = vadd.f32 0.0, %v5259
      %v5261 = vpop.f32.mrb[0].mxu0
      %v5262 = vpop.f32.mrb[0].mxu0
      %v5263 = vadd.f32 0.0, %v5262
      %v5264 = vpop.f32.mrb[0].mxu0
      %5265 = vmatprep.mubr.bf16.mxu0 0
      %5266 = vmatmul.mubr.bf16.gmra.mrb[0].mxu0 %v5133
      %v5267 = vpop.f32.mrb[0].mxu0
      %v5268 = vadd.f32 0.0, %v5267
      %v5269 = vpop.f32.mrb[0].mxu0
      %v5270 = vpop.f32.mrb[0].mxu0
      %v5271 = vadd.f32 0.0, %v5270
      %v5272 = vpop.f32.mrb[0].mxu0
      %5273 = vmatprep.mubr.bf16.mxu0 0
      %5274 = vmatmul.mubr.bf16.gmra.mrb[0].mxu0 %v5136
      %v5275 = vpop.f32.mrb[0].mxu0
      %v5276 = vadd.f32 0.0, %v5275
      %v5277 = vpop.f32.mrb[0].mxu0
      %v5278 = vpop.f32.mrb[0].mxu0
      %v5279 = vadd.f32 0.0, %v5278
      %v5280 = vpop.f32.mrb[0].mxu0
      %5281 = vmatprep.mubr.bf16.mxu0 0
      %5282 = vmatmul.mubr.bf16.gmra.mrb[0].mxu0 %v5139
      %v5283 = vpop.f32.mrb[0].mxu0
      %v5284 = vadd.f32 0.0, %v5283
      %v5285 = vpop.f32.mrb[0].mxu0
      %v5286 = vpop.f32.mrb[0].mxu0
      %v5287 = vadd.f32 0.0, %v5286
      %v5288 = vpop.f32.mrb[0].mxu0
      %5289 = vmatprep.mubr.bf16.mxu0 0
      %5290 = vmatmul.mubr.bf16.gmra.mrb[0].mxu0 %v5142
      %v5291 = vpop.f32.mrb[0].mxu0
      %v5292 = vadd.f32 0.0, %v5291
      %v5293 = vpop.f32.mrb[0].mxu0
      %v5294 = vpop.f32.mrb[0].mxu0
      %v5295 = vadd.f32 0.0, %v5294
      %v5296 = vpop.f32.mrb[0].mxu0
      %5297 = vmatprep.mubr.bf16.mxu0 0
      %5298 = vmatmul.mubr.bf16.gmra.mrb[0].mxu0 %v5145
      %v5299 = vpop.f32.mrb[0].mxu0
      %v5300 = vadd.f32 0.0, %v5299
      %v5301 = vpop.f32.mrb[0].mxu0
      %v5302 = vpop.f32.mrb[0].mxu0
      %v5303 = vadd.f32 0.0, %v5302
      %v5304 = vpop.f32.mrb[0].mxu0
      %5305 = vmatprep.mubr.bf16.mxu0 0
      %5306 = vmatmul.mubr.bf16.gmra.mrb[0].mxu0 %v5148
      %v5307 = vpop.f32.mrb[0].mxu0
      %v5308 = vadd.f32 0.0, %v5307
      %v5309 = vpop.f32.mrb[0].mxu0
      %v5310 = vpop.f32.mrb[0].mxu0
      %v5311 = vadd.f32 0.0, %v5310
      %v5312 = vpop.f32.mrb[0].mxu0
      %5313 = vdwg.mxu0
      %v5314 = vadd.f32 %v5020, %v5188
      %v5315 = vadd.f32 %v5021, %v5191
      %v5316 = vadd.f32 %v5022, %v5196
      %v5317 = vadd.f32 %v5023, %v5199
      %v5318 = vadd.f32 %v5024, %v5204
      %v5319 = vadd.f32 %v5025, %v5207
      %v5320 = vadd.f32 %v5026, %v5212
      %v5321 = vadd.f32 %v5027, %v5215
      %v5322 = vadd.f32 %v5028, %v5220
      %v5323 = vadd.f32 %v5029, %v5223
      %v5324 = vadd.f32 %v5030, %v5228
      %v5325 = vadd.f32 %v5031, %v5231
      %v5326 = vadd.f32 %v5032, %v5236
      %v5327 = vadd.f32 %v5033, %v5239
      %v5328 = vadd.f32 %v5034, %v5244
      %v5329 = vadd.f32 %v5035, %v5247
      %v5330 = vadd.f32 %v5036, %v5252
      %v5331 = vadd.f32 %v5037, %v5255
      %v5332 = vadd.f32 %v5038, %v5260
      %v5333 = vadd.f32 %v5039, %v5263
      %v5334 = vadd.f32 %v5040, %v5268
      %v5335 = vadd.f32 %v5041, %v5271
      %v5336 = vadd.f32 %v5042, %v5276
      %v5337 = vadd.f32 %v5043, %v5279
      %v5338 = vadd.f32 %v5044, %v5284
      %v5339 = vadd.f32 %v5045, %v5287
      %v5340 = vadd.f32 %v5046, %v5292
      %v5341 = vadd.f32 %v5047, %v5295
      %v5342 = vadd.f32 %v5048, %v5300
      %v5343 = vadd.f32 %v5049, %v5303
      %v5344 = vadd.f32 %v5050, %v5308
      %v5345 = vadd.f32 %v5051, %v5311
      %s5346 = scalar_lea.vmem [#allocation2], %s1732
      %v5347 = vld [vmem:[%s5346] sm:$0xff]
      %v5348 = vld [vmem:[%s5346 + $0x8] sm:$0xff]
      %v5349 = vld [vmem:[%s5346 + $0x10] sm:$0xff]
      %v5350 = vld [vmem:[%s5346 + $0x18] sm:$0xff]
      %v5351 = vld [vmem:[%s5346 + $0x20] sm:$0xff]
      %v5352 = vld [vmem:[%s5346 + $0x28] sm:$0xff]
      %v5353 = vld [vmem:[%s5346 + $0x30] sm:$0xff]
      %v5354 = vld [vmem:[%s5346 + $0x38] sm:$0xff]
      %v5355 = vld [vmem:[%s5346 + $0x40] sm:$0xff]
      %v5356 = vld [vmem:[%s5346 + $0x48] sm:$0xff]
      %v5357 = vld [vmem:[%s5346 + $0x50] sm:$0xff]
      %v5358 = vld [vmem:[%s5346 + $0x58] sm:$0xff]
      %v5359 = vld [vmem:[%s5346 + $0x60] sm:$0xff]
      %v5360 = vld [vmem:[%s5346 + $0x68] sm:$0xff]
      %v5361 = vld [vmem:[%s5346 + $0x70] sm:$0xff]
      %v5362 = vld [vmem:[%s5346 + $0x78] sm:$0xff]
      %v5363 = vld [vmem:[%s5346 + $0x80] sm:$0xff]
      %v5364 = vld [vmem:[%s5346 + $0x88] sm:$0xff]
      %v5365 = vld [vmem:[%s5346 + $0x90] sm:$0xff]
      %v5366 = vld [vmem:[%s5346 + $0x98] sm:$0xff]
      %v5367 = vld [vmem:[%s5346 + $0xa0] sm:$0xff]
      %v5368 = vld [vmem:[%s5346 + $0xa8] sm:$0xff]
      %v5369 = vld [vmem:[%s5346 + $0xb0] sm:$0xff]
      %v5370 = vld [vmem:[%s5346 + $0xb8] sm:$0xff]
      %v5371 = vld [vmem:[%s5346 + $0xc0] sm:$0xff]
      %v5372 = vld [vmem:[%s5346 + $0xc8] sm:$0xff]
      %v5373 = vld [vmem:[%s5346 + $0xd0] sm:$0xff]
      %v5374 = vld [vmem:[%s5346 + $0xd8] sm:$0xff]
      %v5375 = vld [vmem:[%s5346 + $0xe0] sm:$0xff]
      %v5376 = vld [vmem:[%s5346 + $0xe8] sm:$0xff]
      %v5377 = vld [vmem:[%s5346 + $0xf0] sm:$0xff]
      %v5378 = vld [vmem:[%s5346 + $0xf8] sm:$0xff]
      %v5379 = vpack.c.bf16 %v5348, %v5347
      %v5380 = vpack.c.bf16 %v5350, %v5349
      %v5381 = vpack.c.bf16 %v5352, %v5351
      %v5382 = vpack.c.bf16 %v5354, %v5353
      %v5383 = vpack.c.bf16 %v5356, %v5355
      %v5384 = vpack.c.bf16 %v5358, %v5357
      %v5385 = vpack.c.bf16 %v5360, %v5359
      %v5386 = vpack.c.bf16 %v5362, %v5361
      %v5387 = vpack.c.bf16 %v5364, %v5363
      %v5388 = vpack.c.bf16 %v5366, %v5365
      %v5389 = vpack.c.bf16 %v5368, %v5367
      %v5390 = vpack.c.bf16 %v5370, %v5369
      %v5391 = vpack.c.bf16 %v5372, %v5371
      %v5392 = vpack.c.bf16 %v5374, %v5373
      %v5393 = vpack.c.bf16 %v5376, %v5375
      %v5394 = vpack.c.bf16 %v5378, %v5377
      %s5395 = scalar_lea.vmem %s2, 10
      %v5396 = vld [vmem:[%s5395] sm:$0x3]
      %v5398 = vsel %vm307, %v5379, 0
      %v5401 = vsel %vm307, %v5380, 0
      %v5404 = vsel %vm307, %v5381, 0
      %v5407 = vsel %vm307, %v5382, 0
      %v5410 = vsel %vm307, %v5383, 0
      %v5413 = vsel %vm307, %v5384, 0
      %v5416 = vsel %vm307, %v5385, 0
      %v5419 = vsel %vm307, %v5386, 0
      %v5422 = vsel %vm307, %v5387, 0
      %v5425 = vsel %vm307, %v5388, 0
      %v5428 = vsel %vm307, %v5389, 0
      %v5431 = vsel %vm307, %v5390, 0
      %v5434 = vsel %vm307, %v5391, 0
      %v5437 = vsel %vm307, %v5392, 0
      %v5440 = vsel %vm307, %v5393, 0
      %v5443 = vsel %vm307, %v5394, 0
      %v5446 = vsel %vm467, %v5396, 0
      %5448 = vmatprep.subr.bf16.mxu0 0
      %5449 = vmatpush1.bf16.msra.mxu0 %v5446
      %5450 = vmatprep.subr.bf16.mxu0 0
      %5451 = vmatpush1.bf16.msra.mxu0 0
      %5452 = vmatprep.subr.bf16.mxu0 0
      %5453 = vmatpush1.bf16.msra.mxu0 0
      %5454 = vmatprep.subr.bf16.mxu0 0
      %5455 = vmatpush1.bf16.msra.mxu0 0
      %5456 = vmatprep.subr.bf16.mxu0 0
      %5457 = vmatpush1.bf16.msra.mxu0 0
      %5458 = vmatprep.subr.bf16.mxu0 0
      %5459 = vmatpush1.bf16.msra.mxu0 0
      %5460 = vmatprep.subr.bf16.mxu0 0
      %5461 = vmatpush1.bf16.msra.mxu0 0
      %5462 = vmatprep.subr.bf16.mxu0 0
      %5463 = vmatpush1.bf16.msra.mxu0 0
      %5464 = vmatprep.subr.bf16.mxu0 0
      %5465 = vmatpush1.bf16.msra.mxu0 0
      %5466 = vmatprep.subr.bf16.mxu0 0
      %5467 = vmatpush1.bf16.msra.mxu0 0
      %5468 = vmatprep.subr.bf16.mxu0 0
      %5469 = vmatpush1.bf16.msra.mxu0 0
      %5470 = vmatprep.subr.bf16.mxu0 0
      %5471 = vmatpush1.bf16.msra.mxu0 0
      %5472 = vmatprep.subr.bf16.mxu0 0
      %5473 = vmatpush1.bf16.msra.mxu0 0
      %5474 = vmatprep.subr.bf16.mxu0 0
      %5475 = vmatpush1.bf16.msra.mxu0 0
      %5476 = vmatprep.subr.bf16.mxu0 0
      %5477 = vmatpush1.bf16.msra.mxu0 0
      %5478 = vmatprep.subr.bf16.mxu0 0
      %5479 = vmatpush1.bf16.msra.mxu0 0
      %5480 = vmatprep.mubr.bf16.mxu0 0
      %5481 = vmatmul.mubr.bf16.gmra.mrb[0].mxu0 %v5398
      %v5482 = vpop.f32.mrb[0].mxu0
      %v5483 = vadd.f32 0.0, %v5482
      %v5484 = vpop.f32.mrb[0].mxu0
      %v5485 = vpop.f32.mrb[0].mxu0
      %v5486 = vadd.f32 0.0, %v5485
      %v5487 = vpop.f32.mrb[0].mxu0
      %5488 = vmatprep.mubr.bf16.mxu0 0
      %5489 = vmatmul.mubr.bf16.gmra.mrb[0].mxu0 %v5401
      %v5490 = vpop.f32.mrb[0].mxu0
      %v5491 = vadd.f32 0.0, %v5490
      %v5492 = vpop.f32.mrb[0].mxu0
      %v5493 = vpop.f32.mrb[0].mxu0
      %v5494 = vadd.f32 0.0, %v5493
      %v5495 = vpop.f32.mrb[0].mxu0
      %5496 = vmatprep.mubr.bf16.mxu0 0
      %5497 = vmatmul.mubr.bf16.gmra.mrb[0].mxu0 %v5404
      %v5498 = vpop.f32.mrb[0].mxu0
      %v5499 = vadd.f32 0.0, %v5498
      %v5500 = vpop.f32.mrb[0].mxu0
      %v5501 = vpop.f32.mrb[0].mxu0
      %v5502 = vadd.f32 0.0, %v5501
      %v5503 = vpop.f32.mrb[0].mxu0
      %5504 = vmatprep.mubr.bf16.mxu0 0
      %5505 = vmatmul.mubr.bf16.gmra.mrb[0].mxu0 %v5407
      %v5506 = vpop.f32.mrb[0].mxu0
      %v5507 = vadd.f32 0.0, %v5506
      %v5508 = vpop.f32.mrb[0].mxu0
      %v5509 = vpop.f32.mrb[0].mxu0
      %v5510 = vadd.f32 0.0, %v5509
      %v5511 = vpop.f32.mrb[0].mxu0
      %5512 = vmatprep.mubr.bf16.mxu0 0
      %5513 = vmatmul.mubr.bf16.gmra.mrb[0].mxu0 %v5410
      %v5514 = vpop.f32.mrb[0].mxu0
      %v5515 = vadd.f32 0.0, %v5514
      %v5516 = vpop.f32.mrb[0].mxu0
      %v5517 = vpop.f32.mrb[0].mxu0
      %v5518 = vadd.f32 0.0, %v5517
      %v5519 = vpop.f32.mrb[0].mxu0
      %5520 = vmatprep.mubr.bf16.mxu0 0
      %5521 = vmatmul.mubr.bf16.gmra.mrb[0].mxu0 %v5413
      %v5522 = vpop.f32.mrb[0].mxu0
      %v5523 = vadd.f32 0.0, %v5522
      %v5524 = vpop.f32.mrb[0].mxu0
      %v5525 = vpop.f32.mrb[0].mxu0
      %v5526 = vadd.f32 0.0, %v5525
      %v5527 = vpop.f32.mrb[0].mxu0
      %5528 = vmatprep.mubr.bf16.mxu0 0
      %5529 = vmatmul.mubr.bf16.gmra.mrb[0].mxu0 %v5416
      %v5530 = vpop.f32.mrb[0].mxu0
      %v5531 = vadd.f32 0.0, %v5530
      %v5532 = vpop.f32.mrb[0].mxu0
      %v5533 = vpop.f32.mrb[0].mxu0
      %v5534 = vadd.f32 0.0, %v5533
      %v5535 = vpop.f32.mrb[0].mxu0
      %5536 = vmatprep.mubr.bf16.mxu0 0
      %5537 = vmatmul.mubr.bf16.gmra.mrb[0].mxu0 %v5419
      %v5538 = vpop.f32.mrb[0].mxu0
      %v5539 = vadd.f32 0.0, %v5538
      %v5540 = vpop.f32.mrb[0].mxu0
      %v5541 = vpop.f32.mrb[0].mxu0
      %v5542 = vadd.f32 0.0, %v5541
      %v5543 = vpop.f32.mrb[0].mxu0
      %5544 = vmatprep.mubr.bf16.mxu0 0
      %5545 = vmatmul.mubr.bf16.gmra.mrb[0].mxu0 %v5422
      %v5546 = vpop.f32.mrb[0].mxu0
      %v5547 = vadd.f32 0.0, %v5546
      %v5548 = vpop.f32.mrb[0].mxu0
      %v5549 = vpop.f32.mrb[0].mxu0
      %v5550 = vadd.f32 0.0, %v5549
      %v5551 = vpop.f32.mrb[0].mxu0
      %5552 = vmatprep.mubr.bf16.mxu0 0
      %5553 = vmatmul.mubr.bf16.gmra.mrb[0].mxu0 %v5425
      %v5554 = vpop.f32.mrb[0].mxu0
      %v5555 = vadd.f32 0.0, %v5554
      %v5556 = vpop.f32.mrb[0].mxu0
      %v5557 = vpop.f32.mrb[0].mxu0
      %v5558 = vadd.f32 0.0, %v5557
      %v5559 = vpop.f32.mrb[0].mxu0
      %5560 = vmatprep.mubr.bf16.mxu0 0
      %5561 = vmatmul.mubr.bf16.gmra.mrb[0].mxu0 %v5428
      %v5562 = vpop.f32.mrb[0].mxu0
      %v5563 = vadd.f32 0.0, %v5562
      %v5564 = vpop.f32.mrb[0].mxu0
      %v5565 = vpop.f32.mrb[0].mxu0
      %v5566 = vadd.f32 0.0, %v5565
      %v5567 = vpop.f32.mrb[0].mxu0
      %5568 = vmatprep.mubr.bf16.mxu0 0
      %5569 = vmatmul.mubr.bf16.gmra.mrb[0].mxu0 %v5431
      %v5570 = vpop.f32.mrb[0].mxu0
      %v5571 = vadd.f32 0.0, %v5570
      %v5572 = vpop.f32.mrb[0].mxu0
      %v5573 = vpop.f32.mrb[0].mxu0
      %v5574 = vadd.f32 0.0, %v5573
      %v5575 = vpop.f32.mrb[0].mxu0
      %5576 = vmatprep.mubr.bf16.mxu0 0
      %5577 = vmatmul.mubr.bf16.gmra.mrb[0].mxu0 %v5434
      %v5578 = vpop.f32.mrb[0].mxu0
      %v5579 = vadd.f32 0.0, %v5578
      %v5580 = vpop.f32.mrb[0].mxu0
      %v5581 = vpop.f32.mrb[0].mxu0
      %v5582 = vadd.f32 0.0, %v5581
      %v5583 = vpop.f32.mrb[0].mxu0
      %5584 = vmatprep.mubr.bf16.mxu0 0
      %5585 = vmatmul.mubr.bf16.gmra.mrb[0].mxu0 %v5437
      %v5586 = vpop.f32.mrb[0].mxu0
      %v5587 = vadd.f32 0.0, %v5586
      %v5588 = vpop.f32.mrb[0].mxu0
      %v5589 = vpop.f32.mrb[0].mxu0
      %v5590 = vadd.f32 0.0, %v5589
      %v5591 = vpop.f32.mrb[0].mxu0
      %5592 = vmatprep.mubr.bf16.mxu0 0
      %5593 = vmatmul.mubr.bf16.gmra.mrb[0].mxu0 %v5440
      %v5594 = vpop.f32.mrb[0].mxu0
      %v5595 = vadd.f32 0.0, %v5594
      %v5596 = vpop.f32.mrb[0].mxu0
      %v5597 = vpop.f32.mrb[0].mxu0
      %v5598 = vadd.f32 0.0, %v5597
      %v5599 = vpop.f32.mrb[0].mxu0
      %5600 = vmatprep.mubr.bf16.mxu0 0
      %5601 = vmatmul.mubr.bf16.gmra.mrb[0].mxu0 %v5443
      %v5602 = vpop.f32.mrb[0].mxu0
      %v5603 = vadd.f32 0.0, %v5602
      %v5604 = vpop.f32.mrb[0].mxu0
      %v5605 = vpop.f32.mrb[0].mxu0
      %v5606 = vadd.f32 0.0, %v5605
      %v5607 = vpop.f32.mrb[0].mxu0
      %5608 = vdwg.mxu0
      %v5609 = vadd.f32 %v5314, %v5483
      %v5610 = vadd.f32 %v5315, %v5486
      %v5611 = vadd.f32 %v5316, %v5491
      %v5612 = vadd.f32 %v5317, %v5494
      %v5613 = vadd.f32 %v5318, %v5499
      %v5614 = vadd.f32 %v5319, %v5502
      %v5615 = vadd.f32 %v5320, %v5507
      %v5616 = vadd.f32 %v5321, %v5510
      %v5617 = vadd.f32 %v5322, %v5515
      %v5618 = vadd.f32 %v5323, %v5518
      %v5619 = vadd.f32 %v5324, %v5523
      %v5620 = vadd.f32 %v5325, %v5526
      %v5621 = vadd.f32 %v5326, %v5531
      %v5622 = vadd.f32 %v5327, %v5534
      %v5623 = vadd.f32 %v5328, %v5539
      %v5624 = vadd.f32 %v5329, %v5542
      %v5625 = vadd.f32 %v5330, %v5547
      %v5626 = vadd.f32 %v5331, %v5550
      %v5627 = vadd.f32 %v5332, %v5555
      %v5628 = vadd.f32 %v5333, %v5558
      %v5629 = vadd.f32 %v5334, %v5563
      %v5630 = vadd.f32 %v5335, %v5566
      %v5631 = vadd.f32 %v5336, %v5571
      %v5632 = vadd.f32 %v5337, %v5574
      %v5633 = vadd.f32 %v5338, %v5579
      %v5634 = vadd.f32 %v5339, %v5582
      %v5635 = vadd.f32 %v5340, %v5587
      %v5636 = vadd.f32 %v5341, %v5590
      %v5637 = vadd.f32 %v5342, %v5595
      %v5638 = vadd.f32 %v5343, %v5598
      %v5639 = vadd.f32 %v5344, %v5603
      %v5640 = vadd.f32 %v5345, %v5606
      %s5641 = scalar_lea.vmem [#allocation2], %s2028
      %v5642 = vld [vmem:[%s5641] sm:$0xff]
      %v5643 = vld [vmem:[%s5641 + $0x8] sm:$0xff]
      %v5644 = vld [vmem:[%s5641 + $0x10] sm:$0xff]
      %v5645 = vld [vmem:[%s5641 + $0x18] sm:$0xff]
      %v5646 = vld [vmem:[%s5641 + $0x20] sm:$0xff]
      %v5647 = vld [vmem:[%s5641 + $0x28] sm:$0xff]
      %v5648 = vld [vmem:[%s5641 + $0x30] sm:$0xff]
      %v5649 = vld [vmem:[%s5641 + $0x38] sm:$0xff]
      %v5650 = vld [vmem:[%s5641 + $0x40] sm:$0xff]
      %v5651 = vld [vmem:[%s5641 + $0x48] sm:$0xff]
      %v5652 = vld [vmem:[%s5641 + $0x50] sm:$0xff]
      %v5653 = vld [vmem:[%s5641 + $0x58] sm:$0xff]
      %v5654 = vld [vmem:[%s5641 + $0x60] sm:$0xff]
      %v5655 = vld [vmem:[%s5641 + $0x68] sm:$0xff]
      %v5656 = vld [vmem:[%s5641 + $0x70] sm:$0xff]
      %v5657 = vld [vmem:[%s5641 + $0x78] sm:$0xff]
      %v5658 = vld [vmem:[%s5641 + $0x80] sm:$0xff]
      %v5659 = vld [vmem:[%s5641 + $0x88] sm:$0xff]
      %v5660 = vld [vmem:[%s5641 + $0x90] sm:$0xff]
      %v5661 = vld [vmem:[%s5641 + $0x98] sm:$0xff]
      %v5662 = vld [vmem:[%s5641 + $0xa0] sm:$0xff]
      %v5663 = vld [vmem:[%s5641 + $0xa8] sm:$0xff]
      %v5664 = vld [vmem:[%s5641 + $0xb0] sm:$0xff]
      %v5665 = vld [vmem:[%s5641 + $0xb8] sm:$0xff]
      %v5666 = vld [vmem:[%s5641 + $0xc0] sm:$0xff]
      %v5667 = vld [vmem:[%s5641 + $0xc8] sm:$0xff]
      %v5668 = vld [vmem:[%s5641 + $0xd0] sm:$0xff]
      %v5669 = vld [vmem:[%s5641 + $0xd8] sm:$0xff]
      %v5670 = vld [vmem:[%s5641 + $0xe0] sm:$0xff]
      %v5671 = vld [vmem:[%s5641 + $0xe8] sm:$0xff]
      %v5672 = vld [vmem:[%s5641 + $0xf0] sm:$0xff]
      %v5673 = vld [vmem:[%s5641 + $0xf8] sm:$0xff]
      %v5674 = vpack.c.bf16 %v5643, %v5642
      %v5675 = vpack.c.bf16 %v5645, %v5644
      %v5676 = vpack.c.bf16 %v5647, %v5646
      %v5677 = vpack.c.bf16 %v5649, %v5648
      %v5678 = vpack.c.bf16 %v5651, %v5650
      %v5679 = vpack.c.bf16 %v5653, %v5652
      %v5680 = vpack.c.bf16 %v5655, %v5654
      %v5681 = vpack.c.bf16 %v5657, %v5656
      %v5682 = vpack.c.bf16 %v5659, %v5658
      %v5683 = vpack.c.bf16 %v5661, %v5660
      %v5684 = vpack.c.bf16 %v5663, %v5662
      %v5685 = vpack.c.bf16 %v5665, %v5664
      %v5686 = vpack.c.bf16 %v5667, %v5666
      %v5687 = vpack.c.bf16 %v5669, %v5668
      %v5688 = vpack.c.bf16 %v5671, %v5670
      %v5689 = vpack.c.bf16 %v5673, %v5672
      %s5690 = scalar_lea.vmem %s2, 12
      %v5691 = vld [vmem:[%s5690] sm:$0x3]
      %v5693 = vsel %vm307, %v5674, 0
      %v5696 = vsel %vm307, %v5675, 0
      %v5699 = vsel %vm307, %v5676, 0
      %v5702 = vsel %vm307, %v5677, 0
      %v5705 = vsel %vm307, %v5678, 0
      %v5708 = vsel %vm307, %v5679, 0
      %v5711 = vsel %vm307, %v5680, 0
      %v5714 = vsel %vm307, %v5681, 0
      %v5717 = vsel %vm307, %v5682, 0
      %v5720 = vsel %vm307, %v5683, 0
      %v5723 = vsel %vm307, %v5684, 0
      %v5726 = vsel %vm307, %v5685, 0
      %v5729 = vsel %vm307, %v5686, 0
      %v5732 = vsel %vm307, %v5687, 0
      %v5735 = vsel %vm307, %v5688, 0
      %v5738 = vsel %vm307, %v5689, 0
      %v5741 = vsel %vm467, %v5691, 0
      %5743 = vmatprep.subr.bf16.mxu0 0
      %5744 = vmatpush1.bf16.msra.mxu0 %v5741
      %5745 = vmatprep.subr.bf16.mxu0 0
      %5746 = vmatpush1.bf16.msra.mxu0 0
      %5747 = vmatprep.subr.bf16.mxu0 0
      %5748 = vmatpush1.bf16.msra.mxu0 0
      %5749 = vmatprep.subr.bf16.mxu0 0
      %5750 = vmatpush1.bf16.msra.mxu0 0
      %5751 = vmatprep.subr.bf16.mxu0 0
      %5752 = vmatpush1.bf16.msra.mxu0 0
      %5753 = vmatprep.subr.bf16.mxu0 0
      %5754 = vmatpush1.bf16.msra.mxu0 0
      %5755 = vmatprep.subr.bf16.mxu0 0
      %5756 = vmatpush1.bf16.msra.mxu0 0
      %5757 = vmatprep.subr.bf16.mxu0 0
      %5758 = vmatpush1.bf16.msra.mxu0 0
      %5759 = vmatprep.subr.bf16.mxu0 0
      %5760 = vmatpush1.bf16.msra.mxu0 0
      %5761 = vmatprep.subr.bf16.mxu0 0
      %5762 = vmatpush1.bf16.msra.mxu0 0
      %5763 = vmatprep.subr.bf16.mxu0 0
      %5764 = vmatpush1.bf16.msra.mxu0 0
      %5765 = vmatprep.subr.bf16.mxu0 0
      %5766 = vmatpush1.bf16.msra.mxu0 0
      %5767 = vmatprep.subr.bf16.mxu0 0
      %5768 = vmatpush1.bf16.msra.mxu0 0
      %5769 = vmatprep.subr.bf16.mxu0 0
      %5770 = vmatpush1.bf16.msra.mxu0 0
      %5771 = vmatprep.subr.bf16.mxu0 0
      %5772 = vmatpush1.bf16.msra.mxu0 0
      %5773 = vmatprep.subr.bf16.mxu0 0
      %5774 = vmatpush1.bf16.msra.mxu0 0
      %5775 = vmatprep.mubr.bf16.mxu0 0
      %5776 = vmatmul.mubr.bf16.gmra.mrb[0].mxu0 %v5693
      %v5777 = vpop.f32.mrb[0].mxu0
      %v5778 = vadd.f32 0.0, %v5777
      %v5779 = vpop.f32.mrb[0].mxu0
      %v5780 = vpop.f32.mrb[0].mxu0
      %v5781 = vadd.f32 0.0, %v5780
      %v5782 = vpop.f32.mrb[0].mxu0
      %5783 = vmatprep.mubr.bf16.mxu0 0
      %5784 = vmatmul.mubr.bf16.gmra.mrb[0].mxu0 %v5696
      %v5785 = vpop.f32.mrb[0].mxu0
      %v5786 = vadd.f32 0.0, %v5785
      %v5787 = vpop.f32.mrb[0].mxu0
      %v5788 = vpop.f32.mrb[0].mxu0
      %v5789 = vadd.f32 0.0, %v5788
      %v5790 = vpop.f32.mrb[0].mxu0
      %5791 = vmatprep.mubr.bf16.mxu0 0
      %5792 = vmatmul.mubr.bf16.gmra.mrb[0].mxu0 %v5699
      %v5793 = vpop.f32.mrb[0].mxu0
      %v5794 = vadd.f32 0.0, %v5793
      %v5795 = vpop.f32.mrb[0].mxu0
      %v5796 = vpop.f32.mrb[0].mxu0
      %v5797 = vadd.f32 0.0, %v5796
      %v5798 = vpop.f32.mrb[0].mxu0
      %5799 = vmatprep.mubr.bf16.mxu0 0
      %5800 = vmatmul.mubr.bf16.gmra.mrb[0].mxu0 %v5702
      %v5801 = vpop.f32.mrb[0].mxu0
      %v5802 = vadd.f32 0.0, %v5801
      %v5803 = vpop.f32.mrb[0].mxu0
      %v5804 = vpop.f32.mrb[0].mxu0
      %v5805 = vadd.f32 0.0, %v5804
      %v5806 = vpop.f32.mrb[0].mxu0
      %5807 = vmatprep.mubr.bf16.mxu0 0
      %5808 = vmatmul.mubr.bf16.gmra.mrb[0].mxu0 %v5705
      %v5809 = vpop.f32.mrb[0].mxu0
      %v5810 = vadd.f32 0.0, %v5809
      %v5811 = vpop.f32.mrb[0].mxu0
      %v5812 = vpop.f32.mrb[0].mxu0
      %v5813 = vadd.f32 0.0, %v5812
      %v5814 = vpop.f32.mrb[0].mxu0
      %5815 = vmatprep.mubr.bf16.mxu0 0
      %5816 = vmatmul.mubr.bf16.gmra.mrb[0].mxu0 %v5708
      %v5817 = vpop.f32.mrb[0].mxu0
      %v5818 = vadd.f32 0.0, %v5817
      %v5819 = vpop.f32.mrb[0].mxu0
      %v5820 = vpop.f32.mrb[0].mxu0
      %v5821 = vadd.f32 0.0, %v5820
      %v5822 = vpop.f32.mrb[0].mxu0
      %5823 = vmatprep.mubr.bf16.mxu0 0
      %5824 = vmatmul.mubr.bf16.gmra.mrb[0].mxu0 %v5711
      %v5825 = vpop.f32.mrb[0].mxu0
      %v5826 = vadd.f32 0.0, %v5825
      %v5827 = vpop.f32.mrb[0].mxu0
      %v5828 = vpop.f32.mrb[0].mxu0
      %v5829 = vadd.f32 0.0, %v5828
      %v5830 = vpop.f32.mrb[0].mxu0
      %5831 = vmatprep.mubr.bf16.mxu0 0
      %5832 = vmatmul.mubr.bf16.gmra.mrb[0].mxu0 %v5714
      %v5833 = vpop.f32.mrb[0].mxu0
      %v5834 = vadd.f32 0.0, %v5833
      %v5835 = vpop.f32.mrb[0].mxu0
      %v5836 = vpop.f32.mrb[0].mxu0
      %v5837 = vadd.f32 0.0, %v5836
      %v5838 = vpop.f32.mrb[0].mxu0
      %5839 = vmatprep.mubr.bf16.mxu0 0
      %5840 = vmatmul.mubr.bf16.gmra.mrb[0].mxu0 %v5717
      %v5841 = vpop.f32.mrb[0].mxu0
      %v5842 = vadd.f32 0.0, %v5841
      %v5843 = vpop.f32.mrb[0].mxu0
      %v5844 = vpop.f32.mrb[0].mxu0
      %v5845 = vadd.f32 0.0, %v5844
      %v5846 = vpop.f32.mrb[0].mxu0
      %5847 = vmatprep.mubr.bf16.mxu0 0
      %5848 = vmatmul.mubr.bf16.gmra.mrb[0].mxu0 %v5720
      %v5849 = vpop.f32.mrb[0].mxu0
      %v5850 = vadd.f32 0.0, %v5849
      %v5851 = vpop.f32.mrb[0].mxu0
      %v5852 = vpop.f32.mrb[0].mxu0
      %v5853 = vadd.f32 0.0, %v5852
      %v5854 = vpop.f32.mrb[0].mxu0
      %5855 = vmatprep.mubr.bf16.mxu0 0
      %5856 = vmatmul.mubr.bf16.gmra.mrb[0].mxu0 %v5723
      %v5857 = vpop.f32.mrb[0].mxu0
      %v5858 = vadd.f32 0.0, %v5857
      %v5859 = vpop.f32.mrb[0].mxu0
      %v5860 = vpop.f32.mrb[0].mxu0
      %v5861 = vadd.f32 0.0, %v5860
      %v5862 = vpop.f32.mrb[0].mxu0
      %5863 = vmatprep.mubr.bf16.mxu0 0
      %5864 = vmatmul.mubr.bf16.gmra.mrb[0].mxu0 %v5726
      %v5865 = vpop.f32.mrb[0].mxu0
      %v5866 = vadd.f32 0.0, %v5865
      %v5867 = vpop.f32.mrb[0].mxu0
      %v5868 = vpop.f32.mrb[0].mxu0
      %v5869 = vadd.f32 0.0, %v5868
      %v5870 = vpop.f32.mrb[0].mxu0
      %5871 = vmatprep.mubr.bf16.mxu0 0
      %5872 = vmatmul.mubr.bf16.gmra.mrb[0].mxu0 %v5729
      %v5873 = vpop.f32.mrb[0].mxu0
      %v5874 = vadd.f32 0.0, %v5873
      %v5875 = vpop.f32.mrb[0].mxu0
      %v5876 = vpop.f32.mrb[0].mxu0
      %v5877 = vadd.f32 0.0, %v5876
      %v5878 = vpop.f32.mrb[0].mxu0
      %5879 = vmatprep.mubr.bf16.mxu0 0
      %5880 = vmatmul.mubr.bf16.gmra.mrb[0].mxu0 %v5732
      %v5881 = vpop.f32.mrb[0].mxu0
      %v5882 = vadd.f32 0.0, %v5881
      %v5883 = vpop.f32.mrb[0].mxu0
      %v5884 = vpop.f32.mrb[0].mxu0
      %v5885 = vadd.f32 0.0, %v5884
      %v5886 = vpop.f32.mrb[0].mxu0
      %5887 = vmatprep.mubr.bf16.mxu0 0
      %5888 = vmatmul.mubr.bf16.gmra.mrb[0].mxu0 %v5735
      %v5889 = vpop.f32.mrb[0].mxu0
      %v5890 = vadd.f32 0.0, %v5889
      %v5891 = vpop.f32.mrb[0].mxu0
      %v5892 = vpop.f32.mrb[0].mxu0
      %v5893 = vadd.f32 0.0, %v5892
      %v5894 = vpop.f32.mrb[0].mxu0
      %5895 = vmatprep.mubr.bf16.mxu0 0
      %5896 = vmatmul.mubr.bf16.gmra.mrb[0].mxu0 %v5738
      %v5897 = vpop.f32.mrb[0].mxu0
      %v5898 = vadd.f32 0.0, %v5897
      %v5899 = vpop.f32.mrb[0].mxu0
      %v5900 = vpop.f32.mrb[0].mxu0
      %v5901 = vadd.f32 0.0, %v5900
      %v5902 = vpop.f32.mrb[0].mxu0
      %5903 = vdwg.mxu0
      %v5904 = vadd.f32 %v5609, %v5778
      %v5905 = vadd.f32 %v5610, %v5781
      %v5906 = vadd.f32 %v5611, %v5786
      %v5907 = vadd.f32 %v5612, %v5789
      %v5908 = vadd.f32 %v5613, %v5794
      %v5909 = vadd.f32 %v5614, %v5797
      %v5910 = vadd.f32 %v5615, %v5802
      %v5911 = vadd.f32 %v5616, %v5805
      %v5912 = vadd.f32 %v5617, %v5810
      %v5913 = vadd.f32 %v5618, %v5813
      %v5914 = vadd.f32 %v5619, %v5818
      %v5915 = vadd.f32 %v5620, %v5821
      %v5916 = vadd.f32 %v5621, %v5826
      %v5917 = vadd.f32 %v5622, %v5829
      %v5918 = vadd.f32 %v5623, %v5834
      %v5919 = vadd.f32 %v5624, %v5837
      %v5920 = vadd.f32 %v5625, %v5842
      %v5921 = vadd.f32 %v5626, %v5845
      %v5922 = vadd.f32 %v5627, %v5850
      %v5923 = vadd.f32 %v5628, %v5853
      %v5924 = vadd.f32 %v5629, %v5858
      %v5925 = vadd.f32 %v5630, %v5861
      %v5926 = vadd.f32 %v5631, %v5866
      %v5927 = vadd.f32 %v5632, %v5869
      %v5928 = vadd.f32 %v5633, %v5874
      %v5929 = vadd.f32 %v5634, %v5877
      %v5930 = vadd.f32 %v5635, %v5882
      %v5931 = vadd.f32 %v5636, %v5885
      %v5932 = vadd.f32 %v5637, %v5890
      %v5933 = vadd.f32 %v5638, %v5893
      %v5934 = vadd.f32 %v5639, %v5898
      %v5935 = vadd.f32 %v5640, %v5901
      %s5936 = scalar_lea.vmem [#allocation2], %s2324
      %v5937 = vld [vmem:[%s5936] sm:$0xff]
      %v5938 = vld [vmem:[%s5936 + $0x8] sm:$0xff]
      %v5939 = vld [vmem:[%s5936 + $0x10] sm:$0xff]
      %v5940 = vld [vmem:[%s5936 + $0x18] sm:$0xff]
      %v5941 = vld [vmem:[%s5936 + $0x20] sm:$0xff]
      %v5942 = vld [vmem:[%s5936 + $0x28] sm:$0xff]
      %v5943 = vld [vmem:[%s5936 + $0x30] sm:$0xff]
      %v5944 = vld [vmem:[%s5936 + $0x38] sm:$0xff]
      %v5945 = vld [vmem:[%s5936 + $0x40] sm:$0xff]
      %v5946 = vld [vmem:[%s5936 + $0x48] sm:$0xff]
      %v5947 = vld [vmem:[%s5936 + $0x50] sm:$0xff]
      %v5948 = vld [vmem:[%s5936 + $0x58] sm:$0xff]
      %v5949 = vld [vmem:[%s5936 + $0x60] sm:$0xff]
      %v5950 = vld [vmem:[%s5936 + $0x68] sm:$0xff]
      %v5951 = vld [vmem:[%s5936 + $0x70] sm:$0xff]
      %v5952 = vld [vmem:[%s5936 + $0x78] sm:$0xff]
      %v5953 = vld [vmem:[%s5936 + $0x80] sm:$0xff]
      %v5954 = vld [vmem:[%s5936 + $0x88] sm:$0xff]
      %v5955 = vld [vmem:[%s5936 + $0x90] sm:$0xff]
      %v5956 = vld [vmem:[%s5936 + $0x98] sm:$0xff]
      %v5957 = vld [vmem:[%s5936 + $0xa0] sm:$0xff]
      %v5958 = vld [vmem:[%s5936 + $0xa8] sm:$0xff]
      %v5959 = vld [vmem:[%s5936 + $0xb0] sm:$0xff]
      %v5960 = vld [vmem:[%s5936 + $0xb8] sm:$0xff]
      %v5961 = vld [vmem:[%s5936 + $0xc0] sm:$0xff]
      %v5962 = vld [vmem:[%s5936 + $0xc8] sm:$0xff]
      %v5963 = vld [vmem:[%s5936 + $0xd0] sm:$0xff]
      %v5964 = vld [vmem:[%s5936 + $0xd8] sm:$0xff]
      %v5965 = vld [vmem:[%s5936 + $0xe0] sm:$0xff]
      %v5966 = vld [vmem:[%s5936 + $0xe8] sm:$0xff]
      %v5967 = vld [vmem:[%s5936 + $0xf0] sm:$0xff]
      %v5968 = vld [vmem:[%s5936 + $0xf8] sm:$0xff]
      %v5969 = vpack.c.bf16 %v5938, %v5937
      %v5970 = vpack.c.bf16 %v5940, %v5939
      %v5971 = vpack.c.bf16 %v5942, %v5941
      %v5972 = vpack.c.bf16 %v5944, %v5943
      %v5973 = vpack.c.bf16 %v5946, %v5945
      %v5974 = vpack.c.bf16 %v5948, %v5947
      %v5975 = vpack.c.bf16 %v5950, %v5949
      %v5976 = vpack.c.bf16 %v5952, %v5951
      %v5977 = vpack.c.bf16 %v5954, %v5953
      %v5978 = vpack.c.bf16 %v5956, %v5955
      %v5979 = vpack.c.bf16 %v5958, %v5957
      %v5980 = vpack.c.bf16 %v5960, %v5959
      %v5981 = vpack.c.bf16 %v5962, %v5961
      %v5982 = vpack.c.bf16 %v5964, %v5963
      %v5983 = vpack.c.bf16 %v5966, %v5965
      %v5984 = vpack.c.bf16 %v5968, %v5967
      %s5985 = scalar_lea.vmem %s2, 14
      %v5986 = vld [vmem:[%s5985] sm:$0x3]
      %v5988 = vsel %vm307, %v5969, 0
      %v5991 = vsel %vm307, %v5970, 0
      %v5994 = vsel %vm307, %v5971, 0
      %v5997 = vsel %vm307, %v5972, 0
      %v6000 = vsel %vm307, %v5973, 0
      %v6003 = vsel %vm307, %v5974, 0
      %v6006 = vsel %vm307, %v5975, 0
      %v6009 = vsel %vm307, %v5976, 0
      %v6012 = vsel %vm307, %v5977, 0
      %v6015 = vsel %vm307, %v5978, 0
      %v6018 = vsel %vm307, %v5979, 0
      %v6021 = vsel %vm307, %v5980, 0
      %v6024 = vsel %vm307, %v5981, 0
      %v6027 = vsel %vm307, %v5982, 0
      %v6030 = vsel %vm307, %v5983, 0
      %v6033 = vsel %vm307, %v5984, 0
      %v6036 = vsel %vm467, %v5986, 0
      %6038 = vmatprep.subr.bf16.mxu0 0
      %6039 = vmatpush1.bf16.msra.mxu0 %v6036
      %6040 = vmatprep.subr.bf16.mxu0 0
      %6041 = vmatpush1.bf16.msra.mxu0 0
      %6042 = vmatprep.subr.bf16.mxu0 0
      %6043 = vmatpush1.bf16.msra.mxu0 0
      %6044 = vmatprep.subr.bf16.mxu0 0
      %6045 = vmatpush1.bf16.msra.mxu0 0
      %6046 = vmatprep.subr.bf16.mxu0 0
      %6047 = vmatpush1.bf16.msra.mxu0 0
      %6048 = vmatprep.subr.bf16.mxu0 0
      %6049 = vmatpush1.bf16.msra.mxu0 0
      %6050 = vmatprep.subr.bf16.mxu0 0
      %6051 = vmatpush1.bf16.msra.mxu0 0
      %6052 = vmatprep.subr.bf16.mxu0 0
      %6053 = vmatpush1.bf16.msra.mxu0 0
      %6054 = vmatprep.subr.bf16.mxu0 0
      %6055 = vmatpush1.bf16.msra.mxu0 0
      %6056 = vmatprep.subr.bf16.mxu0 0
      %6057 = vmatpush1.bf16.msra.mxu0 0
      %6058 = vmatprep.subr.bf16.mxu0 0
      %6059 = vmatpush1.bf16.msra.mxu0 0
      %6060 = vmatprep.subr.bf16.mxu0 0
      %6061 = vmatpush1.bf16.msra.mxu0 0
      %6062 = vmatprep.subr.bf16.mxu0 0
      %6063 = vmatpush1.bf16.msra.mxu0 0
      %6064 = vmatprep.subr.bf16.mxu0 0
      %6065 = vmatpush1.bf16.msra.mxu0 0
      %6066 = vmatprep.subr.bf16.mxu0 0
      %6067 = vmatpush1.bf16.msra.mxu0 0
      %6068 = vmatprep.subr.bf16.mxu0 0
      %6069 = vmatpush1.bf16.msra.mxu0 0
      %6070 = vmatprep.mubr.bf16.mxu0 0
      %6071 = vmatmul.mubr.bf16.gmra.mrb[0].mxu0 %v5988
      %v6072 = vpop.f32.mrb[0].mxu0
      %v6073 = vadd.f32 0.0, %v6072
      %v6074 = vpop.f32.mrb[0].mxu0
      %v6075 = vpop.f32.mrb[0].mxu0
      %v6076 = vadd.f32 0.0, %v6075
      %v6077 = vpop.f32.mrb[0].mxu0
      %6078 = vmatprep.mubr.bf16.mxu0 0
      %6079 = vmatmul.mubr.bf16.gmra.mrb[0].mxu0 %v5991
      %v6080 = vpop.f32.mrb[0].mxu0
      %v6081 = vadd.f32 0.0, %v6080
      %v6082 = vpop.f32.mrb[0].mxu0
      %v6083 = vpop.f32.mrb[0].mxu0
      %v6084 = vadd.f32 0.0, %v6083
      %v6085 = vpop.f32.mrb[0].mxu0
      %6086 = vmatprep.mubr.bf16.mxu0 0
      %6087 = vmatmul.mubr.bf16.gmra.mrb[0].mxu0 %v5994
      %v6088 = vpop.f32.mrb[0].mxu0
      %v6089 = vadd.f32 0.0, %v6088
      %v6090 = vpop.f32.mrb[0].mxu0
      %v6091 = vpop.f32.mrb[0].mxu0
      %v6092 = vadd.f32 0.0, %v6091
      %v6093 = vpop.f32.mrb[0].mxu0
      %6094 = vmatprep.mubr.bf16.mxu0 0
      %6095 = vmatmul.mubr.bf16.gmra.mrb[0].mxu0 %v5997
      %v6096 = vpop.f32.mrb[0].mxu0
      %v6097 = vadd.f32 0.0, %v6096
      %v6098 = vpop.f32.mrb[0].mxu0
      %v6099 = vpop.f32.mrb[0].mxu0
      %v6100 = vadd.f32 0.0, %v6099
      %v6101 = vpop.f32.mrb[0].mxu0
      %6102 = vmatprep.mubr.bf16.mxu0 0
      %6103 = vmatmul.mubr.bf16.gmra.mrb[0].mxu0 %v6000
      %v6104 = vpop.f32.mrb[0].mxu0
      %v6105 = vadd.f32 0.0, %v6104
      %v6106 = vpop.f32.mrb[0].mxu0
      %v6107 = vpop.f32.mrb[0].mxu0
      %v6108 = vadd.f32 0.0, %v6107
      %v6109 = vpop.f32.mrb[0].mxu0
      %6110 = vmatprep.mubr.bf16.mxu0 0
      %6111 = vmatmul.mubr.bf16.gmra.mrb[0].mxu0 %v6003
      %v6112 = vpop.f32.mrb[0].mxu0
      %v6113 = vadd.f32 0.0, %v6112
      %v6114 = vpop.f32.mrb[0].mxu0
      %v6115 = vpop.f32.mrb[0].mxu0
      %v6116 = vadd.f32 0.0, %v6115
      %v6117 = vpop.f32.mrb[0].mxu0
      %6118 = vmatprep.mubr.bf16.mxu0 0
      %6119 = vmatmul.mubr.bf16.gmra.mrb[0].mxu0 %v6006
      %v6120 = vpop.f32.mrb[0].mxu0
      %v6121 = vadd.f32 0.0, %v6120
      %v6122 = vpop.f32.mrb[0].mxu0
      %v6123 = vpop.f32.mrb[0].mxu0
      %v6124 = vadd.f32 0.0, %v6123
      %v6125 = vpop.f32.mrb[0].mxu0
      %6126 = vmatprep.mubr.bf16.mxu0 0
      %6127 = vmatmul.mubr.bf16.gmra.mrb[0].mxu0 %v6009
      %v6128 = vpop.f32.mrb[0].mxu0
      %v6129 = vadd.f32 0.0, %v6128
      %v6130 = vpop.f32.mrb[0].mxu0
      %v6131 = vpop.f32.mrb[0].mxu0
      %v6132 = vadd.f32 0.0, %v6131
      %v6133 = vpop.f32.mrb[0].mxu0
      %6134 = vmatprep.mubr.bf16.mxu0 0
      %6135 = vmatmul.mubr.bf16.gmra.mrb[0].mxu0 %v6012
      %v6136 = vpop.f32.mrb[0].mxu0
      %v6137 = vadd.f32 0.0, %v6136
      %v6138 = vpop.f32.mrb[0].mxu0
      %v6139 = vpop.f32.mrb[0].mxu0
      %v6140 = vadd.f32 0.0, %v6139
      %v6141 = vpop.f32.mrb[0].mxu0
      %6142 = vmatprep.mubr.bf16.mxu0 0
      %6143 = vmatmul.mubr.bf16.gmra.mrb[0].mxu0 %v6015
      %v6144 = vpop.f32.mrb[0].mxu0
      %v6145 = vadd.f32 0.0, %v6144
      %v6146 = vpop.f32.mrb[0].mxu0
      %v6147 = vpop.f32.mrb[0].mxu0
      %v6148 = vadd.f32 0.0, %v6147
      %v6149 = vpop.f32.mrb[0].mxu0
      %6150 = vmatprep.mubr.bf16.mxu0 0
      %6151 = vmatmul.mubr.bf16.gmra.mrb[0].mxu0 %v6018
      %v6152 = vpop.f32.mrb[0].mxu0
      %v6153 = vadd.f32 0.0, %v6152
      %v6154 = vpop.f32.mrb[0].mxu0
      %v6155 = vpop.f32.mrb[0].mxu0
      %v6156 = vadd.f32 0.0, %v6155
      %v6157 = vpop.f32.mrb[0].mxu0
      %6158 = vmatprep.mubr.bf16.mxu0 0
      %6159 = vmatmul.mubr.bf16.gmra.mrb[0].mxu0 %v6021
      %v6160 = vpop.f32.mrb[0].mxu0
      %v6161 = vadd.f32 0.0, %v6160
      %v6162 = vpop.f32.mrb[0].mxu0
      %v6163 = vpop.f32.mrb[0].mxu0
      %v6164 = vadd.f32 0.0, %v6163
      %v6165 = vpop.f32.mrb[0].mxu0
      %6166 = vmatprep.mubr.bf16.mxu0 0
      %6167 = vmatmul.mubr.bf16.gmra.mrb[0].mxu0 %v6024
      %v6168 = vpop.f32.mrb[0].mxu0
      %v6169 = vadd.f32 0.0, %v6168
      %v6170 = vpop.f32.mrb[0].mxu0
      %v6171 = vpop.f32.mrb[0].mxu0
      %v6172 = vadd.f32 0.0, %v6171
      %v6173 = vpop.f32.mrb[0].mxu0
      %6174 = vmatprep.mubr.bf16.mxu0 0
      %6175 = vmatmul.mubr.bf16.gmra.mrb[0].mxu0 %v6027
      %v6176 = vpop.f32.mrb[0].mxu0
      %v6177 = vadd.f32 0.0, %v6176
      %v6178 = vpop.f32.mrb[0].mxu0
      %v6179 = vpop.f32.mrb[0].mxu0
      %v6180 = vadd.f32 0.0, %v6179
      %v6181 = vpop.f32.mrb[0].mxu0
      %6182 = vmatprep.mubr.bf16.mxu0 0
      %6183 = vmatmul.mubr.bf16.gmra.mrb[0].mxu0 %v6030
      %v6184 = vpop.f32.mrb[0].mxu0
      %v6185 = vadd.f32 0.0, %v6184
      %v6186 = vpop.f32.mrb[0].mxu0
      %v6187 = vpop.f32.mrb[0].mxu0
      %v6188 = vadd.f32 0.0, %v6187
      %v6189 = vpop.f32.mrb[0].mxu0
      %6190 = vmatprep.mubr.bf16.mxu0 0
      %6191 = vmatmul.mubr.bf16.gmra.mrb[0].mxu0 %v6033
      %v6192 = vpop.f32.mrb[0].mxu0
      %v6193 = vadd.f32 0.0, %v6192
      %v6194 = vpop.f32.mrb[0].mxu0
      %v6195 = vpop.f32.mrb[0].mxu0
      %v6196 = vadd.f32 0.0, %v6195
      %v6197 = vpop.f32.mrb[0].mxu0
      %6198 = vdwg.mxu0
      %v6199 = vadd.f32 %v5904, %v6073
      %v6200 = vadd.f32 %v5905, %v6076
      %v6201 = vadd.f32 %v5906, %v6081
      %v6202 = vadd.f32 %v5907, %v6084
      %v6203 = vadd.f32 %v5908, %v6089
      %v6204 = vadd.f32 %v5909, %v6092
      %v6205 = vadd.f32 %v5910, %v6097
      %v6206 = vadd.f32 %v5911, %v6100
      %v6207 = vadd.f32 %v5912, %v6105
      %v6208 = vadd.f32 %v5913, %v6108
      %v6209 = vadd.f32 %v5914, %v6113
      %v6210 = vadd.f32 %v5915, %v6116
      %v6211 = vadd.f32 %v5916, %v6121
      %v6212 = vadd.f32 %v5917, %v6124
      %v6213 = vadd.f32 %v5918, %v6129
      %v6214 = vadd.f32 %v5919, %v6132
      %v6215 = vadd.f32 %v5920, %v6137
      %v6216 = vadd.f32 %v5921, %v6140
      %v6217 = vadd.f32 %v5922, %v6145
      %v6218 = vadd.f32 %v5923, %v6148
      %v6219 = vadd.f32 %v5924, %v6153
      %v6220 = vadd.f32 %v5925, %v6156
      %v6221 = vadd.f32 %v5926, %v6161
      %v6222 = vadd.f32 %v5927, %v6164
      %v6223 = vadd.f32 %v5928, %v6169
      %v6224 = vadd.f32 %v5929, %v6172
      %v6225 = vadd.f32 %v5930, %v6177
      %v6226 = vadd.f32 %v5931, %v6180
      %v6227 = vadd.f32 %v5932, %v6185
      %v6228 = vadd.f32 %v5933, %v6188
      %v6229 = vadd.f32 %v5934, %v6193
      %v6230 = vadd.f32 %v5935, %v6196
      %s6231 = scalar_lea.vmem [#allocation2], %s2620
      %v6232 = vld [vmem:[%s6231] sm:$0xff]
      %v6233 = vld [vmem:[%s6231 + $0x8] sm:$0xff]
      %v6234 = vld [vmem:[%s6231 + $0x10] sm:$0xff]
      %v6235 = vld [vmem:[%s6231 + $0x18] sm:$0xff]
      %v6236 = vld [vmem:[%s6231 + $0x20] sm:$0xff]
      %v6237 = vld [vmem:[%s6231 + $0x28] sm:$0xff]
      %v6238 = vld [vmem:[%s6231 + $0x30] sm:$0xff]
      %v6239 = vld [vmem:[%s6231 + $0x38] sm:$0xff]
      %v6240 = vld [vmem:[%s6231 + $0x40] sm:$0xff]
      %v6241 = vld [vmem:[%s6231 + $0x48] sm:$0xff]
      %v6242 = vld [vmem:[%s6231 + $0x50] sm:$0xff]
      %v6243 = vld [vmem:[%s6231 + $0x58] sm:$0xff]
      %v6244 = vld [vmem:[%s6231 + $0x60] sm:$0xff]
      %v6245 = vld [vmem:[%s6231 + $0x68] sm:$0xff]
      %v6246 = vld [vmem:[%s6231 + $0x70] sm:$0xff]
      %v6247 = vld [vmem:[%s6231 + $0x78] sm:$0xff]
      %v6248 = vld [vmem:[%s6231 + $0x80] sm:$0xff]
      %v6249 = vld [vmem:[%s6231 + $0x88] sm:$0xff]
      %v6250 = vld [vmem:[%s6231 + $0x90] sm:$0xff]
      %v6251 = vld [vmem:[%s6231 + $0x98] sm:$0xff]
      %v6252 = vld [vmem:[%s6231 + $0xa0] sm:$0xff]
      %v6253 = vld [vmem:[%s6231 + $0xa8] sm:$0xff]
      %v6254 = vld [vmem:[%s6231 + $0xb0] sm:$0xff]
      %v6255 = vld [vmem:[%s6231 + $0xb8] sm:$0xff]
      %v6256 = vld [vmem:[%s6231 + $0xc0] sm:$0xff]
      %v6257 = vld [vmem:[%s6231 + $0xc8] sm:$0xff]
      %v6258 = vld [vmem:[%s6231 + $0xd0] sm:$0xff]
      %v6259 = vld [vmem:[%s6231 + $0xd8] sm:$0xff]
      %v6260 = vld [vmem:[%s6231 + $0xe0] sm:$0xff]
      %v6261 = vld [vmem:[%s6231 + $0xe8] sm:$0xff]
      %v6262 = vld [vmem:[%s6231 + $0xf0] sm:$0xff]
      %v6263 = vld [vmem:[%s6231 + $0xf8] sm:$0xff]
      %v6264 = vpack.c.bf16 %v6233, %v6232
      %v6265 = vpack.c.bf16 %v6235, %v6234
      %v6266 = vpack.c.bf16 %v6237, %v6236
      %v6267 = vpack.c.bf16 %v6239, %v6238
      %v6268 = vpack.c.bf16 %v6241, %v6240
      %v6269 = vpack.c.bf16 %v6243, %v6242
      %v6270 = vpack.c.bf16 %v6245, %v6244
      %v6271 = vpack.c.bf16 %v6247, %v6246
      %v6272 = vpack.c.bf16 %v6249, %v6248
      %v6273 = vpack.c.bf16 %v6251, %v6250
      %v6274 = vpack.c.bf16 %v6253, %v6252
      %v6275 = vpack.c.bf16 %v6255, %v6254
      %v6276 = vpack.c.bf16 %v6257, %v6256
      %v6277 = vpack.c.bf16 %v6259, %v6258
      %v6278 = vpack.c.bf16 %v6261, %v6260
      %v6279 = vpack.c.bf16 %v6263, %v6262
      %s6280 = scalar_lea.vmem %s2, 16
      %v6281 = vld [vmem:[%s6280] sm:$0x3]
      %v6283 = vsel %vm307, %v6264, 0
      %v6286 = vsel %vm307, %v6265, 0
      %v6289 = vsel %vm307, %v6266, 0
      %v6292 = vsel %vm307, %v6267, 0
      %v6295 = vsel %vm307, %v6268, 0
      %v6298 = vsel %vm307, %v6269, 0
      %v6301 = vsel %vm307, %v6270, 0
      %v6304 = vsel %vm307, %v6271, 0
      %v6307 = vsel %vm307, %v6272, 0
      %v6310 = vsel %vm307, %v6273, 0
      %v6313 = vsel %vm307, %v6274, 0
      %v6316 = vsel %vm307, %v6275, 0
      %v6319 = vsel %vm307, %v6276, 0
      %v6322 = vsel %vm307, %v6277, 0
      %v6325 = vsel %vm307, %v6278, 0
      %v6328 = vsel %vm307, %v6279, 0
      %v6331 = vsel %vm467, %v6281, 0
      %6333 = vmatprep.subr.bf16.mxu0 0
      %6334 = vmatpush1.bf16.msra.mxu0 %v6331
      %6335 = vmatprep.subr.bf16.mxu0 0
      %6336 = vmatpush1.bf16.msra.mxu0 0
      %6337 = vmatprep.subr.bf16.mxu0 0
      %6338 = vmatpush1.bf16.msra.mxu0 0
      %6339 = vmatprep.subr.bf16.mxu0 0
      %6340 = vmatpush1.bf16.msra.mxu0 0
      %6341 = vmatprep.subr.bf16.mxu0 0
      %6342 = vmatpush1.bf16.msra.mxu0 0
      %6343 = vmatprep.subr.bf16.mxu0 0
      %6344 = vmatpush1.bf16.msra.mxu0 0
      %6345 = vmatprep.subr.bf16.mxu0 0
      %6346 = vmatpush1.bf16.msra.mxu0 0
      %6347 = vmatprep.subr.bf16.mxu0 0
      %6348 = vmatpush1.bf16.msra.mxu0 0
      %6349 = vmatprep.subr.bf16.mxu0 0
      %6350 = vmatpush1.bf16.msra.mxu0 0
      %6351 = vmatprep.subr.bf16.mxu0 0
      %6352 = vmatpush1.bf16.msra.mxu0 0
      %6353 = vmatprep.subr.bf16.mxu0 0
      %6354 = vmatpush1.bf16.msra.mxu0 0
      %6355 = vmatprep.subr.bf16.mxu0 0
      %6356 = vmatpush1.bf16.msra.mxu0 0
      %6357 = vmatprep.subr.bf16.mxu0 0
      %6358 = vmatpush1.bf16.msra.mxu0 0
      %6359 = vmatprep.subr.bf16.mxu0 0
      %6360 = vmatpush1.bf16.msra.mxu0 0
      %6361 = vmatprep.subr.bf16.mxu0 0
      %6362 = vmatpush1.bf16.msra.mxu0 0
      %6363 = vmatprep.subr.bf16.mxu0 0
      %6364 = vmatpush1.bf16.msra.mxu0 0
      %6365 = vmatprep.mubr.bf16.mxu0 0
      %6366 = vmatmul.mubr.bf16.gmra.mrb[0].mxu0 %v6283
      %v6367 = vpop.f32.mrb[0].mxu0
      %v6368 = vadd.f32 0.0, %v6367
      %v6369 = vpop.f32.mrb[0].mxu0
      %v6370 = vpop.f32.mrb[0].mxu0
      %v6371 = vadd.f32 0.0, %v6370
      %v6372 = vpop.f32.mrb[0].mxu0
      %6373 = vmatprep.mubr.bf16.mxu0 0
      %6374 = vmatmul.mubr.bf16.gmra.mrb[0].mxu0 %v6286
      %v6375 = vpop.f32.mrb[0].mxu0
      %v6376 = vadd.f32 0.0, %v6375
      %v6377 = vpop.f32.mrb[0].mxu0
      %v6378 = vpop.f32.mrb[0].mxu0
      %v6379 = vadd.f32 0.0, %v6378
      %v6380 = vpop.f32.mrb[0].mxu0
      %6381 = vmatprep.mubr.bf16.mxu0 0
      %6382 = vmatmul.mubr.bf16.gmra.mrb[0].mxu0 %v6289
      %v6383 = vpop.f32.mrb[0].mxu0
      %v6384 = vadd.f32 0.0, %v6383
      %v6385 = vpop.f32.mrb[0].mxu0
      %v6386 = vpop.f32.mrb[0].mxu0
      %v6387 = vadd.f32 0.0, %v6386
      %v6388 = vpop.f32.mrb[0].mxu0
      %6389 = vmatprep.mubr.bf16.mxu0 0
      %6390 = vmatmul.mubr.bf16.gmra.mrb[0].mxu0 %v6292
      %v6391 = vpop.f32.mrb[0].mxu0
      %v6392 = vadd.f32 0.0, %v6391
      %v6393 = vpop.f32.mrb[0].mxu0
      %v6394 = vpop.f32.mrb[0].mxu0
      %v6395 = vadd.f32 0.0, %v6394
      %v6396 = vpop.f32.mrb[0].mxu0
      %6397 = vmatprep.mubr.bf16.mxu0 0
      %6398 = vmatmul.mubr.bf16.gmra.mrb[0].mxu0 %v6295
      %v6399 = vpop.f32.mrb[0].mxu0
      %v6400 = vadd.f32 0.0, %v6399
      %v6401 = vpop.f32.mrb[0].mxu0
      %v6402 = vpop.f32.mrb[0].mxu0
      %v6403 = vadd.f32 0.0, %v6402
      %v6404 = vpop.f32.mrb[0].mxu0
      %6405 = vmatprep.mubr.bf16.mxu0 0
      %6406 = vmatmul.mubr.bf16.gmra.mrb[0].mxu0 %v6298
      %v6407 = vpop.f32.mrb[0].mxu0
      %v6408 = vadd.f32 0.0, %v6407
      %v6409 = vpop.f32.mrb[0].mxu0
      %v6410 = vpop.f32.mrb[0].mxu0
      %v6411 = vadd.f32 0.0, %v6410
      %v6412 = vpop.f32.mrb[0].mxu0
      %6413 = vmatprep.mubr.bf16.mxu0 0
      %6414 = vmatmul.mubr.bf16.gmra.mrb[0].mxu0 %v6301
      %v6415 = vpop.f32.mrb[0].mxu0
      %v6416 = vadd.f32 0.0, %v6415
      %v6417 = vpop.f32.mrb[0].mxu0
      %v6418 = vpop.f32.mrb[0].mxu0
      %v6419 = vadd.f32 0.0, %v6418
      %v6420 = vpop.f32.mrb[0].mxu0
      %6421 = vmatprep.mubr.bf16.mxu0 0
      %6422 = vmatmul.mubr.bf16.gmra.mrb[0].mxu0 %v6304
      %v6423 = vpop.f32.mrb[0].mxu0
      %v6424 = vadd.f32 0.0, %v6423
      %v6425 = vpop.f32.mrb[0].mxu0
      %v6426 = vpop.f32.mrb[0].mxu0
      %v6427 = vadd.f32 0.0, %v6426
      %v6428 = vpop.f32.mrb[0].mxu0
      %6429 = vmatprep.mubr.bf16.mxu0 0
      %6430 = vmatmul.mubr.bf16.gmra.mrb[0].mxu0 %v6307
      %v6431 = vpop.f32.mrb[0].mxu0
      %v6432 = vadd.f32 0.0, %v6431
      %v6433 = vpop.f32.mrb[0].mxu0
      %v6434 = vpop.f32.mrb[0].mxu0
      %v6435 = vadd.f32 0.0, %v6434
      %v6436 = vpop.f32.mrb[0].mxu0
      %6437 = vmatprep.mubr.bf16.mxu0 0
      %6438 = vmatmul.mubr.bf16.gmra.mrb[0].mxu0 %v6310
      %v6439 = vpop.f32.mrb[0].mxu0
      %v6440 = vadd.f32 0.0, %v6439
      %v6441 = vpop.f32.mrb[0].mxu0
      %v6442 = vpop.f32.mrb[0].mxu0
      %v6443 = vadd.f32 0.0, %v6442
      %v6444 = vpop.f32.mrb[0].mxu0
      %6445 = vmatprep.mubr.bf16.mxu0 0
      %6446 = vmatmul.mubr.bf16.gmra.mrb[0].mxu0 %v6313
      %v6447 = vpop.f32.mrb[0].mxu0
      %v6448 = vadd.f32 0.0, %v6447
      %v6449 = vpop.f32.mrb[0].mxu0
      %v6450 = vpop.f32.mrb[0].mxu0
      %v6451 = vadd.f32 0.0, %v6450
      %v6452 = vpop.f32.mrb[0].mxu0
      %6453 = vmatprep.mubr.bf16.mxu0 0
      %6454 = vmatmul.mubr.bf16.gmra.mrb[0].mxu0 %v6316
      %v6455 = vpop.f32.mrb[0].mxu0
      %v6456 = vadd.f32 0.0, %v6455
      %v6457 = vpop.f32.mrb[0].mxu0
      %v6458 = vpop.f32.mrb[0].mxu0
      %v6459 = vadd.f32 0.0, %v6458
      %v6460 = vpop.f32.mrb[0].mxu0
      %6461 = vmatprep.mubr.bf16.mxu0 0
      %6462 = vmatmul.mubr.bf16.gmra.mrb[0].mxu0 %v6319
      %v6463 = vpop.f32.mrb[0].mxu0
      %v6464 = vadd.f32 0.0, %v6463
      %v6465 = vpop.f32.mrb[0].mxu0
      %v6466 = vpop.f32.mrb[0].mxu0
      %v6467 = vadd.f32 0.0, %v6466
      %v6468 = vpop.f32.mrb[0].mxu0
      %6469 = vmatprep.mubr.bf16.mxu0 0
      %6470 = vmatmul.mubr.bf16.gmra.mrb[0].mxu0 %v6322
      %v6471 = vpop.f32.mrb[0].mxu0
      %v6472 = vadd.f32 0.0, %v6471
      %v6473 = vpop.f32.mrb[0].mxu0
      %v6474 = vpop.f32.mrb[0].mxu0
      %v6475 = vadd.f32 0.0, %v6474
      %v6476 = vpop.f32.mrb[0].mxu0
      %6477 = vmatprep.mubr.bf16.mxu0 0
      %6478 = vmatmul.mubr.bf16.gmra.mrb[0].mxu0 %v6325
      %v6479 = vpop.f32.mrb[0].mxu0
      %v6480 = vadd.f32 0.0, %v6479
      %v6481 = vpop.f32.mrb[0].mxu0
      %v6482 = vpop.f32.mrb[0].mxu0
      %v6483 = vadd.f32 0.0, %v6482
      %v6484 = vpop.f32.mrb[0].mxu0
      %6485 = vmatprep.mubr.bf16.mxu0 0
      %6486 = vmatmul.mubr.bf16.gmra.mrb[0].mxu0 %v6328
      %v6487 = vpop.f32.mrb[0].mxu0
      %v6488 = vadd.f32 0.0, %v6487
      %v6489 = vpop.f32.mrb[0].mxu0
      %v6490 = vpop.f32.mrb[0].mxu0
      %v6491 = vadd.f32 0.0, %v6490
      %v6492 = vpop.f32.mrb[0].mxu0
      %6493 = vdwg.mxu0
      %v6494 = vadd.f32 %v6199, %v6368
      %v6495 = vadd.f32 %v6200, %v6371
      %v6496 = vadd.f32 %v6201, %v6376
      %v6497 = vadd.f32 %v6202, %v6379
      %v6498 = vadd.f32 %v6203, %v6384
      %v6499 = vadd.f32 %v6204, %v6387
      %v6500 = vadd.f32 %v6205, %v6392
      %v6501 = vadd.f32 %v6206, %v6395
      %v6502 = vadd.f32 %v6207, %v6400
      %v6503 = vadd.f32 %v6208, %v6403
      %v6504 = vadd.f32 %v6209, %v6408
      %v6505 = vadd.f32 %v6210, %v6411
      %v6506 = vadd.f32 %v6211, %v6416
      %v6507 = vadd.f32 %v6212, %v6419
      %v6508 = vadd.f32 %v6213, %v6424
      %v6509 = vadd.f32 %v6214, %v6427
      %v6510 = vadd.f32 %v6215, %v6432
      %v6511 = vadd.f32 %v6216, %v6435
      %v6512 = vadd.f32 %v6217, %v6440
      %v6513 = vadd.f32 %v6218, %v6443
      %v6514 = vadd.f32 %v6219, %v6448
      %v6515 = vadd.f32 %v6220, %v6451
      %v6516 = vadd.f32 %v6221, %v6456
      %v6517 = vadd.f32 %v6222, %v6459
      %v6518 = vadd.f32 %v6223, %v6464
      %v6519 = vadd.f32 %v6224, %v6467
      %v6520 = vadd.f32 %v6225, %v6472
      %v6521 = vadd.f32 %v6226, %v6475
      %v6522 = vadd.f32 %v6227, %v6480
      %v6523 = vadd.f32 %v6228, %v6483
      %v6524 = vadd.f32 %v6229, %v6488
      %v6525 = vadd.f32 %v6230, %v6491
      %v6526 = vld [vmem:[%s1437] sm:$0xff]
      %v6527 = vld [vmem:[%s1437 + $0x8] sm:$0xff]
      %v6528 = vld [vmem:[%s1437 + $0x10] sm:$0xff]
      %v6529 = vld [vmem:[%s1437 + $0x18] sm:$0xff]
      %v6530 = vld [vmem:[%s1437 + $0x20] sm:$0xff]
      %v6531 = vld [vmem:[%s1437 + $0x28] sm:$0xff]
      %v6532 = vld [vmem:[%s1437 + $0x30] sm:$0xff]
      %v6533 = vld [vmem:[%s1437 + $0x38] sm:$0xff]
      %v6534 = vld [vmem:[%s1437 + $0x40] sm:$0xff]
      %v6535 = vld [vmem:[%s1437 + $0x48] sm:$0xff]
      %v6536 = vld [vmem:[%s1437 + $0x50] sm:$0xff]
      %v6537 = vld [vmem:[%s1437 + $0x58] sm:$0xff]
      %v6538 = vld [vmem:[%s1437 + $0x60] sm:$0xff]
      %v6539 = vld [vmem:[%s1437 + $0x68] sm:$0xff]
      %v6540 = vld [vmem:[%s1437 + $0x70] sm:$0xff]
      %v6541 = vld [vmem:[%s1437 + $0x78] sm:$0xff]
      %v6542 = vld [vmem:[%s1437 + $0x80] sm:$0xff]
      %v6543 = vld [vmem:[%s1437 + $0x88] sm:$0xff]
      %v6544 = vld [vmem:[%s1437 + $0x90] sm:$0xff]
      %v6545 = vld [vmem:[%s1437 + $0x98] sm:$0xff]
      %v6546 = vld [vmem:[%s1437 + $0xa0] sm:$0xff]
      %v6547 = vld [vmem:[%s1437 + $0xa8] sm:$0xff]
      %v6548 = vld [vmem:[%s1437 + $0xb0] sm:$0xff]
      %v6549 = vld [vmem:[%s1437 + $0xb8] sm:$0xff]
      %v6550 = vld [vmem:[%s1437 + $0xc0] sm:$0xff]
      %v6551 = vld [vmem:[%s1437 + $0xc8] sm:$0xff]
      %v6552 = vld [vmem:[%s1437 + $0xd0] sm:$0xff]
      %v6553 = vld [vmem:[%s1437 + $0xd8] sm:$0xff]
      %v6554 = vld [vmem:[%s1437 + $0xe0] sm:$0xff]
      %v6555 = vld [vmem:[%s1437 + $0xe8] sm:$0xff]
      %v6556 = vld [vmem:[%s1437 + $0xf0] sm:$0xff]
      %v6557 = vld [vmem:[%s1437 + $0xf8] sm:$0xff]
      %v6559 = vlaneseq
      %v6560 = vshrl.u32 %v6559, 7
      %v6561 = vsub.s32 0, %v6560
      %v6562 = vrot.slane %v316, %v6561
      %v6564 = vmul.f32 %v6494, %v6562
      %v6565 = vmul.f32 %v6495, %v6562
      %v6566 = vmul.f32 %v6496, %v6562
      %v6567 = vmul.f32 %v6497, %v6562
      %v6568 = vmul.f32 %v6498, %v6562
      %v6569 = vmul.f32 %v6499, %v6562
      %v6570 = vmul.f32 %v6500, %v6562
      %v6571 = vmul.f32 %v6501, %v6562
      %v6572 = vmul.f32 %v6502, %v6562
      %v6573 = vmul.f32 %v6503, %v6562
      %v6574 = vmul.f32 %v6504, %v6562
      %v6575 = vmul.f32 %v6505, %v6562
      %v6576 = vmul.f32 %v6506, %v6562
      %v6577 = vmul.f32 %v6507, %v6562
      %v6578 = vmul.f32 %v6508, %v6562
      %v6579 = vmul.f32 %v6509, %v6562
      %v6580 = vmul.f32 %v6510, %v6562
      %v6581 = vmul.f32 %v6511, %v6562
      %v6582 = vmul.f32 %v6512, %v6562
      %v6583 = vmul.f32 %v6513, %v6562
      %v6584 = vmul.f32 %v6514, %v6562
      %v6585 = vmul.f32 %v6515, %v6562
      %v6586 = vmul.f32 %v6516, %v6562
      %v6587 = vmul.f32 %v6517, %v6562
      %v6588 = vmul.f32 %v6518, %v6562
      %v6589 = vmul.f32 %v6519, %v6562
      %v6590 = vmul.f32 %v6520, %v6562
      %v6591 = vmul.f32 %v6521, %v6562
      %v6592 = vmul.f32 %v6522, %v6562
      %v6593 = vmul.f32 %v6523, %v6562
      %v6594 = vmul.f32 %v6524, %v6562
      %v6595 = vmul.f32 %v6525, %v6562
      %v6597 = vlaneseq
      %v6598 = vshrl.u32 %v6597, 7
      %v6599 = vsub.s32 0, %v6598
      %v6600 = vrot.slane %v317, %v6599
      %v6602 = vadd.f32 %v6564, %v6600
      %v6603 = vadd.f32 %v6565, %v6600
      %v6604 = vadd.f32 %v6566, %v6600
      %v6605 = vadd.f32 %v6567, %v6600
      %v6606 = vadd.f32 %v6568, %v6600
      %v6607 = vadd.f32 %v6569, %v6600
      %v6608 = vadd.f32 %v6570, %v6600
      %v6609 = vadd.f32 %v6571, %v6600
      %v6610 = vadd.f32 %v6572, %v6600
      %v6611 = vadd.f32 %v6573, %v6600
      %v6612 = vadd.f32 %v6574, %v6600
      %v6613 = vadd.f32 %v6575, %v6600
      %v6614 = vadd.f32 %v6576, %v6600
      %v6615 = vadd.f32 %v6577, %v6600
      %v6616 = vadd.f32 %v6578, %v6600
      %v6617 = vadd.f32 %v6579, %v6600
      %v6618 = vadd.f32 %v6580, %v6600
      %v6619 = vadd.f32 %v6581, %v6600
      %v6620 = vadd.f32 %v6582, %v6600
      %v6621 = vadd.f32 %v6583, %v6600
      %v6622 = vadd.f32 %v6584, %v6600
      %v6623 = vadd.f32 %v6585, %v6600
      %v6624 = vadd.f32 %v6586, %v6600
      %v6625 = vadd.f32 %v6587, %v6600
      %v6626 = vadd.f32 %v6588, %v6600
      %v6627 = vadd.f32 %v6589, %v6600
      %v6628 = vadd.f32 %v6590, %v6600
      %v6629 = vadd.f32 %v6591, %v6600
      %v6630 = vadd.f32 %v6592, %v6600
      %v6631 = vadd.f32 %v6593, %v6600
      %v6632 = vadd.f32 %v6594, %v6600
      %v6633 = vadd.f32 %v6595, %v6600
      %v6634 = vadd.f32 %v6602, %v6526
      %v6635 = vadd.f32 %v6603, %v6527
      %v6636 = vadd.f32 %v6604, %v6528
      %v6637 = vadd.f32 %v6605, %v6529
      %v6638 = vadd.f32 %v6606, %v6530
      %v6639 = vadd.f32 %v6607, %v6531
      %v6640 = vadd.f32 %v6608, %v6532
      %v6641 = vadd.f32 %v6609, %v6533
      %v6642 = vadd.f32 %v6610, %v6534
      %v6643 = vadd.f32 %v6611, %v6535
      %v6644 = vadd.f32 %v6612, %v6536
      %v6645 = vadd.f32 %v6613, %v6537
      %v6646 = vadd.f32 %v6614, %v6538
      %v6647 = vadd.f32 %v6615, %v6539
      %v6648 = vadd.f32 %v6616, %v6540
      %v6649 = vadd.f32 %v6617, %v6541
      %v6650 = vadd.f32 %v6618, %v6542
      %v6651 = vadd.f32 %v6619, %v6543
      %v6652 = vadd.f32 %v6620, %v6544
      %v6653 = vadd.f32 %v6621, %v6545
      %v6654 = vadd.f32 %v6622, %v6546
      %v6655 = vadd.f32 %v6623, %v6547
      %v6656 = vadd.f32 %v6624, %v6548
      %v6657 = vadd.f32 %v6625, %v6549
      %v6658 = vadd.f32 %v6626, %v6550
      %v6659 = vadd.f32 %v6627, %v6551
      %v6660 = vadd.f32 %v6628, %v6552
      %v6661 = vadd.f32 %v6629, %v6553
      %v6662 = vadd.f32 %v6630, %v6554
      %v6663 = vadd.f32 %v6631, %v6555
      %v6664 = vadd.f32 %v6632, %v6556
      %v6665 = vadd.f32 %v6633, %v6557
      %v6666 = vmax.f32 %v6634, 0.0
      %v6667 = vmax.f32 %v6635, 0.0
      %v6668 = vmax.f32 %v6636, 0.0
      %v6669 = vmax.f32 %v6637, 0.0
      %v6670 = vmax.f32 %v6638, 0.0
      %v6671 = vmax.f32 %v6639, 0.0
      %v6672 = vmax.f32 %v6640, 0.0
      %v6673 = vmax.f32 %v6641, 0.0
      %v6674 = vmax.f32 %v6642, 0.0
      %v6675 = vmax.f32 %v6643, 0.0
      %v6676 = vmax.f32 %v6644, 0.0
      %v6677 = vmax.f32 %v6645, 0.0
      %v6678 = vmax.f32 %v6646, 0.0
      %v6679 = vmax.f32 %v6647, 0.0
      %v6680 = vmax.f32 %v6648, 0.0
      %v6681 = vmax.f32 %v6649, 0.0
      %v6682 = vmax.f32 %v6650, 0.0
      %v6683 = vmax.f32 %v6651, 0.0
      %v6684 = vmax.f32 %v6652, 0.0
      %v6685 = vmax.f32 %v6653, 0.0
      %v6686 = vmax.f32 %v6654, 0.0
      %v6687 = vmax.f32 %v6655, 0.0
      %v6688 = vmax.f32 %v6656, 0.0
      %v6689 = vmax.f32 %v6657, 0.0
      %v6690 = vmax.f32 %v6658, 0.0
      %v6691 = vmax.f32 %v6659, 0.0
      %v6692 = vmax.f32 %v6660, 0.0
      %v6693 = vmax.f32 %v6661, 0.0
      %v6694 = vmax.f32 %v6662, 0.0
      %v6695 = vmax.f32 %v6663, 0.0
      %v6696 = vmax.f32 %v6664, 0.0
      %v6697 = vmax.f32 %v6665, 0.0
      %6698 = vst.msk [vmem:[%s305] sm:$0xff] %vm307, %v6666
      %6699 = vst.msk [vmem:[%s305 + $0x8] sm:$0xff] %vm307, %v6667
      %6700 = vst.msk [vmem:[%s305 + $0x10] sm:$0xff] %vm307, %v6668
      %6701 = vst.msk [vmem:[%s305 + $0x18] sm:$0xff] %vm307, %v6669
      %6702 = vst.msk [vmem:[%s305 + $0x20] sm:$0xff] %vm307, %v6670
      %6703 = vst.msk [vmem:[%s305 + $0x28] sm:$0xff] %vm307, %v6671
      %6704 = vst.msk [vmem:[%s305 + $0x30] sm:$0xff] %vm307, %v6672
      %6705 = vst.msk [vmem:[%s305 + $0x38] sm:$0xff] %vm307, %v6673
      %6706 = vst.msk [vmem:[%s305 + $0x40] sm:$0xff] %vm307, %v6674
      %6707 = vst.msk [vmem:[%s305 + $0x48] sm:$0xff] %vm307, %v6675
      %6708 = vst.msk [vmem:[%s305 + $0x50] sm:$0xff] %vm307, %v6676
      %6709 = vst.msk [vmem:[%s305 + $0x58] sm:$0xff] %vm307, %v6677
      %6710 = vst.msk [vmem:[%s305 + $0x60] sm:$0xff] %vm307, %v6678
      %6711 = vst.msk [vmem:[%s305 + $0x68] sm:$0xff] %vm307, %v6679
      %6712 = vst.msk [vmem:[%s305 + $0x70] sm:$0xff] %vm307, %v6680
      %6713 = vst.msk [vmem:[%s305 + $0x78] sm:$0xff] %vm307, %v6681
      %6714 = vst.msk [vmem:[%s305 + $0x80] sm:$0xff] %vm307, %v6682
      %6715 = vst.msk [vmem:[%s305 + $0x88] sm:$0xff] %vm307, %v6683
      %6716 = vst.msk [vmem:[%s305 + $0x90] sm:$0xff] %vm307, %v6684
      %6717 = vst.msk [vmem:[%s305 + $0x98] sm:$0xff] %vm307, %v6685
      %6718 = vst.msk [vmem:[%s305 + $0xa0] sm:$0xff] %vm307, %v6686
      %6719 = vst.msk [vmem:[%s305 + $0xa8] sm:$0xff] %vm307, %v6687
      %6720 = vst.msk [vmem:[%s305 + $0xb0] sm:$0xff] %vm307, %v6688
      %6721 = vst.msk [vmem:[%s305 + $0xb8] sm:$0xff] %vm307, %v6689
      %6722 = vst.msk [vmem:[%s305 + $0xc0] sm:$0xff] %vm307, %v6690
      %6723 = vst.msk [vmem:[%s305 + $0xc8] sm:$0xff] %vm307, %v6691
      %6724 = vst.msk [vmem:[%s305 + $0xd0] sm:$0xff] %vm307, %v6692
      %6725 = vst.msk [vmem:[%s305 + $0xd8] sm:$0xff] %vm307, %v6693
      %6726 = vst.msk [vmem:[%s305 + $0xe0] sm:$0xff] %vm307, %v6694
      %6727 = vst.msk [vmem:[%s305 + $0xe8] sm:$0xff] %vm307, %v6695
      %6728 = vst.msk [vmem:[%s305 + $0xf0] sm:$0xff] %vm307, %v6696
      %6729 = vst.msk [vmem:[%s305 + $0xf8] sm:$0xff] %vm307, %v6697
      %v6730 = vld [vmem:[#allocation2 + $0x100] sm:$0xff]
      %v6731 = vld [vmem:[#allocation2 + $0x108] sm:$0xff]
      %v6732 = vld [vmem:[#allocation2 + $0x110] sm:$0xff]
      %v6733 = vld [vmem:[#allocation2 + $0x118] sm:$0xff]
      %v6734 = vpack.c.bf16 %v6731, %v6730
      %v6735 = vpack.c.bf16 %v6733, %v6732
      %v6736 = vld [vmem:[%s2] sm:$0x3]
      %v6737 = vld [vmem:[#allocation2 + $0x101] sm:$0xff]
      %v6738 = vld [vmem:[#allocation2 + $0x109] sm:$0xff]
      %v6739 = vld [vmem:[#allocation2 + $0x111] sm:$0xff]
      %v6740 = vld [vmem:[#allocation2 + $0x119] sm:$0xff]
      %v6741 = vpack.c.bf16 %v6738, %v6737
      %v6742 = vpack.c.bf16 %v6740, %v6739
      %v6743 = vld [vmem:[%s4036] sm:$0x3]
      %v6745 = vsel %vm307, %v6741, 0
      %v6748 = vsel %vm307, %v6742, 0
      %v6751 = vsel %vm467, %v6743, 0
      %6753 = vmatprep.subr.bf16.mxu0 0
      %6754 = vmatpush1.bf16.msra.mxu0 %v6751
      %6755 = vmatprep.subr.bf16.mxu0 0
      %6756 = vmatpush1.bf16.msra.mxu0 0
      %6757 = vmatprep.subr.bf16.mxu0 0
      %6758 = vmatpush1.bf16.msra.mxu0 0
      %6759 = vmatprep.subr.bf16.mxu0 0
      %6760 = vmatpush1.bf16.msra.mxu0 0
      %6761 = vmatprep.subr.bf16.mxu0 0
      %6762 = vmatpush1.bf16.msra.mxu0 0
      %6763 = vmatprep.subr.bf16.mxu0 0
      %6764 = vmatpush1.bf16.msra.mxu0 0
      %6765 = vmatprep.subr.bf16.mxu0 0
      %6766 = vmatpush1.bf16.msra.mxu0 0
      %6767 = vmatprep.subr.bf16.mxu0 0
      %6768 = vmatpush1.bf16.msra.mxu0 0
      %6769 = vmatprep.subr.bf16.mxu0 0
      %6770 = vmatpush1.bf16.msra.mxu0 0
      %6771 = vmatprep.subr.bf16.mxu0 0
      %6772 = vmatpush1.bf16.msra.mxu0 0
      %6773 = vmatprep.subr.bf16.mxu0 0
      %6774 = vmatpush1.bf16.msra.mxu0 0
      %6775 = vmatprep.subr.bf16.mxu0 0
      %6776 = vmatpush1.bf16.msra.mxu0 0
      %6777 = vmatprep.subr.bf16.mxu0 0
      %6778 = vmatpush1.bf16.msra.mxu0 0
      %6779 = vmatprep.subr.bf16.mxu0 0
      %6780 = vmatpush1.bf16.msra.mxu0 0
      %6781 = vmatprep.subr.bf16.mxu0 0
      %6782 = vmatpush1.bf16.msra.mxu0 0
      %6783 = vmatprep.subr.bf16.mxu0 0
      %6784 = vmatpush1.bf16.msra.mxu0 0
      %6785 = vmatprep.mubr.bf16.mxu0 0
      %6786 = vmatmul.mubr.bf16.gmra.mrb[0].mxu0 %v6745
      %v6787 = vpop.f32.mrb[0].mxu0
      %v6788 = vadd.f32 0.0, %v6787
      %v6789 = vpop.f32.mrb[0].mxu0
      %v6790 = vpop.f32.mrb[0].mxu0
      %v6791 = vadd.f32 0.0, %v6790
      %v6792 = vpop.f32.mrb[0].mxu0
      %6793 = vmatprep.mubr.bf16.mxu0 0
      %6794 = vmatmul.mubr.bf16.gmra.mrb[0].mxu0 %v6748
      %v6795 = vpop.f32.mrb[0].mxu0
      %v6796 = vadd.f32 0.0, %v6795
      %v6797 = vpop.f32.mrb[0].mxu0
      %v6798 = vpop.f32.mrb[0].mxu0
      %v6799 = vadd.f32 0.0, %v6798
      %v6800 = vpop.f32.mrb[0].mxu0
      %6801 = vdwg.mxu0
      %v6803 = vsel %vm307, %v6734, 0
      %v6806 = vsel %vm307, %v6735, 0
      %v6809 = vsel %vm467, %v6736, 0
      %6811 = vmatprep.subr.bf16.mxu0 0
      %6812 = vmatpush1.bf16.msra.mxu0 %v6809
      %6813 = vmatprep.subr.bf16.mxu0 0
      %6814 = vmatpush1.bf16.msra.mxu0 0
      %6815 = vmatprep.subr.bf16.mxu0 0
      %6816 = vmatpush1.bf16.msra.mxu0 0
      %6817 = vmatprep.subr.bf16.mxu0 0
      %6818 = vmatpush1.bf16.msra.mxu0 0
      %6819 = vmatprep.subr.bf16.mxu0 0
      %6820 = vmatpush1.bf16.msra.mxu0 0
      %6821 = vmatprep.subr.bf16.mxu0 0
      %6822 = vmatpush1.bf16.msra.mxu0 0
      %6823 = vmatprep.subr.bf16.mxu0 0
      %6824 = vmatpush1.bf16.msra.mxu0 0
      %6825 = vmatprep.subr.bf16.mxu0 0
      %6826 = vmatpush1.bf16.msra.mxu0 0
      %6827 = vmatprep.subr.bf16.mxu0 0
      %6828 = vmatpush1.bf16.msra.mxu0 0
      %6829 = vmatprep.subr.bf16.mxu0 0
      %6830 = vmatpush1.bf16.msra.mxu0 0
      %6831 = vmatprep.subr.bf16.mxu0 0
      %6832 = vmatpush1.bf16.msra.mxu0 0
      %6833 = vmatprep.subr.bf16.mxu0 0
      %6834 = vmatpush1.bf16.msra.mxu0 0
      %6835 = vmatprep.subr.bf16.mxu0 0
      %6836 = vmatpush1.bf16.msra.mxu0 0
      %6837 = vmatprep.subr.bf16.mxu0 0
      %6838 = vmatpush1.bf16.msra.mxu0 0
      %6839 = vmatprep.subr.bf16.mxu0 0
      %6840 = vmatpush1.bf16.msra.mxu0 0
      %6841 = vmatprep.subr.bf16.mxu0 0
      %6842 = vmatpush1.bf16.msra.mxu0 0
      %6843 = vmatprep.mubr.bf16.mxu0 0
      %6844 = vmatmul.mubr.bf16.gmra.mrb[0].mxu0 %v6803
      %v6845 = vpop.f32.mrb[0].mxu0
      %v6846 = vadd.f32 %v6788, %v6845
      %v6847 = vpop.f32.mrb[0].mxu0
      %v6848 = vpop.f32.mrb[0].mxu0
      %v6849 = vadd.f32 %v6791, %v6848
      %v6850 = vpop.f32.mrb[0].mxu0
      %6851 = vmatprep.mubr.bf16.mxu0 0
      %6852 = vmatmul.mubr.bf16.gmra.mrb[0].mxu0 %v6806
      %v6853 = vpop.f32.mrb[0].mxu0
      %v6854 = vadd.f32 %v6796, %v6853
      %v6855 = vpop.f32.mrb[0].mxu0
      %v6856 = vpop.f32.mrb[0].mxu0
      %v6857 = vadd.f32 %v6799, %v6856
      %v6858 = vpop.f32.mrb[0].mxu0
      %6859 = vdwg.mxu0
      %v6860 = vld [vmem:[#allocation2 + $0x102] sm:$0xff]
      %v6861 = vld [vmem:[#allocation2 + $0x10a] sm:$0xff]
      %v6862 = vld [vmem:[#allocation2 + $0x112] sm:$0xff]
      %v6863 = vld [vmem:[#allocation2 + $0x11a] sm:$0xff]
      %v6864 = vpack.c.bf16 %v6861, %v6860
      %v6865 = vpack.c.bf16 %v6863, %v6862
      %v6866 = vld [vmem:[%s4511] sm:$0x3]
      %v6868 = vsel %vm307, %v6864, 0
      %v6871 = vsel %vm307, %v6865, 0
      %v6874 = vsel %vm467, %v6866, 0
      %6876 = vmatprep.subr.bf16.mxu0 0
      %6877 = vmatpush1.bf16.msra.mxu0 %v6874
      %6878 = vmatprep.subr.bf16.mxu0 0
      %6879 = vmatpush1.bf16.msra.mxu0 0
      %6880 = vmatprep.subr.bf16.mxu0 0
      %6881 = vmatpush1.bf16.msra.mxu0 0
      %6882 = vmatprep.subr.bf16.mxu0 0
      %6883 = vmatpush1.bf16.msra.mxu0 0
      %6884 = vmatprep.subr.bf16.mxu0 0
      %6885 = vmatpush1.bf16.msra.mxu0 0
      %6886 = vmatprep.subr.bf16.mxu0 0
      %6887 = vmatpush1.bf16.msra.mxu0 0
      %6888 = vmatprep.subr.bf16.mxu0 0
      %6889 = vmatpush1.bf16.msra.mxu0 0
      %6890 = vmatprep.subr.bf16.mxu0 0
      %6891 = vmatpush1.bf16.msra.mxu0 0
      %6892 = vmatprep.subr.bf16.mxu0 0
      %6893 = vmatpush1.bf16.msra.mxu0 0
      %6894 = vmatprep.subr.bf16.mxu0 0
      %6895 = vmatpush1.bf16.msra.mxu0 0
      %6896 = vmatprep.subr.bf16.mxu0 0
      %6897 = vmatpush1.bf16.msra.mxu0 0
      %6898 = vmatprep.subr.bf16.mxu0 0
      %6899 = vmatpush1.bf16.msra.mxu0 0
      %6900 = vmatprep.subr.bf16.mxu0 0
      %6901 = vmatpush1.bf16.msra.mxu0 0
      %6902 = vmatprep.subr.bf16.mxu0 0
      %6903 = vmatpush1.bf16.msra.mxu0 0
      %6904 = vmatprep.subr.bf16.mxu0 0
      %6905 = vmatpush1.bf16.msra.mxu0 0
      %6906 = vmatprep.subr.bf16.mxu0 0
      %6907 = vmatpush1.bf16.msra.mxu0 0
      %6908 = vmatprep.mubr.bf16.mxu0 0
      %6909 = vmatmul.mubr.bf16.gmra.mrb[0].mxu0 %v6868
      %v6910 = vpop.f32.mrb[0].mxu0
      %v6911 = vadd.f32 0.0, %v6910
      %v6912 = vpop.f32.mrb[0].mxu0
      %v6913 = vpop.f32.mrb[0].mxu0
      %v6914 = vadd.f32 0.0, %v6913
      %v6915 = vpop.f32.mrb[0].mxu0
      %6916 = vmatprep.mubr.bf16.mxu0 0
      %6917 = vmatmul.mubr.bf16.gmra.mrb[0].mxu0 %v6871
      %v6918 = vpop.f32.mrb[0].mxu0
      %v6919 = vadd.f32 0.0, %v6918
      %v6920 = vpop.f32.mrb[0].mxu0
      %v6921 = vpop.f32.mrb[0].mxu0
      %v6922 = vadd.f32 0.0, %v6921
      %v6923 = vpop.f32.mrb[0].mxu0
      %6924 = vdwg.mxu0
      %v6925 = vadd.f32 %v6846, %v6911
      %v6926 = vadd.f32 %v6849, %v6914
      %v6927 = vadd.f32 %v6854, %v6919
      %v6928 = vadd.f32 %v6857, %v6922
      %v6929 = vld [vmem:[#allocation2 + $0x112] sm:$0xff]
      %v6930 = vld [vmem:[#allocation2 + $0x11a] sm:$0xff]
      %v6931 = vld [vmem:[#allocation2 + $0x122] sm:$0xff]
      %v6932 = vld [vmem:[#allocation2 + $0x12a] sm:$0xff]
      %v6933 = vpack.c.bf16 %v6930, %v6929
      %v6934 = vpack.c.bf16 %v6932, %v6931
      %v6935 = vld [vmem:[%s4806] sm:$0x3]
      %v6937 = vsel %vm307, %v6933, 0
      %v6940 = vsel %vm307, %v6934, 0
      %v6943 = vsel %vm467, %v6935, 0
      %6945 = vmatprep.subr.bf16.mxu0 0
      %6946 = vmatpush1.bf16.msra.mxu0 %v6943
      %6947 = vmatprep.subr.bf16.mxu0 0
      %6948 = vmatpush1.bf16.msra.mxu0 0
      %6949 = vmatprep.subr.bf16.mxu0 0
      %6950 = vmatpush1.bf16.msra.mxu0 0
      %6951 = vmatprep.subr.bf16.mxu0 0
      %6952 = vmatpush1.bf16.msra.mxu0 0
      %6953 = vmatprep.subr.bf16.mxu0 0
      %6954 = vmatpush1.bf16.msra.mxu0 0
      %6955 = vmatprep.subr.bf16.mxu0 0
      %6956 = vmatpush1.bf16.msra.mxu0 0
      %6957 = vmatprep.subr.bf16.mxu0 0
      %6958 = vmatpush1.bf16.msra.mxu0 0
      %6959 = vmatprep.subr.bf16.mxu0 0
      %6960 = vmatpush1.bf16.msra.mxu0 0
      %6961 = vmatprep.subr.bf16.mxu0 0
      %6962 = vmatpush1.bf16.msra.mxu0 0
      %6963 = vmatprep.subr.bf16.mxu0 0
      %6964 = vmatpush1.bf16.msra.mxu0 0
      %6965 = vmatprep.subr.bf16.mxu0 0
      %6966 = vmatpush1.bf16.msra.mxu0 0
      %6967 = vmatprep.subr.bf16.mxu0 0
      %6968 = vmatpush1.bf16.msra.mxu0 0
      %6969 = vmatprep.subr.bf16.mxu0 0
      %6970 = vmatpush1.bf16.msra.mxu0 0
      %6971 = vmatprep.subr.bf16.mxu0 0
      %6972 = vmatpush1.bf16.msra.mxu0 0
      %6973 = vmatprep.subr.bf16.mxu0 0
      %6974 = vmatpush1.bf16.msra.mxu0 0
      %6975 = vmatprep.subr.bf16.mxu0 0
      %6976 = vmatpush1.bf16.msra.mxu0 0
      %6977 = vmatprep.mubr.bf16.mxu0 0
      %6978 = vmatmul.mubr.bf16.gmra.mrb[0].mxu0 %v6937
      %v6979 = vpop.f32.mrb[0].mxu0
      %v6980 = vadd.f32 0.0, %v6979
      %v6981 = vpop.f32.mrb[0].mxu0
      %v6982 = vpop.f32.mrb[0].mxu0
      %v6983 = vadd.f32 0.0, %v6982
      %v6984 = vpop.f32.mrb[0].mxu0
      %6985 = vmatprep.mubr.bf16.mxu0 0
      %6986 = vmatmul.mubr.bf16.gmra.mrb[0].mxu0 %v6940
      %v6987 = vpop.f32.mrb[0].mxu0
      %v6988 = vadd.f32 0.0, %v6987
      %v6989 = vpop.f32.mrb[0].mxu0
      %v6990 = vpop.f32.mrb[0].mxu0
      %v6991 = vadd.f32 0.0, %v6990
      %v6992 = vpop.f32.mrb[0].mxu0
      %6993 = vdwg.mxu0
      %v6994 = vadd.f32 %v6925, %v6980
      %v6995 = vadd.f32 %v6926, %v6983
      %v6996 = vadd.f32 %v6927, %v6988
      %v6997 = vadd.f32 %v6928, %v6991
      %v6998 = vld [vmem:[#allocation2 + $0x113] sm:$0xff]
      %v6999 = vld [vmem:[#allocation2 + $0x11b] sm:$0xff]
      %v7000 = vld [vmem:[#allocation2 + $0x123] sm:$0xff]
      %v7001 = vld [vmem:[#allocation2 + $0x12b] sm:$0xff]
      %v7002 = vpack.c.bf16 %v6999, %v6998
      %v7003 = vpack.c.bf16 %v7001, %v7000
      %v7004 = vld [vmem:[%s5100] sm:$0x3]
      %v7006 = vsel %vm307, %v7002, 0
      %v7009 = vsel %vm307, %v7003, 0
      %v7012 = vsel %vm467, %v7004, 0
      %7014 = vmatprep.subr.bf16.mxu0 0
      %7015 = vmatpush1.bf16.msra.mxu0 %v7012
      %7016 = vmatprep.subr.bf16.mxu0 0
      %7017 = vmatpush1.bf16.msra.mxu0 0
      %7018 = vmatprep.subr.bf16.mxu0 0
      %7019 = vmatpush1.bf16.msra.mxu0 0
      %7020 = vmatprep.subr.bf16.mxu0 0
      %7021 = vmatpush1.bf16.msra.mxu0 0
      %7022 = vmatprep.subr.bf16.mxu0 0
      %7023 = vmatpush1.bf16.msra.mxu0 0
      %7024 = vmatprep.subr.bf16.mxu0 0
      %7025 = vmatpush1.bf16.msra.mxu0 0
      %7026 = vmatprep.subr.bf16.mxu0 0
      %7027 = vmatpush1.bf16.msra.mxu0 0
      %7028 = vmatprep.subr.bf16.mxu0 0
      %7029 = vmatpush1.bf16.msra.mxu0 0
      %7030 = vmatprep.subr.bf16.mxu0 0
      %7031 = vmatpush1.bf16.msra.mxu0 0
      %7032 = vmatprep.subr.bf16.mxu0 0
      %7033 = vmatpush1.bf16.msra.mxu0 0
      %7034 = vmatprep.subr.bf16.mxu0 0
      %7035 = vmatpush1.bf16.msra.mxu0 0
      %7036 = vmatprep.subr.bf16.mxu0 0
      %7037 = vmatpush1.bf16.msra.mxu0 0
      %7038 = vmatprep.subr.bf16.mxu0 0
      %7039 = vmatpush1.bf16.msra.mxu0 0
      %7040 = vmatprep.subr.bf16.mxu0 0
      %7041 = vmatpush1.bf16.msra.mxu0 0
      %7042 = vmatprep.subr.bf16.mxu0 0
      %7043 = vmatpush1.bf16.msra.mxu0 0
      %7044 = vmatprep.subr.bf16.mxu0 0
      %7045 = vmatpush1.bf16.msra.mxu0 0
      %7046 = vmatprep.mubr.bf16.mxu0 0
      %7047 = vmatmul.mubr.bf16.gmra.mrb[0].mxu0 %v7006
      %v7048 = vpop.f32.mrb[0].mxu0
      %v7049 = vadd.f32 0.0, %v7048
      %v7050 = vpop.f32.mrb[0].mxu0
      %v7051 = vpop.f32.mrb[0].mxu0
      %v7052 = vadd.f32 0.0, %v7051
      %v7053 = vpop.f32.mrb[0].mxu0
      %7054 = vmatprep.mubr.bf16.mxu0 0
      %7055 = vmatmul.mubr.bf16.gmra.mrb[0].mxu0 %v7009
      %v7056 = vpop.f32.mrb[0].mxu0
      %v7057 = vadd.f32 0.0, %v7056
      %v7058 = vpop.f32.mrb[0].mxu0
      %v7059 = vpop.f32.mrb[0].mxu0
      %v7060 = vadd.f32 0.0, %v7059
      %v7061 = vpop.f32.mrb[0].mxu0
      %7062 = vdwg.mxu0
      %v7063 = vadd.f32 %v6994, %v7049
      %v7064 = vadd.f32 %v6995, %v7052
      %v7065 = vadd.f32 %v6996, %v7057
      %v7066 = vadd.f32 %v6997, %v7060
      %v7067 = vld [vmem:[#allocation2 + $0x114] sm:$0xff]
      %v7068 = vld [vmem:[#allocation2 + $0x11c] sm:$0xff]
      %v7069 = vld [vmem:[#allocation2 + $0x124] sm:$0xff]
      %v7070 = vld [vmem:[#allocation2 + $0x12c] sm:$0xff]
      %v7071 = vpack.c.bf16 %v7068, %v7067
      %v7072 = vpack.c.bf16 %v7070, %v7069
      %v7073 = vld [vmem:[%s5395] sm:$0x3]
      %v7075 = vsel %vm307, %v7071, 0
      %v7078 = vsel %vm307, %v7072, 0
      %v7081 = vsel %vm467, %v7073, 0
      %7083 = vmatprep.subr.bf16.mxu0 0
      %7084 = vmatpush1.bf16.msra.mxu0 %v7081
      %7085 = vmatprep.subr.bf16.mxu0 0
      %7086 = vmatpush1.bf16.msra.mxu0 0
      %7087 = vmatprep.subr.bf16.mxu0 0
      %7088 = vmatpush1.bf16.msra.mxu0 0
      %7089 = vmatprep.subr.bf16.mxu0 0
      %7090 = vmatpush1.bf16.msra.mxu0 0
      %7091 = vmatprep.subr.bf16.mxu0 0
      %7092 = vmatpush1.bf16.msra.mxu0 0
      %7093 = vmatprep.subr.bf16.mxu0 0
      %7094 = vmatpush1.bf16.msra.mxu0 0
      %7095 = vmatprep.subr.bf16.mxu0 0
      %7096 = vmatpush1.bf16.msra.mxu0 0
      %7097 = vmatprep.subr.bf16.mxu0 0
      %7098 = vmatpush1.bf16.msra.mxu0 0
      %7099 = vmatprep.subr.bf16.mxu0 0
      %7100 = vmatpush1.bf16.msra.mxu0 0
      %7101 = vmatprep.subr.bf16.mxu0 0
      %7102 = vmatpush1.bf16.msra.mxu0 0
      %7103 = vmatprep.subr.bf16.mxu0 0
      %7104 = vmatpush1.bf16.msra.mxu0 0
      %7105 = vmatprep.subr.bf16.mxu0 0
      %7106 = vmatpush1.bf16.msra.mxu0 0
      %7107 = vmatprep.subr.bf16.mxu0 0
      %7108 = vmatpush1.bf16.msra.mxu0 0
      %7109 = vmatprep.subr.bf16.mxu0 0
      %7110 = vmatpush1.bf16.msra.mxu0 0
      %7111 = vmatprep.subr.bf16.mxu0 0
      %7112 = vmatpush1.bf16.msra.mxu0 0
      %7113 = vmatprep.subr.bf16.mxu0 0
      %7114 = vmatpush1.bf16.msra.mxu0 0
      %7115 = vmatprep.mubr.bf16.mxu0 0
      %7116 = vmatmul.mubr.bf16.gmra.mrb[0].mxu0 %v7075
      %v7117 = vpop.f32.mrb[0].mxu0
      %v7118 = vadd.f32 0.0, %v7117
      %v7119 = vpop.f32.mrb[0].mxu0
      %v7120 = vpop.f32.mrb[0].mxu0
      %v7121 = vadd.f32 0.0, %v7120
      %v7122 = vpop.f32.mrb[0].mxu0
      %7123 = vmatprep.mubr.bf16.mxu0 0
      %7124 = vmatmul.mubr.bf16.gmra.mrb[0].mxu0 %v7078
      %v7125 = vpop.f32.mrb[0].mxu0
      %v7126 = vadd.f32 0.0, %v7125
      %v7127 = vpop.f32.mrb[0].mxu0
      %v7128 = vpop.f32.mrb[0].mxu0
      %v7129 = vadd.f32 0.0, %v7128
      %v7130 = vpop.f32.mrb[0].mxu0
      %7131 = vdwg.mxu0
      %v7132 = vadd.f32 %v7063, %v7118
      %v7133 = vadd.f32 %v7064, %v7121
      %v7134 = vadd.f32 %v7065, %v7126
      %v7135 = vadd.f32 %v7066, %v7129
      %v7136 = vld [vmem:[#allocation2 + $0x124] sm:$0xff]
      %v7137 = vld [vmem:[#allocation2 + $0x12c] sm:$0xff]
      %v7138 = vld [vmem:[#allocation2 + $0x134] sm:$0xff]
      %v7139 = vld [vmem:[#allocation2 + $0x13c] sm:$0xff]
      %v7140 = vpack.c.bf16 %v7137, %v7136
      %v7141 = vpack.c.bf16 %v7139, %v7138
      %v7142 = vld [vmem:[%s5690] sm:$0x3]
      %v7144 = vsel %vm307, %v7140, 0
      %v7147 = vsel %vm307, %v7141, 0
      %v7150 = vsel %vm467, %v7142, 0
      %7152 = vmatprep.subr.bf16.mxu0 0
      %7153 = vmatpush1.bf16.msra.mxu0 %v7150
      %7154 = vmatprep.subr.bf16.mxu0 0
      %7155 = vmatpush1.bf16.msra.mxu0 0
      %7156 = vmatprep.subr.bf16.mxu0 0
      %7157 = vmatpush1.bf16.msra.mxu0 0
      %7158 = vmatprep.subr.bf16.mxu0 0
      %7159 = vmatpush1.bf16.msra.mxu0 0
      %7160 = vmatprep.subr.bf16.mxu0 0
      %7161 = vmatpush1.bf16.msra.mxu0 0
      %7162 = vmatprep.subr.bf16.mxu0 0
      %7163 = vmatpush1.bf16.msra.mxu0 0
      %7164 = vmatprep.subr.bf16.mxu0 0
      %7165 = vmatpush1.bf16.msra.mxu0 0
      %7166 = vmatprep.subr.bf16.mxu0 0
      %7167 = vmatpush1.bf16.msra.mxu0 0
      %7168 = vmatprep.subr.bf16.mxu0 0
      %7169 = vmatpush1.bf16.msra.mxu0 0
      %7170 = vmatprep.subr.bf16.mxu0 0
      %7171 = vmatpush1.bf16.msra.mxu0 0
      %7172 = vmatprep.subr.bf16.mxu0 0
      %7173 = vmatpush1.bf16.msra.mxu0 0
      %7174 = vmatprep.subr.bf16.mxu0 0
      %7175 = vmatpush1.bf16.msra.mxu0 0
      %7176 = vmatprep.subr.bf16.mxu0 0
      %7177 = vmatpush1.bf16.msra.mxu0 0
      %7178 = vmatprep.subr.bf16.mxu0 0
      %7179 = vmatpush1.bf16.msra.mxu0 0
      %7180 = vmatprep.subr.bf16.mxu0 0
      %7181 = vmatpush1.bf16.msra.mxu0 0
      %7182 = vmatprep.subr.bf16.mxu0 0
      %7183 = vmatpush1.bf16.msra.mxu0 0
      %7184 = vmatprep.mubr.bf16.mxu0 0
      %7185 = vmatmul.mubr.bf16.gmra.mrb[0].mxu0 %v7144
      %v7186 = vpop.f32.mrb[0].mxu0
      %v7187 = vadd.f32 0.0, %v7186
      %v7188 = vpop.f32.mrb[0].mxu0
      %v7189 = vpop.f32.mrb[0].mxu0
      %v7190 = vadd.f32 0.0, %v7189
      %v7191 = vpop.f32.mrb[0].mxu0
      %7192 = vmatprep.mubr.bf16.mxu0 0
      %7193 = vmatmul.mubr.bf16.gmra.mrb[0].mxu0 %v7147
      %v7194 = vpop.f32.mrb[0].mxu0
      %v7195 = vadd.f32 0.0, %v7194
      %v7196 = vpop.f32.mrb[0].mxu0
      %v7197 = vpop.f32.mrb[0].mxu0
      %v7198 = vadd.f32 0.0, %v7197
      %v7199 = vpop.f32.mrb[0].mxu0
      %7200 = vdwg.mxu0
      %v7201 = vadd.f32 %v7132, %v7187
      %v7202 = vadd.f32 %v7133, %v7190
      %v7203 = vadd.f32 %v7134, %v7195
      %v7204 = vadd.f32 %v7135, %v7198
      %v7205 = vld [vmem:[#allocation2 + $0x125] sm:$0xff]
      %v7206 = vld [vmem:[#allocation2 + $0x12d] sm:$0xff]
      %v7207 = vld [vmem:[#allocation2 + $0x135] sm:$0xff]
      %v7208 = vld [vmem:[#allocation2 + $0x13d] sm:$0xff]
      %v7209 = vpack.c.bf16 %v7206, %v7205
      %v7210 = vpack.c.bf16 %v7208, %v7207
      %v7211 = vld [vmem:[%s5985] sm:$0x3]
      %v7213 = vsel %vm307, %v7209, 0
      %v7216 = vsel %vm307, %v7210, 0
      %v7219 = vsel %vm467, %v7211, 0
      %7221 = vmatprep.subr.bf16.mxu0 0
      %7222 = vmatpush1.bf16.msra.mxu0 %v7219
      %7223 = vmatprep.subr.bf16.mxu0 0
      %7224 = vmatpush1.bf16.msra.mxu0 0
      %7225 = vmatprep.subr.bf16.mxu0 0
      %7226 = vmatpush1.bf16.msra.mxu0 0
      %7227 = vmatprep.subr.bf16.mxu0 0
      %7228 = vmatpush1.bf16.msra.mxu0 0
      %7229 = vmatprep.subr.bf16.mxu0 0
      %7230 = vmatpush1.bf16.msra.mxu0 0
      %7231 = vmatprep.subr.bf16.mxu0 0
      %7232 = vmatpush1.bf16.msra.mxu0 0
      %7233 = vmatprep.subr.bf16.mxu0 0
      %7234 = vmatpush1.bf16.msra.mxu0 0
      %7235 = vmatprep.subr.bf16.mxu0 0
      %7236 = vmatpush1.bf16.msra.mxu0 0
      %7237 = vmatprep.subr.bf16.mxu0 0
      %7238 = vmatpush1.bf16.msra.mxu0 0
      %7239 = vmatprep.subr.bf16.mxu0 0
      %7240 = vmatpush1.bf16.msra.mxu0 0
      %7241 = vmatprep.subr.bf16.mxu0 0
      %7242 = vmatpush1.bf16.msra.mxu0 0
      %7243 = vmatprep.subr.bf16.mxu0 0
      %7244 = vmatpush1.bf16.msra.mxu0 0
      %7245 = vmatprep.subr.bf16.mxu0 0
      %7246 = vmatpush1.bf16.msra.mxu0 0
      %7247 = vmatprep.subr.bf16.mxu0 0
      %7248 = vmatpush1.bf16.msra.mxu0 0
      %7249 = vmatprep.subr.bf16.mxu0 0
      %7250 = vmatpush1.bf16.msra.mxu0 0
      %7251 = vmatprep.subr.bf16.mxu0 0
      %7252 = vmatpush1.bf16.msra.mxu0 0
      %7253 = vmatprep.mubr.bf16.mxu0 0
      %7254 = vmatmul.mubr.bf16.gmra.mrb[0].mxu0 %v7213
      %v7255 = vpop.f32.mrb[0].mxu0
      %v7256 = vadd.f32 0.0, %v7255
      %v7257 = vpop.f32.mrb[0].mxu0
      %v7258 = vpop.f32.mrb[0].mxu0
      %v7259 = vadd.f32 0.0, %v7258
      %v7260 = vpop.f32.mrb[0].mxu0
      %7261 = vmatprep.mubr.bf16.mxu0 0
      %7262 = vmatmul.mubr.bf16.gmra.mrb[0].mxu0 %v7216
      %v7263 = vpop.f32.mrb[0].mxu0
      %v7264 = vadd.f32 0.0, %v7263
      %v7265 = vpop.f32.mrb[0].mxu0
      %v7266 = vpop.f32.mrb[0].mxu0
      %v7267 = vadd.f32 0.0, %v7266
      %v7268 = vpop.f32.mrb[0].mxu0
      %7269 = vdwg.mxu0
      %v7270 = vadd.f32 %v7201, %v7256
      %v7271 = vadd.f32 %v7202, %v7259
      %v7272 = vadd.f32 %v7203, %v7264
      %v7273 = vadd.f32 %v7204, %v7267
      %v7274 = vld [vmem:[#allocation2 + $0x126] sm:$0xff]
      %v7275 = vld [vmem:[#allocation2 + $0x12e] sm:$0xff]
      %v7276 = vld [vmem:[#allocation2 + $0x136] sm:$0xff]
      %v7277 = vld [vmem:[#allocation2 + $0x13e] sm:$0xff]
      %v7278 = vpack.c.bf16 %v7275, %v7274
      %v7279 = vpack.c.bf16 %v7277, %v7276
      %v7280 = vld [vmem:[%s6280] sm:$0x3]
      %v7282 = vsel %vm307, %v7278, 0
      %v7285 = vsel %vm307, %v7279, 0
      %v7288 = vsel %vm467, %v7280, 0
      %7290 = vmatprep.subr.bf16.mxu0 0
      %7291 = vmatpush1.bf16.msra.mxu0 %v7288
      %7292 = vmatprep.subr.bf16.mxu0 0
      %7293 = vmatpush1.bf16.msra.mxu0 0
      %7294 = vmatprep.subr.bf16.mxu0 0
      %7295 = vmatpush1.bf16.msra.mxu0 0
      %7296 = vmatprep.subr.bf16.mxu0 0
      %7297 = vmatpush1.bf16.msra.mxu0 0
      %7298 = vmatprep.subr.bf16.mxu0 0
      %7299 = vmatpush1.bf16.msra.mxu0 0
      %7300 = vmatprep.subr.bf16.mxu0 0
      %7301 = vmatpush1.bf16.msra.mxu0 0
      %7302 = vmatprep.subr.bf16.mxu0 0
      %7303 = vmatpush1.bf16.msra.mxu0 0
      %7304 = vmatprep.subr.bf16.mxu0 0
      %7305 = vmatpush1.bf16.msra.mxu0 0
      %7306 = vmatprep.subr.bf16.mxu0 0
      %7307 = vmatpush1.bf16.msra.mxu0 0
      %7308 = vmatprep.subr.bf16.mxu0 0
      %7309 = vmatpush1.bf16.msra.mxu0 0
      %7310 = vmatprep.subr.bf16.mxu0 0
      %7311 = vmatpush1.bf16.msra.mxu0 0
      %7312 = vmatprep.subr.bf16.mxu0 0
      %7313 = vmatpush1.bf16.msra.mxu0 0
      %7314 = vmatprep.subr.bf16.mxu0 0
      %7315 = vmatpush1.bf16.msra.mxu0 0
      %7316 = vmatprep.subr.bf16.mxu0 0
      %7317 = vmatpush1.bf16.msra.mxu0 0
      %7318 = vmatprep.subr.bf16.mxu0 0
      %7319 = vmatpush1.bf16.msra.mxu0 0
      %7320 = vmatprep.subr.bf16.mxu0 0
      %7321 = vmatpush1.bf16.msra.mxu0 0
      %7322 = vmatprep.mubr.bf16.mxu0 0
      %7323 = vmatmul.mubr.bf16.gmra.mrb[0].mxu0 %v7282
      %v7324 = vpop.f32.mrb[0].mxu0
      %v7325 = vadd.f32 0.0, %v7324
      %v7326 = vpop.f32.mrb[0].mxu0
      %v7327 = vpop.f32.mrb[0].mxu0
      %v7328 = vadd.f32 0.0, %v7327
      %v7329 = vpop.f32.mrb[0].mxu0
      %7330 = vmatprep.mubr.bf16.mxu0 0
      %7331 = vmatmul.mubr.bf16.gmra.mrb[0].mxu0 %v7285
      %v7332 = vpop.f32.mrb[0].mxu0
      %v7333 = vadd.f32 0.0, %v7332
      %v7334 = vpop.f32.mrb[0].mxu0
      %v7335 = vpop.f32.mrb[0].mxu0
      %v7336 = vadd.f32 0.0, %v7335
      %v7337 = vpop.f32.mrb[0].mxu0
      %7338 = vdwg.mxu0
      %v7339 = vadd.f32 %v7270, %v7325
      %v7340 = vadd.f32 %v7271, %v7328
      %v7341 = vadd.f32 %v7272, %v7333
      %v7342 = vadd.f32 %v7273, %v7336
      %v7343 = vld [vmem:[%s300 + $0x113] sm:$0xff]
      %v7344 = vld [vmem:[%s300 + $0x11b] sm:$0xff]
      %v7345 = vld [vmem:[%s300 + $0x123] sm:$0xff]
      %v7346 = vld [vmem:[%s300 + $0x12b] sm:$0xff]
      %v7347 = vmul.f32 %v7339, %v6562
      %v7348 = vmul.f32 %v7340, %v6562
      %v7349 = vmul.f32 %v7341, %v6562
      %v7350 = vmul.f32 %v7342, %v6562
      %v7351 = vadd.f32 %v7347, %v6600
      %v7352 = vadd.f32 %v7348, %v6600
      %v7353 = vadd.f32 %v7349, %v6600
      %v7354 = vadd.f32 %v7350, %v6600
      %v7355 = vadd.f32 %v7351, %v7343
      %v7356 = vadd.f32 %v7352, %v7344
      %v7357 = vadd.f32 %v7353, %v7345
      %v7358 = vadd.f32 %v7354, %v7346
      %v7359 = vmax.f32 %v7355, 0.0
      %v7360 = vmax.f32 %v7356, 0.0
      %v7361 = vmax.f32 %v7357, 0.0
      %v7362 = vmax.f32 %v7358, 0.0
      %7363 = vst.msk [vmem:[%s305 + $0x100] sm:$0xff] %vm307, %v7359
      %7364 = vst.msk [vmem:[%s305 + $0x108] sm:$0xff] %vm307, %v7360
      %7365 = vst.msk [vmem:[%s305 + $0x110] sm:$0xff] %vm307, %v7361
      %7366 = vst.msk [vmem:[%s305 + $0x118] sm:$0xff] %vm307, %v7362
      %p7367 = scmp.lt.s32.totalorder %s19, 1
      %s7368 = scalar_select %p7367, %s19, 1
      %s7369 = smul.addr %s7368, 36
      %s7370 = smul.addr %s7369, 8
      %s7371 = scalar_lea.vmem %s8, %s7370
      // Predicated region
      $region53: #{tpu_custom_call.1} parent=51 // pred_check
        %p7372 = pneg %p210
      $region54: #{tpu_custom_call.1} parent=51 // pred_check_branch
        %7374 = sbr.rel (%p7372) target = $region56
      $region55: #{tpu_custom_call.1} parent=51 // pred_region
        _
      $region56: #{tpu_custom_call.1} parent=51 // pred_fallthru
        _
    $region52: #{tpu_custom_call.1} parent=5 // pred_fallthru
      _
    %p7375 = scmp.le.s32.totalorder 2, %s14
    // Predicated region
    $region57: #{tpu_custom_call.1} parent=5 // pred_check
      %p7376 = pneg %p7375
    $region58: #{tpu_custom_call.1} parent=5 // pred_check_branch
      %7378 = sbr.rel (%p7376) target = $region60
    $region59: #{tpu_custom_call.1} parent=5 // pred_region
      %s7379 = ssub.s32 %s14, 2
      // Predicated region
      $region61: #{tpu_custom_call.1} parent=59 // pred_check
        %p7380 = pneg %p216
      $region62: #{tpu_custom_call.1} parent=59 // pred_check_branch
        %7382 = sbr.rel (%p7380) target = $region64
      $region63: #{tpu_custom_call.1} parent=59 // pred_region
        %p7383 = scmp.lt.s32.totalorder %s20, 1
        %s7384 = scalar_select %p7383, %s20, 1
        %s7385 = smul.addr %s7384, 36
        %s7386 = smul.addr %s7385, 8
        %s7387 = scalar_lea.vmem %s8, %s7386
      $region64: #{tpu_custom_call.1} parent=59 // pred_fallthru
        _
    $region60: #{tpu_custom_call.1} parent=5 // pred_fallthru
      _
  $region6: #{tpu_custom_call.1} parent=0 // loop_footer
    %s18 = sadd.s32 1, %s14
  $region7: #{tpu_custom_call.1} parent=0 // loop_footer_branch
    %13 = sbr.rel target = $region3
  $region8: #{tpu_custom_call.1} parent=0 // loop_exit
    _

</llo_original>
